<compile_context>
chip_gen: v6e
topology: v6e:2x2x1
jax: 0.10.0
libtpu: 0.0.40
codegen_flags: <defaults>
</compile_context>

<pallas_src>
import functools

import jax
import jax.numpy as jnp
from jax.experimental import pallas as pl
from jax.experimental.pallas import tpu as pltpu


# ---------------------------------------------------------------------------
# Pallas kernels: fused matmul + bias + activation (ReLU / Tanh / identity).
# ---------------------------------------------------------------------------
def _apply_act(y, activation):
    if activation == "relu":
        return jnp.maximum(y, 0.0)
    if activation == "tanh":
        return jnp.tanh(y)
    return y


def _mm_bias_act_kernel(a_ref, b_ref, bias_ref, o_ref, *, activation):
    # Single-K-tile path: no accumulator scratch, write output directly.
    y = jnp.dot(a_ref[...], b_ref[...], preferred_element_type=jnp.float32)
    y = y + bias_ref[...]
    o_ref[...] = _apply_act(y, activation).astype(o_ref.dtype)


def _mm_bias_act_acc_kernel(a_ref, b_ref, bias_ref, o_ref, acc_ref, *, activation):
    # K-looped path (only used by the final Linear).
    @pl.when(pl.program_id(2) == 0)
    def _():
        acc_ref[...] = jnp.zeros_like(acc_ref)

    acc_ref[...] += jnp.dot(
        a_ref[...], b_ref[...], preferred_element_type=jnp.float32
    )

    @pl.when(pl.program_id(2) == pl.num_programs(2) - 1)
    def _():
        y = acc_ref[...] + bias_ref[...]
        o_ref[...] = _apply_act(y, activation).astype(o_ref.dtype)


def fused_matmul(a, b, bias, *, activation, tm, tk, tn, out_dtype=jnp.float32):
    """act(a @ b + bias); a:[M,K], b:[K,N], bias:[N]. bf16 MXU, f32 accum."""
    M, K = a.shape
    K2, N = b.shape
    assert K == K2, (K, K2)
    assert M % tm == 0 and K % tk == 0 and N % tn == 0, (M, K, N, tm, tk, tn)

    a = a.astype(jnp.bfloat16)
    b = b.astype(jnp.bfloat16)
    bias2d = bias.reshape(1, N).astype(jnp.float32)
    nk = K // tk

    if nk == 1:
        # Collapsed K axis: 2-D parallel grid, no scratch.
        kernel = functools.partial(_mm_bias_act_kernel, activation=activation)
        return pl.pallas_call(
            kernel,
            out_shape=jax.ShapeDtypeStruct((M, N), out_dtype),
            grid_spec=pltpu.PrefetchScalarGridSpec(
                num_scalar_prefetch=0,
                grid=(M // tm, N // tn),
                in_specs=[
                    pl.BlockSpec((tm, K), lambda i, j: (i, 0)),
                    pl.BlockSpec((K, tn), lambda i, j: (0, j)),
                    pl.BlockSpec((1, tn), lambda i, j: (0, j)),
                ],
                out_specs=pl.BlockSpec((tm, tn), lambda i, j: (i, j)),
            ),
            compiler_params=pltpu.CompilerParams(
                dimension_semantics=("parallel", "parallel")
            ),
        )(a, b, bias2d)

    kernel = functools.partial(_mm_bias_act_acc_kernel, activation=activation)
    return pl.pallas_call(
        kernel,
        out_shape=jax.ShapeDtypeStruct((M, N), out_dtype),
        grid_spec=pltpu.PrefetchScalarGridSpec(
            num_scalar_prefetch=0,
            grid=(M // tm, N // tn, nk),
            in_specs=[
                pl.BlockSpec((tm, tk), lambda i, j, k: (i, k)),
                pl.BlockSpec((tk, tn), lambda i, j, k: (k, j)),
                pl.BlockSpec((1, tn), lambda i, j, k: (0, j)),
            ],
            out_specs=pl.BlockSpec((tm, tn), lambda i, j, k: (i, j)),
            scratch_shapes=[pltpu.VMEM((tm, tn), jnp.float32)],
        ),
        compiler_params=pltpu.CompilerParams(
            dimension_semantics=("parallel", "parallel", "arbitrary")
        ),
    )(a, b, bias2d)


# ---------------------------------------------------------------------------
# im2col for k=4, stride=2, pad=1 on NHWC data via space-to-depth.
# Patch column ordering is (bh, bw, rh, rw, c) with kh = 2*bh+rh, kw = 2*bw+rw;
# the same ordering is baked into the repacked conv weights.
# ---------------------------------------------------------------------------
def im2col_s2d(x_nhwc):
    B, H, W, C = x_nhwc.shape
    Ho, Wo = H // 2, W // 2
    xp = jnp.pad(x_nhwc, ((0, 0), (1, 1), (1, 1), (0, 0)))
    Hh, Wh = Ho + 1, Wo + 1
    d = xp.reshape(B, Hh, 2, Wh, 2, C).transpose(0, 1, 3, 2, 4, 5)  # [B,Hh,Wh,2,2,C]
    blocks = [d[:, bh:bh + Ho, bw:bw + Wo] for bh in range(2) for bw in range(2)]
    p = jnp.stack(blocks, axis=3)  # [B, Ho, Wo, 4(bh*2+bw), 2(rh), 2(rw), C]
    return p.reshape(B * Ho * Wo, 16 * C), Ho, Wo


def conv4s2_relu(x_nhwc, w_mat, bias, tm):
    """Conv2d(k=4,s=2,p=1)+ReLU on NHWC data; w_mat is the repacked [16*Cin, Cout]."""
    B = x_nhwc.shape[0]
    patches, Ho, Wo = im2col_s2d(x_nhwc)          # [B*Ho*Wo, 16*Cin] (bf16 after conv1)
    Cout = w_mat.shape[1]
    y = fused_matmul(
        patches, w_mat, bias, activation="relu",
        tm=tm, tk=patches.shape[1], tn=Cout, out_dtype=jnp.bfloat16,
    )
    return y.reshape(B, Ho, Wo, Cout)             # stay NHWC


# ---------------------------------------------------------------------------
# One-time weight repack (PyTorch layout -> kernel layout).  Done outside jit.
# ---------------------------------------------------------------------------
def prepare_params(params):
    w1, b1, w2, b2, w3, b3 = params

    def conv_w_to_mat(w):
        cout, cin, _, _ = w.shape                       # [Cout, Cin, 4, 4]
        wr = w.reshape(cout, cin, 2, 2, 2, 2)           # (co, ci, bh, rh, bw, rw)
        wr = wr.transpose(2, 4, 3, 5, 1, 0)             # (bh, bw, rh, rw, ci, co)
        return wr.reshape(16 * cin, cout).astype(jnp.bfloat16)

    w1m = conv_w_to_mat(w1)                             # [48, 64]
    w2m = conv_w_to_mat(w2)                             # [1024, 128]

    nz = w3.shape[0]
    # Rows reordered so that an NHWC flatten of h2 matches PyTorch's NCHW flatten.
    w3m = (
        w3.reshape(nz, 128, 16, 16)                     # (j, c, h, w)
          .transpose(0, 2, 3, 1)                        # (j, h, w, c)
          .reshape(nz, 128 * 16 * 16)
          .T                                            # [32768, nz]
    ).astype(jnp.bfloat16)

    return (w1m, b1.astype(jnp.float32), w2m, b2.astype(jnp.float32),
            w3m, b3.astype(jnp.float32))


# ---------------------------------------------------------------------------
# Decoder forward (takes PyTorch-style NCHW input + prepared weights).
# ---------------------------------------------------------------------------
def decoder_forward(x_nchw, prepared):
    w1m, b1, w2m, b2, w3m, b3 = prepared
    B = x_nchw.shape[0]

    x = jnp.transpose(x_nchw, (0, 2, 3, 1))             # NHWC once at entry

    # Conv1: [B,64,64,3] -> [B,32,32,64]; M = B*1024, split in 2 (v7x megacore).
    h1 = conv4s2_relu(x, w1m, b1, tm=(B * 1024) // 2)

    # Conv2: [B,32,32,64] -> [B,16,16,128]; K = 1024 in one tile, M split in 2.
    h2 = conv4s2_relu(h1, w2m, b2, tm=(B * 256) // 2)

    # Flatten (PyTorch order baked into w3m rows) + Linear + Tanh.
    flat = h2.reshape(B, 16 * 16 * 128)
    nz = w3m.shape[1]
    return fused_matmul(
        flat, w3m, b3, activation="tanh",
        tm=B, tk=8192, tn=nz, out_dtype=jnp.float32,
    )


# ---------------------------------------------------------------------------
# Pure-JAX f32 reference (PyTorch semantics) for a correctness cross-check.
# ---------------------------------------------------------------------------
def reference_forward(x, params):
    w1, b1, w2, b2, w3, b3 = params

    def conv(h, w, b):
        y = jax.lax.conv_general_dilated(
            h, w, window_strides=(2, 2), padding=((1, 1), (1, 1)),
            dimension_numbers=("NCHW", "OIHW", "NCHW"))
        return jax.nn.relu(y + b[None, :, None, None])

    h = conv(conv(x, w1, b1), w2, b2)
    flat = h.reshape(x.shape[0], -1)
    return jnp.tanh(flat @ w3.T + b3)


# ---------------------------------------------------------------------------
# Deterministic synthetic parameters (PyTorch layouts / shapes).
# ---------------------------------------------------------------------------
def init_params(nz=100):
    key = jax.random.PRNGKey(0)
    k1, k2, k3 = jax.random.split(key, 3)
    w1 = 0.05 * jax.random.normal(k1, (64, 3, 4, 4), jnp.float32)
    b1 = 0.01 * jnp.arange(64, dtype=jnp.float32)
    w2 = 0.02 * jax.random.normal(k2, (128, 64, 4, 4), jnp.float32)
    b2 = 0.01 * jnp.arange(128, dtype=jnp.float32)
    w3 = 0.001 * jax.random.normal(k3, (nz, 128 * 16 * 16), jnp.float32)
    b3 = 0.01 * jnp.arange(nz, dtype=jnp.float32)
    return (w1, b1, w2, b2, w3, b3)


if __name__ == "__main__":
    nz = 100
    B = 2                     # Linear(128*16*16, nz) after 2 stride-2 convs => 64x64 input
    params = init_params(nz)
    prepared = prepare_params(params)   # one-time repack (not per forward pass)

    key_x = jax.random.PRNGKey(0)
    x = jax.random.normal(key_x, (B, 3, 64, 64), dtype=jnp.float32)

    out = jax.jit(decoder_forward)(x, prepared)
    out = jax.block_until_ready(out)

    assert out.shape == (B, nz), out.shape
    assert out.dtype == jnp.float32
    assert bool(jnp.all(jnp.isfinite(out)))
    assert bool(jnp.all(jnp.abs(out) <= 1.0))    # tanh range

    # Cross-check against the f32 reference (bf16 matmul tolerance).
    ref = jax.jit(reference_forward)(x, params)
    max_err = float(jnp.max(jnp.abs(out - ref)))
    assert max_err < 3e-2, max_err

    print("KERNEL_OK")
</pallas_src>

<mosaic_0001>
module attributes {stable_mosaic.version = 11 : i64} {
  func.func @_mm_bias_act_kernel(%arg0: i32, %arg1: i32, %arg2: memref<1024x48xbf16, #tpu.memory_space<vmem>>, %arg3: memref<48x64xbf16, #tpu.memory_space<vmem>>, %arg4: memref<1x64xf32, #tpu.memory_space<vmem>>, %arg5: memref<1024x64xbf16, #tpu.memory_space<vmem>>) attributes {dimension_semantics = [#tpu.dimension_semantics<parallel>, #tpu.dimension_semantics<parallel>], iteration_bounds = array<i64: 2, 1>, scalar_prefetch = 0 : i64, scratch_operands = 0 : i64, tpu.core_type = #tpu.core_type<tc>, window_params = [{transform_indices = @transform_0, window_bounds = array<i64: 1024, 48>}, {transform_indices = @transform_1, window_bounds = array<i64: 48, 64>}, {transform_indices = @transform_2, window_bounds = array<i64: 1, 64>}, {transform_indices = @transform_3, window_bounds = array<i64: 1024, 64>}]} {
    %c0 = arith.constant 0 : index
    %c0_0 = arith.constant 0 : index
    %0 = vector.load %arg2[%c0, %c0_0] : memref<1024x48xbf16, #tpu.memory_space<vmem>>, vector<1024x48xbf16>
    %c0_1 = arith.constant 0 : index
    %c0_2 = arith.constant 0 : index
    %1 = vector.load %arg3[%c0_1, %c0_2] : memref<48x64xbf16, #tpu.memory_space<vmem>>, vector<48x64xbf16>
    %cst = arith.constant dense<0.000000e+00> : vector<1024x64xf32>
    %2 = tpu.matmul %0, %1, %cst {dimension_numbers = #tpu.dot_dimension_numbers<[1], [0], [0], [1], [0, 0, 1, 1], [], []>} : vector<1024x48xbf16>, vector<48x64xbf16>, vector<1024x64xf32> -> vector<1024x64xf32>
    %c0_3 = arith.constant 0 : index
    %c0_4 = arith.constant 0 : index
    %3 = vector.load %arg4[%c0_3, %c0_4] : memref<1x64xf32, #tpu.memory_space<vmem>>, vector<1x64xf32>
    %4 = vector.broadcast %3 : vector<1x64xf32> to vector<1024x64xf32>
    %5 = arith.addf %2, %4 : vector<1024x64xf32>
    %cst_5 = arith.constant 0.000000e+00 : f32
    %6 = vector.broadcast %cst_5 : f32 to vector<1024x64xf32>
    %7 = arith.maximumf %5, %6 : vector<1024x64xf32>
    %8 = arith.truncf %7 : vector<1024x64xf32> to vector<1024x64xbf16>
    %c0_6 = arith.constant 0 : index
    %c0_7 = arith.constant 0 : index
    %9 = vector.load %arg5[%c0_6, %c0_7] : memref<1024x64xbf16, #tpu.memory_space<vmem>>, vector<1024x64xbf16>
    tpu.vector_store %arg5[%c0_6, %c0_7], %8 {strides = array<i32>} : memref<1024x64xbf16, #tpu.memory_space<vmem>>, vector<1024x64xbf16>,
    return
  }
  func.func @transform_0(%arg0: i32, %arg1: i32) -> (i32, i32) {
    %c0_i32 = arith.constant 0 : i32
    %c0_i32_0 = arith.constant 0 : i32
    return %arg0, %c0_i32 : i32, i32
  }
  func.func @transform_1(%arg0: i32, %arg1: i32) -> (i32, i32) {
    %c0_i32 = arith.constant 0 : i32
    %c0_i32_0 = arith.constant 0 : i32
    return %c0_i32, %arg1 : i32, i32
  }
  func.func @transform_2(%arg0: i32, %arg1: i32) -> (i32, i32) {
    %c0_i32 = arith.constant 0 : i32
    %c0_i32_0 = arith.constant 0 : i32
    return %c0_i32, %arg1 : i32, i32
  }
  func.func @transform_3(%arg0: i32, %arg1: i32) -> (i32, i32) {
    %c0_i32 = arith.constant 0 : i32
    return %arg0, %arg1 : i32, i32
  }
}

module attributes {stable_mosaic.version = 11 : i64} {
  func.func @_mm_bias_act_kernel(%arg0: i32, %arg1: i32, %arg2: memref<256x1024xbf16, #tpu.memory_space<vmem>>, %arg3: memref<1024x128xbf16, #tpu.memory_space<vmem>>, %arg4: memref<1x128xf32, #tpu.memory_space<vmem>>, %arg5: memref<256x128xbf16, #tpu.memory_space<vmem>>) attributes {dimension_semantics = [#tpu.dimension_semantics<parallel>, #tpu.dimension_semantics<parallel>], iteration_bounds = array<i64: 2, 1>, scalar_prefetch = 0 : i64, scratch_operands = 0 : i64, tpu.core_type = #tpu.core_type<tc>, window_params = [{transform_indices = @transform_0, window_bounds = array<i64: 256, 1024>}, {transform_indices = @transform_1, window_bounds = array<i64: 1024, 128>}, {transform_indices = @transform_2, window_bounds = array<i64: 1, 128>}, {transform_indices = @transform_3, window_bounds = array<i64: 256, 128>}]} {
    %c0 = arith.constant 0 : index
    %c0_0 = arith.constant 0 : index
    %0 = vector.load %arg2[%c0, %c0_0] : memref<256x1024xbf16, #tpu.memory_space<vmem>>, vector<256x1024xbf16>
    %c0_1 = arith.constant 0 : index
    %c0_2 = arith.constant 0 : index
    %1 = vector.load %arg3[%c0_1, %c0_2] : memref<1024x128xbf16, #tpu.memory_space<vmem>>, vector<1024x128xbf16>
    %cst = arith.constant dense<0.000000e+00> : vector<256x128xf32>
    %2 = tpu.matmul %0, %1, %cst {dimension_numbers = #tpu.dot_dimension_numbers<[1], [0], [0], [1], [0, 0, 1, 1], [], []>} : vector<256x1024xbf16>, vector<1024x128xbf16>, vector<256x128xf32> -> vector<256x128xf32>
    %c0_3 = arith.constant 0 : index
    %c0_4 = arith.constant 0 : index
    %3 = vector.load %arg4[%c0_3, %c0_4] : memref<1x128xf32, #tpu.memory_space<vmem>>, vector<1x128xf32>
    %4 = vector.broadcast %3 : vector<1x128xf32> to vector<256x128xf32>
    %5 = arith.addf %2, %4 : vector<256x128xf32>
    %cst_5 = arith.constant 0.000000e+00 : f32
    %6 = vector.broadcast %cst_5 : f32 to vector<256x128xf32>
    %7 = arith.maximumf %5, %6 : vector<256x128xf32>
    %8 = arith.truncf %7 : vector<256x128xf32> to vector<256x128xbf16>
    %c0_6 = arith.constant 0 : index
    %c0_7 = arith.constant 0 : index
    %9 = vector.load %arg5[%c0_6, %c0_7] : memref<256x128xbf16, #tpu.memory_space<vmem>>, vector<256x128xbf16>
    tpu.vector_store %arg5[%c0_6, %c0_7], %8 {strides = array<i32>} : memref<256x128xbf16, #tpu.memory_space<vmem>>, vector<256x128xbf16>,
    return
  }
  func.func @transform_0(%arg0: i32, %arg1: i32) -> (i32, i32) {
    %c0_i32 = arith.constant 0 : i32
    %c0_i32_0 = arith.constant 0 : i32
    return %arg0, %c0_i32 : i32, i32
  }
  func.func @transform_1(%arg0: i32, %arg1: i32) -> (i32, i32) {
    %c0_i32 = arith.constant 0 : i32
    %c0_i32_0 = arith.constant 0 : i32
    return %c0_i32, %arg1 : i32, i32
  }
  func.func @transform_2(%arg0: i32, %arg1: i32) -> (i32, i32) {
    %c0_i32 = arith.constant 0 : i32
    %c0_i32_0 = arith.constant 0 : i32
    return %c0_i32, %arg1 : i32, i32
  }
  func.func @transform_3(%arg0: i32, %arg1: i32) -> (i32, i32) {
    %c0_i32 = arith.constant 0 : i32
    return %arg0, %arg1 : i32, i32
  }
}

module attributes {stable_mosaic.version = 11 : i64} {
  func.func @_mm_bias_act_acc_kernel(%arg0: i32, %arg1: i32, %arg2: i32, %arg3: memref<2x8192xbf16, #tpu.memory_space<vmem>>, %arg4: memref<8192x100xbf16, #tpu.memory_space<vmem>>, %arg5: memref<1x100xf32, #tpu.memory_space<vmem>>, %arg6: memref<2x100xf32, #tpu.memory_space<vmem>>, %arg7: memref<2x100xf32, #tpu.memory_space<vmem>>) attributes {dimension_semantics = [#tpu.dimension_semantics<parallel>, #tpu.dimension_semantics<parallel>, #tpu.dimension_semantics<arbitrary>], iteration_bounds = array<i64: 1, 1, 4>, scalar_prefetch = 0 : i64, scratch_operands = 1 : i64, tpu.core_type = #tpu.core_type<tc>, window_params = [{transform_indices = @transform_0, window_bounds = array<i64: 2, 8192>}, {transform_indices = @transform_1, window_bounds = array<i64: 8192, 100>}, {transform_indices = @transform_2, window_bounds = array<i64: 1, 100>}, {transform_indices = @transform_3, window_bounds = array<i64: 2, 100>}]} {
    %c0_i32 = arith.constant 0 : i32
    %0 = arith.cmpi eq, %arg2, %c0_i32 : i32
    %1 = arith.extui %0 : i1 to i32
    %c0_i32_0 = arith.constant 0 : i32
    %2 = arith.cmpi ne, %1, %c0_i32_0 : i32
    scf.if %2 {
      %cst_9 = arith.constant 0.000000e+00 : f32
      %12 = vector.broadcast %cst_9 : f32 to vector<2x100xf32>
      %c0_10 = arith.constant 0 : index
      %c0_11 = arith.constant 0 : index
      %13 = vector.load %arg7[%c0_10, %c0_11] : memref<2x100xf32, #tpu.memory_space<vmem>>, vector<2x100xf32>
      tpu.vector_store %arg7[%c0_10, %c0_11], %12 {strides = array<i32>} : memref<2x100xf32, #tpu.memory_space<vmem>>, vector<2x100xf32>,
    } else {
    }
    %c0 = arith.constant 0 : index
    %c0_1 = arith.constant 0 : index
    %3 = vector.load %arg7[%c0, %c0_1] : memref<2x100xf32, #tpu.memory_space<vmem>>, vector<2x100xf32>
    %c0_2 = arith.constant 0 : index
    %c0_3 = arith.constant 0 : index
    %4 = vector.load %arg3[%c0_2, %c0_3] : memref<2x8192xbf16, #tpu.memory_space<vmem>>, vector<2x8192xbf16>
    %c0_4 = arith.constant 0 : index
    %c0_5 = arith.constant 0 : index
    %5 = vector.load %arg4[%c0_4, %c0_5] : memref<8192x100xbf16, #tpu.memory_space<vmem>>, vector<8192x100xbf16>
    %cst = arith.constant dense<0.000000e+00> : vector<2x100xf32>
    %6 = tpu.matmul %4, %5, %cst {dimension_numbers = #tpu.dot_dimension_numbers<[1], [0], [0], [1], [0, 0, 1, 1], [], []>} : vector<2x8192xbf16>, vector<8192x100xbf16>, vector<2x100xf32> -> vector<2x100xf32>
    %7 = arith.addf %3, %6 : vector<2x100xf32>
    %c0_6 = arith.constant 0 : index
    %c0_7 = arith.constant 0 : index
    %8 = vector.load %arg7[%c0_6, %c0_7] : memref<2x100xf32, #tpu.memory_space<vmem>>, vector<2x100xf32>
    tpu.vector_store %arg7[%c0_6, %c0_7], %7 {strides = array<i32>} : memref<2x100xf32, #tpu.memory_space<vmem>>, vector<2x100xf32>,
    %c3_i32 = arith.constant 3 : i32
    %9 = arith.cmpi eq, %arg2, %c3_i32 : i32
    %10 = arith.extui %9 : i1 to i32
    %c0_i32_8 = arith.constant 0 : i32
    %11 = arith.cmpi ne, %10, %c0_i32_8 : i32
    scf.if %11 {
      %c0_9 = arith.constant 0 : index
      %c0_10 = arith.constant 0 : index
      %12 = vector.load %arg7[%c0_9, %c0_10] : memref<2x100xf32, #tpu.memory_space<vmem>>, vector<2x100xf32>
      %c0_11 = arith.constant 0 : index
      %c0_12 = arith.constant 0 : index
      %13 = vector.load %arg5[%c0_11, %c0_12] : memref<1x100xf32, #tpu.memory_space<vmem>>, vector<1x100xf32>
      %14 = vector.broadcast %13 : vector<1x100xf32> to vector<2x100xf32>
      %15 = arith.addf %12, %14 : vector<2x100xf32>
      %16 = math.tanh %15 : vector<2x100xf32>
      %c0_13 = arith.constant 0 : index
      %c0_14 = arith.constant 0 : index
      %17 = vector.load %arg6[%c0_13, %c0_14] : memref<2x100xf32, #tpu.memory_space<vmem>>, vector<2x100xf32>
      tpu.vector_store %arg6[%c0_13, %c0_14], %16 {strides = array<i32>} : memref<2x100xf32, #tpu.memory_space<vmem>>, vector<2x100xf32>,
    } else {
    }
    return
  }
  func.func @transform_0(%arg0: i32, %arg1: i32, %arg2: i32) -> (i32, i32) {
    %c0_i32 = arith.constant 0 : i32
    return %arg0, %arg2 : i32, i32
  }
  func.func @transform_1(%arg0: i32, %arg1: i32, %arg2: i32) -> (i32, i32) {
    %c0_i32 = arith.constant 0 : i32
    return %arg2, %arg1 : i32, i32
  }
  func.func @transform_2(%arg0: i32, %arg1: i32, %arg2: i32) -> (i32, i32) {
    %c0_i32 = arith.constant 0 : i32
    %c0_i32_0 = arith.constant 0 : i32
    return %c0_i32, %arg1 : i32, i32
  }
  func.func @transform_3(%arg0: i32, %arg1: i32, %arg2: i32) -> (i32, i32) {
    %c0_i32 = arith.constant 0 : i32
    return %arg0, %arg1 : i32, i32
  }
}

</mosaic_0001>

<llo_original>
// kernel: decoder_forward.3
$region0: #{decoder_forward.3}
  #allocation0 [shape = 'u32[]', space=smem, size = 0x4, offset = 0x4, fixed_abs, tag = 'smem constant byte address 0x4 - core index']
  #allocation1 [shape = 'u32[144,128]{1,0:T(1,128)}', space=vmem, size = 0x12000, scoped, tag = 'internal scratch']
  %s0 = inlined_call_operand.vmem [shape: bf16[2048,48], index: 0, kind: input, shape index: {}]
  %s1 = inlined_call_operand.vmem [shape: bf16[48,64], index: 1, kind: input, shape index: {}]
  %s2 = inlined_call_operand.vmem [shape: f32[1,64], index: 2, kind: input, shape index: {}]
  %s3 = inlined_call_operand.vmem [shape: bf16[2048,64], index: 3, kind: output, shape index: {}]
  %s4 = sld [smem:[#allocation0]]
  $region45: #{decoder_forward.3} parent=0
    _
  %s6 = ssub.s32 1, %s4
  %s7 = scalar_select 0, %s6, %s4
  loop: start=0, step=1, limit=4
  $region2: #{decoder_forward.3} parent=0 // loop_pre_header
    _
  $region3: #{decoder_forward.3} parent=0 // loop_header
    %s9 = sphi 0, %s13
    %p10 = scmp.ge.s32.totalorder %s9, 4
    %s16 = sphi 0, %s28
    %s17 = sphi 0, %s24
    %s18 = sphi 0, %s16
    %s19 = sphi 0, %s17
    %s20 = sphi 0, %s18
    %s21 = sphi 0, %s19
    %s31 = sphi 0, %s33
    %s34 = sphi 0, %s31
    %s35 = sphi 0, %s34
    %s51 = sphi 0, %s35
    %s57 = sphi 0, %s59
    %s60 = sphi 0, %s57
    %s61 = sphi 0, %s60
    %s77 = sphi 0, %s61
    %s83 = sphi 0, %s85
    %s86 = sphi 0, %s83
    %s87 = sphi 0, %s86
    %s103 = sphi 0, %s87
    %s111 = sphi 0, %s113
    %s114 = sphi 0, %s111
    %s115 = sphi 0, %s114
    %s131 = sphi 0, %s115
  $region4: #{decoder_forward.3} parent=0 // loop_header_branch
    %12 = sbr.rel (%p10) target = $region8
  $region5: #{decoder_forward.3} parent=0 // loop_body
    %s14 = ssub.s32 %s9, 1
    %s15 = ssub.s32 %s9, 2
    %s22 = sadd.s32 1, %s17
    %p23 = scmp.ge.s32.totalorder %s22, 1
    %s24 = scalar_select %p23, 0, %s22
    %s25 = sadd.s32 1, %s16
    %s26 = scalar_select %p23, %s25, %s16
    %p27 = scmp.ge.s32.totalorder %s26, 2
    %s28 = scalar_select %p27, 0, %s26
    %s29 = ssub.s32 %s16, %s28
    %p30 = scmp.eq.s32.totalorder %s29, 0
    %s32 = sadd.s32 %s31, 1
    %s33 = scalar_select %p30, %s31, %s32
    %p36 = pneg %p30
    %p37 = scmp.eq.s32.totalorder %s9, 1
    %p38 = por %p36, %p37
    %p39 = scmp.ne.s32.totalorder %s31, %s34
    %p40 = scmp.eq.s32.totalorder %s9, 0
    %p41 = por %p39, %p40
    %p42 = scmp.ne.s32.totalorder %s31, %s34
    %p43 = scmp.eq.s32.totalorder %s14, 1
    %p44 = por %p42, %p43
    %p45 = scmp.ne.s32.totalorder %s34, %s35
    %p46 = scmp.eq.s32.totalorder %s14, 0
    %p47 = por %p45, %p46
    %p48 = scmp.ne.s32.totalorder %s34, %s35
    %p49 = scmp.eq.s32.totalorder %s15, 1
    %p50 = por %p48, %p49
    %p52 = scmp.ne.s32.totalorder %s35, %s51
    %p53 = scmp.eq.s32.totalorder %s15, 0
    %p54 = por %p52, %p53
    %s55 = ssub.s32 %s17, %s24
    %p56 = scmp.eq.s32.totalorder %s55, 0
    %s58 = sadd.s32 %s57, 1
    %s59 = scalar_select %p56, %s57, %s58
    %p62 = pneg %p56
    %p63 = scmp.eq.s32.totalorder %s9, 1
    %p64 = por %p62, %p63
    %p65 = scmp.ne.s32.totalorder %s57, %s60
    %p66 = scmp.eq.s32.totalorder %s9, 0
    %p67 = por %p65, %p66
    %p68 = scmp.ne.s32.totalorder %s57, %s60
    %p69 = scmp.eq.s32.totalorder %s14, 1
    %p70 = por %p68, %p69
    %p71 = scmp.ne.s32.totalorder %s60, %s61
    %p72 = scmp.eq.s32.totalorder %s14, 0
    %p73 = por %p71, %p72
    %p74 = scmp.ne.s32.totalorder %s60, %s61
    %p75 = scmp.eq.s32.totalorder %s15, 1
    %p76 = por %p74, %p75
    %p78 = scmp.ne.s32.totalorder %s61, %s77
    %p79 = scmp.eq.s32.totalorder %s15, 0
    %p80 = por %p78, %p79
    %s81 = ssub.s32 %s17, %s24
    %p82 = scmp.eq.s32.totalorder %s81, 0
    %s84 = sadd.s32 %s83, 1
    %s85 = scalar_select %p82, %s83, %s84
    %p88 = pneg %p82
    %p89 = scmp.eq.s32.totalorder %s9, 1
    %p90 = por %p88, %p89
    %p91 = scmp.ne.s32.totalorder %s83, %s86
    %p92 = scmp.eq.s32.totalorder %s9, 0
    %p93 = por %p91, %p92
    %p94 = scmp.ne.s32.totalorder %s83, %s86
    %p95 = scmp.eq.s32.totalorder %s14, 1
    %p96 = por %p94, %p95
    %p97 = scmp.ne.s32.totalorder %s86, %s87
    %p98 = scmp.eq.s32.totalorder %s14, 0
    %p99 = por %p97, %p98
    %p100 = scmp.ne.s32.totalorder %s86, %s87
    %p101 = scmp.eq.s32.totalorder %s15, 1
    %p102 = por %p100, %p101
    %p104 = scmp.ne.s32.totalorder %s87, %s103
    %p105 = scmp.eq.s32.totalorder %s15, 0
    %p106 = por %p104, %p105
    %s107 = ssub.s32 %s16, %s28
    %s108 = ssub.s32 %s17, %s24
    %s109 = sor.u32 %s107, %s108
    %p110 = scmp.eq.s32.totalorder %s109, 0
    %s112 = sadd.s32 %s111, 1
    %s113 = scalar_select %p110, %s111, %s112
    %p116 = pneg %p110
    %p117 = scmp.eq.s32.totalorder %s9, 1
    %p118 = por %p116, %p117
    %p119 = scmp.ne.s32.totalorder %s111, %s114
    %p120 = scmp.eq.s32.totalorder %s9, 0
    %p121 = por %p119, %p120
    %p122 = scmp.ne.s32.totalorder %s111, %s114
    %p123 = scmp.eq.s32.totalorder %s14, 1
    %p124 = por %p122, %p123
    %p125 = scmp.ne.s32.totalorder %s114, %s115
    %p126 = scmp.eq.s32.totalorder %s14, 0
    %p127 = por %p125, %p126
    %p128 = scmp.ne.s32.totalorder %s114, %s115
    %p129 = scmp.eq.s32.totalorder %s15, 1
    %p130 = por %p128, %p129
    %p132 = scmp.ne.s32.totalorder %s115, %s131
    %p133 = scmp.eq.s32.totalorder %s15, 0
    %p134 = por %p132, %p133
    %p135 = scmp.le.s32.totalorder 1, %s9
    %p136 = scmp.lt.s32.totalorder %s9, 3
    %p137 = pnand %p135, %p136
    %p138 = pneg %p137
    // Predicated region
    $region9: #{decoder_forward.3} parent=5 // pred_check
      _
    $region10: #{decoder_forward.3} parent=5 // pred_check_branch
      %140 = sbr.rel (%p137) target = $region12
    $region11: #{decoder_forward.3} parent=5 // pred_region
      %s141 = ssub.s32 %s9, 1
      // Predicated region
      $region13: #{decoder_forward.3} parent=11 // pred_check
        %p142 = pneg %p73
      $region14: #{decoder_forward.3} parent=11 // pred_check_branch
        %144 = sbr.rel (%p142) target = $region16
      $region15: #{decoder_forward.3} parent=11 // pred_region
        %p145 = scmp.lt.s32.totalorder %s19, 0
        %s146 = scalar_select %p145, %s19, 0
        %s147 = smul.addr %s146, 4
        %s148 = scalar_lea.vmem %s1, %s147
      $region16: #{decoder_forward.3} parent=11 // pred_fallthru
        _
      // Predicated region
      $region17: #{decoder_forward.3} parent=11 // pred_check
        %p149 = pneg %p99
      $region18: #{decoder_forward.3} parent=11 // pred_check_branch
        %151 = sbr.rel (%p149) target = $region20
      $region19: #{decoder_forward.3} parent=11 // pred_region
        %p152 = scmp.lt.s32.totalorder %s19, 0
        %s153 = scalar_select %p152, %s19, 0
        %s154 = scalar_lea.vmem %s2, %s153
      $region20: #{decoder_forward.3} parent=11 // pred_fallthru
        _
    $region12: #{decoder_forward.3} parent=5 // pred_fallthru
      _
    %p155 = scmp.lt.s32.totalorder %s9, 2
    // Predicated region
    $region21: #{decoder_forward.3} parent=5 // pred_check
      %p156 = pneg %p155
    $region22: #{decoder_forward.3} parent=5 // pred_check_branch
      %158 = sbr.rel (%p156) target = $region24
    $region23: #{decoder_forward.3} parent=5 // pred_region
      // Predicated region
      $region25: #{decoder_forward.3} parent=23 // pred_check
        %p159 = pneg %p41
      $region26: #{decoder_forward.3} parent=23 // pred_check_branch
        %161 = sbr.rel (%p159) target = $region28
      $region27: #{decoder_forward.3} parent=23 // pred_region
        %s162 = smul.u32 128, %s16
        %p163 = scmp.lt.s32.totalorder %s162, 255
        %s164 = scalar_select %p163, %s162, 255
        %s165 = smul.addr %s164, 4
        %s166 = scalar_lea.vmem %s0, %s165
        %s167 = smul.u32 128, %s16
      $region28: #{decoder_forward.3} parent=23 // pred_fallthru
        _
    $region24: #{decoder_forward.3} parent=5 // pred_fallthru
      _
    %p168 = scmp.le.s32.totalorder 1, %s9
    %p169 = scmp.lt.s32.totalorder %s9, 3
    %p170 = pnand %p168, %p169
    %p171 = pneg %p170
    // Predicated region
    $region29: #{decoder_forward.3} parent=5 // pred_check
      _
    $region30: #{decoder_forward.3} parent=5 // pred_check_branch
      %173 = sbr.rel (%p170) target = $region32
    $region31: #{decoder_forward.3} parent=5 // pred_region
      %s174 = ssub.s32 %s9, 1
      %s175 = smul.u32 128, %s18
      %p176 = scmp.lt.s32.totalorder %s175, 255
      %s177 = scalar_select %p176, %s175, 255
      %s178 = smul.addr %s177, 4
      %s179 = scalar_lea.vmem %s0, %s178
      %p180 = pneg %p47
      %p181 = pneg %p44
      %p182 = scmp.lt.s32.totalorder %s19, 0
      %s183 = scalar_select %p182, %s19, 0
      %s184 = smul.addr %s183, 4
      %s185 = scalar_lea.vmem %s1, %s184
      %p186 = pneg %p73
      %p187 = pneg %p70
      %p188 = scmp.lt.s32.totalorder %s19, 0
      %s189 = scalar_select %p188, %s19, 0
      %s190 = scalar_lea.vmem %s2, %s189
      %p191 = pneg %p99
      %p192 = pneg %p96
      %p193 = pneg %p127
      %p194 = pneg %p124
      %s195 = smul.u32 128, %s18
      %p196 = scmp.lt.s32.totalorder %s195, 255
      %s197 = scalar_select %p196, %s195, 255
      %p198 = scmp.lt.s32.totalorder %s19, 0
      %s199 = scalar_select %p198, %s19, 0
      %s200 = sadd.s32 %s199, %s197
      %s201 = smul.addr %s200, 4
      %s202 = scalar_lea.vmem %s3, %s201
      %s203 = smul.u32 128, %s18
      %p204 = scmp.lt.s32.totalorder %s203, 255
      %s205 = scalar_select %p204, %s203, 255
      %s206 = smul.addr %s205, 4
      %s207 = scalar_lea.vmem %s0, %s206
      %s208 = smul.u32 128, %s18
      %p209 = scmp.lt.s32.totalorder %s19, 0
      %s210 = scalar_select %p209, %s19, 0
      %s211 = smul.addr %s210, 4
      %s212 = scalar_lea.vmem %s1, %s211
      %p213 = scmp.lt.s32.totalorder %s19, 0
      %s214 = scalar_select %p213, %s19, 0
      %s215 = scalar_lea.vmem %s2, %s214
      %s216 = smul.u32 128, %s18
      %p217 = scmp.lt.s32.totalorder %s216, 255
      %s218 = scalar_select %p217, %s216, 255
      %p219 = scmp.lt.s32.totalorder %s19, 0
      %s220 = scalar_select %p219, %s19, 0
      %s221 = sadd.s32 %s220, %s218
      %s222 = smul.addr %s221, 4
      %s223 = scalar_lea.vmem %s3, %s222
      %s224 = smul.u32 128, %s18
      %v226 = vld [vmem:[%s207] sm:$0xf]
      %v227 = vld [vmem:[%s207 + $0x4] sm:$0xf]
      %v228 = vld [vmem:[%s207 + $0x8] sm:$0xf]
      %v229 = vld [vmem:[%s207 + $0xc] sm:$0xf]
      %v230 = vld [vmem:[%s207 + $0x10] sm:$0xf]
      %v231 = vld [vmem:[%s207 + $0x14] sm:$0xf]
      %v232 = vld [vmem:[%s207 + $0x18] sm:$0xf]
      %v233 = vld [vmem:[%s207 + $0x1c] sm:$0xf]
      %v234 = vld [vmem:[%s207 + $0x20] sm:$0xf]
      %v235 = vld [vmem:[%s207 + $0x24] sm:$0xf]
      %v236 = vld [vmem:[%s207 + $0x28] sm:$0xf]
      %v237 = vld [vmem:[%s207 + $0x2c] sm:$0xf]
      %v238 = vld [vmem:[%s207 + $0x30] sm:$0xf]
      %v239 = vld [vmem:[%s207 + $0x34] sm:$0xf]
      %v240 = vld [vmem:[%s207 + $0x38] sm:$0xf]
      %v241 = vld [vmem:[%s207 + $0x3c] sm:$0xf]
      %v242 = vld [vmem:[%s207 + $0x40] sm:$0xf]
      %v243 = vld [vmem:[%s207 + $0x44] sm:$0xf]
      %v244 = vld [vmem:[%s207 + $0x48] sm:$0xf]
      %v245 = vld [vmem:[%s207 + $0x4c] sm:$0xf]
      %v246 = vld [vmem:[%s207 + $0x50] sm:$0xf]
      %v247 = vld [vmem:[%s207 + $0x54] sm:$0xf]
      %v248 = vld [vmem:[%s207 + $0x58] sm:$0xf]
      %v249 = vld [vmem:[%s207 + $0x5c] sm:$0xf]
      %v250 = vld [vmem:[%s207 + $0x60] sm:$0xf]
      %v251 = vld [vmem:[%s207 + $0x64] sm:$0xf]
      %v252 = vld [vmem:[%s207 + $0x68] sm:$0xf]
      %v253 = vld [vmem:[%s207 + $0x6c] sm:$0xf]
      %v254 = vld [vmem:[%s207 + $0x70] sm:$0xf]
      %v255 = vld [vmem:[%s207 + $0x74] sm:$0xf]
      %v256 = vld [vmem:[%s207 + $0x78] sm:$0xf]
      %v257 = vld [vmem:[%s207 + $0x7c] sm:$0xf]
      %v258 = vld [vmem:[%s207 + $0x80] sm:$0xf]
      %v259 = vld [vmem:[%s207 + $0x84] sm:$0xf]
      %v260 = vld [vmem:[%s207 + $0x88] sm:$0xf]
      %v261 = vld [vmem:[%s207 + $0x8c] sm:$0xf]
      %v262 = vld [vmem:[%s207 + $0x90] sm:$0xf]
      %v263 = vld [vmem:[%s207 + $0x94] sm:$0xf]
      %v264 = vld [vmem:[%s207 + $0x98] sm:$0xf]
      %v265 = vld [vmem:[%s207 + $0x9c] sm:$0xf]
      %v266 = vld [vmem:[%s207 + $0xa0] sm:$0xf]
      %v267 = vld [vmem:[%s207 + $0xa4] sm:$0xf]
      %v268 = vld [vmem:[%s207 + $0xa8] sm:$0xf]
      %v269 = vld [vmem:[%s207 + $0xac] sm:$0xf]
      %v270 = vld [vmem:[%s207 + $0xb0] sm:$0xf]
      %v271 = vld [vmem:[%s207 + $0xb4] sm:$0xf]
      %v272 = vld [vmem:[%s207 + $0xb8] sm:$0xf]
      %v273 = vld [vmem:[%s207 + $0xbc] sm:$0xf]
      %v274 = vld [vmem:[%s207 + $0xc0] sm:$0xf]
      %v275 = vld [vmem:[%s207 + $0xc4] sm:$0xf]
      %v276 = vld [vmem:[%s207 + $0xc8] sm:$0xf]
      %v277 = vld [vmem:[%s207 + $0xcc] sm:$0xf]
      %v278 = vld [vmem:[%s207 + $0xd0] sm:$0xf]
      %v279 = vld [vmem:[%s207 + $0xd4] sm:$0xf]
      %v280 = vld [vmem:[%s207 + $0xd8] sm:$0xf]
      %v281 = vld [vmem:[%s207 + $0xdc] sm:$0xf]
      %v282 = vld [vmem:[%s207 + $0xe0] sm:$0xf]
      %v283 = vld [vmem:[%s207 + $0xe4] sm:$0xf]
      %v284 = vld [vmem:[%s207 + $0xe8] sm:$0xf]
      %v285 = vld [vmem:[%s207 + $0xec] sm:$0xf]
      %v286 = vld [vmem:[%s207 + $0xf0] sm:$0xf]
      %v287 = vld [vmem:[%s207 + $0xf4] sm:$0xf]
      %v288 = vld [vmem:[%s207 + $0xf8] sm:$0xf]
      %v289 = vld [vmem:[%s207 + $0xfc] sm:$0xf]
      %v290 = vld [vmem:[%s207 + $0x100] sm:$0xf]
      %v291 = vld [vmem:[%s207 + $0x104] sm:$0xf]
      %v292 = vld [vmem:[%s207 + $0x108] sm:$0xf]
      %v293 = vld [vmem:[%s207 + $0x10c] sm:$0xf]
      %v294 = vld [vmem:[%s207 + $0x110] sm:$0xf]
      %v295 = vld [vmem:[%s207 + $0x114] sm:$0xf]
      %v296 = vld [vmem:[%s207 + $0x118] sm:$0xf]
      %v297 = vld [vmem:[%s207 + $0x11c] sm:$0xf]
      %v298 = vld [vmem:[%s207 + $0x120] sm:$0xf]
      %v299 = vld [vmem:[%s207 + $0x124] sm:$0xf]
      %v300 = vld [vmem:[%s207 + $0x128] sm:$0xf]
      %v301 = vld [vmem:[%s207 + $0x12c] sm:$0xf]
      %v302 = vld [vmem:[%s207 + $0x130] sm:$0xf]
      %v303 = vld [vmem:[%s207 + $0x134] sm:$0xf]
      %v304 = vld [vmem:[%s207 + $0x138] sm:$0xf]
      %v305 = vld [vmem:[%s207 + $0x13c] sm:$0xf]
      %v306 = vld [vmem:[%s207 + $0x140] sm:$0xf]
      %v307 = vld [vmem:[%s207 + $0x144] sm:$0xf]
      %v308 = vld [vmem:[%s207 + $0x148] sm:$0xf]
      %v309 = vld [vmem:[%s207 + $0x14c] sm:$0xf]
      %v310 = vld [vmem:[%s207 + $0x150] sm:$0xf]
      %v311 = vld [vmem:[%s207 + $0x154] sm:$0xf]
      %v312 = vld [vmem:[%s207 + $0x158] sm:$0xf]
      %v313 = vld [vmem:[%s207 + $0x15c] sm:$0xf]
      %v314 = vld [vmem:[%s207 + $0x160] sm:$0xf]
      %v315 = vld [vmem:[%s207 + $0x164] sm:$0xf]
      %v316 = vld [vmem:[%s207 + $0x168] sm:$0xf]
      %v317 = vld [vmem:[%s207 + $0x16c] sm:$0xf]
      %v318 = vld [vmem:[%s207 + $0x170] sm:$0xf]
      %v319 = vld [vmem:[%s207 + $0x174] sm:$0xf]
      %v320 = vld [vmem:[%s207 + $0x178] sm:$0xf]
      %v321 = vld [vmem:[%s207 + $0x17c] sm:$0xf]
      %v322 = vld [vmem:[%s207 + $0x180] sm:$0xf]
      %v323 = vld [vmem:[%s207 + $0x184] sm:$0xf]
      %v324 = vld [vmem:[%s207 + $0x188] sm:$0xf]
      %v325 = vld [vmem:[%s207 + $0x18c] sm:$0xf]
      %v326 = vld [vmem:[%s207 + $0x190] sm:$0xf]
      %v327 = vld [vmem:[%s207 + $0x194] sm:$0xf]
      %v328 = vld [vmem:[%s207 + $0x198] sm:$0xf]
      %v329 = vld [vmem:[%s207 + $0x19c] sm:$0xf]
      %v330 = vld [vmem:[%s207 + $0x1a0] sm:$0xf]
      %v331 = vld [vmem:[%s207 + $0x1a4] sm:$0xf]
      %v332 = vld [vmem:[%s207 + $0x1a8] sm:$0xf]
      %v333 = vld [vmem:[%s207 + $0x1ac] sm:$0xf]
      %v334 = vld [vmem:[%s207 + $0x1b0] sm:$0xf]
      %v335 = vld [vmem:[%s207 + $0x1b4] sm:$0xf]
      %v336 = vld [vmem:[%s207 + $0x1b8] sm:$0xf]
      %v337 = vld [vmem:[%s207 + $0x1bc] sm:$0xf]
      %v338 = vld [vmem:[%s207 + $0x1c0] sm:$0xf]
      %v339 = vld [vmem:[%s207 + $0x1c4] sm:$0xf]
      %v340 = vld [vmem:[%s207 + $0x1c8] sm:$0xf]
      %v341 = vld [vmem:[%s207 + $0x1cc] sm:$0xf]
      %v342 = vld [vmem:[%s207 + $0x1d0] sm:$0xf]
      %v343 = vld [vmem:[%s207 + $0x1d4] sm:$0xf]
      %v344 = vld [vmem:[%s207 + $0x1d8] sm:$0xf]
      %v345 = vld [vmem:[%s207 + $0x1dc] sm:$0xf]
      %v346 = vld [vmem:[%s207 + $0x1e0] sm:$0xf]
      %v347 = vld [vmem:[%s207 + $0x1e4] sm:$0xf]
      %v348 = vld [vmem:[%s207 + $0x1e8] sm:$0xf]
      %v349 = vld [vmem:[%s207 + $0x1ec] sm:$0xf]
      %v350 = vld [vmem:[%s207 + $0x1f0] sm:$0xf]
      %v351 = vld [vmem:[%s207 + $0x1f4] sm:$0xf]
      %v352 = vld [vmem:[%s207 + $0x1f8] sm:$0xf]
      %v353 = vld [vmem:[%s207 + $0x1fc] sm:$0xf]
      %v354 = vld [vmem:[%s212] sm:$0xf]
      %v355 = vld [vmem:[%s212 + $0x4] sm:$0xf]
      %v356 = vld [vmem:[%s212 + $0x8] sm:$0xf]
      %v357 = vld [vmem:[%s212 + $0xc] sm:$0xf]
      %v358 = vld [vmem:[%s212 + $0x10] sm:$0xf]
      %v359 = vld [vmem:[%s212 + $0x14] sm:$0xf]
      %v360 = vld [vmem:[%s215] sm:$0x1]
      %v362 = vlaneseq
      %v363 = vshrl.u32 %v362, 7
      %v364 = vsub.s32 0, %v363
      %v365 = vrot.slane %v360, %v364
      %v495 = vunpack.c.l.b16 %v226
      %v496 = vunpack.c.l.b16 %v227
      %v497 = vunpack.c.l.b16 %v228
      %v498 = vunpack.c.l.b16 %v229
      %v499 = vunpack.c.l.b16 %v230
      %v500 = vunpack.c.l.b16 %v231
      %v501 = vunpack.c.l.b16 %v232
      %v502 = vunpack.c.l.b16 %v233
      %v503 = vunpack.c.l.b16 %v234
      %v504 = vunpack.c.l.b16 %v235
      %v505 = vunpack.c.l.b16 %v236
      %v506 = vunpack.c.l.b16 %v237
      %v507 = vunpack.c.l.b16 %v238
      %v508 = vunpack.c.l.b16 %v239
      %v509 = vunpack.c.l.b16 %v240
      %v510 = vunpack.c.l.b16 %v241
      %v511 = vunpack.c.l.b16 %v242
      %v512 = vunpack.c.l.b16 %v243
      %v513 = vunpack.c.l.b16 %v244
      %v514 = vunpack.c.l.b16 %v245
      %v515 = vunpack.c.l.b16 %v246
      %v516 = vunpack.c.l.b16 %v247
      %v517 = vunpack.c.l.b16 %v248
      %v518 = vunpack.c.l.b16 %v249
      %v519 = vunpack.c.l.b16 %v250
      %v520 = vunpack.c.l.b16 %v251
      %v521 = vunpack.c.l.b16 %v252
      %v522 = vunpack.c.l.b16 %v253
      %v523 = vunpack.c.l.b16 %v254
      %v524 = vunpack.c.l.b16 %v255
      %v525 = vunpack.c.l.b16 %v256
      %v526 = vunpack.c.l.b16 %v257
      %v527 = vunpack.c.l.b16 %v258
      %v528 = vunpack.c.l.b16 %v259
      %v529 = vunpack.c.l.b16 %v260
      %v530 = vunpack.c.l.b16 %v261
      %v531 = vunpack.c.l.b16 %v262
      %v532 = vunpack.c.l.b16 %v263
      %v533 = vunpack.c.l.b16 %v264
      %v534 = vunpack.c.l.b16 %v265
      %v535 = vunpack.c.l.b16 %v266
      %v536 = vunpack.c.l.b16 %v267
      %v537 = vunpack.c.l.b16 %v268
      %v538 = vunpack.c.l.b16 %v269
      %v539 = vunpack.c.l.b16 %v270
      %v540 = vunpack.c.l.b16 %v271
      %v541 = vunpack.c.l.b16 %v272
      %v542 = vunpack.c.l.b16 %v273
      %v543 = vunpack.c.l.b16 %v274
      %v544 = vunpack.c.l.b16 %v275
      %v545 = vunpack.c.l.b16 %v276
      %v546 = vunpack.c.l.b16 %v277
      %v547 = vunpack.c.l.b16 %v278
      %v548 = vunpack.c.l.b16 %v279
      %v549 = vunpack.c.l.b16 %v280
      %v550 = vunpack.c.l.b16 %v281
      %v551 = vunpack.c.l.b16 %v282
      %v552 = vunpack.c.l.b16 %v283
      %v553 = vunpack.c.l.b16 %v284
      %v554 = vunpack.c.l.b16 %v285
      %v555 = vunpack.c.l.b16 %v286
      %v556 = vunpack.c.l.b16 %v287
      %v557 = vunpack.c.l.b16 %v288
      %v558 = vunpack.c.l.b16 %v289
      %v559 = vunpack.c.l.b16 %v290
      %v560 = vunpack.c.l.b16 %v291
      %v561 = vunpack.c.l.b16 %v292
      %v562 = vunpack.c.l.b16 %v293
      %v563 = vunpack.c.l.b16 %v294
      %v564 = vunpack.c.l.b16 %v295
      %v565 = vunpack.c.l.b16 %v296
      %v566 = vunpack.c.l.b16 %v297
      %v567 = vunpack.c.l.b16 %v298
      %v568 = vunpack.c.l.b16 %v299
      %v569 = vunpack.c.l.b16 %v300
      %v570 = vunpack.c.l.b16 %v301
      %v571 = vunpack.c.l.b16 %v302
      %v572 = vunpack.c.l.b16 %v303
      %v573 = vunpack.c.l.b16 %v304
      %v574 = vunpack.c.l.b16 %v305
      %v575 = vunpack.c.l.b16 %v306
      %v576 = vunpack.c.l.b16 %v307
      %v577 = vunpack.c.l.b16 %v308
      %v578 = vunpack.c.l.b16 %v309
      %v579 = vunpack.c.l.b16 %v310
      %v580 = vunpack.c.l.b16 %v311
      %v581 = vunpack.c.l.b16 %v312
      %v582 = vunpack.c.l.b16 %v313
      %v583 = vunpack.c.l.b16 %v314
      %v584 = vunpack.c.l.b16 %v315
      %v585 = vunpack.c.l.b16 %v316
      %v586 = vunpack.c.l.b16 %v317
      %v587 = vunpack.c.l.b16 %v318
      %v588 = vunpack.c.l.b16 %v319
      %v589 = vunpack.c.l.b16 %v320
      %v590 = vunpack.c.l.b16 %v321
      %v591 = vunpack.c.l.b16 %v322
      %v592 = vunpack.c.l.b16 %v323
      %v593 = vunpack.c.l.b16 %v324
      %v594 = vunpack.c.l.b16 %v325
      %v595 = vunpack.c.l.b16 %v326
      %v596 = vunpack.c.l.b16 %v327
      %v597 = vunpack.c.l.b16 %v328
      %v598 = vunpack.c.l.b16 %v329
      %v599 = vunpack.c.l.b16 %v330
      %v600 = vunpack.c.l.b16 %v331
      %v601 = vunpack.c.l.b16 %v332
      %v602 = vunpack.c.l.b16 %v333
      %v603 = vunpack.c.l.b16 %v334
      %v604 = vunpack.c.l.b16 %v335
      %v605 = vunpack.c.l.b16 %v336
      %v606 = vunpack.c.l.b16 %v337
      %v607 = vunpack.c.l.b16 %v338
      %v608 = vunpack.c.l.b16 %v339
      %v609 = vunpack.c.l.b16 %v340
      %v610 = vunpack.c.l.b16 %v341
      %v611 = vunpack.c.l.b16 %v342
      %v612 = vunpack.c.l.b16 %v343
      %v613 = vunpack.c.l.b16 %v344
      %v614 = vunpack.c.l.b16 %v345
      %v615 = vunpack.c.l.b16 %v346
      %v616 = vunpack.c.l.b16 %v347
      %v617 = vunpack.c.l.b16 %v348
      %v618 = vunpack.c.l.b16 %v349
      %v619 = vunpack.c.l.b16 %v350
      %v620 = vunpack.c.l.b16 %v351
      %v621 = vunpack.c.l.b16 %v352
      %v622 = vunpack.c.l.b16 %v353
      %v623 = vpack.c.b16 %v496, %v495
      %v624 = vpack.c.b16 %v498, %v497
      %v625 = vpack.c.b16 %v500, %v499
      %v626 = vpack.c.b16 %v502, %v501
      %v627 = vpack.c.b16 %v504, %v503
      %v628 = vpack.c.b16 %v506, %v505
      %v629 = vpack.c.b16 %v508, %v507
      %v630 = vpack.c.b16 %v510, %v509
      %v631 = vpack.c.b16 %v512, %v511
      %v632 = vpack.c.b16 %v514, %v513
      %v633 = vpack.c.b16 %v516, %v515
      %v634 = vpack.c.b16 %v518, %v517
      %v635 = vpack.c.b16 %v520, %v519
      %v636 = vpack.c.b16 %v522, %v521
      %v637 = vpack.c.b16 %v524, %v523
      %v638 = vpack.c.b16 %v526, %v525
      %v639 = vpack.c.b16 %v528, %v527
      %v640 = vpack.c.b16 %v530, %v529
      %v641 = vpack.c.b16 %v532, %v531
      %v642 = vpack.c.b16 %v534, %v533
      %v643 = vpack.c.b16 %v536, %v535
      %v644 = vpack.c.b16 %v538, %v537
      %v645 = vpack.c.b16 %v540, %v539
      %v646 = vpack.c.b16 %v542, %v541
      %v647 = vpack.c.b16 %v544, %v543
      %v648 = vpack.c.b16 %v546, %v545
      %v649 = vpack.c.b16 %v548, %v547
      %v650 = vpack.c.b16 %v550, %v549
      %v651 = vpack.c.b16 %v552, %v551
      %v652 = vpack.c.b16 %v554, %v553
      %v653 = vpack.c.b16 %v556, %v555
      %v654 = vpack.c.b16 %v558, %v557
      %v655 = vpack.c.b16 %v560, %v559
      %v656 = vpack.c.b16 %v562, %v561
      %v657 = vpack.c.b16 %v564, %v563
      %v658 = vpack.c.b16 %v566, %v565
      %v659 = vpack.c.b16 %v568, %v567
      %v660 = vpack.c.b16 %v570, %v569
      %v661 = vpack.c.b16 %v572, %v571
      %v662 = vpack.c.b16 %v574, %v573
      %v663 = vpack.c.b16 %v576, %v575
      %v664 = vpack.c.b16 %v578, %v577
      %v665 = vpack.c.b16 %v580, %v579
      %v666 = vpack.c.b16 %v582, %v581
      %v667 = vpack.c.b16 %v584, %v583
      %v668 = vpack.c.b16 %v586, %v585
      %v669 = vpack.c.b16 %v588, %v587
      %v670 = vpack.c.b16 %v590, %v589
      %v671 = vpack.c.b16 %v592, %v591
      %v672 = vpack.c.b16 %v594, %v593
      %v673 = vpack.c.b16 %v596, %v595
      %v674 = vpack.c.b16 %v598, %v597
      %v675 = vpack.c.b16 %v600, %v599
      %v676 = vpack.c.b16 %v602, %v601
      %v677 = vpack.c.b16 %v604, %v603
      %v678 = vpack.c.b16 %v606, %v605
      %v679 = vpack.c.b16 %v608, %v607
      %v680 = vpack.c.b16 %v610, %v609
      %v681 = vpack.c.b16 %v612, %v611
      %v682 = vpack.c.b16 %v614, %v613
      %v683 = vpack.c.b16 %v616, %v615
      %v684 = vpack.c.b16 %v618, %v617
      %v685 = vpack.c.b16 %v620, %v619
      %v686 = vpack.c.b16 %v622, %v621
      %v693 = vunpack.c.l.b16 %v354
      %v694 = vunpack.c.l.b16 %v355
      %v695 = vunpack.c.l.b16 %v356
      %v696 = vunpack.c.l.b16 %v357
      %v697 = vunpack.c.l.b16 %v358
      %v698 = vunpack.c.l.b16 %v359
      %v699 = vpack.c.b16 %v694, %v693
      %v700 = vpack.c.b16 %v696, %v695
      %v701 = vpack.c.b16 %v698, %v697
      %vm705 = vcmask 392192
      %v707 = vsel %vm705, %v623, 0
      %v710 = vsel %vm705, %v624, 0
      %v713 = vsel %vm705, %v625, 0
      %v716 = vsel %vm705, %v626, 0
      %v719 = vsel %vm705, %v627, 0
      %v722 = vsel %vm705, %v628, 0
      %v725 = vsel %vm705, %v629, 0
      %v728 = vsel %vm705, %v630, 0
      %v731 = vsel %vm705, %v631, 0
      %v734 = vsel %vm705, %v632, 0
      %v737 = vsel %vm705, %v633, 0
      %v740 = vsel %vm705, %v634, 0
      %v743 = vsel %vm705, %v635, 0
      %v746 = vsel %vm705, %v636, 0
      %v749 = vsel %vm705, %v637, 0
      %v752 = vsel %vm705, %v638, 0
      %v755 = vsel %vm705, %v639, 0
      %v758 = vsel %vm705, %v640, 0
      %v761 = vsel %vm705, %v641, 0
      %v764 = vsel %vm705, %v642, 0
      %v767 = vsel %vm705, %v643, 0
      %v770 = vsel %vm705, %v644, 0
      %v773 = vsel %vm705, %v645, 0
      %v776 = vsel %vm705, %v646, 0
      %v779 = vsel %vm705, %v647, 0
      %v782 = vsel %vm705, %v648, 0
      %v785 = vsel %vm705, %v649, 0
      %v788 = vsel %vm705, %v650, 0
      %v791 = vsel %vm705, %v651, 0
      %v794 = vsel %vm705, %v652, 0
      %v797 = vsel %vm705, %v653, 0
      %v800 = vsel %vm705, %v654, 0
      %v803 = vsel %vm705, %v655, 0
      %v806 = vsel %vm705, %v656, 0
      %v809 = vsel %vm705, %v657, 0
      %v812 = vsel %vm705, %v658, 0
      %v815 = vsel %vm705, %v659, 0
      %v818 = vsel %vm705, %v660, 0
      %v821 = vsel %vm705, %v661, 0
      %v824 = vsel %vm705, %v662, 0
      %v827 = vsel %vm705, %v663, 0
      %v830 = vsel %vm705, %v664, 0
      %v833 = vsel %vm705, %v665, 0
      %v836 = vsel %vm705, %v666, 0
      %v839 = vsel %vm705, %v667, 0
      %v842 = vsel %vm705, %v668, 0
      %v845 = vsel %vm705, %v669, 0
      %v848 = vsel %vm705, %v670, 0
      %v851 = vsel %vm705, %v671, 0
      %v854 = vsel %vm705, %v672, 0
      %v857 = vsel %vm705, %v673, 0
      %v860 = vsel %vm705, %v674, 0
      %v863 = vsel %vm705, %v675, 0
      %v866 = vsel %vm705, %v676, 0
      %v869 = vsel %vm705, %v677, 0
      %v872 = vsel %vm705, %v678, 0
      %v875 = vsel %vm705, %v679, 0
      %v878 = vsel %vm705, %v680, 0
      %v881 = vsel %vm705, %v681, 0
      %v884 = vsel %vm705, %v682, 0
      %v887 = vsel %vm705, %v683, 0
      %v890 = vsel %vm705, %v684, 0
      %v893 = vsel %vm705, %v685, 0
      %v896 = vsel %vm705, %v686, 0
      %898 = vmatprep.subr.bf16.mxu0 0
      %899 = vmatpush1.bf16.msra.mxu0 0
      %900 = vmatprep.subr.bf16.mxu0 0
      %901 = vmatpush1.bf16.msra.mxu0 0
      %902 = vmatprep.subr.bf16.mxu0 0
      %903 = vmatpush1.bf16.msra.mxu0 0
      %904 = vmatprep.subr.bf16.mxu0 0
      %905 = vmatpush1.bf16.msra.mxu0 0
      %906 = vmatprep.subr.bf16.mxu0 0
      %907 = vmatpush1.bf16.msra.mxu0 0
      %908 = vmatprep.subr.bf16.mxu0 0
      %909 = vmatpush1.bf16.msra.mxu0 %v701
      %910 = vmatprep.subr.bf16.mxu0 0
      %911 = vmatpush1.bf16.msra.mxu0 %v700
      %912 = vmatprep.subr.bf16.mxu0 0
      %913 = vmatpush1.bf16.msra.mxu0 %v699
      %914 = vmatprep.subr.bf16.mxu0 0
      %915 = vmatpush2.bf16.msra.mxu0 0
      %916 = vmatprep.subr.bf16.mxu0 0
      %917 = vmatpush2.bf16.msra.mxu0 0
      %918 = vmatprep.subr.bf16.mxu0 0
      %919 = vmatpush2.bf16.msra.mxu0 0
      %920 = vmatprep.subr.bf16.mxu0 0
      %921 = vmatpush2.bf16.msra.mxu0 0
      %922 = vmatprep.subr.bf16.mxu0 0
      %923 = vmatpush2.bf16.msra.mxu0 0
      %924 = vmatprep.subr.bf16.mxu0 0
      %925 = vmatpush2.bf16.msra.mxu0 0
      %926 = vmatprep.subr.bf16.mxu0 0
      %927 = vmatpush2.bf16.msra.mxu0 0
      %928 = vmatprep.subr.bf16.mxu0 0
      %929 = vmatpush2.bf16.msra.mxu0 0
      %930 = vmatprep.mubr.bf16.mxu0 0
      %931 = vmatmul.mubr.bf16.gmra.mxu0 %v707
      %v932 = vpop.f32.mrf.mxu0
      %v933 = vadd.f32 %v365, %v932
      %v934 = vpop.f32.mrf.mxu0
      %v935 = vpop.f32.mrf.mxu0
      %v936 = vadd.f32 %v365, %v935
      %v937 = vpop.f32.mrf.mxu0
      %938 = vmatprep.mubr.bf16.mxu0 0
      %939 = vmatmul.mubr.bf16.gmra.mxu0 %v710
      %v940 = vpop.f32.mrf.mxu0
      %v941 = vadd.f32 %v365, %v940
      %v942 = vpop.f32.mrf.mxu0
      %v943 = vpop.f32.mrf.mxu0
      %v944 = vadd.f32 %v365, %v943
      %v945 = vpop.f32.mrf.mxu0
      %946 = vmatprep.mubr.bf16.mxu0 0
      %947 = vmatmul.mubr.bf16.gmra.mxu0 %v713
      %v948 = vpop.f32.mrf.mxu0
      %v949 = vadd.f32 %v365, %v948
      %v950 = vpop.f32.mrf.mxu0
      %v951 = vpop.f32.mrf.mxu0
      %v952 = vadd.f32 %v365, %v951
      %v953 = vpop.f32.mrf.mxu0
      %954 = vmatprep.mubr.bf16.mxu0 0
      %955 = vmatmul.mubr.bf16.gmra.mxu0 %v716
      %v956 = vpop.f32.mrf.mxu0
      %v957 = vadd.f32 %v365, %v956
      %v958 = vpop.f32.mrf.mxu0
      %v959 = vpop.f32.mrf.mxu0
      %v960 = vadd.f32 %v365, %v959
      %v961 = vpop.f32.mrf.mxu0
      %962 = vmatprep.mubr.bf16.mxu0 0
      %963 = vmatmul.mubr.bf16.gmra.mxu0 %v719
      %v964 = vpop.f32.mrf.mxu0
      %v965 = vadd.f32 %v365, %v964
      %v966 = vpop.f32.mrf.mxu0
      %v967 = vpop.f32.mrf.mxu0
      %v968 = vadd.f32 %v365, %v967
      %v969 = vpop.f32.mrf.mxu0
      %970 = vmatprep.mubr.bf16.mxu0 0
      %971 = vmatmul.mubr.bf16.gmra.mxu0 %v722
      %v972 = vpop.f32.mrf.mxu0
      %v973 = vadd.f32 %v365, %v972
      %v974 = vpop.f32.mrf.mxu0
      %v975 = vpop.f32.mrf.mxu0
      %v976 = vadd.f32 %v365, %v975
      %v977 = vpop.f32.mrf.mxu0
      %978 = vmatprep.mubr.bf16.mxu0 0
      %979 = vmatmul.mubr.bf16.gmra.mxu0 %v725
      %v980 = vpop.f32.mrf.mxu0
      %v981 = vadd.f32 %v365, %v980
      %v982 = vpop.f32.mrf.mxu0
      %v983 = vpop.f32.mrf.mxu0
      %v984 = vadd.f32 %v365, %v983
      %v985 = vpop.f32.mrf.mxu0
      %986 = vmatprep.mubr.bf16.mxu0 0
      %987 = vmatmul.mubr.bf16.gmra.mxu0 %v728
      %v988 = vpop.f32.mrf.mxu0
      %v989 = vadd.f32 %v365, %v988
      %v990 = vpop.f32.mrf.mxu0
      %v991 = vpop.f32.mrf.mxu0
      %v992 = vadd.f32 %v365, %v991
      %v993 = vpop.f32.mrf.mxu0
      %994 = vmatprep.mubr.bf16.mxu0 0
      %995 = vmatmul.mubr.bf16.gmra.mxu0 %v731
      %v996 = vpop.f32.mrf.mxu0
      %v997 = vadd.f32 %v365, %v996
      %v998 = vpop.f32.mrf.mxu0
      %v999 = vpop.f32.mrf.mxu0
      %v1000 = vadd.f32 %v365, %v999
      %v1001 = vpop.f32.mrf.mxu0
      %1002 = vmatprep.mubr.bf16.mxu0 0
      %1003 = vmatmul.mubr.bf16.gmra.mxu0 %v734
      %v1004 = vpop.f32.mrf.mxu0
      %v1005 = vadd.f32 %v365, %v1004
      %v1006 = vpop.f32.mrf.mxu0
      %v1007 = vpop.f32.mrf.mxu0
      %v1008 = vadd.f32 %v365, %v1007
      %v1009 = vpop.f32.mrf.mxu0
      %1010 = vmatprep.mubr.bf16.mxu0 0
      %1011 = vmatmul.mubr.bf16.gmra.mxu0 %v737
      %v1012 = vpop.f32.mrf.mxu0
      %v1013 = vadd.f32 %v365, %v1012
      %v1014 = vpop.f32.mrf.mxu0
      %v1015 = vpop.f32.mrf.mxu0
      %v1016 = vadd.f32 %v365, %v1015
      %v1017 = vpop.f32.mrf.mxu0
      %1018 = vmatprep.mubr.bf16.mxu0 0
      %1019 = vmatmul.mubr.bf16.gmra.mxu0 %v740
      %v1020 = vpop.f32.mrf.mxu0
      %v1021 = vadd.f32 %v365, %v1020
      %v1022 = vpop.f32.mrf.mxu0
      %v1023 = vpop.f32.mrf.mxu0
      %v1024 = vadd.f32 %v365, %v1023
      %v1025 = vpop.f32.mrf.mxu0
      %1026 = vmatprep.mubr.bf16.mxu0 0
      %1027 = vmatmul.mubr.bf16.gmra.mxu0 %v743
      %v1028 = vpop.f32.mrf.mxu0
      %v1029 = vadd.f32 %v365, %v1028
      %v1030 = vpop.f32.mrf.mxu0
      %v1031 = vpop.f32.mrf.mxu0
      %v1032 = vadd.f32 %v365, %v1031
      %v1033 = vpop.f32.mrf.mxu0
      %1034 = vmatprep.mubr.bf16.mxu0 0
      %1035 = vmatmul.mubr.bf16.gmra.mxu0 %v746
      %v1036 = vpop.f32.mrf.mxu0
      %v1037 = vadd.f32 %v365, %v1036
      %v1038 = vpop.f32.mrf.mxu0
      %v1039 = vpop.f32.mrf.mxu0
      %v1040 = vadd.f32 %v365, %v1039
      %v1041 = vpop.f32.mrf.mxu0
      %1042 = vmatprep.mubr.bf16.mxu0 0
      %1043 = vmatmul.mubr.bf16.gmra.mxu0 %v749
      %v1044 = vpop.f32.mrf.mxu0
      %v1045 = vadd.f32 %v365, %v1044
      %v1046 = vpop.f32.mrf.mxu0
      %v1047 = vpop.f32.mrf.mxu0
      %v1048 = vadd.f32 %v365, %v1047
      %v1049 = vpop.f32.mrf.mxu0
      %1050 = vmatprep.mubr.bf16.mxu0 0
      %1051 = vmatmul.mubr.bf16.gmra.mxu0 %v752
      %v1052 = vpop.f32.mrf.mxu0
      %v1053 = vadd.f32 %v365, %v1052
      %v1054 = vpop.f32.mrf.mxu0
      %v1055 = vpop.f32.mrf.mxu0
      %v1056 = vadd.f32 %v365, %v1055
      %v1057 = vpop.f32.mrf.mxu0
      %1058 = vmatprep.mubr.bf16.mxu0 0
      %1059 = vmatmul.mubr.bf16.gmra.mxu0 %v755
      %v1060 = vpop.f32.mrf.mxu0
      %v1061 = vadd.f32 %v365, %v1060
      %v1062 = vpop.f32.mrf.mxu0
      %v1063 = vpop.f32.mrf.mxu0
      %v1064 = vadd.f32 %v365, %v1063
      %v1065 = vpop.f32.mrf.mxu0
      %1066 = vmatprep.mubr.bf16.mxu0 0
      %1067 = vmatmul.mubr.bf16.gmra.mxu0 %v758
      %v1068 = vpop.f32.mrf.mxu0
      %v1069 = vadd.f32 %v365, %v1068
      %v1070 = vpop.f32.mrf.mxu0
      %v1071 = vpop.f32.mrf.mxu0
      %v1072 = vadd.f32 %v365, %v1071
      %v1073 = vpop.f32.mrf.mxu0
      %1074 = vmatprep.mubr.bf16.mxu0 0
      %1075 = vmatmul.mubr.bf16.gmra.mxu0 %v761
      %v1076 = vpop.f32.mrf.mxu0
      %v1077 = vadd.f32 %v365, %v1076
      %v1078 = vpop.f32.mrf.mxu0
      %v1079 = vpop.f32.mrf.mxu0
      %v1080 = vadd.f32 %v365, %v1079
      %v1081 = vpop.f32.mrf.mxu0
      %1082 = vmatprep.mubr.bf16.mxu0 0
      %1083 = vmatmul.mubr.bf16.gmra.mxu0 %v764
      %v1084 = vpop.f32.mrf.mxu0
      %v1085 = vadd.f32 %v365, %v1084
      %v1086 = vpop.f32.mrf.mxu0
      %v1087 = vpop.f32.mrf.mxu0
      %v1088 = vadd.f32 %v365, %v1087
      %v1089 = vpop.f32.mrf.mxu0
      %1090 = vmatprep.mubr.bf16.mxu0 0
      %1091 = vmatmul.mubr.bf16.gmra.mxu0 %v767
      %v1092 = vpop.f32.mrf.mxu0
      %v1093 = vadd.f32 %v365, %v1092
      %v1094 = vpop.f32.mrf.mxu0
      %v1095 = vpop.f32.mrf.mxu0
      %v1096 = vadd.f32 %v365, %v1095
      %v1097 = vpop.f32.mrf.mxu0
      %1098 = vmatprep.mubr.bf16.mxu0 0
      %1099 = vmatmul.mubr.bf16.gmra.mxu0 %v770
      %v1100 = vpop.f32.mrf.mxu0
      %v1101 = vadd.f32 %v365, %v1100
      %v1102 = vpop.f32.mrf.mxu0
      %v1103 = vpop.f32.mrf.mxu0
      %v1104 = vadd.f32 %v365, %v1103
      %v1105 = vpop.f32.mrf.mxu0
      %1106 = vmatprep.mubr.bf16.mxu0 0
      %1107 = vmatmul.mubr.bf16.gmra.mxu0 %v773
      %v1108 = vpop.f32.mrf.mxu0
      %v1109 = vadd.f32 %v365, %v1108
      %v1110 = vpop.f32.mrf.mxu0
      %v1111 = vpop.f32.mrf.mxu0
      %v1112 = vadd.f32 %v365, %v1111
      %v1113 = vpop.f32.mrf.mxu0
      %1114 = vmatprep.mubr.bf16.mxu0 0
      %1115 = vmatmul.mubr.bf16.gmra.mxu0 %v776
      %v1116 = vpop.f32.mrf.mxu0
      %v1117 = vadd.f32 %v365, %v1116
      %v1118 = vpop.f32.mrf.mxu0
      %v1119 = vpop.f32.mrf.mxu0
      %v1120 = vadd.f32 %v365, %v1119
      %v1121 = vpop.f32.mrf.mxu0
      %1122 = vmatprep.mubr.bf16.mxu0 0
      %1123 = vmatmul.mubr.bf16.gmra.mxu0 %v779
      %v1124 = vpop.f32.mrf.mxu0
      %v1125 = vadd.f32 %v365, %v1124
      %v1126 = vpop.f32.mrf.mxu0
      %v1127 = vpop.f32.mrf.mxu0
      %v1128 = vadd.f32 %v365, %v1127
      %v1129 = vpop.f32.mrf.mxu0
      %1130 = vmatprep.mubr.bf16.mxu0 0
      %1131 = vmatmul.mubr.bf16.gmra.mxu0 %v782
      %v1132 = vpop.f32.mrf.mxu0
      %v1133 = vadd.f32 %v365, %v1132
      %v1134 = vpop.f32.mrf.mxu0
      %v1135 = vpop.f32.mrf.mxu0
      %v1136 = vadd.f32 %v365, %v1135
      %v1137 = vpop.f32.mrf.mxu0
      %1138 = vmatprep.mubr.bf16.mxu0 0
      %1139 = vmatmul.mubr.bf16.gmra.mxu0 %v785
      %v1140 = vpop.f32.mrf.mxu0
      %v1141 = vadd.f32 %v365, %v1140
      %v1142 = vpop.f32.mrf.mxu0
      %v1143 = vpop.f32.mrf.mxu0
      %v1144 = vadd.f32 %v365, %v1143
      %v1145 = vpop.f32.mrf.mxu0
      %1146 = vmatprep.mubr.bf16.mxu0 0
      %1147 = vmatmul.mubr.bf16.gmra.mxu0 %v788
      %v1148 = vpop.f32.mrf.mxu0
      %v1149 = vadd.f32 %v365, %v1148
      %v1150 = vpop.f32.mrf.mxu0
      %v1151 = vpop.f32.mrf.mxu0
      %v1152 = vadd.f32 %v365, %v1151
      %v1153 = vpop.f32.mrf.mxu0
      %1154 = vmatprep.mubr.bf16.mxu0 0
      %1155 = vmatmul.mubr.bf16.gmra.mxu0 %v791
      %v1156 = vpop.f32.mrf.mxu0
      %v1157 = vadd.f32 %v365, %v1156
      %v1158 = vpop.f32.mrf.mxu0
      %v1159 = vpop.f32.mrf.mxu0
      %v1160 = vadd.f32 %v365, %v1159
      %v1161 = vpop.f32.mrf.mxu0
      %1162 = vmatprep.mubr.bf16.mxu0 0
      %1163 = vmatmul.mubr.bf16.gmra.mxu0 %v794
      %v1164 = vpop.f32.mrf.mxu0
      %v1165 = vadd.f32 %v365, %v1164
      %v1166 = vpop.f32.mrf.mxu0
      %v1167 = vpop.f32.mrf.mxu0
      %v1168 = vadd.f32 %v365, %v1167
      %v1169 = vpop.f32.mrf.mxu0
      %1170 = vmatprep.mubr.bf16.mxu0 0
      %1171 = vmatmul.mubr.bf16.gmra.mxu0 %v797
      %v1172 = vpop.f32.mrf.mxu0
      %v1173 = vadd.f32 %v365, %v1172
      %v1174 = vpop.f32.mrf.mxu0
      %v1175 = vpop.f32.mrf.mxu0
      %v1176 = vadd.f32 %v365, %v1175
      %v1177 = vpop.f32.mrf.mxu0
      %1178 = vmatprep.mubr.bf16.mxu0 0
      %1179 = vmatmul.mubr.bf16.gmra.mxu0 %v800
      %v1180 = vpop.f32.mrf.mxu0
      %v1181 = vadd.f32 %v365, %v1180
      %v1182 = vpop.f32.mrf.mxu0
      %v1183 = vpop.f32.mrf.mxu0
      %v1184 = vadd.f32 %v365, %v1183
      %v1185 = vpop.f32.mrf.mxu0
      %1186 = vmatprep.mubr.bf16.mxu0 0
      %1187 = vmatmul.mubr.bf16.gmra.mxu0 %v803
      %v1188 = vpop.f32.mrf.mxu0
      %v1189 = vadd.f32 %v365, %v1188
      %v1190 = vpop.f32.mrf.mxu0
      %v1191 = vpop.f32.mrf.mxu0
      %v1192 = vadd.f32 %v365, %v1191
      %v1193 = vpop.f32.mrf.mxu0
      %1194 = vmatprep.mubr.bf16.mxu0 0
      %1195 = vmatmul.mubr.bf16.gmra.mxu0 %v806
      %v1196 = vpop.f32.mrf.mxu0
      %v1197 = vadd.f32 %v365, %v1196
      %v1198 = vpop.f32.mrf.mxu0
      %v1199 = vpop.f32.mrf.mxu0
      %v1200 = vadd.f32 %v365, %v1199
      %v1201 = vpop.f32.mrf.mxu0
      %1202 = vmatprep.mubr.bf16.mxu0 0
      %1203 = vmatmul.mubr.bf16.gmra.mxu0 %v809
      %v1204 = vpop.f32.mrf.mxu0
      %v1205 = vadd.f32 %v365, %v1204
      %v1206 = vpop.f32.mrf.mxu0
      %v1207 = vpop.f32.mrf.mxu0
      %v1208 = vadd.f32 %v365, %v1207
      %v1209 = vpop.f32.mrf.mxu0
      %1210 = vmatprep.mubr.bf16.mxu0 0
      %1211 = vmatmul.mubr.bf16.gmra.mxu0 %v812
      %v1212 = vpop.f32.mrf.mxu0
      %v1213 = vadd.f32 %v365, %v1212
      %v1214 = vpop.f32.mrf.mxu0
      %v1215 = vpop.f32.mrf.mxu0
      %v1216 = vadd.f32 %v365, %v1215
      %v1217 = vpop.f32.mrf.mxu0
      %1218 = vmatprep.mubr.bf16.mxu0 0
      %1219 = vmatmul.mubr.bf16.gmra.mxu0 %v815
      %v1220 = vpop.f32.mrf.mxu0
      %v1221 = vadd.f32 %v365, %v1220
      %v1222 = vpop.f32.mrf.mxu0
      %v1223 = vpop.f32.mrf.mxu0
      %v1224 = vadd.f32 %v365, %v1223
      %v1225 = vpop.f32.mrf.mxu0
      %1226 = vmatprep.mubr.bf16.mxu0 0
      %1227 = vmatmul.mubr.bf16.gmra.mxu0 %v818
      %v1228 = vpop.f32.mrf.mxu0
      %v1229 = vadd.f32 %v365, %v1228
      %v1230 = vpop.f32.mrf.mxu0
      %v1231 = vpop.f32.mrf.mxu0
      %v1232 = vadd.f32 %v365, %v1231
      %v1233 = vpop.f32.mrf.mxu0
      %1234 = vmatprep.mubr.bf16.mxu0 0
      %1235 = vmatmul.mubr.bf16.gmra.mxu0 %v821
      %v1236 = vpop.f32.mrf.mxu0
      %v1237 = vadd.f32 %v365, %v1236
      %v1238 = vpop.f32.mrf.mxu0
      %v1239 = vpop.f32.mrf.mxu0
      %v1240 = vadd.f32 %v365, %v1239
      %v1241 = vpop.f32.mrf.mxu0
      %1242 = vmatprep.mubr.bf16.mxu0 0
      %1243 = vmatmul.mubr.bf16.gmra.mxu0 %v824
      %v1244 = vpop.f32.mrf.mxu0
      %v1245 = vadd.f32 %v365, %v1244
      %v1246 = vpop.f32.mrf.mxu0
      %v1247 = vpop.f32.mrf.mxu0
      %v1248 = vadd.f32 %v365, %v1247
      %v1249 = vpop.f32.mrf.mxu0
      %1250 = vmatprep.mubr.bf16.mxu0 0
      %1251 = vmatmul.mubr.bf16.gmra.mxu0 %v827
      %v1252 = vpop.f32.mrf.mxu0
      %v1253 = vadd.f32 %v365, %v1252
      %v1254 = vpop.f32.mrf.mxu0
      %v1255 = vpop.f32.mrf.mxu0
      %v1256 = vadd.f32 %v365, %v1255
      %v1257 = vpop.f32.mrf.mxu0
      %1258 = vmatprep.mubr.bf16.mxu0 0
      %1259 = vmatmul.mubr.bf16.gmra.mxu0 %v830
      %v1260 = vpop.f32.mrf.mxu0
      %v1261 = vadd.f32 %v365, %v1260
      %v1262 = vpop.f32.mrf.mxu0
      %v1263 = vpop.f32.mrf.mxu0
      %v1264 = vadd.f32 %v365, %v1263
      %v1265 = vpop.f32.mrf.mxu0
      %1266 = vmatprep.mubr.bf16.mxu0 0
      %1267 = vmatmul.mubr.bf16.gmra.mxu0 %v833
      %v1268 = vpop.f32.mrf.mxu0
      %v1269 = vadd.f32 %v365, %v1268
      %v1270 = vpop.f32.mrf.mxu0
      %v1271 = vpop.f32.mrf.mxu0
      %v1272 = vadd.f32 %v365, %v1271
      %v1273 = vpop.f32.mrf.mxu0
      %1274 = vmatprep.mubr.bf16.mxu0 0
      %1275 = vmatmul.mubr.bf16.gmra.mxu0 %v836
      %v1276 = vpop.f32.mrf.mxu0
      %v1277 = vadd.f32 %v365, %v1276
      %v1278 = vpop.f32.mrf.mxu0
      %v1279 = vpop.f32.mrf.mxu0
      %v1280 = vadd.f32 %v365, %v1279
      %v1281 = vpop.f32.mrf.mxu0
      %1282 = vmatprep.mubr.bf16.mxu0 0
      %1283 = vmatmul.mubr.bf16.gmra.mxu0 %v839
      %v1284 = vpop.f32.mrf.mxu0
      %v1285 = vadd.f32 %v365, %v1284
      %v1286 = vpop.f32.mrf.mxu0
      %v1287 = vpop.f32.mrf.mxu0
      %v1288 = vadd.f32 %v365, %v1287
      %v1289 = vpop.f32.mrf.mxu0
      %1290 = vmatprep.mubr.bf16.mxu0 0
      %1291 = vmatmul.mubr.bf16.gmra.mxu0 %v842
      %v1292 = vpop.f32.mrf.mxu0
      %v1293 = vadd.f32 %v365, %v1292
      %v1294 = vpop.f32.mrf.mxu0
      %v1295 = vpop.f32.mrf.mxu0
      %v1296 = vadd.f32 %v365, %v1295
      %v1297 = vpop.f32.mrf.mxu0
      %1298 = vmatprep.mubr.bf16.mxu0 0
      %1299 = vmatmul.mubr.bf16.gmra.mxu0 %v845
      %v1300 = vpop.f32.mrf.mxu0
      %v1301 = vadd.f32 %v365, %v1300
      %v1302 = vpop.f32.mrf.mxu0
      %v1303 = vpop.f32.mrf.mxu0
      %v1304 = vadd.f32 %v365, %v1303
      %v1305 = vpop.f32.mrf.mxu0
      %1306 = vmatprep.mubr.bf16.mxu0 0
      %1307 = vmatmul.mubr.bf16.gmra.mxu0 %v848
      %v1308 = vpop.f32.mrf.mxu0
      %v1309 = vadd.f32 %v365, %v1308
      %v1310 = vpop.f32.mrf.mxu0
      %v1311 = vpop.f32.mrf.mxu0
      %v1312 = vadd.f32 %v365, %v1311
      %v1313 = vpop.f32.mrf.mxu0
      %1314 = vmatprep.mubr.bf16.mxu0 0
      %1315 = vmatmul.mubr.bf16.gmra.mxu0 %v851
      %v1316 = vpop.f32.mrf.mxu0
      %v1317 = vadd.f32 %v365, %v1316
      %v1318 = vpop.f32.mrf.mxu0
      %v1319 = vpop.f32.mrf.mxu0
      %v1320 = vadd.f32 %v365, %v1319
      %v1321 = vpop.f32.mrf.mxu0
      %1322 = vmatprep.mubr.bf16.mxu0 0
      %1323 = vmatmul.mubr.bf16.gmra.mxu0 %v854
      %v1324 = vpop.f32.mrf.mxu0
      %v1325 = vadd.f32 %v365, %v1324
      %v1326 = vpop.f32.mrf.mxu0
      %v1327 = vpop.f32.mrf.mxu0
      %v1328 = vadd.f32 %v365, %v1327
      %v1329 = vpop.f32.mrf.mxu0
      %1330 = vmatprep.mubr.bf16.mxu0 0
      %1331 = vmatmul.mubr.bf16.gmra.mxu0 %v857
      %v1332 = vpop.f32.mrf.mxu0
      %v1333 = vadd.f32 %v365, %v1332
      %v1334 = vpop.f32.mrf.mxu0
      %v1335 = vpop.f32.mrf.mxu0
      %v1336 = vadd.f32 %v365, %v1335
      %v1337 = vpop.f32.mrf.mxu0
      %1338 = vmatprep.mubr.bf16.mxu0 0
      %1339 = vmatmul.mubr.bf16.gmra.mxu0 %v860
      %v1340 = vpop.f32.mrf.mxu0
      %v1341 = vadd.f32 %v365, %v1340
      %v1342 = vpop.f32.mrf.mxu0
      %v1343 = vpop.f32.mrf.mxu0
      %v1344 = vadd.f32 %v365, %v1343
      %v1345 = vpop.f32.mrf.mxu0
      %1346 = vmatprep.mubr.bf16.mxu0 0
      %1347 = vmatmul.mubr.bf16.gmra.mxu0 %v863
      %v1348 = vpop.f32.mrf.mxu0
      %v1349 = vadd.f32 %v365, %v1348
      %v1350 = vpop.f32.mrf.mxu0
      %v1351 = vpop.f32.mrf.mxu0
      %v1352 = vadd.f32 %v365, %v1351
      %v1353 = vpop.f32.mrf.mxu0
      %1354 = vmatprep.mubr.bf16.mxu0 0
      %1355 = vmatmul.mubr.bf16.gmra.mxu0 %v866
      %v1356 = vpop.f32.mrf.mxu0
      %v1357 = vadd.f32 %v365, %v1356
      %v1358 = vpop.f32.mrf.mxu0
      %v1359 = vpop.f32.mrf.mxu0
      %v1360 = vadd.f32 %v365, %v1359
      %v1361 = vpop.f32.mrf.mxu0
      %1362 = vmatprep.mubr.bf16.mxu0 0
      %1363 = vmatmul.mubr.bf16.gmra.mxu0 %v869
      %v1364 = vpop.f32.mrf.mxu0
      %v1365 = vadd.f32 %v365, %v1364
      %v1366 = vpop.f32.mrf.mxu0
      %v1367 = vpop.f32.mrf.mxu0
      %v1368 = vadd.f32 %v365, %v1367
      %v1369 = vpop.f32.mrf.mxu0
      %1370 = vmatprep.mubr.bf16.mxu0 0
      %1371 = vmatmul.mubr.bf16.gmra.mxu0 %v872
      %v1372 = vpop.f32.mrf.mxu0
      %v1373 = vadd.f32 %v365, %v1372
      %v1374 = vpop.f32.mrf.mxu0
      %v1375 = vpop.f32.mrf.mxu0
      %v1376 = vadd.f32 %v365, %v1375
      %v1377 = vpop.f32.mrf.mxu0
      %1378 = vmatprep.mubr.bf16.mxu0 0
      %1379 = vmatmul.mubr.bf16.gmra.mxu0 %v875
      %v1380 = vpop.f32.mrf.mxu0
      %v1381 = vadd.f32 %v365, %v1380
      %v1382 = vpop.f32.mrf.mxu0
      %v1383 = vpop.f32.mrf.mxu0
      %v1384 = vadd.f32 %v365, %v1383
      %v1385 = vpop.f32.mrf.mxu0
      %1386 = vmatprep.mubr.bf16.mxu0 0
      %1387 = vmatmul.mubr.bf16.gmra.mxu0 %v878
      %v1388 = vpop.f32.mrf.mxu0
      %v1389 = vadd.f32 %v365, %v1388
      %v1390 = vpop.f32.mrf.mxu0
      %v1391 = vpop.f32.mrf.mxu0
      %v1392 = vadd.f32 %v365, %v1391
      %v1393 = vpop.f32.mrf.mxu0
      %1394 = vmatprep.mubr.bf16.mxu0 0
      %1395 = vmatmul.mubr.bf16.gmra.mxu0 %v881
      %v1396 = vpop.f32.mrf.mxu0
      %v1397 = vadd.f32 %v365, %v1396
      %v1398 = vpop.f32.mrf.mxu0
      %v1399 = vpop.f32.mrf.mxu0
      %v1400 = vadd.f32 %v365, %v1399
      %v1401 = vpop.f32.mrf.mxu0
      %1402 = vmatprep.mubr.bf16.mxu0 0
      %1403 = vmatmul.mubr.bf16.gmra.mxu0 %v884
      %v1404 = vpop.f32.mrf.mxu0
      %v1405 = vadd.f32 %v365, %v1404
      %v1406 = vpop.f32.mrf.mxu0
      %v1407 = vpop.f32.mrf.mxu0
      %v1408 = vadd.f32 %v365, %v1407
      %v1409 = vpop.f32.mrf.mxu0
      %1410 = vmatprep.mubr.bf16.mxu0 0
      %1411 = vmatmul.mubr.bf16.gmra.mxu0 %v887
      %v1412 = vpop.f32.mrf.mxu0
      %v1413 = vadd.f32 %v365, %v1412
      %v1414 = vpop.f32.mrf.mxu0
      %v1415 = vpop.f32.mrf.mxu0
      %v1416 = vadd.f32 %v365, %v1415
      %v1417 = vpop.f32.mrf.mxu0
      %1418 = vmatprep.mubr.bf16.mxu0 0
      %1419 = vmatmul.mubr.bf16.gmra.mxu0 %v890
      %v1420 = vpop.f32.mrf.mxu0
      %v1421 = vadd.f32 %v365, %v1420
      %v1422 = vpop.f32.mrf.mxu0
      %v1423 = vpop.f32.mrf.mxu0
      %v1424 = vadd.f32 %v365, %v1423
      %v1425 = vpop.f32.mrf.mxu0
      %1426 = vmatprep.mubr.bf16.mxu0 0
      %1427 = vmatmul.mubr.bf16.gmra.mxu0 %v893
      %v1428 = vpop.f32.mrf.mxu0
      %v1429 = vadd.f32 %v365, %v1428
      %v1430 = vpop.f32.mrf.mxu0
      %v1431 = vpop.f32.mrf.mxu0
      %v1432 = vadd.f32 %v365, %v1431
      %v1433 = vpop.f32.mrf.mxu0
      %1434 = vmatprep.mubr.bf16.mxu0 0
      %1435 = vmatmul.mubr.bf16.gmra.mxu0 %v896
      %v1436 = vpop.f32.mrf.mxu0
      %v1437 = vadd.f32 %v365, %v1436
      %v1438 = vpop.f32.mrf.mxu0
      %v1439 = vpop.f32.mrf.mxu0
      %v1440 = vadd.f32 %v365, %v1439
      %v1441 = vpop.f32.mrf.mxu0
      %1442 = vdwg.mxu0
      %v1443 = vmax.f32 %v933, 0.0
      %v1444 = vmax.f32 %v936, 0.0
      %v1445 = vmax.f32 %v941, 0.0
      %v1446 = vmax.f32 %v944, 0.0
      %v1447 = vmax.f32 %v949, 0.0
      %v1448 = vmax.f32 %v952, 0.0
      %v1449 = vmax.f32 %v957, 0.0
      %v1450 = vmax.f32 %v960, 0.0
      %v1451 = vmax.f32 %v965, 0.0
      %v1452 = vmax.f32 %v968, 0.0
      %v1453 = vmax.f32 %v973, 0.0
      %v1454 = vmax.f32 %v976, 0.0
      %v1455 = vmax.f32 %v981, 0.0
      %v1456 = vmax.f32 %v984, 0.0
      %v1457 = vmax.f32 %v989, 0.0
      %v1458 = vmax.f32 %v992, 0.0
      %v1459 = vmax.f32 %v997, 0.0
      %v1460 = vmax.f32 %v1000, 0.0
      %v1461 = vmax.f32 %v1005, 0.0
      %v1462 = vmax.f32 %v1008, 0.0
      %v1463 = vmax.f32 %v1013, 0.0
      %v1464 = vmax.f32 %v1016, 0.0
      %v1465 = vmax.f32 %v1021, 0.0
      %v1466 = vmax.f32 %v1024, 0.0
      %v1467 = vmax.f32 %v1029, 0.0
      %v1468 = vmax.f32 %v1032, 0.0
      %v1469 = vmax.f32 %v1037, 0.0
      %v1470 = vmax.f32 %v1040, 0.0
      %v1471 = vmax.f32 %v1045, 0.0
      %v1472 = vmax.f32 %v1048, 0.0
      %v1473 = vmax.f32 %v1053, 0.0
      %v1474 = vmax.f32 %v1056, 0.0
      %v1475 = vmax.f32 %v1061, 0.0
      %v1476 = vmax.f32 %v1064, 0.0
      %v1477 = vmax.f32 %v1069, 0.0
      %v1478 = vmax.f32 %v1072, 0.0
      %v1479 = vmax.f32 %v1077, 0.0
      %v1480 = vmax.f32 %v1080, 0.0
      %v1481 = vmax.f32 %v1085, 0.0
      %v1482 = vmax.f32 %v1088, 0.0
      %v1483 = vmax.f32 %v1093, 0.0
      %v1484 = vmax.f32 %v1096, 0.0
      %v1485 = vmax.f32 %v1101, 0.0
      %v1486 = vmax.f32 %v1104, 0.0
      %v1487 = vmax.f32 %v1109, 0.0
      %v1488 = vmax.f32 %v1112, 0.0
      %v1489 = vmax.f32 %v1117, 0.0
      %v1490 = vmax.f32 %v1120, 0.0
      %v1491 = vmax.f32 %v1125, 0.0
      %v1492 = vmax.f32 %v1128, 0.0
      %v1493 = vmax.f32 %v1133, 0.0
      %v1494 = vmax.f32 %v1136, 0.0
      %v1495 = vmax.f32 %v1141, 0.0
      %v1496 = vmax.f32 %v1144, 0.0
      %v1497 = vmax.f32 %v1149, 0.0
      %v1498 = vmax.f32 %v1152, 0.0
      %v1499 = vmax.f32 %v1157, 0.0
      %v1500 = vmax.f32 %v1160, 0.0
      %v1501 = vmax.f32 %v1165, 0.0
      %v1502 = vmax.f32 %v1168, 0.0
      %v1503 = vmax.f32 %v1173, 0.0
      %v1504 = vmax.f32 %v1176, 0.0
      %v1505 = vmax.f32 %v1181, 0.0
      %v1506 = vmax.f32 %v1184, 0.0
      %v1507 = vmax.f32 %v1189, 0.0
      %v1508 = vmax.f32 %v1192, 0.0
      %v1509 = vmax.f32 %v1197, 0.0
      %v1510 = vmax.f32 %v1200, 0.0
      %v1511 = vmax.f32 %v1205, 0.0
      %v1512 = vmax.f32 %v1208, 0.0
      %v1513 = vmax.f32 %v1213, 0.0
      %v1514 = vmax.f32 %v1216, 0.0
      %v1515 = vmax.f32 %v1221, 0.0
      %v1516 = vmax.f32 %v1224, 0.0
      %v1517 = vmax.f32 %v1229, 0.0
      %v1518 = vmax.f32 %v1232, 0.0
      %v1519 = vmax.f32 %v1237, 0.0
      %v1520 = vmax.f32 %v1240, 0.0
      %v1521 = vmax.f32 %v1245, 0.0
      %v1522 = vmax.f32 %v1248, 0.0
      %v1523 = vmax.f32 %v1253, 0.0
      %v1524 = vmax.f32 %v1256, 0.0
      %v1525 = vmax.f32 %v1261, 0.0
      %v1526 = vmax.f32 %v1264, 0.0
      %v1527 = vmax.f32 %v1269, 0.0
      %v1528 = vmax.f32 %v1272, 0.0
      %v1529 = vmax.f32 %v1277, 0.0
      %v1530 = vmax.f32 %v1280, 0.0
      %v1531 = vmax.f32 %v1285, 0.0
      %v1532 = vmax.f32 %v1288, 0.0
      %v1533 = vmax.f32 %v1293, 0.0
      %v1534 = vmax.f32 %v1296, 0.0
      %v1535 = vmax.f32 %v1301, 0.0
      %v1536 = vmax.f32 %v1304, 0.0
      %v1537 = vmax.f32 %v1309, 0.0
      %v1538 = vmax.f32 %v1312, 0.0
      %v1539 = vmax.f32 %v1317, 0.0
      %v1540 = vmax.f32 %v1320, 0.0
      %v1541 = vmax.f32 %v1325, 0.0
      %v1542 = vmax.f32 %v1328, 0.0
      %v1543 = vmax.f32 %v1333, 0.0
      %v1544 = vmax.f32 %v1336, 0.0
      %v1545 = vmax.f32 %v1341, 0.0
      %v1546 = vmax.f32 %v1344, 0.0
      %v1547 = vmax.f32 %v1349, 0.0
      %v1548 = vmax.f32 %v1352, 0.0
      %v1549 = vmax.f32 %v1357, 0.0
      %v1550 = vmax.f32 %v1360, 0.0
      %v1551 = vmax.f32 %v1365, 0.0
      %v1552 = vmax.f32 %v1368, 0.0
      %v1553 = vmax.f32 %v1373, 0.0
      %v1554 = vmax.f32 %v1376, 0.0
      %v1555 = vmax.f32 %v1381, 0.0
      %v1556 = vmax.f32 %v1384, 0.0
      %v1557 = vmax.f32 %v1389, 0.0
      %v1558 = vmax.f32 %v1392, 0.0
      %v1559 = vmax.f32 %v1397, 0.0
      %v1560 = vmax.f32 %v1400, 0.0
      %v1561 = vmax.f32 %v1405, 0.0
      %v1562 = vmax.f32 %v1408, 0.0
      %v1563 = vmax.f32 %v1413, 0.0
      %v1564 = vmax.f32 %v1416, 0.0
      %v1565 = vmax.f32 %v1421, 0.0
      %v1566 = vmax.f32 %v1424, 0.0
      %v1567 = vmax.f32 %v1429, 0.0
      %v1568 = vmax.f32 %v1432, 0.0
      %v1569 = vmax.f32 %v1437, 0.0
      %v1570 = vmax.f32 %v1440, 0.0
      %v1571 = vpack.c.bf16 %v1444, %v1443
      %v1572 = vpack.c.bf16 %v1446, %v1445
      %v1573 = vpack.c.bf16 %v1448, %v1447
      %v1574 = vpack.c.bf16 %v1450, %v1449
      %v1575 = vpack.c.bf16 %v1452, %v1451
      %v1576 = vpack.c.bf16 %v1454, %v1453
      %v1577 = vpack.c.bf16 %v1456, %v1455
      %v1578 = vpack.c.bf16 %v1458, %v1457
      %v1579 = vpack.c.bf16 %v1460, %v1459
      %v1580 = vpack.c.bf16 %v1462, %v1461
      %v1581 = vpack.c.bf16 %v1464, %v1463
      %v1582 = vpack.c.bf16 %v1466, %v1465
      %v1583 = vpack.c.bf16 %v1468, %v1467
      %v1584 = vpack.c.bf16 %v1470, %v1469
      %v1585 = vpack.c.bf16 %v1472, %v1471
      %v1586 = vpack.c.bf16 %v1474, %v1473
      %v1587 = vpack.c.bf16 %v1476, %v1475
      %v1588 = vpack.c.bf16 %v1478, %v1477
      %v1589 = vpack.c.bf16 %v1480, %v1479
      %v1590 = vpack.c.bf16 %v1482, %v1481
      %v1591 = vpack.c.bf16 %v1484, %v1483
      %v1592 = vpack.c.bf16 %v1486, %v1485
      %v1593 = vpack.c.bf16 %v1488, %v1487
      %v1594 = vpack.c.bf16 %v1490, %v1489
      %v1595 = vpack.c.bf16 %v1492, %v1491
      %v1596 = vpack.c.bf16 %v1494, %v1493
      %v1597 = vpack.c.bf16 %v1496, %v1495
      %v1598 = vpack.c.bf16 %v1498, %v1497
      %v1599 = vpack.c.bf16 %v1500, %v1499
      %v1600 = vpack.c.bf16 %v1502, %v1501
      %v1601 = vpack.c.bf16 %v1504, %v1503
      %v1602 = vpack.c.bf16 %v1506, %v1505
      %v1603 = vpack.c.bf16 %v1508, %v1507
      %v1604 = vpack.c.bf16 %v1510, %v1509
      %v1605 = vpack.c.bf16 %v1512, %v1511
      %v1606 = vpack.c.bf16 %v1514, %v1513
      %v1607 = vpack.c.bf16 %v1516, %v1515
      %v1608 = vpack.c.bf16 %v1518, %v1517
      %v1609 = vpack.c.bf16 %v1520, %v1519
      %v1610 = vpack.c.bf16 %v1522, %v1521
      %v1611 = vpack.c.bf16 %v1524, %v1523
      %v1612 = vpack.c.bf16 %v1526, %v1525
      %v1613 = vpack.c.bf16 %v1528, %v1527
      %v1614 = vpack.c.bf16 %v1530, %v1529
      %v1615 = vpack.c.bf16 %v1532, %v1531
      %v1616 = vpack.c.bf16 %v1534, %v1533
      %v1617 = vpack.c.bf16 %v1536, %v1535
      %v1618 = vpack.c.bf16 %v1538, %v1537
      %v1619 = vpack.c.bf16 %v1540, %v1539
      %v1620 = vpack.c.bf16 %v1542, %v1541
      %v1621 = vpack.c.bf16 %v1544, %v1543
      %v1622 = vpack.c.bf16 %v1546, %v1545
      %v1623 = vpack.c.bf16 %v1548, %v1547
      %v1624 = vpack.c.bf16 %v1550, %v1549
      %v1625 = vpack.c.bf16 %v1552, %v1551
      %v1626 = vpack.c.bf16 %v1554, %v1553
      %v1627 = vpack.c.bf16 %v1556, %v1555
      %v1628 = vpack.c.bf16 %v1558, %v1557
      %v1629 = vpack.c.bf16 %v1560, %v1559
      %v1630 = vpack.c.bf16 %v1562, %v1561
      %v1631 = vpack.c.bf16 %v1564, %v1563
      %v1632 = vpack.c.bf16 %v1566, %v1565
      %v1633 = vpack.c.bf16 %v1568, %v1567
      %v1634 = vpack.c.bf16 %v1570, %v1569
      %v1699 = vunpack.c.l.b16 %v1571
      %v1700 = vunpack.c.h.b16 %v1571
      %v1701 = vunpack.c.l.b16 %v1572
      %v1702 = vunpack.c.h.b16 %v1572
      %v1703 = vunpack.c.l.b16 %v1573
      %v1704 = vunpack.c.h.b16 %v1573
      %v1705 = vunpack.c.l.b16 %v1574
      %v1706 = vunpack.c.h.b16 %v1574
      %v1707 = vunpack.c.l.b16 %v1575
      %v1708 = vunpack.c.h.b16 %v1575
      %v1709 = vunpack.c.l.b16 %v1576
      %v1710 = vunpack.c.h.b16 %v1576
      %v1711 = vunpack.c.l.b16 %v1577
      %v1712 = vunpack.c.h.b16 %v1577
      %v1713 = vunpack.c.l.b16 %v1578
      %v1714 = vunpack.c.h.b16 %v1578
      %v1715 = vunpack.c.l.b16 %v1579
      %v1716 = vunpack.c.h.b16 %v1579
      %v1717 = vunpack.c.l.b16 %v1580
      %v1718 = vunpack.c.h.b16 %v1580
      %v1719 = vunpack.c.l.b16 %v1581
      %v1720 = vunpack.c.h.b16 %v1581
      %v1721 = vunpack.c.l.b16 %v1582
      %v1722 = vunpack.c.h.b16 %v1582
      %v1723 = vunpack.c.l.b16 %v1583
      %v1724 = vunpack.c.h.b16 %v1583
      %v1725 = vunpack.c.l.b16 %v1584
      %v1726 = vunpack.c.h.b16 %v1584
      %v1727 = vunpack.c.l.b16 %v1585
      %v1728 = vunpack.c.h.b16 %v1585
      %v1729 = vunpack.c.l.b16 %v1586
      %v1730 = vunpack.c.h.b16 %v1586
      %v1731 = vunpack.c.l.b16 %v1587
      %v1732 = vunpack.c.h.b16 %v1587
      %v1733 = vunpack.c.l.b16 %v1588
      %v1734 = vunpack.c.h.b16 %v1588
      %v1735 = vunpack.c.l.b16 %v1589
      %v1736 = vunpack.c.h.b16 %v1589
      %v1737 = vunpack.c.l.b16 %v1590
      %v1738 = vunpack.c.h.b16 %v1590
      %v1739 = vunpack.c.l.b16 %v1591
      %v1740 = vunpack.c.h.b16 %v1591
      %v1741 = vunpack.c.l.b16 %v1592
      %v1742 = vunpack.c.h.b16 %v1592
      %v1743 = vunpack.c.l.b16 %v1593
      %v1744 = vunpack.c.h.b16 %v1593
      %v1745 = vunpack.c.l.b16 %v1594
      %v1746 = vunpack.c.h.b16 %v1594
      %v1747 = vunpack.c.l.b16 %v1595
      %v1748 = vunpack.c.h.b16 %v1595
      %v1749 = vunpack.c.l.b16 %v1596
      %v1750 = vunpack.c.h.b16 %v1596
      %v1751 = vunpack.c.l.b16 %v1597
      %v1752 = vunpack.c.h.b16 %v1597
      %v1753 = vunpack.c.l.b16 %v1598
      %v1754 = vunpack.c.h.b16 %v1598
      %v1755 = vunpack.c.l.b16 %v1599
      %v1756 = vunpack.c.h.b16 %v1599
      %v1757 = vunpack.c.l.b16 %v1600
      %v1758 = vunpack.c.h.b16 %v1600
      %v1759 = vunpack.c.l.b16 %v1601
      %v1760 = vunpack.c.h.b16 %v1601
      %v1761 = vunpack.c.l.b16 %v1602
      %v1762 = vunpack.c.h.b16 %v1602
      %v1763 = vunpack.c.l.b16 %v1603
      %v1764 = vunpack.c.h.b16 %v1603
      %v1765 = vunpack.c.l.b16 %v1604
      %v1766 = vunpack.c.h.b16 %v1604
      %v1767 = vunpack.c.l.b16 %v1605
      %v1768 = vunpack.c.h.b16 %v1605
      %v1769 = vunpack.c.l.b16 %v1606
      %v1770 = vunpack.c.h.b16 %v1606
      %v1771 = vunpack.c.l.b16 %v1607
      %v1772 = vunpack.c.h.b16 %v1607
      %v1773 = vunpack.c.l.b16 %v1608
      %v1774 = vunpack.c.h.b16 %v1608
      %v1775 = vunpack.c.l.b16 %v1609
      %v1776 = vunpack.c.h.b16 %v1609
      %v1777 = vunpack.c.l.b16 %v1610
      %v1778 = vunpack.c.h.b16 %v1610
      %v1779 = vunpack.c.l.b16 %v1611
      %v1780 = vunpack.c.h.b16 %v1611
      %v1781 = vunpack.c.l.b16 %v1612
      %v1782 = vunpack.c.h.b16 %v1612
      %v1783 = vunpack.c.l.b16 %v1613
      %v1784 = vunpack.c.h.b16 %v1613
      %v1785 = vunpack.c.l.b16 %v1614
      %v1786 = vunpack.c.h.b16 %v1614
      %v1787 = vunpack.c.l.b16 %v1615
      %v1788 = vunpack.c.h.b16 %v1615
      %v1789 = vunpack.c.l.b16 %v1616
      %v1790 = vunpack.c.h.b16 %v1616
      %v1791 = vunpack.c.l.b16 %v1617
      %v1792 = vunpack.c.h.b16 %v1617
      %v1793 = vunpack.c.l.b16 %v1618
      %v1794 = vunpack.c.h.b16 %v1618
      %v1795 = vunpack.c.l.b16 %v1619
      %v1796 = vunpack.c.h.b16 %v1619
      %v1797 = vunpack.c.l.b16 %v1620
      %v1798 = vunpack.c.h.b16 %v1620
      %v1799 = vunpack.c.l.b16 %v1621
      %v1800 = vunpack.c.h.b16 %v1621
      %v1801 = vunpack.c.l.b16 %v1622
      %v1802 = vunpack.c.h.b16 %v1622
      %v1803 = vunpack.c.l.b16 %v1623
      %v1804 = vunpack.c.h.b16 %v1623
      %v1805 = vunpack.c.l.b16 %v1624
      %v1806 = vunpack.c.h.b16 %v1624
      %v1807 = vunpack.c.l.b16 %v1625
      %v1808 = vunpack.c.h.b16 %v1625
      %v1809 = vunpack.c.l.b16 %v1626
      %v1810 = vunpack.c.h.b16 %v1626
      %v1811 = vunpack.c.l.b16 %v1627
      %v1812 = vunpack.c.h.b16 %v1627
      %v1813 = vunpack.c.l.b16 %v1628
      %v1814 = vunpack.c.h.b16 %v1628
      %v1815 = vunpack.c.l.b16 %v1629
      %v1816 = vunpack.c.h.b16 %v1629
      %v1817 = vunpack.c.l.b16 %v1630
      %v1818 = vunpack.c.h.b16 %v1630
      %v1819 = vunpack.c.l.b16 %v1631
      %v1820 = vunpack.c.h.b16 %v1631
      %v1821 = vunpack.c.l.b16 %v1632
      %v1822 = vunpack.c.h.b16 %v1632
      %v1823 = vunpack.c.l.b16 %v1633
      %v1824 = vunpack.c.h.b16 %v1633
      %v1825 = vunpack.c.l.b16 %v1634
      %v1826 = vunpack.c.h.b16 %v1634
      %v1827 = vpack.c.b16 %v1699, %v1699
      %v1828 = vpack.c.b16 %v1700, %v1700
      %v1829 = vpack.c.b16 %v1701, %v1701
      %v1830 = vpack.c.b16 %v1702, %v1702
      %v1831 = vpack.c.b16 %v1703, %v1703
      %v1832 = vpack.c.b16 %v1704, %v1704
      %v1833 = vpack.c.b16 %v1705, %v1705
      %v1834 = vpack.c.b16 %v1706, %v1706
      %v1835 = vpack.c.b16 %v1707, %v1707
      %v1836 = vpack.c.b16 %v1708, %v1708
      %v1837 = vpack.c.b16 %v1709, %v1709
      %v1838 = vpack.c.b16 %v1710, %v1710
      %v1839 = vpack.c.b16 %v1711, %v1711
      %v1840 = vpack.c.b16 %v1712, %v1712
      %v1841 = vpack.c.b16 %v1713, %v1713
      %v1842 = vpack.c.b16 %v1714, %v1714
      %v1843 = vpack.c.b16 %v1715, %v1715
      %v1844 = vpack.c.b16 %v1716, %v1716
      %v1845 = vpack.c.b16 %v1717, %v1717
      %v1846 = vpack.c.b16 %v1718, %v1718
      %v1847 = vpack.c.b16 %v1719, %v1719
      %v1848 = vpack.c.b16 %v1720, %v1720
      %v1849 = vpack.c.b16 %v1721, %v1721
      %v1850 = vpack.c.b16 %v1722, %v1722
      %v1851 = vpack.c.b16 %v1723, %v1723
      %v1852 = vpack.c.b16 %v1724, %v1724
      %v1853 = vpack.c.b16 %v1725, %v1725
      %v1854 = vpack.c.b16 %v1726, %v1726
      %v1855 = vpack.c.b16 %v1727, %v1727
      %v1856 = vpack.c.b16 %v1728, %v1728
      %v1857 = vpack.c.b16 %v1729, %v1729
      %v1858 = vpack.c.b16 %v1730, %v1730
      %v1859 = vpack.c.b16 %v1731, %v1731
      %v1860 = vpack.c.b16 %v1732, %v1732
      %v1861 = vpack.c.b16 %v1733, %v1733
      %v1862 = vpack.c.b16 %v1734, %v1734
      %v1863 = vpack.c.b16 %v1735, %v1735
      %v1864 = vpack.c.b16 %v1736, %v1736
      %v1865 = vpack.c.b16 %v1737, %v1737
      %v1866 = vpack.c.b16 %v1738, %v1738
      %v1867 = vpack.c.b16 %v1739, %v1739
      %v1868 = vpack.c.b16 %v1740, %v1740
      %v1869 = vpack.c.b16 %v1741, %v1741
      %v1870 = vpack.c.b16 %v1742, %v1742
      %v1871 = vpack.c.b16 %v1743, %v1743
      %v1872 = vpack.c.b16 %v1744, %v1744
      %v1873 = vpack.c.b16 %v1745, %v1745
      %v1874 = vpack.c.b16 %v1746, %v1746
      %v1875 = vpack.c.b16 %v1747, %v1747
      %v1876 = vpack.c.b16 %v1748, %v1748
      %v1877 = vpack.c.b16 %v1749, %v1749
      %v1878 = vpack.c.b16 %v1750, %v1750
      %v1879 = vpack.c.b16 %v1751, %v1751
      %v1880 = vpack.c.b16 %v1752, %v1752
      %v1881 = vpack.c.b16 %v1753, %v1753
      %v1882 = vpack.c.b16 %v1754, %v1754
      %v1883 = vpack.c.b16 %v1755, %v1755
      %v1884 = vpack.c.b16 %v1756, %v1756
      %v1885 = vpack.c.b16 %v1757, %v1757
      %v1886 = vpack.c.b16 %v1758, %v1758
      %v1887 = vpack.c.b16 %v1759, %v1759
      %v1888 = vpack.c.b16 %v1760, %v1760
      %v1889 = vpack.c.b16 %v1761, %v1761
      %v1890 = vpack.c.b16 %v1762, %v1762
      %v1891 = vpack.c.b16 %v1763, %v1763
      %v1892 = vpack.c.b16 %v1764, %v1764
      %v1893 = vpack.c.b16 %v1765, %v1765
      %v1894 = vpack.c.b16 %v1766, %v1766
      %v1895 = vpack.c.b16 %v1767, %v1767
      %v1896 = vpack.c.b16 %v1768, %v1768
      %v1897 = vpack.c.b16 %v1769, %v1769
      %v1898 = vpack.c.b16 %v1770, %v1770
      %v1899 = vpack.c.b16 %v1771, %v1771
      %v1900 = vpack.c.b16 %v1772, %v1772
      %v1901 = vpack.c.b16 %v1773, %v1773
      %v1902 = vpack.c.b16 %v1774, %v1774
      %v1903 = vpack.c.b16 %v1775, %v1775
      %v1904 = vpack.c.b16 %v1776, %v1776
      %v1905 = vpack.c.b16 %v1777, %v1777
      %v1906 = vpack.c.b16 %v1778, %v1778
      %v1907 = vpack.c.b16 %v1779, %v1779
      %v1908 = vpack.c.b16 %v1780, %v1780
      %v1909 = vpack.c.b16 %v1781, %v1781
      %v1910 = vpack.c.b16 %v1782, %v1782
      %v1911 = vpack.c.b16 %v1783, %v1783
      %v1912 = vpack.c.b16 %v1784, %v1784
      %v1913 = vpack.c.b16 %v1785, %v1785
      %v1914 = vpack.c.b16 %v1786, %v1786
      %v1915 = vpack.c.b16 %v1787, %v1787
      %v1916 = vpack.c.b16 %v1788, %v1788
      %v1917 = vpack.c.b16 %v1789, %v1789
      %v1918 = vpack.c.b16 %v1790, %v1790
      %v1919 = vpack.c.b16 %v1791, %v1791
      %v1920 = vpack.c.b16 %v1792, %v1792
      %v1921 = vpack.c.b16 %v1793, %v1793
      %v1922 = vpack.c.b16 %v1794, %v1794
      %v1923 = vpack.c.b16 %v1795, %v1795
      %v1924 = vpack.c.b16 %v1796, %v1796
      %v1925 = vpack.c.b16 %v1797, %v1797
      %v1926 = vpack.c.b16 %v1798, %v1798
      %v1927 = vpack.c.b16 %v1799, %v1799
      %v1928 = vpack.c.b16 %v1800, %v1800
      %v1929 = vpack.c.b16 %v1801, %v1801
      %v1930 = vpack.c.b16 %v1802, %v1802
      %v1931 = vpack.c.b16 %v1803, %v1803
      %v1932 = vpack.c.b16 %v1804, %v1804
      %v1933 = vpack.c.b16 %v1805, %v1805
      %v1934 = vpack.c.b16 %v1806, %v1806
      %v1935 = vpack.c.b16 %v1807, %v1807
      %v1936 = vpack.c.b16 %v1808, %v1808
      %v1937 = vpack.c.b16 %v1809, %v1809
      %v1938 = vpack.c.b16 %v1810, %v1810
      %v1939 = vpack.c.b16 %v1811, %v1811
      %v1940 = vpack.c.b16 %v1812, %v1812
      %v1941 = vpack.c.b16 %v1813, %v1813
      %v1942 = vpack.c.b16 %v1814, %v1814
      %v1943 = vpack.c.b16 %v1815, %v1815
      %v1944 = vpack.c.b16 %v1816, %v1816
      %v1945 = vpack.c.b16 %v1817, %v1817
      %v1946 = vpack.c.b16 %v1818, %v1818
      %v1947 = vpack.c.b16 %v1819, %v1819
      %v1948 = vpack.c.b16 %v1820, %v1820
      %v1949 = vpack.c.b16 %v1821, %v1821
      %v1950 = vpack.c.b16 %v1822, %v1822
      %v1951 = vpack.c.b16 %v1823, %v1823
      %v1952 = vpack.c.b16 %v1824, %v1824
      %v1953 = vpack.c.b16 %v1825, %v1825
      %v1954 = vpack.c.b16 %v1826, %v1826
      %vm2083 = vcmask 519168
      %2084 = vst.msk [vmem:[%s223] sm:$0xf] %vm2083, %v1827
      %2085 = vst.msk [vmem:[%s223 + $0x4] sm:$0xf] %vm2083, %v1828
      %2086 = vst.msk [vmem:[%s223 + $0x8] sm:$0xf] %vm2083, %v1829
      %2087 = vst.msk [vmem:[%s223 + $0xc] sm:$0xf] %vm2083, %v1830
      %2088 = vst.msk [vmem:[%s223 + $0x10] sm:$0xf] %vm2083, %v1831
      %2089 = vst.msk [vmem:[%s223 + $0x14] sm:$0xf] %vm2083, %v1832
      %2090 = vst.msk [vmem:[%s223 + $0x18] sm:$0xf] %vm2083, %v1833
      %2091 = vst.msk [vmem:[%s223 + $0x1c] sm:$0xf] %vm2083, %v1834
      %2092 = vst.msk [vmem:[%s223 + $0x20] sm:$0xf] %vm2083, %v1835
      %2093 = vst.msk [vmem:[%s223 + $0x24] sm:$0xf] %vm2083, %v1836
      %2094 = vst.msk [vmem:[%s223 + $0x28] sm:$0xf] %vm2083, %v1837
      %2095 = vst.msk [vmem:[%s223 + $0x2c] sm:$0xf] %vm2083, %v1838
      %2096 = vst.msk [vmem:[%s223 + $0x30] sm:$0xf] %vm2083, %v1839
      %2097 = vst.msk [vmem:[%s223 + $0x34] sm:$0xf] %vm2083, %v1840
      %2098 = vst.msk [vmem:[%s223 + $0x38] sm:$0xf] %vm2083, %v1841
      %2099 = vst.msk [vmem:[%s223 + $0x3c] sm:$0xf] %vm2083, %v1842
      %2100 = vst.msk [vmem:[%s223 + $0x40] sm:$0xf] %vm2083, %v1843
      %2101 = vst.msk [vmem:[%s223 + $0x44] sm:$0xf] %vm2083, %v1844
      %2102 = vst.msk [vmem:[%s223 + $0x48] sm:$0xf] %vm2083, %v1845
      %2103 = vst.msk [vmem:[%s223 + $0x4c] sm:$0xf] %vm2083, %v1846
      %2104 = vst.msk [vmem:[%s223 + $0x50] sm:$0xf] %vm2083, %v1847
      %2105 = vst.msk [vmem:[%s223 + $0x54] sm:$0xf] %vm2083, %v1848
      %2106 = vst.msk [vmem:[%s223 + $0x58] sm:$0xf] %vm2083, %v1849
      %2107 = vst.msk [vmem:[%s223 + $0x5c] sm:$0xf] %vm2083, %v1850
      %2108 = vst.msk [vmem:[%s223 + $0x60] sm:$0xf] %vm2083, %v1851
      %2109 = vst.msk [vmem:[%s223 + $0x64] sm:$0xf] %vm2083, %v1852
      %2110 = vst.msk [vmem:[%s223 + $0x68] sm:$0xf] %vm2083, %v1853
      %2111 = vst.msk [vmem:[%s223 + $0x6c] sm:$0xf] %vm2083, %v1854
      %2112 = vst.msk [vmem:[%s223 + $0x70] sm:$0xf] %vm2083, %v1855
      %2113 = vst.msk [vmem:[%s223 + $0x74] sm:$0xf] %vm2083, %v1856
      %2114 = vst.msk [vmem:[%s223 + $0x78] sm:$0xf] %vm2083, %v1857
      %2115 = vst.msk [vmem:[%s223 + $0x7c] sm:$0xf] %vm2083, %v1858
      %2116 = vst.msk [vmem:[%s223 + $0x80] sm:$0xf] %vm2083, %v1859
      %2117 = vst.msk [vmem:[%s223 + $0x84] sm:$0xf] %vm2083, %v1860
      %2118 = vst.msk [vmem:[%s223 + $0x88] sm:$0xf] %vm2083, %v1861
      %2119 = vst.msk [vmem:[%s223 + $0x8c] sm:$0xf] %vm2083, %v1862
      %2120 = vst.msk [vmem:[%s223 + $0x90] sm:$0xf] %vm2083, %v1863
      %2121 = vst.msk [vmem:[%s223 + $0x94] sm:$0xf] %vm2083, %v1864
      %2122 = vst.msk [vmem:[%s223 + $0x98] sm:$0xf] %vm2083, %v1865
      %2123 = vst.msk [vmem:[%s223 + $0x9c] sm:$0xf] %vm2083, %v1866
      %2124 = vst.msk [vmem:[%s223 + $0xa0] sm:$0xf] %vm2083, %v1867
      %2125 = vst.msk [vmem:[%s223 + $0xa4] sm:$0xf] %vm2083, %v1868
      %2126 = vst.msk [vmem:[%s223 + $0xa8] sm:$0xf] %vm2083, %v1869
      %2127 = vst.msk [vmem:[%s223 + $0xac] sm:$0xf] %vm2083, %v1870
      %2128 = vst.msk [vmem:[%s223 + $0xb0] sm:$0xf] %vm2083, %v1871
      %2129 = vst.msk [vmem:[%s223 + $0xb4] sm:$0xf] %vm2083, %v1872
      %2130 = vst.msk [vmem:[%s223 + $0xb8] sm:$0xf] %vm2083, %v1873
      %2131 = vst.msk [vmem:[%s223 + $0xbc] sm:$0xf] %vm2083, %v1874
      %2132 = vst.msk [vmem:[%s223 + $0xc0] sm:$0xf] %vm2083, %v1875
      %2133 = vst.msk [vmem:[%s223 + $0xc4] sm:$0xf] %vm2083, %v1876
      %2134 = vst.msk [vmem:[%s223 + $0xc8] sm:$0xf] %vm2083, %v1877
      %2135 = vst.msk [vmem:[%s223 + $0xcc] sm:$0xf] %vm2083, %v1878
      %2136 = vst.msk [vmem:[%s223 + $0xd0] sm:$0xf] %vm2083, %v1879
      %2137 = vst.msk [vmem:[%s223 + $0xd4] sm:$0xf] %vm2083, %v1880
      %2138 = vst.msk [vmem:[%s223 + $0xd8] sm:$0xf] %vm2083, %v1881
      %2139 = vst.msk [vmem:[%s223 + $0xdc] sm:$0xf] %vm2083, %v1882
      %2140 = vst.msk [vmem:[%s223 + $0xe0] sm:$0xf] %vm2083, %v1883
      %2141 = vst.msk [vmem:[%s223 + $0xe4] sm:$0xf] %vm2083, %v1884
      %2142 = vst.msk [vmem:[%s223 + $0xe8] sm:$0xf] %vm2083, %v1885
      %2143 = vst.msk [vmem:[%s223 + $0xec] sm:$0xf] %vm2083, %v1886
      %2144 = vst.msk [vmem:[%s223 + $0xf0] sm:$0xf] %vm2083, %v1887
      %2145 = vst.msk [vmem:[%s223 + $0xf4] sm:$0xf] %vm2083, %v1888
      %2146 = vst.msk [vmem:[%s223 + $0xf8] sm:$0xf] %vm2083, %v1889
      %2147 = vst.msk [vmem:[%s223 + $0xfc] sm:$0xf] %vm2083, %v1890
      %2148 = vst.msk [vmem:[%s223 + $0x100] sm:$0xf] %vm2083, %v1891
      %2149 = vst.msk [vmem:[%s223 + $0x104] sm:$0xf] %vm2083, %v1892
      %2150 = vst.msk [vmem:[%s223 + $0x108] sm:$0xf] %vm2083, %v1893
      %2151 = vst.msk [vmem:[%s223 + $0x10c] sm:$0xf] %vm2083, %v1894
      %2152 = vst.msk [vmem:[%s223 + $0x110] sm:$0xf] %vm2083, %v1895
      %2153 = vst.msk [vmem:[%s223 + $0x114] sm:$0xf] %vm2083, %v1896
      %2154 = vst.msk [vmem:[%s223 + $0x118] sm:$0xf] %vm2083, %v1897
      %2155 = vst.msk [vmem:[%s223 + $0x11c] sm:$0xf] %vm2083, %v1898
      %2156 = vst.msk [vmem:[%s223 + $0x120] sm:$0xf] %vm2083, %v1899
      %2157 = vst.msk [vmem:[%s223 + $0x124] sm:$0xf] %vm2083, %v1900
      %2158 = vst.msk [vmem:[%s223 + $0x128] sm:$0xf] %vm2083, %v1901
      %2159 = vst.msk [vmem:[%s223 + $0x12c] sm:$0xf] %vm2083, %v1902
      %2160 = vst.msk [vmem:[%s223 + $0x130] sm:$0xf] %vm2083, %v1903
      %2161 = vst.msk [vmem:[%s223 + $0x134] sm:$0xf] %vm2083, %v1904
      %2162 = vst.msk [vmem:[%s223 + $0x138] sm:$0xf] %vm2083, %v1905
      %2163 = vst.msk [vmem:[%s223 + $0x13c] sm:$0xf] %vm2083, %v1906
      %2164 = vst.msk [vmem:[%s223 + $0x140] sm:$0xf] %vm2083, %v1907
      %2165 = vst.msk [vmem:[%s223 + $0x144] sm:$0xf] %vm2083, %v1908
      %2166 = vst.msk [vmem:[%s223 + $0x148] sm:$0xf] %vm2083, %v1909
      %2167 = vst.msk [vmem:[%s223 + $0x14c] sm:$0xf] %vm2083, %v1910
      %2168 = vst.msk [vmem:[%s223 + $0x150] sm:$0xf] %vm2083, %v1911
      %2169 = vst.msk [vmem:[%s223 + $0x154] sm:$0xf] %vm2083, %v1912
      %2170 = vst.msk [vmem:[%s223 + $0x158] sm:$0xf] %vm2083, %v1913
      %2171 = vst.msk [vmem:[%s223 + $0x15c] sm:$0xf] %vm2083, %v1914
      %2172 = vst.msk [vmem:[%s223 + $0x160] sm:$0xf] %vm2083, %v1915
      %2173 = vst.msk [vmem:[%s223 + $0x164] sm:$0xf] %vm2083, %v1916
      %2174 = vst.msk [vmem:[%s223 + $0x168] sm:$0xf] %vm2083, %v1917
      %2175 = vst.msk [vmem:[%s223 + $0x16c] sm:$0xf] %vm2083, %v1918
      %2176 = vst.msk [vmem:[%s223 + $0x170] sm:$0xf] %vm2083, %v1919
      %2177 = vst.msk [vmem:[%s223 + $0x174] sm:$0xf] %vm2083, %v1920
      %2178 = vst.msk [vmem:[%s223 + $0x178] sm:$0xf] %vm2083, %v1921
      %2179 = vst.msk [vmem:[%s223 + $0x17c] sm:$0xf] %vm2083, %v1922
      %2180 = vst.msk [vmem:[%s223 + $0x180] sm:$0xf] %vm2083, %v1923
      %2181 = vst.msk [vmem:[%s223 + $0x184] sm:$0xf] %vm2083, %v1924
      %2182 = vst.msk [vmem:[%s223 + $0x188] sm:$0xf] %vm2083, %v1925
      %2183 = vst.msk [vmem:[%s223 + $0x18c] sm:$0xf] %vm2083, %v1926
      %2184 = vst.msk [vmem:[%s223 + $0x190] sm:$0xf] %vm2083, %v1927
      %2185 = vst.msk [vmem:[%s223 + $0x194] sm:$0xf] %vm2083, %v1928
      %2186 = vst.msk [vmem:[%s223 + $0x198] sm:$0xf] %vm2083, %v1929
      %2187 = vst.msk [vmem:[%s223 + $0x19c] sm:$0xf] %vm2083, %v1930
      %2188 = vst.msk [vmem:[%s223 + $0x1a0] sm:$0xf] %vm2083, %v1931
      %2189 = vst.msk [vmem:[%s223 + $0x1a4] sm:$0xf] %vm2083, %v1932
      %2190 = vst.msk [vmem:[%s223 + $0x1a8] sm:$0xf] %vm2083, %v1933
      %2191 = vst.msk [vmem:[%s223 + $0x1ac] sm:$0xf] %vm2083, %v1934
      %2192 = vst.msk [vmem:[%s223 + $0x1b0] sm:$0xf] %vm2083, %v1935
      %2193 = vst.msk [vmem:[%s223 + $0x1b4] sm:$0xf] %vm2083, %v1936
      %2194 = vst.msk [vmem:[%s223 + $0x1b8] sm:$0xf] %vm2083, %v1937
      %2195 = vst.msk [vmem:[%s223 + $0x1bc] sm:$0xf] %vm2083, %v1938
      %2196 = vst.msk [vmem:[%s223 + $0x1c0] sm:$0xf] %vm2083, %v1939
      %2197 = vst.msk [vmem:[%s223 + $0x1c4] sm:$0xf] %vm2083, %v1940
      %2198 = vst.msk [vmem:[%s223 + $0x1c8] sm:$0xf] %vm2083, %v1941
      %2199 = vst.msk [vmem:[%s223 + $0x1cc] sm:$0xf] %vm2083, %v1942
      %2200 = vst.msk [vmem:[%s223 + $0x1d0] sm:$0xf] %vm2083, %v1943
      %2201 = vst.msk [vmem:[%s223 + $0x1d4] sm:$0xf] %vm2083, %v1944
      %2202 = vst.msk [vmem:[%s223 + $0x1d8] sm:$0xf] %vm2083, %v1945
      %2203 = vst.msk [vmem:[%s223 + $0x1dc] sm:$0xf] %vm2083, %v1946
      %2204 = vst.msk [vmem:[%s223 + $0x1e0] sm:$0xf] %vm2083, %v1947
      %2205 = vst.msk [vmem:[%s223 + $0x1e4] sm:$0xf] %vm2083, %v1948
      %2206 = vst.msk [vmem:[%s223 + $0x1e8] sm:$0xf] %vm2083, %v1949
      %2207 = vst.msk [vmem:[%s223 + $0x1ec] sm:$0xf] %vm2083, %v1950
      %2208 = vst.msk [vmem:[%s223 + $0x1f0] sm:$0xf] %vm2083, %v1951
      %2209 = vst.msk [vmem:[%s223 + $0x1f4] sm:$0xf] %vm2083, %v1952
      %2210 = vst.msk [vmem:[%s223 + $0x1f8] sm:$0xf] %vm2083, %v1953
      %2211 = vst.msk [vmem:[%s223 + $0x1fc] sm:$0xf] %vm2083, %v1954
      %s2212 = smul.u32 128, %s18
      %p2213 = scmp.lt.s32.totalorder %s2212, 255
      %s2214 = scalar_select %p2213, %s2212, 255
      %p2215 = scmp.lt.s32.totalorder %s19, 0
      %s2216 = scalar_select %p2215, %s19, 0
      %s2217 = sadd.s32 %s2216, %s2214
      %s2218 = smul.addr %s2217, 4
      %s2219 = scalar_lea.vmem %s3, %s2218
      // Predicated region
      $region33: #{decoder_forward.3} parent=31 // pred_check
        %p2220 = pneg %p124
      $region34: #{decoder_forward.3} parent=31 // pred_check_branch
        %2222 = sbr.rel (%p2220) target = $region36
      $region35: #{decoder_forward.3} parent=31 // pred_region
        %s2223 = smul.u32 128, %s18
      $region36: #{decoder_forward.3} parent=31 // pred_fallthru
        _
    $region32: #{decoder_forward.3} parent=5 // pred_fallthru
      _
    %p2224 = scmp.le.s32.totalorder 2, %s9
    // Predicated region
    $region37: #{decoder_forward.3} parent=5 // pred_check
      %p2225 = pneg %p2224
    $region38: #{decoder_forward.3} parent=5 // pred_check_branch
      %2227 = sbr.rel (%p2225) target = $region40
    $region39: #{decoder_forward.3} parent=5 // pred_region
      %s2228 = ssub.s32 %s9, 2
      // Predicated region
      $region41: #{decoder_forward.3} parent=39 // pred_check
        %p2229 = pneg %p130
      $region42: #{decoder_forward.3} parent=39 // pred_check_branch
        %2231 = sbr.rel (%p2229) target = $region44
      $region43: #{decoder_forward.3} parent=39 // pred_region
        %s2232 = smul.u32 128, %s20
        %p2233 = scmp.lt.s32.totalorder %s2232, 255
        %s2234 = scalar_select %p2233, %s2232, 255
        %p2235 = scmp.lt.s32.totalorder %s21, 0
        %s2236 = scalar_select %p2235, %s21, 0
        %s2237 = sadd.s32 %s2236, %s2234
        %s2238 = smul.addr %s2237, 4
        %s2239 = scalar_lea.vmem %s3, %s2238
      $region44: #{decoder_forward.3} parent=39 // pred_fallthru
        _
    $region40: #{decoder_forward.3} parent=5 // pred_fallthru
      _
  $region6: #{decoder_forward.3} parent=0 // loop_footer
    %s13 = sadd.s32 1, %s9
  $region7: #{decoder_forward.3} parent=0 // loop_footer_branch
    %8 = sbr.rel target = $region3
  $region8: #{decoder_forward.3} parent=0 // loop_exit
    _

// kernel: decoder_forward.4
$region0: #{decoder_forward.4}
  #allocation0 [shape = 'u32[]', space=smem, size = 0x4, offset = 0x4, fixed_abs, tag = 'smem constant byte address 0x4 - core index']
  #allocation1 [shape = 'u32[144,128]{1,0:T(1,128)}', space=vmem, size = 0x12000, scoped, tag = 'internal scratch']
  %s0 = inlined_call_operand.vmem [shape: bf16[512,1024], index: 0, kind: input, shape index: {}]
  %s1 = inlined_call_operand.vmem [shape: bf16[1024,128], index: 1, kind: input, shape index: {}]
  %s2 = inlined_call_operand.vmem [shape: f32[1,128], index: 2, kind: input, shape index: {}]
  %s3 = inlined_call_operand.vmem [shape: bf16[512,128], index: 3, kind: output, shape index: {}]
  %s4 = sld [smem:[#allocation0]]
  $region45: #{decoder_forward.4} parent=0
    _
  %s6 = ssub.s32 1, %s4
  %s7 = scalar_select 0, %s6, %s4
  loop: start=0, step=1, limit=4
  $region2: #{decoder_forward.4} parent=0 // loop_pre_header
    _
  $region3: #{decoder_forward.4} parent=0 // loop_header
    %s9 = sphi 0, %s13
    %p10 = scmp.ge.s32.totalorder %s9, 4
    %s16 = sphi 0, %s28
    %s17 = sphi 0, %s24
    %s18 = sphi 0, %s16
    %s19 = sphi 0, %s17
    %s20 = sphi 0, %s18
    %s21 = sphi 0, %s19
    %s31 = sphi 0, %s33
    %s34 = sphi 0, %s31
    %s35 = sphi 0, %s34
    %s51 = sphi 0, %s35
    %s57 = sphi 0, %s59
    %s60 = sphi 0, %s57
    %s61 = sphi 0, %s60
    %s77 = sphi 0, %s61
    %s83 = sphi 0, %s85
    %s86 = sphi 0, %s83
    %s87 = sphi 0, %s86
    %s103 = sphi 0, %s87
    %s111 = sphi 0, %s113
    %s114 = sphi 0, %s111
    %s115 = sphi 0, %s114
    %s131 = sphi 0, %s115
  $region4: #{decoder_forward.4} parent=0 // loop_header_branch
    %12 = sbr.rel (%p10) target = $region8
  $region5: #{decoder_forward.4} parent=0 // loop_body
    %s14 = ssub.s32 %s9, 1
    %s15 = ssub.s32 %s9, 2
    %s22 = sadd.s32 1, %s17
    %p23 = scmp.ge.s32.totalorder %s22, 1
    %s24 = scalar_select %p23, 0, %s22
    %s25 = sadd.s32 1, %s16
    %s26 = scalar_select %p23, %s25, %s16
    %p27 = scmp.ge.s32.totalorder %s26, 2
    %s28 = scalar_select %p27, 0, %s26
    %s29 = ssub.s32 %s16, %s28
    %p30 = scmp.eq.s32.totalorder %s29, 0
    %s32 = sadd.s32 %s31, 1
    %s33 = scalar_select %p30, %s31, %s32
    %p36 = pneg %p30
    %p37 = scmp.eq.s32.totalorder %s9, 1
    %p38 = por %p36, %p37
    %p39 = scmp.ne.s32.totalorder %s31, %s34
    %p40 = scmp.eq.s32.totalorder %s9, 0
    %p41 = por %p39, %p40
    %p42 = scmp.ne.s32.totalorder %s31, %s34
    %p43 = scmp.eq.s32.totalorder %s14, 1
    %p44 = por %p42, %p43
    %p45 = scmp.ne.s32.totalorder %s34, %s35
    %p46 = scmp.eq.s32.totalorder %s14, 0
    %p47 = por %p45, %p46
    %p48 = scmp.ne.s32.totalorder %s34, %s35
    %p49 = scmp.eq.s32.totalorder %s15, 1
    %p50 = por %p48, %p49
    %p52 = scmp.ne.s32.totalorder %s35, %s51
    %p53 = scmp.eq.s32.totalorder %s15, 0
    %p54 = por %p52, %p53
    %s55 = ssub.s32 %s17, %s24
    %p56 = scmp.eq.s32.totalorder %s55, 0
    %s58 = sadd.s32 %s57, 1
    %s59 = scalar_select %p56, %s57, %s58
    %p62 = pneg %p56
    %p63 = scmp.eq.s32.totalorder %s9, 1
    %p64 = por %p62, %p63
    %p65 = scmp.ne.s32.totalorder %s57, %s60
    %p66 = scmp.eq.s32.totalorder %s9, 0
    %p67 = por %p65, %p66
    %p68 = scmp.ne.s32.totalorder %s57, %s60
    %p69 = scmp.eq.s32.totalorder %s14, 1
    %p70 = por %p68, %p69
    %p71 = scmp.ne.s32.totalorder %s60, %s61
    %p72 = scmp.eq.s32.totalorder %s14, 0
    %p73 = por %p71, %p72
    %p74 = scmp.ne.s32.totalorder %s60, %s61
    %p75 = scmp.eq.s32.totalorder %s15, 1
    %p76 = por %p74, %p75
    %p78 = scmp.ne.s32.totalorder %s61, %s77
    %p79 = scmp.eq.s32.totalorder %s15, 0
    %p80 = por %p78, %p79
    %s81 = ssub.s32 %s17, %s24
    %p82 = scmp.eq.s32.totalorder %s81, 0
    %s84 = sadd.s32 %s83, 1
    %s85 = scalar_select %p82, %s83, %s84
    %p88 = pneg %p82
    %p89 = scmp.eq.s32.totalorder %s9, 1
    %p90 = por %p88, %p89
    %p91 = scmp.ne.s32.totalorder %s83, %s86
    %p92 = scmp.eq.s32.totalorder %s9, 0
    %p93 = por %p91, %p92
    %p94 = scmp.ne.s32.totalorder %s83, %s86
    %p95 = scmp.eq.s32.totalorder %s14, 1
    %p96 = por %p94, %p95
    %p97 = scmp.ne.s32.totalorder %s86, %s87
    %p98 = scmp.eq.s32.totalorder %s14, 0
    %p99 = por %p97, %p98
    %p100 = scmp.ne.s32.totalorder %s86, %s87
    %p101 = scmp.eq.s32.totalorder %s15, 1
    %p102 = por %p100, %p101
    %p104 = scmp.ne.s32.totalorder %s87, %s103
    %p105 = scmp.eq.s32.totalorder %s15, 0
    %p106 = por %p104, %p105
    %s107 = ssub.s32 %s16, %s28
    %s108 = ssub.s32 %s17, %s24
    %s109 = sor.u32 %s107, %s108
    %p110 = scmp.eq.s32.totalorder %s109, 0
    %s112 = sadd.s32 %s111, 1
    %s113 = scalar_select %p110, %s111, %s112
    %p116 = pneg %p110
    %p117 = scmp.eq.s32.totalorder %s9, 1
    %p118 = por %p116, %p117
    %p119 = scmp.ne.s32.totalorder %s111, %s114
    %p120 = scmp.eq.s32.totalorder %s9, 0
    %p121 = por %p119, %p120
    %p122 = scmp.ne.s32.totalorder %s111, %s114
    %p123 = scmp.eq.s32.totalorder %s14, 1
    %p124 = por %p122, %p123
    %p125 = scmp.ne.s32.totalorder %s114, %s115
    %p126 = scmp.eq.s32.totalorder %s14, 0
    %p127 = por %p125, %p126
    %p128 = scmp.ne.s32.totalorder %s114, %s115
    %p129 = scmp.eq.s32.totalorder %s15, 1
    %p130 = por %p128, %p129
    %p132 = scmp.ne.s32.totalorder %s115, %s131
    %p133 = scmp.eq.s32.totalorder %s15, 0
    %p134 = por %p132, %p133
    %p135 = scmp.le.s32.totalorder 1, %s9
    %p136 = scmp.lt.s32.totalorder %s9, 3
    %p137 = pnand %p135, %p136
    %p138 = pneg %p137
    // Predicated region
    $region9: #{decoder_forward.4} parent=5 // pred_check
      _
    $region10: #{decoder_forward.4} parent=5 // pred_check_branch
      %140 = sbr.rel (%p137) target = $region12
    $region11: #{decoder_forward.4} parent=5 // pred_region
      %s141 = ssub.s32 %s9, 1
      // Predicated region
      $region13: #{decoder_forward.4} parent=11 // pred_check
        %p142 = pneg %p73
      $region14: #{decoder_forward.4} parent=11 // pred_check_branch
        %144 = sbr.rel (%p142) target = $region16
      $region15: #{decoder_forward.4} parent=11 // pred_region
        %p145 = scmp.lt.s32.totalorder %s19, 0
        %s146 = scalar_select %p145, %s19, 0
        %s147 = smul.addr %s146, 4
        %s148 = scalar_lea.vmem %s1, %s147
      $region16: #{decoder_forward.4} parent=11 // pred_fallthru
        _
      // Predicated region
      $region17: #{decoder_forward.4} parent=11 // pred_check
        %p149 = pneg %p99
      $region18: #{decoder_forward.4} parent=11 // pred_check_branch
        %151 = sbr.rel (%p149) target = $region20
      $region19: #{decoder_forward.4} parent=11 // pred_region
        %p152 = scmp.lt.s32.totalorder %s19, 0
        %s153 = scalar_select %p152, %s19, 0
        %s154 = scalar_lea.vmem %s2, %s153
      $region20: #{decoder_forward.4} parent=11 // pred_fallthru
        _
    $region12: #{decoder_forward.4} parent=5 // pred_fallthru
      _
    %p155 = scmp.lt.s32.totalorder %s9, 2
    // Predicated region
    $region21: #{decoder_forward.4} parent=5 // pred_check
      %p156 = pneg %p155
    $region22: #{decoder_forward.4} parent=5 // pred_check_branch
      %158 = sbr.rel (%p156) target = $region24
    $region23: #{decoder_forward.4} parent=5 // pred_region
      // Predicated region
      $region25: #{decoder_forward.4} parent=23 // pred_check
        %p159 = pneg %p41
      $region26: #{decoder_forward.4} parent=23 // pred_check_branch
        %161 = sbr.rel (%p159) target = $region28
      $region27: #{decoder_forward.4} parent=23 // pred_region
        %s162 = smul.u32 32, %s16
        %p163 = scmp.lt.s32.totalorder %s162, 63
        %s164 = scalar_select %p163, %s162, 63
        %s165 = smul.addr %s164, 8
        %s166 = smul.addr %s165, 4
        %s167 = scalar_lea.vmem %s0, %s166
        %s168 = smul.u32 32, %s16
      $region28: #{decoder_forward.4} parent=23 // pred_fallthru
        _
    $region24: #{decoder_forward.4} parent=5 // pred_fallthru
      _
    %p169 = scmp.le.s32.totalorder 1, %s9
    %p170 = scmp.lt.s32.totalorder %s9, 3
    %p171 = pnand %p169, %p170
    %p172 = pneg %p171
    // Predicated region
    $region29: #{decoder_forward.4} parent=5 // pred_check
      _
    $region30: #{decoder_forward.4} parent=5 // pred_check_branch
      %174 = sbr.rel (%p171) target = $region32
    $region31: #{decoder_forward.4} parent=5 // pred_region
      %s175 = ssub.s32 %s9, 1
      %s176 = smul.u32 32, %s18
      %p177 = scmp.lt.s32.totalorder %s176, 63
      %s178 = scalar_select %p177, %s176, 63
      %s179 = smul.addr %s178, 8
      %s180 = smul.addr %s179, 4
      %s181 = scalar_lea.vmem %s0, %s180
      %p182 = pneg %p47
      %p183 = pneg %p44
      %p184 = scmp.lt.s32.totalorder %s19, 0
      %s185 = scalar_select %p184, %s19, 0
      %s186 = smul.addr %s185, 4
      %s187 = scalar_lea.vmem %s1, %s186
      %p188 = pneg %p73
      %p189 = pneg %p70
      %p190 = scmp.lt.s32.totalorder %s19, 0
      %s191 = scalar_select %p190, %s19, 0
      %s192 = scalar_lea.vmem %s2, %s191
      %p193 = pneg %p99
      %p194 = pneg %p96
      %p195 = pneg %p127
      %p196 = pneg %p124
      %s197 = smul.u32 32, %s18
      %p198 = scmp.lt.s32.totalorder %s197, 63
      %s199 = scalar_select %p198, %s197, 63
      %p200 = scmp.lt.s32.totalorder %s19, 0
      %s201 = scalar_select %p200, %s19, 0
      %s202 = sadd.s32 %s201, %s199
      %s203 = smul.addr %s202, 4
      %s204 = scalar_lea.vmem %s3, %s203
      %s205 = smul.u32 32, %s18
      %p206 = scmp.lt.s32.totalorder %s205, 63
      %s207 = scalar_select %p206, %s205, 63
      %s208 = smul.addr %s207, 8
      %s209 = smul.addr %s208, 4
      %s210 = scalar_lea.vmem %s0, %s209
      %s211 = smul.u32 32, %s18
      %p212 = scmp.lt.s32.totalorder %s19, 0
      %s213 = scalar_select %p212, %s19, 0
      %s214 = smul.addr %s213, 4
      %s215 = scalar_lea.vmem %s1, %s214
      %p216 = scmp.lt.s32.totalorder %s19, 0
      %s217 = scalar_select %p216, %s19, 0
      %s218 = scalar_lea.vmem %s2, %s217
      %s219 = smul.u32 32, %s18
      %p220 = scmp.lt.s32.totalorder %s219, 63
      %s221 = scalar_select %p220, %s219, 63
      %p222 = scmp.lt.s32.totalorder %s19, 0
      %s223 = scalar_select %p222, %s19, 0
      %s224 = sadd.s32 %s223, %s221
      %s225 = smul.addr %s224, 4
      %s226 = scalar_lea.vmem %s3, %s225
      %s227 = smul.u32 32, %s18
      %v229 = vld [vmem:[%s210] sm:$0xff]
      %v230 = vld [vmem:[%s210 + $0x8] sm:$0xff]
      %v231 = vld [vmem:[%s210 + $0x10] sm:$0xff]
      %v232 = vld [vmem:[%s210 + $0x18] sm:$0xff]
      %v233 = vld [vmem:[%s210 + $0x20] sm:$0xff]
      %v234 = vld [vmem:[%s210 + $0x28] sm:$0xff]
      %v235 = vld [vmem:[%s210 + $0x30] sm:$0xff]
      %v236 = vld [vmem:[%s210 + $0x38] sm:$0xff]
      %v237 = vld [vmem:[%s210 + $0x40] sm:$0xff]
      %v238 = vld [vmem:[%s210 + $0x48] sm:$0xff]
      %v239 = vld [vmem:[%s210 + $0x50] sm:$0xff]
      %v240 = vld [vmem:[%s210 + $0x58] sm:$0xff]
      %v241 = vld [vmem:[%s210 + $0x60] sm:$0xff]
      %v242 = vld [vmem:[%s210 + $0x68] sm:$0xff]
      %v243 = vld [vmem:[%s210 + $0x70] sm:$0xff]
      %v244 = vld [vmem:[%s210 + $0x78] sm:$0xff]
      %v245 = vld [vmem:[%s210 + $0x80] sm:$0xff]
      %v246 = vld [vmem:[%s210 + $0x88] sm:$0xff]
      %v247 = vld [vmem:[%s210 + $0x90] sm:$0xff]
      %v248 = vld [vmem:[%s210 + $0x98] sm:$0xff]
      %v249 = vld [vmem:[%s210 + $0xa0] sm:$0xff]
      %v250 = vld [vmem:[%s210 + $0xa8] sm:$0xff]
      %v251 = vld [vmem:[%s210 + $0xb0] sm:$0xff]
      %v252 = vld [vmem:[%s210 + $0xb8] sm:$0xff]
      %v253 = vld [vmem:[%s210 + $0xc0] sm:$0xff]
      %v254 = vld [vmem:[%s210 + $0xc8] sm:$0xff]
      %v255 = vld [vmem:[%s210 + $0xd0] sm:$0xff]
      %v256 = vld [vmem:[%s210 + $0xd8] sm:$0xff]
      %v257 = vld [vmem:[%s210 + $0xe0] sm:$0xff]
      %v258 = vld [vmem:[%s210 + $0xe8] sm:$0xff]
      %v259 = vld [vmem:[%s210 + $0xf0] sm:$0xff]
      %v260 = vld [vmem:[%s210 + $0xf8] sm:$0xff]
      %v261 = vld [vmem:[%s210 + $0x100] sm:$0xff]
      %v262 = vld [vmem:[%s210 + $0x108] sm:$0xff]
      %v263 = vld [vmem:[%s210 + $0x110] sm:$0xff]
      %v264 = vld [vmem:[%s210 + $0x118] sm:$0xff]
      %v265 = vld [vmem:[%s210 + $0x120] sm:$0xff]
      %v266 = vld [vmem:[%s210 + $0x128] sm:$0xff]
      %v267 = vld [vmem:[%s210 + $0x130] sm:$0xff]
      %v268 = vld [vmem:[%s210 + $0x138] sm:$0xff]
      %v269 = vld [vmem:[%s210 + $0x140] sm:$0xff]
      %v270 = vld [vmem:[%s210 + $0x148] sm:$0xff]
      %v271 = vld [vmem:[%s210 + $0x150] sm:$0xff]
      %v272 = vld [vmem:[%s210 + $0x158] sm:$0xff]
      %v273 = vld [vmem:[%s210 + $0x160] sm:$0xff]
      %v274 = vld [vmem:[%s210 + $0x168] sm:$0xff]
      %v275 = vld [vmem:[%s210 + $0x170] sm:$0xff]
      %v276 = vld [vmem:[%s210 + $0x178] sm:$0xff]
      %v277 = vld [vmem:[%s210 + $0x180] sm:$0xff]
      %v278 = vld [vmem:[%s210 + $0x188] sm:$0xff]
      %v279 = vld [vmem:[%s210 + $0x190] sm:$0xff]
      %v280 = vld [vmem:[%s210 + $0x198] sm:$0xff]
      %v281 = vld [vmem:[%s210 + $0x1a0] sm:$0xff]
      %v282 = vld [vmem:[%s210 + $0x1a8] sm:$0xff]
      %v283 = vld [vmem:[%s210 + $0x1b0] sm:$0xff]
      %v284 = vld [vmem:[%s210 + $0x1b8] sm:$0xff]
      %v285 = vld [vmem:[%s210 + $0x1c0] sm:$0xff]
      %v286 = vld [vmem:[%s210 + $0x1c8] sm:$0xff]
      %v287 = vld [vmem:[%s210 + $0x1d0] sm:$0xff]
      %v288 = vld [vmem:[%s210 + $0x1d8] sm:$0xff]
      %v289 = vld [vmem:[%s210 + $0x1e0] sm:$0xff]
      %v290 = vld [vmem:[%s210 + $0x1e8] sm:$0xff]
      %v291 = vld [vmem:[%s210 + $0x1f0] sm:$0xff]
      %v292 = vld [vmem:[%s210 + $0x1f8] sm:$0xff]
      %v293 = vld [vmem:[%s210 + $0x200] sm:$0xff]
      %v294 = vld [vmem:[%s210 + $0x208] sm:$0xff]
      %v295 = vld [vmem:[%s210 + $0x210] sm:$0xff]
      %v296 = vld [vmem:[%s210 + $0x218] sm:$0xff]
      %v297 = vld [vmem:[%s210 + $0x220] sm:$0xff]
      %v298 = vld [vmem:[%s210 + $0x228] sm:$0xff]
      %v299 = vld [vmem:[%s210 + $0x230] sm:$0xff]
      %v300 = vld [vmem:[%s210 + $0x238] sm:$0xff]
      %v301 = vld [vmem:[%s210 + $0x240] sm:$0xff]
      %v302 = vld [vmem:[%s210 + $0x248] sm:$0xff]
      %v303 = vld [vmem:[%s210 + $0x250] sm:$0xff]
      %v304 = vld [vmem:[%s210 + $0x258] sm:$0xff]
      %v305 = vld [vmem:[%s210 + $0x260] sm:$0xff]
      %v306 = vld [vmem:[%s210 + $0x268] sm:$0xff]
      %v307 = vld [vmem:[%s210 + $0x270] sm:$0xff]
      %v308 = vld [vmem:[%s210 + $0x278] sm:$0xff]
      %v309 = vld [vmem:[%s210 + $0x280] sm:$0xff]
      %v310 = vld [vmem:[%s210 + $0x288] sm:$0xff]
      %v311 = vld [vmem:[%s210 + $0x290] sm:$0xff]
      %v312 = vld [vmem:[%s210 + $0x298] sm:$0xff]
      %v313 = vld [vmem:[%s210 + $0x2a0] sm:$0xff]
      %v314 = vld [vmem:[%s210 + $0x2a8] sm:$0xff]
      %v315 = vld [vmem:[%s210 + $0x2b0] sm:$0xff]
      %v316 = vld [vmem:[%s210 + $0x2b8] sm:$0xff]
      %v317 = vld [vmem:[%s210 + $0x2c0] sm:$0xff]
      %v318 = vld [vmem:[%s210 + $0x2c8] sm:$0xff]
      %v319 = vld [vmem:[%s210 + $0x2d0] sm:$0xff]
      %v320 = vld [vmem:[%s210 + $0x2d8] sm:$0xff]
      %v321 = vld [vmem:[%s210 + $0x2e0] sm:$0xff]
      %v322 = vld [vmem:[%s210 + $0x2e8] sm:$0xff]
      %v323 = vld [vmem:[%s210 + $0x2f0] sm:$0xff]
      %v324 = vld [vmem:[%s210 + $0x2f8] sm:$0xff]
      %v325 = vld [vmem:[%s210 + $0x300] sm:$0xff]
      %v326 = vld [vmem:[%s210 + $0x308] sm:$0xff]
      %v327 = vld [vmem:[%s210 + $0x310] sm:$0xff]
      %v328 = vld [vmem:[%s210 + $0x318] sm:$0xff]
      %v329 = vld [vmem:[%s210 + $0x320] sm:$0xff]
      %v330 = vld [vmem:[%s210 + $0x328] sm:$0xff]
      %v331 = vld [vmem:[%s210 + $0x330] sm:$0xff]
      %v332 = vld [vmem:[%s210 + $0x338] sm:$0xff]
      %v333 = vld [vmem:[%s210 + $0x340] sm:$0xff]
      %v334 = vld [vmem:[%s210 + $0x348] sm:$0xff]
      %v335 = vld [vmem:[%s210 + $0x350] sm:$0xff]
      %v336 = vld [vmem:[%s210 + $0x358] sm:$0xff]
      %v337 = vld [vmem:[%s210 + $0x360] sm:$0xff]
      %v338 = vld [vmem:[%s210 + $0x368] sm:$0xff]
      %v339 = vld [vmem:[%s210 + $0x370] sm:$0xff]
      %v340 = vld [vmem:[%s210 + $0x378] sm:$0xff]
      %v341 = vld [vmem:[%s210 + $0x380] sm:$0xff]
      %v342 = vld [vmem:[%s210 + $0x388] sm:$0xff]
      %v343 = vld [vmem:[%s210 + $0x390] sm:$0xff]
      %v344 = vld [vmem:[%s210 + $0x398] sm:$0xff]
      %v345 = vld [vmem:[%s210 + $0x3a0] sm:$0xff]
      %v346 = vld [vmem:[%s210 + $0x3a8] sm:$0xff]
      %v347 = vld [vmem:[%s210 + $0x3b0] sm:$0xff]
      %v348 = vld [vmem:[%s210 + $0x3b8] sm:$0xff]
      %v349 = vld [vmem:[%s210 + $0x3c0] sm:$0xff]
      %v350 = vld [vmem:[%s210 + $0x3c8] sm:$0xff]
      %v351 = vld [vmem:[%s210 + $0x3d0] sm:$0xff]
      %v352 = vld [vmem:[%s210 + $0x3d8] sm:$0xff]
      %v353 = vld [vmem:[%s210 + $0x3e0] sm:$0xff]
      %v354 = vld [vmem:[%s210 + $0x3e8] sm:$0xff]
      %v355 = vld [vmem:[%s210 + $0x3f0] sm:$0xff]
      %v356 = vld [vmem:[%s210 + $0x3f8] sm:$0xff]
      %v357 = vld [vmem:[%s215] sm:$0xf]
      %v358 = vld [vmem:[%s215 + $0x4] sm:$0xf]
      %v359 = vld [vmem:[%s215 + $0x8] sm:$0xf]
      %v360 = vld [vmem:[%s215 + $0xc] sm:$0xf]
      %v361 = vld [vmem:[%s215 + $0x10] sm:$0xf]
      %v362 = vld [vmem:[%s215 + $0x14] sm:$0xf]
      %v363 = vld [vmem:[%s215 + $0x18] sm:$0xf]
      %v364 = vld [vmem:[%s215 + $0x1c] sm:$0xf]
      %v365 = vld [vmem:[%s215 + $0x20] sm:$0xf]
      %v366 = vld [vmem:[%s215 + $0x24] sm:$0xf]
      %v367 = vld [vmem:[%s215 + $0x28] sm:$0xf]
      %v368 = vld [vmem:[%s215 + $0x2c] sm:$0xf]
      %v369 = vld [vmem:[%s215 + $0x30] sm:$0xf]
      %v370 = vld [vmem:[%s215 + $0x34] sm:$0xf]
      %v371 = vld [vmem:[%s215 + $0x38] sm:$0xf]
      %v372 = vld [vmem:[%s215 + $0x3c] sm:$0xf]
      %v373 = vld [vmem:[%s215 + $0x40] sm:$0xf]
      %v374 = vld [vmem:[%s215 + $0x44] sm:$0xf]
      %v375 = vld [vmem:[%s215 + $0x48] sm:$0xf]
      %v376 = vld [vmem:[%s215 + $0x4c] sm:$0xf]
      %v377 = vld [vmem:[%s215 + $0x50] sm:$0xf]
      %v378 = vld [vmem:[%s215 + $0x54] sm:$0xf]
      %v379 = vld [vmem:[%s215 + $0x58] sm:$0xf]
      %v380 = vld [vmem:[%s215 + $0x5c] sm:$0xf]
      %v381 = vld [vmem:[%s215 + $0x60] sm:$0xf]
      %v382 = vld [vmem:[%s215 + $0x64] sm:$0xf]
      %v383 = vld [vmem:[%s215 + $0x68] sm:$0xf]
      %v384 = vld [vmem:[%s215 + $0x6c] sm:$0xf]
      %v385 = vld [vmem:[%s215 + $0x70] sm:$0xf]
      %v386 = vld [vmem:[%s215 + $0x74] sm:$0xf]
      %v387 = vld [vmem:[%s215 + $0x78] sm:$0xf]
      %v388 = vld [vmem:[%s215 + $0x7c] sm:$0xf]
      %v389 = vld [vmem:[%s215 + $0x80] sm:$0xf]
      %v390 = vld [vmem:[%s215 + $0x84] sm:$0xf]
      %v391 = vld [vmem:[%s215 + $0x88] sm:$0xf]
      %v392 = vld [vmem:[%s215 + $0x8c] sm:$0xf]
      %v393 = vld [vmem:[%s215 + $0x90] sm:$0xf]
      %v394 = vld [vmem:[%s215 + $0x94] sm:$0xf]
      %v395 = vld [vmem:[%s215 + $0x98] sm:$0xf]
      %v396 = vld [vmem:[%s215 + $0x9c] sm:$0xf]
      %v397 = vld [vmem:[%s215 + $0xa0] sm:$0xf]
      %v398 = vld [vmem:[%s215 + $0xa4] sm:$0xf]
      %v399 = vld [vmem:[%s215 + $0xa8] sm:$0xf]
      %v400 = vld [vmem:[%s215 + $0xac] sm:$0xf]
      %v401 = vld [vmem:[%s215 + $0xb0] sm:$0xf]
      %v402 = vld [vmem:[%s215 + $0xb4] sm:$0xf]
      %v403 = vld [vmem:[%s215 + $0xb8] sm:$0xf]
      %v404 = vld [vmem:[%s215 + $0xbc] sm:$0xf]
      %v405 = vld [vmem:[%s215 + $0xc0] sm:$0xf]
      %v406 = vld [vmem:[%s215 + $0xc4] sm:$0xf]
      %v407 = vld [vmem:[%s215 + $0xc8] sm:$0xf]
      %v408 = vld [vmem:[%s215 + $0xcc] sm:$0xf]
      %v409 = vld [vmem:[%s215 + $0xd0] sm:$0xf]
      %v410 = vld [vmem:[%s215 + $0xd4] sm:$0xf]
      %v411 = vld [vmem:[%s215 + $0xd8] sm:$0xf]
      %v412 = vld [vmem:[%s215 + $0xdc] sm:$0xf]
      %v413 = vld [vmem:[%s215 + $0xe0] sm:$0xf]
      %v414 = vld [vmem:[%s215 + $0xe4] sm:$0xf]
      %v415 = vld [vmem:[%s215 + $0xe8] sm:$0xf]
      %v416 = vld [vmem:[%s215 + $0xec] sm:$0xf]
      %v417 = vld [vmem:[%s215 + $0xf0] sm:$0xf]
      %v418 = vld [vmem:[%s215 + $0xf4] sm:$0xf]
      %v419 = vld [vmem:[%s215 + $0xf8] sm:$0xf]
      %v420 = vld [vmem:[%s215 + $0xfc] sm:$0xf]
      %v421 = vld [vmem:[%s215 + $0x100] sm:$0xf]
      %v422 = vld [vmem:[%s215 + $0x104] sm:$0xf]
      %v423 = vld [vmem:[%s215 + $0x108] sm:$0xf]
      %v424 = vld [vmem:[%s215 + $0x10c] sm:$0xf]
      %v425 = vld [vmem:[%s215 + $0x110] sm:$0xf]
      %v426 = vld [vmem:[%s215 + $0x114] sm:$0xf]
      %v427 = vld [vmem:[%s215 + $0x118] sm:$0xf]
      %v428 = vld [vmem:[%s215 + $0x11c] sm:$0xf]
      %v429 = vld [vmem:[%s215 + $0x120] sm:$0xf]
      %v430 = vld [vmem:[%s215 + $0x124] sm:$0xf]
      %v431 = vld [vmem:[%s215 + $0x128] sm:$0xf]
      %v432 = vld [vmem:[%s215 + $0x12c] sm:$0xf]
      %v433 = vld [vmem:[%s215 + $0x130] sm:$0xf]
      %v434 = vld [vmem:[%s215 + $0x134] sm:$0xf]
      %v435 = vld [vmem:[%s215 + $0x138] sm:$0xf]
      %v436 = vld [vmem:[%s215 + $0x13c] sm:$0xf]
      %v437 = vld [vmem:[%s215 + $0x140] sm:$0xf]
      %v438 = vld [vmem:[%s215 + $0x144] sm:$0xf]
      %v439 = vld [vmem:[%s215 + $0x148] sm:$0xf]
      %v440 = vld [vmem:[%s215 + $0x14c] sm:$0xf]
      %v441 = vld [vmem:[%s215 + $0x150] sm:$0xf]
      %v442 = vld [vmem:[%s215 + $0x154] sm:$0xf]
      %v443 = vld [vmem:[%s215 + $0x158] sm:$0xf]
      %v444 = vld [vmem:[%s215 + $0x15c] sm:$0xf]
      %v445 = vld [vmem:[%s215 + $0x160] sm:$0xf]
      %v446 = vld [vmem:[%s215 + $0x164] sm:$0xf]
      %v447 = vld [vmem:[%s215 + $0x168] sm:$0xf]
      %v448 = vld [vmem:[%s215 + $0x16c] sm:$0xf]
      %v449 = vld [vmem:[%s215 + $0x170] sm:$0xf]
      %v450 = vld [vmem:[%s215 + $0x174] sm:$0xf]
      %v451 = vld [vmem:[%s215 + $0x178] sm:$0xf]
      %v452 = vld [vmem:[%s215 + $0x17c] sm:$0xf]
      %v453 = vld [vmem:[%s215 + $0x180] sm:$0xf]
      %v454 = vld [vmem:[%s215 + $0x184] sm:$0xf]
      %v455 = vld [vmem:[%s215 + $0x188] sm:$0xf]
      %v456 = vld [vmem:[%s215 + $0x18c] sm:$0xf]
      %v457 = vld [vmem:[%s215 + $0x190] sm:$0xf]
      %v458 = vld [vmem:[%s215 + $0x194] sm:$0xf]
      %v459 = vld [vmem:[%s215 + $0x198] sm:$0xf]
      %v460 = vld [vmem:[%s215 + $0x19c] sm:$0xf]
      %v461 = vld [vmem:[%s215 + $0x1a0] sm:$0xf]
      %v462 = vld [vmem:[%s215 + $0x1a4] sm:$0xf]
      %v463 = vld [vmem:[%s215 + $0x1a8] sm:$0xf]
      %v464 = vld [vmem:[%s215 + $0x1ac] sm:$0xf]
      %v465 = vld [vmem:[%s215 + $0x1b0] sm:$0xf]
      %v466 = vld [vmem:[%s215 + $0x1b4] sm:$0xf]
      %v467 = vld [vmem:[%s215 + $0x1b8] sm:$0xf]
      %v468 = vld [vmem:[%s215 + $0x1bc] sm:$0xf]
      %v469 = vld [vmem:[%s215 + $0x1c0] sm:$0xf]
      %v470 = vld [vmem:[%s215 + $0x1c4] sm:$0xf]
      %v471 = vld [vmem:[%s215 + $0x1c8] sm:$0xf]
      %v472 = vld [vmem:[%s215 + $0x1cc] sm:$0xf]
      %v473 = vld [vmem:[%s215 + $0x1d0] sm:$0xf]
      %v474 = vld [vmem:[%s215 + $0x1d4] sm:$0xf]
      %v475 = vld [vmem:[%s215 + $0x1d8] sm:$0xf]
      %v476 = vld [vmem:[%s215 + $0x1dc] sm:$0xf]
      %v477 = vld [vmem:[%s215 + $0x1e0] sm:$0xf]
      %v478 = vld [vmem:[%s215 + $0x1e4] sm:$0xf]
      %v479 = vld [vmem:[%s215 + $0x1e8] sm:$0xf]
      %v480 = vld [vmem:[%s215 + $0x1ec] sm:$0xf]
      %v481 = vld [vmem:[%s215 + $0x1f0] sm:$0xf]
      %v482 = vld [vmem:[%s215 + $0x1f4] sm:$0xf]
      %v483 = vld [vmem:[%s215 + $0x1f8] sm:$0xf]
      %v484 = vld [vmem:[%s215 + $0x1fc] sm:$0xf]
      %v485 = vld [vmem:[%s218] sm:$0x1]
      %v487 = vlaneseq
      %v488 = vshrl.u32 %v487, 7
      %v489 = vsub.s32 0, %v488
      %v490 = vrot.slane %v485, %v489
      %v620 = vunpack.c.l.b16 %v229
      %v621 = vunpack.c.h.b16 %v229
      %v622 = vunpack.c.l.b16 %v230
      %v623 = vunpack.c.h.b16 %v230
      %v624 = vunpack.c.l.b16 %v231
      %v625 = vunpack.c.h.b16 %v231
      %v626 = vunpack.c.l.b16 %v232
      %v627 = vunpack.c.h.b16 %v232
      %v628 = vunpack.c.l.b16 %v233
      %v629 = vunpack.c.h.b16 %v233
      %v630 = vunpack.c.l.b16 %v234
      %v631 = vunpack.c.h.b16 %v234
      %v632 = vunpack.c.l.b16 %v235
      %v633 = vunpack.c.h.b16 %v235
      %v634 = vunpack.c.l.b16 %v236
      %v635 = vunpack.c.h.b16 %v236
      %v636 = vunpack.c.l.b16 %v237
      %v637 = vunpack.c.h.b16 %v237
      %v638 = vunpack.c.l.b16 %v238
      %v639 = vunpack.c.h.b16 %v238
      %v640 = vunpack.c.l.b16 %v239
      %v641 = vunpack.c.h.b16 %v239
      %v642 = vunpack.c.l.b16 %v240
      %v643 = vunpack.c.h.b16 %v240
      %v644 = vunpack.c.l.b16 %v241
      %v645 = vunpack.c.h.b16 %v241
      %v646 = vunpack.c.l.b16 %v242
      %v647 = vunpack.c.h.b16 %v242
      %v648 = vunpack.c.l.b16 %v243
      %v649 = vunpack.c.h.b16 %v243
      %v650 = vunpack.c.l.b16 %v244
      %v651 = vunpack.c.h.b16 %v244
      %v652 = vunpack.c.l.b16 %v245
      %v653 = vunpack.c.h.b16 %v245
      %v654 = vunpack.c.l.b16 %v246
      %v655 = vunpack.c.h.b16 %v246
      %v656 = vunpack.c.l.b16 %v247
      %v657 = vunpack.c.h.b16 %v247
      %v658 = vunpack.c.l.b16 %v248
      %v659 = vunpack.c.h.b16 %v248
      %v660 = vunpack.c.l.b16 %v249
      %v661 = vunpack.c.h.b16 %v249
      %v662 = vunpack.c.l.b16 %v250
      %v663 = vunpack.c.h.b16 %v250
      %v664 = vunpack.c.l.b16 %v251
      %v665 = vunpack.c.h.b16 %v251
      %v666 = vunpack.c.l.b16 %v252
      %v667 = vunpack.c.h.b16 %v252
      %v668 = vunpack.c.l.b16 %v253
      %v669 = vunpack.c.h.b16 %v253
      %v670 = vunpack.c.l.b16 %v254
      %v671 = vunpack.c.h.b16 %v254
      %v672 = vunpack.c.l.b16 %v255
      %v673 = vunpack.c.h.b16 %v255
      %v674 = vunpack.c.l.b16 %v256
      %v675 = vunpack.c.h.b16 %v256
      %v676 = vunpack.c.l.b16 %v257
      %v677 = vunpack.c.h.b16 %v257
      %v678 = vunpack.c.l.b16 %v258
      %v679 = vunpack.c.h.b16 %v258
      %v680 = vunpack.c.l.b16 %v259
      %v681 = vunpack.c.h.b16 %v259
      %v682 = vunpack.c.l.b16 %v260
      %v683 = vunpack.c.h.b16 %v260
      %v684 = vunpack.c.l.b16 %v261
      %v685 = vunpack.c.h.b16 %v261
      %v686 = vunpack.c.l.b16 %v262
      %v687 = vunpack.c.h.b16 %v262
      %v688 = vunpack.c.l.b16 %v263
      %v689 = vunpack.c.h.b16 %v263
      %v690 = vunpack.c.l.b16 %v264
      %v691 = vunpack.c.h.b16 %v264
      %v692 = vunpack.c.l.b16 %v265
      %v693 = vunpack.c.h.b16 %v265
      %v694 = vunpack.c.l.b16 %v266
      %v695 = vunpack.c.h.b16 %v266
      %v696 = vunpack.c.l.b16 %v267
      %v697 = vunpack.c.h.b16 %v267
      %v698 = vunpack.c.l.b16 %v268
      %v699 = vunpack.c.h.b16 %v268
      %v700 = vunpack.c.l.b16 %v269
      %v701 = vunpack.c.h.b16 %v269
      %v702 = vunpack.c.l.b16 %v270
      %v703 = vunpack.c.h.b16 %v270
      %v704 = vunpack.c.l.b16 %v271
      %v705 = vunpack.c.h.b16 %v271
      %v706 = vunpack.c.l.b16 %v272
      %v707 = vunpack.c.h.b16 %v272
      %v708 = vunpack.c.l.b16 %v273
      %v709 = vunpack.c.h.b16 %v273
      %v710 = vunpack.c.l.b16 %v274
      %v711 = vunpack.c.h.b16 %v274
      %v712 = vunpack.c.l.b16 %v275
      %v713 = vunpack.c.h.b16 %v275
      %v714 = vunpack.c.l.b16 %v276
      %v715 = vunpack.c.h.b16 %v276
      %v716 = vunpack.c.l.b16 %v277
      %v717 = vunpack.c.h.b16 %v277
      %v718 = vunpack.c.l.b16 %v278
      %v719 = vunpack.c.h.b16 %v278
      %v720 = vunpack.c.l.b16 %v279
      %v721 = vunpack.c.h.b16 %v279
      %v722 = vunpack.c.l.b16 %v280
      %v723 = vunpack.c.h.b16 %v280
      %v724 = vunpack.c.l.b16 %v281
      %v725 = vunpack.c.h.b16 %v281
      %v726 = vunpack.c.l.b16 %v282
      %v727 = vunpack.c.h.b16 %v282
      %v728 = vunpack.c.l.b16 %v283
      %v729 = vunpack.c.h.b16 %v283
      %v730 = vunpack.c.l.b16 %v284
      %v731 = vunpack.c.h.b16 %v284
      %v732 = vunpack.c.l.b16 %v285
      %v733 = vunpack.c.h.b16 %v285
      %v734 = vunpack.c.l.b16 %v286
      %v735 = vunpack.c.h.b16 %v286
      %v736 = vunpack.c.l.b16 %v287
      %v737 = vunpack.c.h.b16 %v287
      %v738 = vunpack.c.l.b16 %v288
      %v739 = vunpack.c.h.b16 %v288
      %v740 = vunpack.c.l.b16 %v289
      %v741 = vunpack.c.h.b16 %v289
      %v742 = vunpack.c.l.b16 %v290
      %v743 = vunpack.c.h.b16 %v290
      %v744 = vunpack.c.l.b16 %v291
      %v745 = vunpack.c.h.b16 %v291
      %v746 = vunpack.c.l.b16 %v292
      %v747 = vunpack.c.h.b16 %v292
      %v748 = vunpack.c.l.b16 %v293
      %v749 = vunpack.c.h.b16 %v293
      %v750 = vunpack.c.l.b16 %v294
      %v751 = vunpack.c.h.b16 %v294
      %v752 = vunpack.c.l.b16 %v295
      %v753 = vunpack.c.h.b16 %v295
      %v754 = vunpack.c.l.b16 %v296
      %v755 = vunpack.c.h.b16 %v296
      %v756 = vunpack.c.l.b16 %v297
      %v757 = vunpack.c.h.b16 %v297
      %v758 = vunpack.c.l.b16 %v298
      %v759 = vunpack.c.h.b16 %v298
      %v760 = vunpack.c.l.b16 %v299
      %v761 = vunpack.c.h.b16 %v299
      %v762 = vunpack.c.l.b16 %v300
      %v763 = vunpack.c.h.b16 %v300
      %v764 = vunpack.c.l.b16 %v301
      %v765 = vunpack.c.h.b16 %v301
      %v766 = vunpack.c.l.b16 %v302
      %v767 = vunpack.c.h.b16 %v302
      %v768 = vunpack.c.l.b16 %v303
      %v769 = vunpack.c.h.b16 %v303
      %v770 = vunpack.c.l.b16 %v304
      %v771 = vunpack.c.h.b16 %v304
      %v772 = vunpack.c.l.b16 %v305
      %v773 = vunpack.c.h.b16 %v305
      %v774 = vunpack.c.l.b16 %v306
      %v775 = vunpack.c.h.b16 %v306
      %v776 = vunpack.c.l.b16 %v307
      %v777 = vunpack.c.h.b16 %v307
      %v778 = vunpack.c.l.b16 %v308
      %v779 = vunpack.c.h.b16 %v308
      %v780 = vunpack.c.l.b16 %v309
      %v781 = vunpack.c.h.b16 %v309
      %v782 = vunpack.c.l.b16 %v310
      %v783 = vunpack.c.h.b16 %v310
      %v784 = vunpack.c.l.b16 %v311
      %v785 = vunpack.c.h.b16 %v311
      %v786 = vunpack.c.l.b16 %v312
      %v787 = vunpack.c.h.b16 %v312
      %v788 = vunpack.c.l.b16 %v313
      %v789 = vunpack.c.h.b16 %v313
      %v790 = vunpack.c.l.b16 %v314
      %v791 = vunpack.c.h.b16 %v314
      %v792 = vunpack.c.l.b16 %v315
      %v793 = vunpack.c.h.b16 %v315
      %v794 = vunpack.c.l.b16 %v316
      %v795 = vunpack.c.h.b16 %v316
      %v796 = vunpack.c.l.b16 %v317
      %v797 = vunpack.c.h.b16 %v317
      %v798 = vunpack.c.l.b16 %v318
      %v799 = vunpack.c.h.b16 %v318
      %v800 = vunpack.c.l.b16 %v319
      %v801 = vunpack.c.h.b16 %v319
      %v802 = vunpack.c.l.b16 %v320
      %v803 = vunpack.c.h.b16 %v320
      %v804 = vunpack.c.l.b16 %v321
      %v805 = vunpack.c.h.b16 %v321
      %v806 = vunpack.c.l.b16 %v322
      %v807 = vunpack.c.h.b16 %v322
      %v808 = vunpack.c.l.b16 %v323
      %v809 = vunpack.c.h.b16 %v323
      %v810 = vunpack.c.l.b16 %v324
      %v811 = vunpack.c.h.b16 %v324
      %v812 = vunpack.c.l.b16 %v325
      %v813 = vunpack.c.h.b16 %v325
      %v814 = vunpack.c.l.b16 %v326
      %v815 = vunpack.c.h.b16 %v326
      %v816 = vunpack.c.l.b16 %v327
      %v817 = vunpack.c.h.b16 %v327
      %v818 = vunpack.c.l.b16 %v328
      %v819 = vunpack.c.h.b16 %v328
      %v820 = vunpack.c.l.b16 %v329
      %v821 = vunpack.c.h.b16 %v329
      %v822 = vunpack.c.l.b16 %v330
      %v823 = vunpack.c.h.b16 %v330
      %v824 = vunpack.c.l.b16 %v331
      %v825 = vunpack.c.h.b16 %v331
      %v826 = vunpack.c.l.b16 %v332
      %v827 = vunpack.c.h.b16 %v332
      %v828 = vunpack.c.l.b16 %v333
      %v829 = vunpack.c.h.b16 %v333
      %v830 = vunpack.c.l.b16 %v334
      %v831 = vunpack.c.h.b16 %v334
      %v832 = vunpack.c.l.b16 %v335
      %v833 = vunpack.c.h.b16 %v335
      %v834 = vunpack.c.l.b16 %v336
      %v835 = vunpack.c.h.b16 %v336
      %v836 = vunpack.c.l.b16 %v337
      %v837 = vunpack.c.h.b16 %v337
      %v838 = vunpack.c.l.b16 %v338
      %v839 = vunpack.c.h.b16 %v338
      %v840 = vunpack.c.l.b16 %v339
      %v841 = vunpack.c.h.b16 %v339
      %v842 = vunpack.c.l.b16 %v340
      %v843 = vunpack.c.h.b16 %v340
      %v844 = vunpack.c.l.b16 %v341
      %v845 = vunpack.c.h.b16 %v341
      %v846 = vunpack.c.l.b16 %v342
      %v847 = vunpack.c.h.b16 %v342
      %v848 = vunpack.c.l.b16 %v343
      %v849 = vunpack.c.h.b16 %v343
      %v850 = vunpack.c.l.b16 %v344
      %v851 = vunpack.c.h.b16 %v344
      %v852 = vunpack.c.l.b16 %v345
      %v853 = vunpack.c.h.b16 %v345
      %v854 = vunpack.c.l.b16 %v346
      %v855 = vunpack.c.h.b16 %v346
      %v856 = vunpack.c.l.b16 %v347
      %v857 = vunpack.c.h.b16 %v347
      %v858 = vunpack.c.l.b16 %v348
      %v859 = vunpack.c.h.b16 %v348
      %v860 = vunpack.c.l.b16 %v349
      %v861 = vunpack.c.h.b16 %v349
      %v862 = vunpack.c.l.b16 %v350
      %v863 = vunpack.c.h.b16 %v350
      %v864 = vunpack.c.l.b16 %v351
      %v865 = vunpack.c.h.b16 %v351
      %v866 = vunpack.c.l.b16 %v352
      %v867 = vunpack.c.h.b16 %v352
      %v868 = vunpack.c.l.b16 %v353
      %v869 = vunpack.c.h.b16 %v353
      %v870 = vunpack.c.l.b16 %v354
      %v871 = vunpack.c.h.b16 %v354
      %v872 = vunpack.c.l.b16 %v355
      %v873 = vunpack.c.h.b16 %v355
      %v874 = vunpack.c.l.b16 %v356
      %v875 = vunpack.c.h.b16 %v356
      %v876 = vpack.c.b16 %v628, %v620
      %v877 = vpack.c.b16 %v629, %v621
      %v878 = vpack.c.b16 %v630, %v622
      %v879 = vpack.c.b16 %v631, %v623
      %v880 = vpack.c.b16 %v632, %v624
      %v881 = vpack.c.b16 %v633, %v625
      %v882 = vpack.c.b16 %v634, %v626
      %v883 = vpack.c.b16 %v635, %v627
      %v884 = vpack.c.b16 %v644, %v636
      %v885 = vpack.c.b16 %v645, %v637
      %v886 = vpack.c.b16 %v646, %v638
      %v887 = vpack.c.b16 %v647, %v639
      %v888 = vpack.c.b16 %v648, %v640
      %v889 = vpack.c.b16 %v649, %v641
      %v890 = vpack.c.b16 %v650, %v642
      %v891 = vpack.c.b16 %v651, %v643
      %v892 = vpack.c.b16 %v660, %v652
      %v893 = vpack.c.b16 %v661, %v653
      %v894 = vpack.c.b16 %v662, %v654
      %v895 = vpack.c.b16 %v663, %v655
      %v896 = vpack.c.b16 %v664, %v656
      %v897 = vpack.c.b16 %v665, %v657
      %v898 = vpack.c.b16 %v666, %v658
      %v899 = vpack.c.b16 %v667, %v659
      %v900 = vpack.c.b16 %v676, %v668
      %v901 = vpack.c.b16 %v677, %v669
      %v902 = vpack.c.b16 %v678, %v670
      %v903 = vpack.c.b16 %v679, %v671
      %v904 = vpack.c.b16 %v680, %v672
      %v905 = vpack.c.b16 %v681, %v673
      %v906 = vpack.c.b16 %v682, %v674
      %v907 = vpack.c.b16 %v683, %v675
      %v908 = vpack.c.b16 %v692, %v684
      %v909 = vpack.c.b16 %v693, %v685
      %v910 = vpack.c.b16 %v694, %v686
      %v911 = vpack.c.b16 %v695, %v687
      %v912 = vpack.c.b16 %v696, %v688
      %v913 = vpack.c.b16 %v697, %v689
      %v914 = vpack.c.b16 %v698, %v690
      %v915 = vpack.c.b16 %v699, %v691
      %v916 = vpack.c.b16 %v708, %v700
      %v917 = vpack.c.b16 %v709, %v701
      %v918 = vpack.c.b16 %v710, %v702
      %v919 = vpack.c.b16 %v711, %v703
      %v920 = vpack.c.b16 %v712, %v704
      %v921 = vpack.c.b16 %v713, %v705
      %v922 = vpack.c.b16 %v714, %v706
      %v923 = vpack.c.b16 %v715, %v707
      %v924 = vpack.c.b16 %v724, %v716
      %v925 = vpack.c.b16 %v725, %v717
      %v926 = vpack.c.b16 %v726, %v718
      %v927 = vpack.c.b16 %v727, %v719
      %v928 = vpack.c.b16 %v728, %v720
      %v929 = vpack.c.b16 %v729, %v721
      %v930 = vpack.c.b16 %v730, %v722
      %v931 = vpack.c.b16 %v731, %v723
      %v932 = vpack.c.b16 %v740, %v732
      %v933 = vpack.c.b16 %v741, %v733
      %v934 = vpack.c.b16 %v742, %v734
      %v935 = vpack.c.b16 %v743, %v735
      %v936 = vpack.c.b16 %v744, %v736
      %v937 = vpack.c.b16 %v745, %v737
      %v938 = vpack.c.b16 %v746, %v738
      %v939 = vpack.c.b16 %v747, %v739
      %v940 = vpack.c.b16 %v756, %v748
      %v941 = vpack.c.b16 %v757, %v749
      %v942 = vpack.c.b16 %v758, %v750
      %v943 = vpack.c.b16 %v759, %v751
      %v944 = vpack.c.b16 %v760, %v752
      %v945 = vpack.c.b16 %v761, %v753
      %v946 = vpack.c.b16 %v762, %v754
      %v947 = vpack.c.b16 %v763, %v755
      %v948 = vpack.c.b16 %v772, %v764
      %v949 = vpack.c.b16 %v773, %v765
      %v950 = vpack.c.b16 %v774, %v766
      %v951 = vpack.c.b16 %v775, %v767
      %v952 = vpack.c.b16 %v776, %v768
      %v953 = vpack.c.b16 %v777, %v769
      %v954 = vpack.c.b16 %v778, %v770
      %v955 = vpack.c.b16 %v779, %v771
      %v956 = vpack.c.b16 %v788, %v780
      %v957 = vpack.c.b16 %v789, %v781
      %v958 = vpack.c.b16 %v790, %v782
      %v959 = vpack.c.b16 %v791, %v783
      %v960 = vpack.c.b16 %v792, %v784
      %v961 = vpack.c.b16 %v793, %v785
      %v962 = vpack.c.b16 %v794, %v786
      %v963 = vpack.c.b16 %v795, %v787
      %v964 = vpack.c.b16 %v804, %v796
      %v965 = vpack.c.b16 %v805, %v797
      %v966 = vpack.c.b16 %v806, %v798
      %v967 = vpack.c.b16 %v807, %v799
      %v968 = vpack.c.b16 %v808, %v800
      %v969 = vpack.c.b16 %v809, %v801
      %v970 = vpack.c.b16 %v810, %v802
      %v971 = vpack.c.b16 %v811, %v803
      %v972 = vpack.c.b16 %v820, %v812
      %v973 = vpack.c.b16 %v821, %v813
      %v974 = vpack.c.b16 %v822, %v814
      %v975 = vpack.c.b16 %v823, %v815
      %v976 = vpack.c.b16 %v824, %v816
      %v977 = vpack.c.b16 %v825, %v817
      %v978 = vpack.c.b16 %v826, %v818
      %v979 = vpack.c.b16 %v827, %v819
      %v980 = vpack.c.b16 %v836, %v828
      %v981 = vpack.c.b16 %v837, %v829
      %v982 = vpack.c.b16 %v838, %v830
      %v983 = vpack.c.b16 %v839, %v831
      %v984 = vpack.c.b16 %v840, %v832
      %v985 = vpack.c.b16 %v841, %v833
      %v986 = vpack.c.b16 %v842, %v834
      %v987 = vpack.c.b16 %v843, %v835
      %v988 = vpack.c.b16 %v852, %v844
      %v989 = vpack.c.b16 %v853, %v845
      %v990 = vpack.c.b16 %v854, %v846
      %v991 = vpack.c.b16 %v855, %v847
      %v992 = vpack.c.b16 %v856, %v848
      %v993 = vpack.c.b16 %v857, %v849
      %v994 = vpack.c.b16 %v858, %v850
      %v995 = vpack.c.b16 %v859, %v851
      %v996 = vpack.c.b16 %v868, %v860
      %v997 = vpack.c.b16 %v869, %v861
      %v998 = vpack.c.b16 %v870, %v862
      %v999 = vpack.c.b16 %v871, %v863
      %v1000 = vpack.c.b16 %v872, %v864
      %v1001 = vpack.c.b16 %v873, %v865
      %v1002 = vpack.c.b16 %v874, %v866
      %v1003 = vpack.c.b16 %v875, %v867
      %v1260 = vunpack.c.l.b16 %v357
      %v1261 = vunpack.c.l.b16 %v358
      %v1262 = vunpack.c.l.b16 %v359
      %v1263 = vunpack.c.l.b16 %v360
      %v1264 = vunpack.c.l.b16 %v361
      %v1265 = vunpack.c.l.b16 %v362
      %v1266 = vunpack.c.l.b16 %v363
      %v1267 = vunpack.c.l.b16 %v364
      %v1268 = vunpack.c.l.b16 %v365
      %v1269 = vunpack.c.l.b16 %v366
      %v1270 = vunpack.c.l.b16 %v367
      %v1271 = vunpack.c.l.b16 %v368
      %v1272 = vunpack.c.l.b16 %v369
      %v1273 = vunpack.c.l.b16 %v370
      %v1274 = vunpack.c.l.b16 %v371
      %v1275 = vunpack.c.l.b16 %v372
      %v1276 = vunpack.c.l.b16 %v373
      %v1277 = vunpack.c.l.b16 %v374
      %v1278 = vunpack.c.l.b16 %v375
      %v1279 = vunpack.c.l.b16 %v376
      %v1280 = vunpack.c.l.b16 %v377
      %v1281 = vunpack.c.l.b16 %v378
      %v1282 = vunpack.c.l.b16 %v379
      %v1283 = vunpack.c.l.b16 %v380
      %v1284 = vunpack.c.l.b16 %v381
      %v1285 = vunpack.c.l.b16 %v382
      %v1286 = vunpack.c.l.b16 %v383
      %v1287 = vunpack.c.l.b16 %v384
      %v1288 = vunpack.c.l.b16 %v385
      %v1289 = vunpack.c.l.b16 %v386
      %v1290 = vunpack.c.l.b16 %v387
      %v1291 = vunpack.c.l.b16 %v388
      %v1292 = vunpack.c.l.b16 %v389
      %v1293 = vunpack.c.l.b16 %v390
      %v1294 = vunpack.c.l.b16 %v391
      %v1295 = vunpack.c.l.b16 %v392
      %v1296 = vunpack.c.l.b16 %v393
      %v1297 = vunpack.c.l.b16 %v394
      %v1298 = vunpack.c.l.b16 %v395
      %v1299 = vunpack.c.l.b16 %v396
      %v1300 = vunpack.c.l.b16 %v397
      %v1301 = vunpack.c.l.b16 %v398
      %v1302 = vunpack.c.l.b16 %v399
      %v1303 = vunpack.c.l.b16 %v400
      %v1304 = vunpack.c.l.b16 %v401
      %v1305 = vunpack.c.l.b16 %v402
      %v1306 = vunpack.c.l.b16 %v403
      %v1307 = vunpack.c.l.b16 %v404
      %v1308 = vunpack.c.l.b16 %v405
      %v1309 = vunpack.c.l.b16 %v406
      %v1310 = vunpack.c.l.b16 %v407
      %v1311 = vunpack.c.l.b16 %v408
      %v1312 = vunpack.c.l.b16 %v409
      %v1313 = vunpack.c.l.b16 %v410
      %v1314 = vunpack.c.l.b16 %v411
      %v1315 = vunpack.c.l.b16 %v412
      %v1316 = vunpack.c.l.b16 %v413
      %v1317 = vunpack.c.l.b16 %v414
      %v1318 = vunpack.c.l.b16 %v415
      %v1319 = vunpack.c.l.b16 %v416
      %v1320 = vunpack.c.l.b16 %v417
      %v1321 = vunpack.c.l.b16 %v418
      %v1322 = vunpack.c.l.b16 %v419
      %v1323 = vunpack.c.l.b16 %v420
      %v1324 = vunpack.c.l.b16 %v421
      %v1325 = vunpack.c.l.b16 %v422
      %v1326 = vunpack.c.l.b16 %v423
      %v1327 = vunpack.c.l.b16 %v424
      %v1328 = vunpack.c.l.b16 %v425
      %v1329 = vunpack.c.l.b16 %v426
      %v1330 = vunpack.c.l.b16 %v427
      %v1331 = vunpack.c.l.b16 %v428
      %v1332 = vunpack.c.l.b16 %v429
      %v1333 = vunpack.c.l.b16 %v430
      %v1334 = vunpack.c.l.b16 %v431
      %v1335 = vunpack.c.l.b16 %v432
      %v1336 = vunpack.c.l.b16 %v433
      %v1337 = vunpack.c.l.b16 %v434
      %v1338 = vunpack.c.l.b16 %v435
      %v1339 = vunpack.c.l.b16 %v436
      %v1340 = vunpack.c.l.b16 %v437
      %v1341 = vunpack.c.l.b16 %v438
      %v1342 = vunpack.c.l.b16 %v439
      %v1343 = vunpack.c.l.b16 %v440
      %v1344 = vunpack.c.l.b16 %v441
      %v1345 = vunpack.c.l.b16 %v442
      %v1346 = vunpack.c.l.b16 %v443
      %v1347 = vunpack.c.l.b16 %v444
      %v1348 = vunpack.c.l.b16 %v445
      %v1349 = vunpack.c.l.b16 %v446
      %v1350 = vunpack.c.l.b16 %v447
      %v1351 = vunpack.c.l.b16 %v448
      %v1352 = vunpack.c.l.b16 %v449
      %v1353 = vunpack.c.l.b16 %v450
      %v1354 = vunpack.c.l.b16 %v451
      %v1355 = vunpack.c.l.b16 %v452
      %v1356 = vunpack.c.l.b16 %v453
      %v1357 = vunpack.c.l.b16 %v454
      %v1358 = vunpack.c.l.b16 %v455
      %v1359 = vunpack.c.l.b16 %v456
      %v1360 = vunpack.c.l.b16 %v457
      %v1361 = vunpack.c.l.b16 %v458
      %v1362 = vunpack.c.l.b16 %v459
      %v1363 = vunpack.c.l.b16 %v460
      %v1364 = vunpack.c.l.b16 %v461
      %v1365 = vunpack.c.l.b16 %v462
      %v1366 = vunpack.c.l.b16 %v463
      %v1367 = vunpack.c.l.b16 %v464
      %v1368 = vunpack.c.l.b16 %v465
      %v1369 = vunpack.c.l.b16 %v466
      %v1370 = vunpack.c.l.b16 %v467
      %v1371 = vunpack.c.l.b16 %v468
      %v1372 = vunpack.c.l.b16 %v469
      %v1373 = vunpack.c.l.b16 %v470
      %v1374 = vunpack.c.l.b16 %v471
      %v1375 = vunpack.c.l.b16 %v472
      %v1376 = vunpack.c.l.b16 %v473
      %v1377 = vunpack.c.l.b16 %v474
      %v1378 = vunpack.c.l.b16 %v475
      %v1379 = vunpack.c.l.b16 %v476
      %v1380 = vunpack.c.l.b16 %v477
      %v1381 = vunpack.c.l.b16 %v478
      %v1382 = vunpack.c.l.b16 %v479
      %v1383 = vunpack.c.l.b16 %v480
      %v1384 = vunpack.c.l.b16 %v481
      %v1385 = vunpack.c.l.b16 %v482
      %v1386 = vunpack.c.l.b16 %v483
      %v1387 = vunpack.c.l.b16 %v484
      %v1388 = vpack.c.b16 %v1261, %v1260
      %v1389 = vpack.c.b16 %v1263, %v1262
      %v1390 = vpack.c.b16 %v1265, %v1264
      %v1391 = vpack.c.b16 %v1267, %v1266
      %v1392 = vpack.c.b16 %v1269, %v1268
      %v1393 = vpack.c.b16 %v1271, %v1270
      %v1394 = vpack.c.b16 %v1273, %v1272
      %v1395 = vpack.c.b16 %v1275, %v1274
      %v1396 = vpack.c.b16 %v1277, %v1276
      %v1397 = vpack.c.b16 %v1279, %v1278
      %v1398 = vpack.c.b16 %v1281, %v1280
      %v1399 = vpack.c.b16 %v1283, %v1282
      %v1400 = vpack.c.b16 %v1285, %v1284
      %v1401 = vpack.c.b16 %v1287, %v1286
      %v1402 = vpack.c.b16 %v1289, %v1288
      %v1403 = vpack.c.b16 %v1291, %v1290
      %v1404 = vpack.c.b16 %v1293, %v1292
      %v1405 = vpack.c.b16 %v1295, %v1294
      %v1406 = vpack.c.b16 %v1297, %v1296
      %v1407 = vpack.c.b16 %v1299, %v1298
      %v1408 = vpack.c.b16 %v1301, %v1300
      %v1409 = vpack.c.b16 %v1303, %v1302
      %v1410 = vpack.c.b16 %v1305, %v1304
      %v1411 = vpack.c.b16 %v1307, %v1306
      %v1412 = vpack.c.b16 %v1309, %v1308
      %v1413 = vpack.c.b16 %v1311, %v1310
      %v1414 = vpack.c.b16 %v1313, %v1312
      %v1415 = vpack.c.b16 %v1315, %v1314
      %v1416 = vpack.c.b16 %v1317, %v1316
      %v1417 = vpack.c.b16 %v1319, %v1318
      %v1418 = vpack.c.b16 %v1321, %v1320
      %v1419 = vpack.c.b16 %v1323, %v1322
      %v1420 = vpack.c.b16 %v1325, %v1324
      %v1421 = vpack.c.b16 %v1327, %v1326
      %v1422 = vpack.c.b16 %v1329, %v1328
      %v1423 = vpack.c.b16 %v1331, %v1330
      %v1424 = vpack.c.b16 %v1333, %v1332
      %v1425 = vpack.c.b16 %v1335, %v1334
      %v1426 = vpack.c.b16 %v1337, %v1336
      %v1427 = vpack.c.b16 %v1339, %v1338
      %v1428 = vpack.c.b16 %v1341, %v1340
      %v1429 = vpack.c.b16 %v1343, %v1342
      %v1430 = vpack.c.b16 %v1345, %v1344
      %v1431 = vpack.c.b16 %v1347, %v1346
      %v1432 = vpack.c.b16 %v1349, %v1348
      %v1433 = vpack.c.b16 %v1351, %v1350
      %v1434 = vpack.c.b16 %v1353, %v1352
      %v1435 = vpack.c.b16 %v1355, %v1354
      %v1436 = vpack.c.b16 %v1357, %v1356
      %v1437 = vpack.c.b16 %v1359, %v1358
      %v1438 = vpack.c.b16 %v1361, %v1360
      %v1439 = vpack.c.b16 %v1363, %v1362
      %v1440 = vpack.c.b16 %v1365, %v1364
      %v1441 = vpack.c.b16 %v1367, %v1366
      %v1442 = vpack.c.b16 %v1369, %v1368
      %v1443 = vpack.c.b16 %v1371, %v1370
      %v1444 = vpack.c.b16 %v1373, %v1372
      %v1445 = vpack.c.b16 %v1375, %v1374
      %v1446 = vpack.c.b16 %v1377, %v1376
      %v1447 = vpack.c.b16 %v1379, %v1378
      %v1448 = vpack.c.b16 %v1381, %v1380
      %v1449 = vpack.c.b16 %v1383, %v1382
      %v1450 = vpack.c.b16 %v1385, %v1384
      %v1451 = vpack.c.b16 %v1387, %v1386
      %1516 = vmatprep.subr.bf16.mxu0 0
      %1517 = vmatpush1.bf16.msra.mxu0 %v1395
      %1518 = vmatprep.subr.bf16.mxu0 0
      %1519 = vmatpush1.bf16.msra.mxu0 %v1394
      %1520 = vmatprep.subr.bf16.mxu0 0
      %1521 = vmatpush1.bf16.msra.mxu0 %v1393
      %1522 = vmatprep.subr.bf16.mxu0 0
      %1523 = vmatpush1.bf16.msra.mxu0 %v1392
      %1524 = vmatprep.subr.bf16.mxu0 0
      %1525 = vmatpush1.bf16.msra.mxu0 %v1391
      %1526 = vmatprep.subr.bf16.mxu0 0
      %1527 = vmatpush1.bf16.msra.mxu0 %v1390
      %1528 = vmatprep.subr.bf16.mxu0 0
      %1529 = vmatpush1.bf16.msra.mxu0 %v1389
      %1530 = vmatprep.subr.bf16.mxu0 0
      %1531 = vmatpush1.bf16.msra.mxu0 %v1388
      %1532 = vmatprep.subr.bf16.mxu0 0
      %1533 = vmatpush2.bf16.msra.mxu0 %v1403
      %1534 = vmatprep.subr.bf16.mxu0 0
      %1535 = vmatpush2.bf16.msra.mxu0 %v1402
      %1536 = vmatprep.subr.bf16.mxu0 0
      %1537 = vmatpush2.bf16.msra.mxu0 %v1401
      %1538 = vmatprep.subr.bf16.mxu0 0
      %1539 = vmatpush2.bf16.msra.mxu0 %v1400
      %1540 = vmatprep.subr.bf16.mxu0 0
      %1541 = vmatpush2.bf16.msra.mxu0 %v1399
      %1542 = vmatprep.subr.bf16.mxu0 0
      %1543 = vmatpush2.bf16.msra.mxu0 %v1398
      %1544 = vmatprep.subr.bf16.mxu0 0
      %1545 = vmatpush2.bf16.msra.mxu0 %v1397
      %1546 = vmatprep.subr.bf16.mxu0 0
      %1547 = vmatpush2.bf16.msra.mxu0 %v1396
      %1548 = vmatprep.mubr.bf16.mxu0 %v877
      %1549 = vmatmul.mubr.bf16.gmra.mxu0 %v876
      %v1550 = vpop.f32.mrf.mxu0
      %v1551 = vadd.f32 %v490, %v1550
      %v1552 = vpop.f32.mrf.mxu0
      %v1553 = vpop.f32.mrf.mxu0
      %v1554 = vadd.f32 %v490, %v1553
      %v1555 = vpop.f32.mrf.mxu0
      %1556 = vmatprep.mubr.bf16.mxu0 %v885
      %1557 = vmatmul.mubr.bf16.gmra.mxu0 %v884
      %v1558 = vpop.f32.mrf.mxu0
      %v1559 = vadd.f32 %v490, %v1558
      %v1560 = vpop.f32.mrf.mxu0
      %v1561 = vpop.f32.mrf.mxu0
      %v1562 = vadd.f32 %v490, %v1561
      %v1563 = vpop.f32.mrf.mxu0
      %1564 = vmatprep.mubr.bf16.mxu0 %v893
      %1565 = vmatmul.mubr.bf16.gmra.mxu0 %v892
      %v1566 = vpop.f32.mrf.mxu0
      %v1567 = vadd.f32 %v490, %v1566
      %v1568 = vpop.f32.mrf.mxu0
      %v1569 = vpop.f32.mrf.mxu0
      %v1570 = vadd.f32 %v490, %v1569
      %v1571 = vpop.f32.mrf.mxu0
      %1572 = vmatprep.mubr.bf16.mxu0 %v901
      %1573 = vmatmul.mubr.bf16.gmra.mxu0 %v900
      %v1574 = vpop.f32.mrf.mxu0
      %v1575 = vadd.f32 %v490, %v1574
      %v1576 = vpop.f32.mrf.mxu0
      %v1577 = vpop.f32.mrf.mxu0
      %v1578 = vadd.f32 %v490, %v1577
      %v1579 = vpop.f32.mrf.mxu0
      %1580 = vmatprep.mubr.bf16.mxu0 %v909
      %1581 = vmatmul.mubr.bf16.gmra.mxu0 %v908
      %v1582 = vpop.f32.mrf.mxu0
      %v1583 = vadd.f32 %v490, %v1582
      %v1584 = vpop.f32.mrf.mxu0
      %v1585 = vpop.f32.mrf.mxu0
      %v1586 = vadd.f32 %v490, %v1585
      %v1587 = vpop.f32.mrf.mxu0
      %1588 = vmatprep.mubr.bf16.mxu0 %v917
      %1589 = vmatmul.mubr.bf16.gmra.mxu0 %v916
      %v1590 = vpop.f32.mrf.mxu0
      %v1591 = vadd.f32 %v490, %v1590
      %v1592 = vpop.f32.mrf.mxu0
      %v1593 = vpop.f32.mrf.mxu0
      %v1594 = vadd.f32 %v490, %v1593
      %v1595 = vpop.f32.mrf.mxu0
      %1596 = vmatprep.mubr.bf16.mxu0 %v925
      %1597 = vmatmul.mubr.bf16.gmra.mxu0 %v924
      %v1598 = vpop.f32.mrf.mxu0
      %v1599 = vadd.f32 %v490, %v1598
      %v1600 = vpop.f32.mrf.mxu0
      %v1601 = vpop.f32.mrf.mxu0
      %v1602 = vadd.f32 %v490, %v1601
      %v1603 = vpop.f32.mrf.mxu0
      %1604 = vmatprep.mubr.bf16.mxu0 %v933
      %1605 = vmatmul.mubr.bf16.gmra.mxu0 %v932
      %v1606 = vpop.f32.mrf.mxu0
      %v1607 = vadd.f32 %v490, %v1606
      %v1608 = vpop.f32.mrf.mxu0
      %v1609 = vpop.f32.mrf.mxu0
      %v1610 = vadd.f32 %v490, %v1609
      %v1611 = vpop.f32.mrf.mxu0
      %1612 = vmatprep.mubr.bf16.mxu0 %v941
      %1613 = vmatmul.mubr.bf16.gmra.mxu0 %v940
      %v1614 = vpop.f32.mrf.mxu0
      %v1615 = vadd.f32 %v490, %v1614
      %v1616 = vpop.f32.mrf.mxu0
      %v1617 = vpop.f32.mrf.mxu0
      %v1618 = vadd.f32 %v490, %v1617
      %v1619 = vpop.f32.mrf.mxu0
      %1620 = vmatprep.mubr.bf16.mxu0 %v949
      %1621 = vmatmul.mubr.bf16.gmra.mxu0 %v948
      %v1622 = vpop.f32.mrf.mxu0
      %v1623 = vadd.f32 %v490, %v1622
      %v1624 = vpop.f32.mrf.mxu0
      %v1625 = vpop.f32.mrf.mxu0
      %v1626 = vadd.f32 %v490, %v1625
      %v1627 = vpop.f32.mrf.mxu0
      %1628 = vmatprep.mubr.bf16.mxu0 %v957
      %1629 = vmatmul.mubr.bf16.gmra.mxu0 %v956
      %v1630 = vpop.f32.mrf.mxu0
      %v1631 = vadd.f32 %v490, %v1630
      %v1632 = vpop.f32.mrf.mxu0
      %v1633 = vpop.f32.mrf.mxu0
      %v1634 = vadd.f32 %v490, %v1633
      %v1635 = vpop.f32.mrf.mxu0
      %1636 = vmatprep.mubr.bf16.mxu0 %v965
      %1637 = vmatmul.mubr.bf16.gmra.mxu0 %v964
      %v1638 = vpop.f32.mrf.mxu0
      %v1639 = vadd.f32 %v490, %v1638
      %v1640 = vpop.f32.mrf.mxu0
      %v1641 = vpop.f32.mrf.mxu0
      %v1642 = vadd.f32 %v490, %v1641
      %v1643 = vpop.f32.mrf.mxu0
      %1644 = vmatprep.mubr.bf16.mxu0 %v973
      %1645 = vmatmul.mubr.bf16.gmra.mxu0 %v972
      %v1646 = vpop.f32.mrf.mxu0
      %v1647 = vadd.f32 %v490, %v1646
      %v1648 = vpop.f32.mrf.mxu0
      %v1649 = vpop.f32.mrf.mxu0
      %v1650 = vadd.f32 %v490, %v1649
      %v1651 = vpop.f32.mrf.mxu0
      %1652 = vmatprep.mubr.bf16.mxu0 %v981
      %1653 = vmatmul.mubr.bf16.gmra.mxu0 %v980
      %v1654 = vpop.f32.mrf.mxu0
      %v1655 = vadd.f32 %v490, %v1654
      %v1656 = vpop.f32.mrf.mxu0
      %v1657 = vpop.f32.mrf.mxu0
      %v1658 = vadd.f32 %v490, %v1657
      %v1659 = vpop.f32.mrf.mxu0
      %1660 = vmatprep.mubr.bf16.mxu0 %v989
      %1661 = vmatmul.mubr.bf16.gmra.mxu0 %v988
      %v1662 = vpop.f32.mrf.mxu0
      %v1663 = vadd.f32 %v490, %v1662
      %v1664 = vpop.f32.mrf.mxu0
      %v1665 = vpop.f32.mrf.mxu0
      %v1666 = vadd.f32 %v490, %v1665
      %v1667 = vpop.f32.mrf.mxu0
      %1668 = vmatprep.mubr.bf16.mxu0 %v997
      %1669 = vmatmul.mubr.bf16.gmra.mxu0 %v996
      %v1670 = vpop.f32.mrf.mxu0
      %v1671 = vadd.f32 %v490, %v1670
      %v1672 = vpop.f32.mrf.mxu0
      %v1673 = vpop.f32.mrf.mxu0
      %v1674 = vadd.f32 %v490, %v1673
      %v1675 = vpop.f32.mrf.mxu0
      %1676 = vdwg.mxu0
      %1677 = vmatprep.subr.bf16.mxu0 0
      %1678 = vmatpush1.bf16.msra.mxu0 %v1411
      %1679 = vmatprep.subr.bf16.mxu0 0
      %1680 = vmatpush1.bf16.msra.mxu0 %v1410
      %1681 = vmatprep.subr.bf16.mxu0 0
      %1682 = vmatpush1.bf16.msra.mxu0 %v1409
      %1683 = vmatprep.subr.bf16.mxu0 0
      %1684 = vmatpush1.bf16.msra.mxu0 %v1408
      %1685 = vmatprep.subr.bf16.mxu0 0
      %1686 = vmatpush1.bf16.msra.mxu0 %v1407
      %1687 = vmatprep.subr.bf16.mxu0 0
      %1688 = vmatpush1.bf16.msra.mxu0 %v1406
      %1689 = vmatprep.subr.bf16.mxu0 0
      %1690 = vmatpush1.bf16.msra.mxu0 %v1405
      %1691 = vmatprep.subr.bf16.mxu0 0
      %1692 = vmatpush1.bf16.msra.mxu0 %v1404
      %1693 = vmatprep.subr.bf16.mxu0 0
      %1694 = vmatpush2.bf16.msra.mxu0 %v1419
      %1695 = vmatprep.subr.bf16.mxu0 0
      %1696 = vmatpush2.bf16.msra.mxu0 %v1418
      %1697 = vmatprep.subr.bf16.mxu0 0
      %1698 = vmatpush2.bf16.msra.mxu0 %v1417
      %1699 = vmatprep.subr.bf16.mxu0 0
      %1700 = vmatpush2.bf16.msra.mxu0 %v1416
      %1701 = vmatprep.subr.bf16.mxu0 0
      %1702 = vmatpush2.bf16.msra.mxu0 %v1415
      %1703 = vmatprep.subr.bf16.mxu0 0
      %1704 = vmatpush2.bf16.msra.mxu0 %v1414
      %1705 = vmatprep.subr.bf16.mxu0 0
      %1706 = vmatpush2.bf16.msra.mxu0 %v1413
      %1707 = vmatprep.subr.bf16.mxu0 0
      %1708 = vmatpush2.bf16.msra.mxu0 %v1412
      %1709 = vmatprep.mubr.bf16.mxu0 %v879
      %1710 = vmatmul.mubr.bf16.gmra.mxu0 %v878
      %v1711 = vpop.f32.mrf.mxu0
      %v1712 = vadd.f32 %v1551, %v1711
      %v1713 = vpop.f32.mrf.mxu0
      %v1714 = vpop.f32.mrf.mxu0
      %v1715 = vadd.f32 %v1554, %v1714
      %v1716 = vpop.f32.mrf.mxu0
      %1717 = vmatprep.mubr.bf16.mxu0 %v887
      %1718 = vmatmul.mubr.bf16.gmra.mxu0 %v886
      %v1719 = vpop.f32.mrf.mxu0
      %v1720 = vadd.f32 %v1559, %v1719
      %v1721 = vpop.f32.mrf.mxu0
      %v1722 = vpop.f32.mrf.mxu0
      %v1723 = vadd.f32 %v1562, %v1722
      %v1724 = vpop.f32.mrf.mxu0
      %1725 = vmatprep.mubr.bf16.mxu0 %v895
      %1726 = vmatmul.mubr.bf16.gmra.mxu0 %v894
      %v1727 = vpop.f32.mrf.mxu0
      %v1728 = vadd.f32 %v1567, %v1727
      %v1729 = vpop.f32.mrf.mxu0
      %v1730 = vpop.f32.mrf.mxu0
      %v1731 = vadd.f32 %v1570, %v1730
      %v1732 = vpop.f32.mrf.mxu0
      %1733 = vmatprep.mubr.bf16.mxu0 %v903
      %1734 = vmatmul.mubr.bf16.gmra.mxu0 %v902
      %v1735 = vpop.f32.mrf.mxu0
      %v1736 = vadd.f32 %v1575, %v1735
      %v1737 = vpop.f32.mrf.mxu0
      %v1738 = vpop.f32.mrf.mxu0
      %v1739 = vadd.f32 %v1578, %v1738
      %v1740 = vpop.f32.mrf.mxu0
      %1741 = vmatprep.mubr.bf16.mxu0 %v911
      %1742 = vmatmul.mubr.bf16.gmra.mxu0 %v910
      %v1743 = vpop.f32.mrf.mxu0
      %v1744 = vadd.f32 %v1583, %v1743
      %v1745 = vpop.f32.mrf.mxu0
      %v1746 = vpop.f32.mrf.mxu0
      %v1747 = vadd.f32 %v1586, %v1746
      %v1748 = vpop.f32.mrf.mxu0
      %1749 = vmatprep.mubr.bf16.mxu0 %v919
      %1750 = vmatmul.mubr.bf16.gmra.mxu0 %v918
      %v1751 = vpop.f32.mrf.mxu0
      %v1752 = vadd.f32 %v1591, %v1751
      %v1753 = vpop.f32.mrf.mxu0
      %v1754 = vpop.f32.mrf.mxu0
      %v1755 = vadd.f32 %v1594, %v1754
      %v1756 = vpop.f32.mrf.mxu0
      %1757 = vmatprep.mubr.bf16.mxu0 %v927
      %1758 = vmatmul.mubr.bf16.gmra.mxu0 %v926
      %v1759 = vpop.f32.mrf.mxu0
      %v1760 = vadd.f32 %v1599, %v1759
      %v1761 = vpop.f32.mrf.mxu0
      %v1762 = vpop.f32.mrf.mxu0
      %v1763 = vadd.f32 %v1602, %v1762
      %v1764 = vpop.f32.mrf.mxu0
      %1765 = vmatprep.mubr.bf16.mxu0 %v935
      %1766 = vmatmul.mubr.bf16.gmra.mxu0 %v934
      %v1767 = vpop.f32.mrf.mxu0
      %v1768 = vadd.f32 %v1607, %v1767
      %v1769 = vpop.f32.mrf.mxu0
      %v1770 = vpop.f32.mrf.mxu0
      %v1771 = vadd.f32 %v1610, %v1770
      %v1772 = vpop.f32.mrf.mxu0
      %1773 = vmatprep.mubr.bf16.mxu0 %v943
      %1774 = vmatmul.mubr.bf16.gmra.mxu0 %v942
      %v1775 = vpop.f32.mrf.mxu0
      %v1776 = vadd.f32 %v1615, %v1775
      %v1777 = vpop.f32.mrf.mxu0
      %v1778 = vpop.f32.mrf.mxu0
      %v1779 = vadd.f32 %v1618, %v1778
      %v1780 = vpop.f32.mrf.mxu0
      %1781 = vmatprep.mubr.bf16.mxu0 %v951
      %1782 = vmatmul.mubr.bf16.gmra.mxu0 %v950
      %v1783 = vpop.f32.mrf.mxu0
      %v1784 = vadd.f32 %v1623, %v1783
      %v1785 = vpop.f32.mrf.mxu0
      %v1786 = vpop.f32.mrf.mxu0
      %v1787 = vadd.f32 %v1626, %v1786
      %v1788 = vpop.f32.mrf.mxu0
      %1789 = vmatprep.mubr.bf16.mxu0 %v959
      %1790 = vmatmul.mubr.bf16.gmra.mxu0 %v958
      %v1791 = vpop.f32.mrf.mxu0
      %v1792 = vadd.f32 %v1631, %v1791
      %v1793 = vpop.f32.mrf.mxu0
      %v1794 = vpop.f32.mrf.mxu0
      %v1795 = vadd.f32 %v1634, %v1794
      %v1796 = vpop.f32.mrf.mxu0
      %1797 = vmatprep.mubr.bf16.mxu0 %v967
      %1798 = vmatmul.mubr.bf16.gmra.mxu0 %v966
      %v1799 = vpop.f32.mrf.mxu0
      %v1800 = vadd.f32 %v1639, %v1799
      %v1801 = vpop.f32.mrf.mxu0
      %v1802 = vpop.f32.mrf.mxu0
      %v1803 = vadd.f32 %v1642, %v1802
      %v1804 = vpop.f32.mrf.mxu0
      %1805 = vmatprep.mubr.bf16.mxu0 %v975
      %1806 = vmatmul.mubr.bf16.gmra.mxu0 %v974
      %v1807 = vpop.f32.mrf.mxu0
      %v1808 = vadd.f32 %v1647, %v1807
      %v1809 = vpop.f32.mrf.mxu0
      %v1810 = vpop.f32.mrf.mxu0
      %v1811 = vadd.f32 %v1650, %v1810
      %v1812 = vpop.f32.mrf.mxu0
      %1813 = vmatprep.mubr.bf16.mxu0 %v983
      %1814 = vmatmul.mubr.bf16.gmra.mxu0 %v982
      %v1815 = vpop.f32.mrf.mxu0
      %v1816 = vadd.f32 %v1655, %v1815
      %v1817 = vpop.f32.mrf.mxu0
      %v1818 = vpop.f32.mrf.mxu0
      %v1819 = vadd.f32 %v1658, %v1818
      %v1820 = vpop.f32.mrf.mxu0
      %1821 = vmatprep.mubr.bf16.mxu0 %v991
      %1822 = vmatmul.mubr.bf16.gmra.mxu0 %v990
      %v1823 = vpop.f32.mrf.mxu0
      %v1824 = vadd.f32 %v1663, %v1823
      %v1825 = vpop.f32.mrf.mxu0
      %v1826 = vpop.f32.mrf.mxu0
      %v1827 = vadd.f32 %v1666, %v1826
      %v1828 = vpop.f32.mrf.mxu0
      %1829 = vmatprep.mubr.bf16.mxu0 %v999
      %1830 = vmatmul.mubr.bf16.gmra.mxu0 %v998
      %v1831 = vpop.f32.mrf.mxu0
      %v1832 = vadd.f32 %v1671, %v1831
      %v1833 = vpop.f32.mrf.mxu0
      %v1834 = vpop.f32.mrf.mxu0
      %v1835 = vadd.f32 %v1674, %v1834
      %v1836 = vpop.f32.mrf.mxu0
      %1837 = vdwg.mxu0
      %1838 = vmatprep.subr.bf16.mxu0 0
      %1839 = vmatpush1.bf16.msra.mxu0 %v1427
      %1840 = vmatprep.subr.bf16.mxu0 0
      %1841 = vmatpush1.bf16.msra.mxu0 %v1426
      %1842 = vmatprep.subr.bf16.mxu0 0
      %1843 = vmatpush1.bf16.msra.mxu0 %v1425
      %1844 = vmatprep.subr.bf16.mxu0 0
      %1845 = vmatpush1.bf16.msra.mxu0 %v1424
      %1846 = vmatprep.subr.bf16.mxu0 0
      %1847 = vmatpush1.bf16.msra.mxu0 %v1423
      %1848 = vmatprep.subr.bf16.mxu0 0
      %1849 = vmatpush1.bf16.msra.mxu0 %v1422
      %1850 = vmatprep.subr.bf16.mxu0 0
      %1851 = vmatpush1.bf16.msra.mxu0 %v1421
      %1852 = vmatprep.subr.bf16.mxu0 0
      %1853 = vmatpush1.bf16.msra.mxu0 %v1420
      %1854 = vmatprep.subr.bf16.mxu0 0
      %1855 = vmatpush2.bf16.msra.mxu0 %v1435
      %1856 = vmatprep.subr.bf16.mxu0 0
      %1857 = vmatpush2.bf16.msra.mxu0 %v1434
      %1858 = vmatprep.subr.bf16.mxu0 0
      %1859 = vmatpush2.bf16.msra.mxu0 %v1433
      %1860 = vmatprep.subr.bf16.mxu0 0
      %1861 = vmatpush2.bf16.msra.mxu0 %v1432
      %1862 = vmatprep.subr.bf16.mxu0 0
      %1863 = vmatpush2.bf16.msra.mxu0 %v1431
      %1864 = vmatprep.subr.bf16.mxu0 0
      %1865 = vmatpush2.bf16.msra.mxu0 %v1430
      %1866 = vmatprep.subr.bf16.mxu0 0
      %1867 = vmatpush2.bf16.msra.mxu0 %v1429
      %1868 = vmatprep.subr.bf16.mxu0 0
      %1869 = vmatpush2.bf16.msra.mxu0 %v1428
      %1870 = vmatprep.mubr.bf16.mxu0 %v881
      %1871 = vmatmul.mubr.bf16.gmra.mxu0 %v880
      %v1872 = vpop.f32.mrf.mxu0
      %v1873 = vadd.f32 %v1712, %v1872
      %v1874 = vpop.f32.mrf.mxu0
      %v1875 = vpop.f32.mrf.mxu0
      %v1876 = vadd.f32 %v1715, %v1875
      %v1877 = vpop.f32.mrf.mxu0
      %1878 = vmatprep.mubr.bf16.mxu0 %v889
      %1879 = vmatmul.mubr.bf16.gmra.mxu0 %v888
      %v1880 = vpop.f32.mrf.mxu0
      %v1881 = vadd.f32 %v1720, %v1880
      %v1882 = vpop.f32.mrf.mxu0
      %v1883 = vpop.f32.mrf.mxu0
      %v1884 = vadd.f32 %v1723, %v1883
      %v1885 = vpop.f32.mrf.mxu0
      %1886 = vmatprep.mubr.bf16.mxu0 %v897
      %1887 = vmatmul.mubr.bf16.gmra.mxu0 %v896
      %v1888 = vpop.f32.mrf.mxu0
      %v1889 = vadd.f32 %v1728, %v1888
      %v1890 = vpop.f32.mrf.mxu0
      %v1891 = vpop.f32.mrf.mxu0
      %v1892 = vadd.f32 %v1731, %v1891
      %v1893 = vpop.f32.mrf.mxu0
      %1894 = vmatprep.mubr.bf16.mxu0 %v905
      %1895 = vmatmul.mubr.bf16.gmra.mxu0 %v904
      %v1896 = vpop.f32.mrf.mxu0
      %v1897 = vadd.f32 %v1736, %v1896
      %v1898 = vpop.f32.mrf.mxu0
      %v1899 = vpop.f32.mrf.mxu0
      %v1900 = vadd.f32 %v1739, %v1899
      %v1901 = vpop.f32.mrf.mxu0
      %1902 = vmatprep.mubr.bf16.mxu0 %v913
      %1903 = vmatmul.mubr.bf16.gmra.mxu0 %v912
      %v1904 = vpop.f32.mrf.mxu0
      %v1905 = vadd.f32 %v1744, %v1904
      %v1906 = vpop.f32.mrf.mxu0
      %v1907 = vpop.f32.mrf.mxu0
      %v1908 = vadd.f32 %v1747, %v1907
      %v1909 = vpop.f32.mrf.mxu0
      %1910 = vmatprep.mubr.bf16.mxu0 %v921
      %1911 = vmatmul.mubr.bf16.gmra.mxu0 %v920
      %v1912 = vpop.f32.mrf.mxu0
      %v1913 = vadd.f32 %v1752, %v1912
      %v1914 = vpop.f32.mrf.mxu0
      %v1915 = vpop.f32.mrf.mxu0
      %v1916 = vadd.f32 %v1755, %v1915
      %v1917 = vpop.f32.mrf.mxu0
      %1918 = vmatprep.mubr.bf16.mxu0 %v929
      %1919 = vmatmul.mubr.bf16.gmra.mxu0 %v928
      %v1920 = vpop.f32.mrf.mxu0
      %v1921 = vadd.f32 %v1760, %v1920
      %v1922 = vpop.f32.mrf.mxu0
      %v1923 = vpop.f32.mrf.mxu0
      %v1924 = vadd.f32 %v1763, %v1923
      %v1925 = vpop.f32.mrf.mxu0
      %1926 = vmatprep.mubr.bf16.mxu0 %v937
      %1927 = vmatmul.mubr.bf16.gmra.mxu0 %v936
      %v1928 = vpop.f32.mrf.mxu0
      %v1929 = vadd.f32 %v1768, %v1928
      %v1930 = vpop.f32.mrf.mxu0
      %v1931 = vpop.f32.mrf.mxu0
      %v1932 = vadd.f32 %v1771, %v1931
      %v1933 = vpop.f32.mrf.mxu0
      %1934 = vmatprep.mubr.bf16.mxu0 %v945
      %1935 = vmatmul.mubr.bf16.gmra.mxu0 %v944
      %v1936 = vpop.f32.mrf.mxu0
      %v1937 = vadd.f32 %v1776, %v1936
      %v1938 = vpop.f32.mrf.mxu0
      %v1939 = vpop.f32.mrf.mxu0
      %v1940 = vadd.f32 %v1779, %v1939
      %v1941 = vpop.f32.mrf.mxu0
      %1942 = vmatprep.mubr.bf16.mxu0 %v953
      %1943 = vmatmul.mubr.bf16.gmra.mxu0 %v952
      %v1944 = vpop.f32.mrf.mxu0
      %v1945 = vadd.f32 %v1784, %v1944
      %v1946 = vpop.f32.mrf.mxu0
      %v1947 = vpop.f32.mrf.mxu0
      %v1948 = vadd.f32 %v1787, %v1947
      %v1949 = vpop.f32.mrf.mxu0
      %1950 = vmatprep.mubr.bf16.mxu0 %v961
      %1951 = vmatmul.mubr.bf16.gmra.mxu0 %v960
      %v1952 = vpop.f32.mrf.mxu0
      %v1953 = vadd.f32 %v1792, %v1952
      %v1954 = vpop.f32.mrf.mxu0
      %v1955 = vpop.f32.mrf.mxu0
      %v1956 = vadd.f32 %v1795, %v1955
      %v1957 = vpop.f32.mrf.mxu0
      %1958 = vmatprep.mubr.bf16.mxu0 %v969
      %1959 = vmatmul.mubr.bf16.gmra.mxu0 %v968
      %v1960 = vpop.f32.mrf.mxu0
      %v1961 = vadd.f32 %v1800, %v1960
      %v1962 = vpop.f32.mrf.mxu0
      %v1963 = vpop.f32.mrf.mxu0
      %v1964 = vadd.f32 %v1803, %v1963
      %v1965 = vpop.f32.mrf.mxu0
      %1966 = vmatprep.mubr.bf16.mxu0 %v977
      %1967 = vmatmul.mubr.bf16.gmra.mxu0 %v976
      %v1968 = vpop.f32.mrf.mxu0
      %v1969 = vadd.f32 %v1808, %v1968
      %v1970 = vpop.f32.mrf.mxu0
      %v1971 = vpop.f32.mrf.mxu0
      %v1972 = vadd.f32 %v1811, %v1971
      %v1973 = vpop.f32.mrf.mxu0
      %1974 = vmatprep.mubr.bf16.mxu0 %v985
      %1975 = vmatmul.mubr.bf16.gmra.mxu0 %v984
      %v1976 = vpop.f32.mrf.mxu0
      %v1977 = vadd.f32 %v1816, %v1976
      %v1978 = vpop.f32.mrf.mxu0
      %v1979 = vpop.f32.mrf.mxu0
      %v1980 = vadd.f32 %v1819, %v1979
      %v1981 = vpop.f32.mrf.mxu0
      %1982 = vmatprep.mubr.bf16.mxu0 %v993
      %1983 = vmatmul.mubr.bf16.gmra.mxu0 %v992
      %v1984 = vpop.f32.mrf.mxu0
      %v1985 = vadd.f32 %v1824, %v1984
      %v1986 = vpop.f32.mrf.mxu0
      %v1987 = vpop.f32.mrf.mxu0
      %v1988 = vadd.f32 %v1827, %v1987
      %v1989 = vpop.f32.mrf.mxu0
      %1990 = vmatprep.mubr.bf16.mxu0 %v1001
      %1991 = vmatmul.mubr.bf16.gmra.mxu0 %v1000
      %v1992 = vpop.f32.mrf.mxu0
      %v1993 = vadd.f32 %v1832, %v1992
      %v1994 = vpop.f32.mrf.mxu0
      %v1995 = vpop.f32.mrf.mxu0
      %v1996 = vadd.f32 %v1835, %v1995
      %v1997 = vpop.f32.mrf.mxu0
      %1998 = vdwg.mxu0
      %1999 = vmatprep.subr.bf16.mxu0 0
      %2000 = vmatpush1.bf16.msra.mxu0 %v1443
      %2001 = vmatprep.subr.bf16.mxu0 0
      %2002 = vmatpush1.bf16.msra.mxu0 %v1442
      %2003 = vmatprep.subr.bf16.mxu0 0
      %2004 = vmatpush1.bf16.msra.mxu0 %v1441
      %2005 = vmatprep.subr.bf16.mxu0 0
      %2006 = vmatpush1.bf16.msra.mxu0 %v1440
      %2007 = vmatprep.subr.bf16.mxu0 0
      %2008 = vmatpush1.bf16.msra.mxu0 %v1439
      %2009 = vmatprep.subr.bf16.mxu0 0
      %2010 = vmatpush1.bf16.msra.mxu0 %v1438
      %2011 = vmatprep.subr.bf16.mxu0 0
      %2012 = vmatpush1.bf16.msra.mxu0 %v1437
      %2013 = vmatprep.subr.bf16.mxu0 0
      %2014 = vmatpush1.bf16.msra.mxu0 %v1436
      %2015 = vmatprep.subr.bf16.mxu0 0
      %2016 = vmatpush2.bf16.msra.mxu0 %v1451
      %2017 = vmatprep.subr.bf16.mxu0 0
      %2018 = vmatpush2.bf16.msra.mxu0 %v1450
      %2019 = vmatprep.subr.bf16.mxu0 0
      %2020 = vmatpush2.bf16.msra.mxu0 %v1449
      %2021 = vmatprep.subr.bf16.mxu0 0
      %2022 = vmatpush2.bf16.msra.mxu0 %v1448
      %2023 = vmatprep.subr.bf16.mxu0 0
      %2024 = vmatpush2.bf16.msra.mxu0 %v1447
      %2025 = vmatprep.subr.bf16.mxu0 0
      %2026 = vmatpush2.bf16.msra.mxu0 %v1446
      %2027 = vmatprep.subr.bf16.mxu0 0
      %2028 = vmatpush2.bf16.msra.mxu0 %v1445
      %2029 = vmatprep.subr.bf16.mxu0 0
      %2030 = vmatpush2.bf16.msra.mxu0 %v1444
      %2031 = vmatprep.mubr.bf16.mxu0 %v883
      %2032 = vmatmul.mubr.bf16.gmra.mxu0 %v882
      %v2033 = vpop.f32.mrf.mxu0
      %v2034 = vadd.f32 %v1873, %v2033
      %v2035 = vpop.f32.mrf.mxu0
      %v2036 = vpop.f32.mrf.mxu0
      %v2037 = vadd.f32 %v1876, %v2036
      %v2038 = vpop.f32.mrf.mxu0
      %2039 = vmatprep.mubr.bf16.mxu0 %v891
      %2040 = vmatmul.mubr.bf16.gmra.mxu0 %v890
      %v2041 = vpop.f32.mrf.mxu0
      %v2042 = vadd.f32 %v1881, %v2041
      %v2043 = vpop.f32.mrf.mxu0
      %v2044 = vpop.f32.mrf.mxu0
      %v2045 = vadd.f32 %v1884, %v2044
      %v2046 = vpop.f32.mrf.mxu0
      %2047 = vmatprep.mubr.bf16.mxu0 %v899
      %2048 = vmatmul.mubr.bf16.gmra.mxu0 %v898
      %v2049 = vpop.f32.mrf.mxu0
      %v2050 = vadd.f32 %v1889, %v2049
      %v2051 = vpop.f32.mrf.mxu0
      %v2052 = vpop.f32.mrf.mxu0
      %v2053 = vadd.f32 %v1892, %v2052
      %v2054 = vpop.f32.mrf.mxu0
      %2055 = vmatprep.mubr.bf16.mxu0 %v907
      %2056 = vmatmul.mubr.bf16.gmra.mxu0 %v906
      %v2057 = vpop.f32.mrf.mxu0
      %v2058 = vadd.f32 %v1897, %v2057
      %v2059 = vpop.f32.mrf.mxu0
      %v2060 = vpop.f32.mrf.mxu0
      %v2061 = vadd.f32 %v1900, %v2060
      %v2062 = vpop.f32.mrf.mxu0
      %2063 = vmatprep.mubr.bf16.mxu0 %v915
      %2064 = vmatmul.mubr.bf16.gmra.mxu0 %v914
      %v2065 = vpop.f32.mrf.mxu0
      %v2066 = vadd.f32 %v1905, %v2065
      %v2067 = vpop.f32.mrf.mxu0
      %v2068 = vpop.f32.mrf.mxu0
      %v2069 = vadd.f32 %v1908, %v2068
      %v2070 = vpop.f32.mrf.mxu0
      %2071 = vmatprep.mubr.bf16.mxu0 %v923
      %2072 = vmatmul.mubr.bf16.gmra.mxu0 %v922
      %v2073 = vpop.f32.mrf.mxu0
      %v2074 = vadd.f32 %v1913, %v2073
      %v2075 = vpop.f32.mrf.mxu0
      %v2076 = vpop.f32.mrf.mxu0
      %v2077 = vadd.f32 %v1916, %v2076
      %v2078 = vpop.f32.mrf.mxu0
      %2079 = vmatprep.mubr.bf16.mxu0 %v931
      %2080 = vmatmul.mubr.bf16.gmra.mxu0 %v930
      %v2081 = vpop.f32.mrf.mxu0
      %v2082 = vadd.f32 %v1921, %v2081
      %v2083 = vpop.f32.mrf.mxu0
      %v2084 = vpop.f32.mrf.mxu0
      %v2085 = vadd.f32 %v1924, %v2084
      %v2086 = vpop.f32.mrf.mxu0
      %2087 = vmatprep.mubr.bf16.mxu0 %v939
      %2088 = vmatmul.mubr.bf16.gmra.mxu0 %v938
      %v2089 = vpop.f32.mrf.mxu0
      %v2090 = vadd.f32 %v1929, %v2089
      %v2091 = vpop.f32.mrf.mxu0
      %v2092 = vpop.f32.mrf.mxu0
      %v2093 = vadd.f32 %v1932, %v2092
      %v2094 = vpop.f32.mrf.mxu0
      %2095 = vmatprep.mubr.bf16.mxu0 %v947
      %2096 = vmatmul.mubr.bf16.gmra.mxu0 %v946
      %v2097 = vpop.f32.mrf.mxu0
      %v2098 = vadd.f32 %v1937, %v2097
      %v2099 = vpop.f32.mrf.mxu0
      %v2100 = vpop.f32.mrf.mxu0
      %v2101 = vadd.f32 %v1940, %v2100
      %v2102 = vpop.f32.mrf.mxu0
      %2103 = vmatprep.mubr.bf16.mxu0 %v955
      %2104 = vmatmul.mubr.bf16.gmra.mxu0 %v954
      %v2105 = vpop.f32.mrf.mxu0
      %v2106 = vadd.f32 %v1945, %v2105
      %v2107 = vpop.f32.mrf.mxu0
      %v2108 = vpop.f32.mrf.mxu0
      %v2109 = vadd.f32 %v1948, %v2108
      %v2110 = vpop.f32.mrf.mxu0
      %2111 = vmatprep.mubr.bf16.mxu0 %v963
      %2112 = vmatmul.mubr.bf16.gmra.mxu0 %v962
      %v2113 = vpop.f32.mrf.mxu0
      %v2114 = vadd.f32 %v1953, %v2113
      %v2115 = vpop.f32.mrf.mxu0
      %v2116 = vpop.f32.mrf.mxu0
      %v2117 = vadd.f32 %v1956, %v2116
      %v2118 = vpop.f32.mrf.mxu0
      %2119 = vmatprep.mubr.bf16.mxu0 %v971
      %2120 = vmatmul.mubr.bf16.gmra.mxu0 %v970
      %v2121 = vpop.f32.mrf.mxu0
      %v2122 = vadd.f32 %v1961, %v2121
      %v2123 = vpop.f32.mrf.mxu0
      %v2124 = vpop.f32.mrf.mxu0
      %v2125 = vadd.f32 %v1964, %v2124
      %v2126 = vpop.f32.mrf.mxu0
      %2127 = vmatprep.mubr.bf16.mxu0 %v979
      %2128 = vmatmul.mubr.bf16.gmra.mxu0 %v978
      %v2129 = vpop.f32.mrf.mxu0
      %v2130 = vadd.f32 %v1969, %v2129
      %v2131 = vpop.f32.mrf.mxu0
      %v2132 = vpop.f32.mrf.mxu0
      %v2133 = vadd.f32 %v1972, %v2132
      %v2134 = vpop.f32.mrf.mxu0
      %2135 = vmatprep.mubr.bf16.mxu0 %v987
      %2136 = vmatmul.mubr.bf16.gmra.mxu0 %v986
      %v2137 = vpop.f32.mrf.mxu0
      %v2138 = vadd.f32 %v1977, %v2137
      %v2139 = vpop.f32.mrf.mxu0
      %v2140 = vpop.f32.mrf.mxu0
      %v2141 = vadd.f32 %v1980, %v2140
      %v2142 = vpop.f32.mrf.mxu0
      %2143 = vmatprep.mubr.bf16.mxu0 %v995
      %2144 = vmatmul.mubr.bf16.gmra.mxu0 %v994
      %v2145 = vpop.f32.mrf.mxu0
      %v2146 = vadd.f32 %v1985, %v2145
      %v2147 = vpop.f32.mrf.mxu0
      %v2148 = vpop.f32.mrf.mxu0
      %v2149 = vadd.f32 %v1988, %v2148
      %v2150 = vpop.f32.mrf.mxu0
      %2151 = vmatprep.mubr.bf16.mxu0 %v1003
      %2152 = vmatmul.mubr.bf16.gmra.mxu0 %v1002
      %v2153 = vpop.f32.mrf.mxu0
      %v2154 = vadd.f32 %v1993, %v2153
      %v2155 = vpop.f32.mrf.mxu0
      %v2156 = vpop.f32.mrf.mxu0
      %v2157 = vadd.f32 %v1996, %v2156
      %v2158 = vpop.f32.mrf.mxu0
      %2159 = vdwg.mxu0
      %v2160 = vmax.f32 %v2034, 0.0
      %v2161 = vmax.f32 %v2037, 0.0
      %v2162 = vmax.f32 %v2042, 0.0
      %v2163 = vmax.f32 %v2045, 0.0
      %v2164 = vmax.f32 %v2050, 0.0
      %v2165 = vmax.f32 %v2053, 0.0
      %v2166 = vmax.f32 %v2058, 0.0
      %v2167 = vmax.f32 %v2061, 0.0
      %v2168 = vmax.f32 %v2066, 0.0
      %v2169 = vmax.f32 %v2069, 0.0
      %v2170 = vmax.f32 %v2074, 0.0
      %v2171 = vmax.f32 %v2077, 0.0
      %v2172 = vmax.f32 %v2082, 0.0
      %v2173 = vmax.f32 %v2085, 0.0
      %v2174 = vmax.f32 %v2090, 0.0
      %v2175 = vmax.f32 %v2093, 0.0
      %v2176 = vmax.f32 %v2098, 0.0
      %v2177 = vmax.f32 %v2101, 0.0
      %v2178 = vmax.f32 %v2106, 0.0
      %v2179 = vmax.f32 %v2109, 0.0
      %v2180 = vmax.f32 %v2114, 0.0
      %v2181 = vmax.f32 %v2117, 0.0
      %v2182 = vmax.f32 %v2122, 0.0
      %v2183 = vmax.f32 %v2125, 0.0
      %v2184 = vmax.f32 %v2130, 0.0
      %v2185 = vmax.f32 %v2133, 0.0
      %v2186 = vmax.f32 %v2138, 0.0
      %v2187 = vmax.f32 %v2141, 0.0
      %v2188 = vmax.f32 %v2146, 0.0
      %v2189 = vmax.f32 %v2149, 0.0
      %v2190 = vmax.f32 %v2154, 0.0
      %v2191 = vmax.f32 %v2157, 0.0
      %v2192 = vpack.c.bf16 %v2161, %v2160
      %v2193 = vpack.c.bf16 %v2163, %v2162
      %v2194 = vpack.c.bf16 %v2165, %v2164
      %v2195 = vpack.c.bf16 %v2167, %v2166
      %v2196 = vpack.c.bf16 %v2169, %v2168
      %v2197 = vpack.c.bf16 %v2171, %v2170
      %v2198 = vpack.c.bf16 %v2173, %v2172
      %v2199 = vpack.c.bf16 %v2175, %v2174
      %v2200 = vpack.c.bf16 %v2177, %v2176
      %v2201 = vpack.c.bf16 %v2179, %v2178
      %v2202 = vpack.c.bf16 %v2181, %v2180
      %v2203 = vpack.c.bf16 %v2183, %v2182
      %v2204 = vpack.c.bf16 %v2185, %v2184
      %v2205 = vpack.c.bf16 %v2187, %v2186
      %v2206 = vpack.c.bf16 %v2189, %v2188
      %v2207 = vpack.c.bf16 %v2191, %v2190
      %v2224 = vunpack.c.l.b16 %v2192
      %v2225 = vunpack.c.h.b16 %v2192
      %v2226 = vunpack.c.l.b16 %v2193
      %v2227 = vunpack.c.h.b16 %v2193
      %v2228 = vunpack.c.l.b16 %v2194
      %v2229 = vunpack.c.h.b16 %v2194
      %v2230 = vunpack.c.l.b16 %v2195
      %v2231 = vunpack.c.h.b16 %v2195
      %v2232 = vunpack.c.l.b16 %v2196
      %v2233 = vunpack.c.h.b16 %v2196
      %v2234 = vunpack.c.l.b16 %v2197
      %v2235 = vunpack.c.h.b16 %v2197
      %v2236 = vunpack.c.l.b16 %v2198
      %v2237 = vunpack.c.h.b16 %v2198
      %v2238 = vunpack.c.l.b16 %v2199
      %v2239 = vunpack.c.h.b16 %v2199
      %v2240 = vunpack.c.l.b16 %v2200
      %v2241 = vunpack.c.h.b16 %v2200
      %v2242 = vunpack.c.l.b16 %v2201
      %v2243 = vunpack.c.h.b16 %v2201
      %v2244 = vunpack.c.l.b16 %v2202
      %v2245 = vunpack.c.h.b16 %v2202
      %v2246 = vunpack.c.l.b16 %v2203
      %v2247 = vunpack.c.h.b16 %v2203
      %v2248 = vunpack.c.l.b16 %v2204
      %v2249 = vunpack.c.h.b16 %v2204
      %v2250 = vunpack.c.l.b16 %v2205
      %v2251 = vunpack.c.h.b16 %v2205
      %v2252 = vunpack.c.l.b16 %v2206
      %v2253 = vunpack.c.h.b16 %v2206
      %v2254 = vunpack.c.l.b16 %v2207
      %v2255 = vunpack.c.h.b16 %v2207
      %v2256 = vpack.c.b16 %v2224, %v2224
      %v2257 = vpack.c.b16 %v2225, %v2225
      %v2258 = vpack.c.b16 %v2226, %v2226
      %v2259 = vpack.c.b16 %v2227, %v2227
      %v2260 = vpack.c.b16 %v2228, %v2228
      %v2261 = vpack.c.b16 %v2229, %v2229
      %v2262 = vpack.c.b16 %v2230, %v2230
      %v2263 = vpack.c.b16 %v2231, %v2231
      %v2264 = vpack.c.b16 %v2232, %v2232
      %v2265 = vpack.c.b16 %v2233, %v2233
      %v2266 = vpack.c.b16 %v2234, %v2234
      %v2267 = vpack.c.b16 %v2235, %v2235
      %v2268 = vpack.c.b16 %v2236, %v2236
      %v2269 = vpack.c.b16 %v2237, %v2237
      %v2270 = vpack.c.b16 %v2238, %v2238
      %v2271 = vpack.c.b16 %v2239, %v2239
      %v2272 = vpack.c.b16 %v2240, %v2240
      %v2273 = vpack.c.b16 %v2241, %v2241
      %v2274 = vpack.c.b16 %v2242, %v2242
      %v2275 = vpack.c.b16 %v2243, %v2243
      %v2276 = vpack.c.b16 %v2244, %v2244
      %v2277 = vpack.c.b16 %v2245, %v2245
      %v2278 = vpack.c.b16 %v2246, %v2246
      %v2279 = vpack.c.b16 %v2247, %v2247
      %v2280 = vpack.c.b16 %v2248, %v2248
      %v2281 = vpack.c.b16 %v2249, %v2249
      %v2282 = vpack.c.b16 %v2250, %v2250
      %v2283 = vpack.c.b16 %v2251, %v2251
      %v2284 = vpack.c.b16 %v2252, %v2252
      %v2285 = vpack.c.b16 %v2253, %v2253
      %v2286 = vpack.c.b16 %v2254, %v2254
      %v2287 = vpack.c.b16 %v2255, %v2255
      %2320 = vst [vmem:[%s226] sm:$0xf] %v2256
      %2321 = vst [vmem:[%s226 + $0x4] sm:$0xf] %v2257
      %2322 = vst [vmem:[%s226 + $0x8] sm:$0xf] %v2258
      %2323 = vst [vmem:[%s226 + $0xc] sm:$0xf] %v2259
      %2324 = vst [vmem:[%s226 + $0x10] sm:$0xf] %v2260
      %2325 = vst [vmem:[%s226 + $0x14] sm:$0xf] %v2261
      %2326 = vst [vmem:[%s226 + $0x18] sm:$0xf] %v2262
      %2327 = vst [vmem:[%s226 + $0x1c] sm:$0xf] %v2263
      %2328 = vst [vmem:[%s226 + $0x20] sm:$0xf] %v2264
      %2329 = vst [vmem:[%s226 + $0x24] sm:$0xf] %v2265
      %2330 = vst [vmem:[%s226 + $0x28] sm:$0xf] %v2266
      %2331 = vst [vmem:[%s226 + $0x2c] sm:$0xf] %v2267
      %2332 = vst [vmem:[%s226 + $0x30] sm:$0xf] %v2268
      %2333 = vst [vmem:[%s226 + $0x34] sm:$0xf] %v2269
      %2334 = vst [vmem:[%s226 + $0x38] sm:$0xf] %v2270
      %2335 = vst [vmem:[%s226 + $0x3c] sm:$0xf] %v2271
      %2336 = vst [vmem:[%s226 + $0x40] sm:$0xf] %v2272
      %2337 = vst [vmem:[%s226 + $0x44] sm:$0xf] %v2273
      %2338 = vst [vmem:[%s226 + $0x48] sm:$0xf] %v2274
      %2339 = vst [vmem:[%s226 + $0x4c] sm:$0xf] %v2275
      %2340 = vst [vmem:[%s226 + $0x50] sm:$0xf] %v2276
      %2341 = vst [vmem:[%s226 + $0x54] sm:$0xf] %v2277
      %2342 = vst [vmem:[%s226 + $0x58] sm:$0xf] %v2278
      %2343 = vst [vmem:[%s226 + $0x5c] sm:$0xf] %v2279
      %2344 = vst [vmem:[%s226 + $0x60] sm:$0xf] %v2280
      %2345 = vst [vmem:[%s226 + $0x64] sm:$0xf] %v2281
      %2346 = vst [vmem:[%s226 + $0x68] sm:$0xf] %v2282
      %2347 = vst [vmem:[%s226 + $0x6c] sm:$0xf] %v2283
      %2348 = vst [vmem:[%s226 + $0x70] sm:$0xf] %v2284
      %2349 = vst [vmem:[%s226 + $0x74] sm:$0xf] %v2285
      %2350 = vst [vmem:[%s226 + $0x78] sm:$0xf] %v2286
      %2351 = vst [vmem:[%s226 + $0x7c] sm:$0xf] %v2287
      %s2352 = smul.u32 32, %s18
      %p2353 = scmp.lt.s32.totalorder %s2352, 63
      %s2354 = scalar_select %p2353, %s2352, 63
      %p2355 = scmp.lt.s32.totalorder %s19, 0
      %s2356 = scalar_select %p2355, %s19, 0
      %s2357 = sadd.s32 %s2356, %s2354
      %s2358 = smul.addr %s2357, 4
      %s2359 = scalar_lea.vmem %s3, %s2358
      // Predicated region
      $region33: #{decoder_forward.4} parent=31 // pred_check
        %p2360 = pneg %p124
      $region34: #{decoder_forward.4} parent=31 // pred_check_branch
        %2362 = sbr.rel (%p2360) target = $region36
      $region35: #{decoder_forward.4} parent=31 // pred_region
        %s2363 = smul.u32 32, %s18
      $region36: #{decoder_forward.4} parent=31 // pred_fallthru
        _
    $region32: #{decoder_forward.4} parent=5 // pred_fallthru
      _
    %p2364 = scmp.le.s32.totalorder 2, %s9
    // Predicated region
    $region37: #{decoder_forward.4} parent=5 // pred_check
      %p2365 = pneg %p2364
    $region38: #{decoder_forward.4} parent=5 // pred_check_branch
      %2367 = sbr.rel (%p2365) target = $region40
    $region39: #{decoder_forward.4} parent=5 // pred_region
      %s2368 = ssub.s32 %s9, 2
      // Predicated region
      $region41: #{decoder_forward.4} parent=39 // pred_check
        %p2369 = pneg %p130
      $region42: #{decoder_forward.4} parent=39 // pred_check_branch
        %2371 = sbr.rel (%p2369) target = $region44
      $region43: #{decoder_forward.4} parent=39 // pred_region
        %s2372 = smul.u32 32, %s20
        %p2373 = scmp.lt.s32.totalorder %s2372, 63
        %s2374 = scalar_select %p2373, %s2372, 63
        %p2375 = scmp.lt.s32.totalorder %s21, 0
        %s2376 = scalar_select %p2375, %s21, 0
        %s2377 = sadd.s32 %s2376, %s2374
        %s2378 = smul.addr %s2377, 4
        %s2379 = scalar_lea.vmem %s3, %s2378
      $region44: #{decoder_forward.4} parent=39 // pred_fallthru
        _
    $region40: #{decoder_forward.4} parent=5 // pred_fallthru
      _
  $region6: #{decoder_forward.4} parent=0 // loop_footer
    %s13 = sadd.s32 1, %s9
  $region7: #{decoder_forward.4} parent=0 // loop_footer_branch
    %8 = sbr.rel target = $region3
  $region8: #{decoder_forward.4} parent=0 // loop_exit
    _

// kernel: decoder_forward.5
$region0: #{decoder_forward.5}
  #allocation0 [shape = 'u32[]', space=smem, size = 0x4, offset = 0x4, fixed_abs, tag = 'smem constant byte address 0x4 - core index']
  #allocation1 [shape = 'u32[144,128]{1,0:T(1,128)}', space=vmem, size = 0x12000, scoped, tag = 'internal scratch']
  #allocation2 [shape = 'f32[2,100]{1,0:T(2,128)}', space=vmem, size = 0x400, scoped, tag = 'scratch operand']
  %s0 = inlined_call_operand.vmem [shape: bf16[2,32768], index: 0, kind: input, shape index: {}]
  %s1 = inlined_call_operand.vmem [shape: bf16[32768,100], index: 1, kind: input, shape index: {}]
  %s2 = inlined_call_operand.vmem [shape: f32[1,100], index: 2, kind: input, shape index: {}]
  %s3 = inlined_call_operand.hbm [shape: f32[2,100], index: 3, kind: output, shape index: {}]
  %s4 = sld [smem:[#allocation0]]
  $region53: #{decoder_forward.5} parent=0
    _
  %s6 = ssub.s32 1, %s4
  %s7 = scalar_select 0, %s6, %s4
  $region1: #{decoder_forward.5} parent=0
    #allocation3 [shape = 'u8[1024]{0}', space=vmem, size = 0x400, scoped, tag = 'output window, operand 0, single buffered']
    #allocation4 [shape = 's32[2]{0}', space=sflag, size = 0x8, scoped, tag = 'scoped memory for decoder_forward.5']
    %8 = vsyncpa [#allocation4], 0
    loop: start=0, step=1, limit=6
    $region2: #{decoder_forward.5} parent=1 // loop_pre_header
      _
    $region3: #{decoder_forward.5} parent=1 // loop_header
      %s10 = sphi 0, %s14
      %p11 = scmp.ge.s32.totalorder %s10, 6
      %s17 = sphi 0, %s36
      %s18 = sphi 0, %s32
      %s19 = sphi 0, %s28
      %s20 = sphi 0, %s17
      %s21 = sphi 0, %s18
      %s22 = sphi 0, %s19
      %s23 = sphi 0, %s20
      %s24 = sphi 0, %s21
      %s25 = sphi 0, %s22
      %s41 = sphi 0, %s43
      %s44 = sphi 0, %s41
      %s45 = sphi 0, %s44
      %s61 = sphi 0, %s45
      %s69 = sphi 0, %s71
      %s72 = sphi 0, %s69
      %s73 = sphi 0, %s72
      %s89 = sphi 0, %s73
      %s95 = sphi 0, %s97
      %s98 = sphi 0, %s95
      %s99 = sphi 0, %s98
      %s115 = sphi 0, %s99
      %s123 = sphi 0, %s125
      %s126 = sphi 0, %s123
      %s127 = sphi 0, %s126
      %s143 = sphi 0, %s127
    $region4: #{decoder_forward.5} parent=1 // loop_header_branch
      %13 = sbr.rel (%p11) target = $region8
    $region5: #{decoder_forward.5} parent=1 // loop_body
      %s15 = ssub.s32 %s10, 1
      %s16 = ssub.s32 %s10, 2
      %s26 = sadd.s32 1, %s19
      %p27 = scmp.ge.s32.totalorder %s26, 4
      %s28 = scalar_select %p27, 0, %s26
      %s29 = sadd.s32 1, %s18
      %s30 = scalar_select %p27, %s29, %s18
      %p31 = scmp.ge.s32.totalorder %s30, 1
      %s32 = scalar_select %p31, 0, %s30
      %s33 = sadd.s32 1, %s17
      %s34 = scalar_select %p31, %s33, %s17
      %p35 = scmp.ge.s32.totalorder %s34, 1
      %s36 = scalar_select %p35, 0, %s34
      %s37 = ssub.s32 %s17, %s36
      %s38 = ssub.s32 %s19, %s28
      %s39 = sor.u32 %s37, %s38
      %p40 = scmp.eq.s32.totalorder %s39, 0
      %s42 = sadd.s32 %s41, 1
      %s43 = scalar_select %p40, %s41, %s42
      %p46 = pneg %p40
      %p47 = scmp.eq.s32.totalorder %s10, 3
      %p48 = por %p46, %p47
      %p49 = scmp.ne.s32.totalorder %s41, %s44
      %p50 = scmp.eq.s32.totalorder %s10, 0
      %p51 = por %p49, %p50
      %p52 = scmp.ne.s32.totalorder %s41, %s44
      %p53 = scmp.eq.s32.totalorder %s15, 3
      %p54 = por %p52, %p53
      %p55 = scmp.ne.s32.totalorder %s44, %s45
      %p56 = scmp.eq.s32.totalorder %s15, 0
      %p57 = por %p55, %p56
      %p58 = scmp.ne.s32.totalorder %s44, %s45
      %p59 = scmp.eq.s32.totalorder %s16, 3
      %p60 = por %p58, %p59
      %p62 = scmp.ne.s32.totalorder %s45, %s61
      %p63 = scmp.eq.s32.totalorder %s16, 0
      %p64 = por %p62, %p63
      %s65 = ssub.s32 %s19, %s28
      %s66 = ssub.s32 %s18, %s32
      %s67 = sor.u32 %s65, %s66
      %p68 = scmp.eq.s32.totalorder %s67, 0
      %s70 = sadd.s32 %s69, 1
      %s71 = scalar_select %p68, %s69, %s70
      %p74 = pneg %p68
      %p75 = scmp.eq.s32.totalorder %s10, 3
      %p76 = por %p74, %p75
      %p77 = scmp.ne.s32.totalorder %s69, %s72
      %p78 = scmp.eq.s32.totalorder %s10, 0
      %p79 = por %p77, %p78
      %p80 = scmp.ne.s32.totalorder %s69, %s72
      %p81 = scmp.eq.s32.totalorder %s15, 3
      %p82 = por %p80, %p81
      %p83 = scmp.ne.s32.totalorder %s72, %s73
      %p84 = scmp.eq.s32.totalorder %s15, 0
      %p85 = por %p83, %p84
      %p86 = scmp.ne.s32.totalorder %s72, %s73
      %p87 = scmp.eq.s32.totalorder %s16, 3
      %p88 = por %p86, %p87
      %p90 = scmp.ne.s32.totalorder %s73, %s89
      %p91 = scmp.eq.s32.totalorder %s16, 0
      %p92 = por %p90, %p91
      %s93 = ssub.s32 %s18, %s32
      %p94 = scmp.eq.s32.totalorder %s93, 0
      %s96 = sadd.s32 %s95, 1
      %s97 = scalar_select %p94, %s95, %s96
      %p100 = pneg %p94
      %p101 = scmp.eq.s32.totalorder %s10, 3
      %p102 = por %p100, %p101
      %p103 = scmp.ne.s32.totalorder %s95, %s98
      %p104 = scmp.eq.s32.totalorder %s10, 0
      %p105 = por %p103, %p104
      %p106 = scmp.ne.s32.totalorder %s95, %s98
      %p107 = scmp.eq.s32.totalorder %s15, 3
      %p108 = por %p106, %p107
      %p109 = scmp.ne.s32.totalorder %s98, %s99
      %p110 = scmp.eq.s32.totalorder %s15, 0
      %p111 = por %p109, %p110
      %p112 = scmp.ne.s32.totalorder %s98, %s99
      %p113 = scmp.eq.s32.totalorder %s16, 3
      %p114 = por %p112, %p113
      %p116 = scmp.ne.s32.totalorder %s99, %s115
      %p117 = scmp.eq.s32.totalorder %s16, 0
      %p118 = por %p116, %p117
      %s119 = ssub.s32 %s17, %s36
      %s120 = ssub.s32 %s18, %s32
      %s121 = sor.u32 %s119, %s120
      %p122 = scmp.eq.s32.totalorder %s121, 0
      %s124 = sadd.s32 %s123, 1
      %s125 = scalar_select %p122, %s123, %s124
      %p128 = pneg %p122
      %p129 = scmp.eq.s32.totalorder %s10, 3
      %p130 = por %p128, %p129
      %p131 = scmp.ne.s32.totalorder %s123, %s126
      %p132 = scmp.eq.s32.totalorder %s10, 0
      %p133 = por %p131, %p132
      %p134 = scmp.ne.s32.totalorder %s123, %s126
      %p135 = scmp.eq.s32.totalorder %s15, 3
      %p136 = por %p134, %p135
      %p137 = scmp.ne.s32.totalorder %s126, %s127
      %p138 = scmp.eq.s32.totalorder %s15, 0
      %p139 = por %p137, %p138
      %p140 = scmp.ne.s32.totalorder %s126, %s127
      %p141 = scmp.eq.s32.totalorder %s16, 3
      %p142 = por %p140, %p141
      %p144 = scmp.ne.s32.totalorder %s127, %s143
      %p145 = scmp.eq.s32.totalorder %s16, 0
      %p146 = por %p144, %p145
      %p147 = scmp.le.s32.totalorder 1, %s10
      %p148 = scmp.lt.s32.totalorder %s10, 5
      %p149 = pnand %p147, %p148
      %p150 = pneg %p149
      // Predicated region
      $region9: #{decoder_forward.5} parent=5 // pred_check
        _
      $region10: #{decoder_forward.5} parent=5 // pred_check_branch
        %152 = sbr.rel (%p149) target = $region12
      $region11: #{decoder_forward.5} parent=5 // pred_region
        %s153 = ssub.s32 %s10, 1
        // Predicated region
        $region13: #{decoder_forward.5} parent=11 // pred_check
          %p154 = pneg %p111
        $region14: #{decoder_forward.5} parent=11 // pred_check_branch
          %156 = sbr.rel (%p154) target = $region16
        $region15: #{decoder_forward.5} parent=11 // pred_region
          %p157 = scmp.lt.s32.totalorder %s21, 0
          %s158 = scalar_select %p157, %s21, 0
          %s159 = scalar_lea.vmem %s2, %s158
        $region16: #{decoder_forward.5} parent=11 // pred_fallthru
          _
      $region12: #{decoder_forward.5} parent=5 // pred_fallthru
        _
      %p160 = scmp.lt.s32.totalorder %s10, 4
      // Predicated region
      $region17: #{decoder_forward.5} parent=5 // pred_check
        %p161 = pneg %p160
      $region18: #{decoder_forward.5} parent=5 // pred_check_branch
        %163 = sbr.rel (%p161) target = $region20
      $region19: #{decoder_forward.5} parent=5 // pred_region
        // Predicated region
        $region21: #{decoder_forward.5} parent=19 // pred_check
          %p164 = pneg %p51
        $region22: #{decoder_forward.5} parent=19 // pred_check_branch
          %166 = sbr.rel (%p164) target = $region24
        $region23: #{decoder_forward.5} parent=19 // pred_region
          %s167 = smul.u32 64, %s19
          %p168 = scmp.lt.s32.totalorder %s17, 0
          %s169 = scalar_select %p168, %s17, 0
          %p170 = scmp.lt.s32.totalorder %s167, 255
          %s171 = scalar_select %p170, %s167, 255
          %s172 = smul.addr %s169, 256
          %s173 = sadd.s32 %s171, %s172
          %s174 = scalar_lea.vmem %s0, %s173
          %s175 = smul.u32 64, %s19
        $region24: #{decoder_forward.5} parent=19 // pred_fallthru
          _
        // Predicated region
        $region25: #{decoder_forward.5} parent=19 // pred_check
          %p176 = pneg %p79
        $region26: #{decoder_forward.5} parent=19 // pred_check_branch
          %178 = sbr.rel (%p176) target = $region28
        $region27: #{decoder_forward.5} parent=19 // pred_region
          %s179 = smul.u32 1024, %s19
          %p180 = scmp.lt.s32.totalorder %s179, 4095
          %s181 = scalar_select %p180, %s179, 4095
          %p182 = scmp.lt.s32.totalorder %s18, 0
          %s183 = scalar_select %p182, %s18, 0
          %s184 = sadd.s32 %s183, %s181
          %s185 = smul.addr %s184, 4
          %s186 = scalar_lea.vmem %s1, %s185
          %s187 = smul.u32 1024, %s19
        $region28: #{decoder_forward.5} parent=19 // pred_fallthru
          _
      $region20: #{decoder_forward.5} parent=5 // pred_fallthru
        _
      %p188 = scmp.le.s32.totalorder 1, %s10
      %p189 = scmp.lt.s32.totalorder %s10, 5
      %p190 = pnand %p188, %p189
      %p191 = pneg %p190
      // Predicated region
      $region29: #{decoder_forward.5} parent=5 // pred_check
        _
      $region30: #{decoder_forward.5} parent=5 // pred_check_branch
        %193 = sbr.rel (%p190) target = $region32
      $region31: #{decoder_forward.5} parent=5 // pred_region
        %s194 = ssub.s32 %s10, 1
        %s195 = smul.u32 64, %s22
        %p196 = scmp.lt.s32.totalorder %s20, 0
        %s197 = scalar_select %p196, %s20, 0
        %p198 = scmp.lt.s32.totalorder %s195, 255
        %s199 = scalar_select %p198, %s195, 255
        %s200 = smul.addr %s197, 256
        %s201 = sadd.s32 %s199, %s200
        %s202 = scalar_lea.vmem %s0, %s201
        %p203 = pneg %p57
        %p204 = pneg %p54
        %s205 = smul.u32 1024, %s22
        %p206 = scmp.lt.s32.totalorder %s205, 4095
        %s207 = scalar_select %p206, %s205, 4095
        %p208 = scmp.lt.s32.totalorder %s21, 0
        %s209 = scalar_select %p208, %s21, 0
        %s210 = sadd.s32 %s209, %s207
        %s211 = smul.addr %s210, 4
        %s212 = scalar_lea.vmem %s1, %s211
        %p213 = pneg %p85
        %p214 = pneg %p82
        %p215 = scmp.lt.s32.totalorder %s21, 0
        %s216 = scalar_select %p215, %s21, 0
        %s217 = scalar_lea.vmem %s2, %s216
        %p218 = pneg %p111
        %p219 = pneg %p108
        %p220 = pneg %p139
        %p221 = pneg %p136
        %s222 = smul.u32 64, %s22
        %p223 = scmp.lt.s32.totalorder %s20, 0
        %s224 = scalar_select %p223, %s20, 0
        %p225 = scmp.lt.s32.totalorder %s222, 255
        %s226 = scalar_select %p225, %s222, 255
        %s227 = smul.addr %s224, 256
        %s228 = sadd.s32 %s226, %s227
        %s229 = scalar_lea.vmem %s0, %s228
        %s230 = smul.u32 64, %s22
        %s231 = smul.u32 1024, %s22
        %p232 = scmp.lt.s32.totalorder %s231, 4095
        %s233 = scalar_select %p232, %s231, 4095
        %p234 = scmp.lt.s32.totalorder %s21, 0
        %s235 = scalar_select %p234, %s21, 0
        %s236 = sadd.s32 %s235, %s233
        %s237 = smul.addr %s236, 4
        %s238 = scalar_lea.vmem %s1, %s237
        %s239 = smul.u32 1024, %s22
        %p240 = scmp.lt.s32.totalorder %s21, 0
        %s241 = scalar_select %p240, %s21, 0
        %s242 = scalar_lea.vmem %s2, %s241
        %p244 = scmp.eq.s32.totalorder %s22, 0
        // Predicated region
        $region33: #{decoder_forward.5} parent=31 // pred_check
          %p245 = pneg %p244
        $region34: #{decoder_forward.5} parent=31 // pred_check_branch
          %247 = sbr.rel (%p245) target = $region36
        $region35: #{decoder_forward.5} parent=31 // pred_region
          %vm248 = vcmask 812032
          %249 = vst.msk [vmem:[#allocation2] sm:$0x3] %vm248, 0.0
        $region36: #{decoder_forward.5} parent=31 // pred_fallthru
          _
        %v250 = vld [vmem:[#allocation2] sm:$0x3]
        %v251 = vld [vmem:[%s229] sm:$0xff]
        %v252 = vld [vmem:[%s229 + $0x8] sm:$0xff]
        %v253 = vld [vmem:[%s229 + $0x10] sm:$0xff]
        %v254 = vld [vmem:[%s229 + $0x18] sm:$0xff]
        %v255 = vld [vmem:[%s229 + $0x20] sm:$0xff]
        %v256 = vld [vmem:[%s229 + $0x28] sm:$0xff]
        %v257 = vld [vmem:[%s229 + $0x30] sm:$0xff]
        %v258 = vld [vmem:[%s229 + $0x38] sm:$0xff]
        %v259 = vld [vmem:[%s238] sm:$0xf]
        %v260 = vld [vmem:[%s238 + $0x4] sm:$0xf]
        %v261 = vld [vmem:[%s238 + $0x8] sm:$0xf]
        %v262 = vld [vmem:[%s238 + $0xc] sm:$0xf]
        %v263 = vld [vmem:[%s238 + $0x10] sm:$0xf]
        %v264 = vld [vmem:[%s238 + $0x14] sm:$0xf]
        %v265 = vld [vmem:[%s238 + $0x18] sm:$0xf]
        %v266 = vld [vmem:[%s238 + $0x1c] sm:$0xf]
        %v267 = vld [vmem:[%s238 + $0x20] sm:$0xf]
        %v268 = vld [vmem:[%s238 + $0x24] sm:$0xf]
        %v269 = vld [vmem:[%s238 + $0x28] sm:$0xf]
        %v270 = vld [vmem:[%s238 + $0x2c] sm:$0xf]
        %v271 = vld [vmem:[%s238 + $0x30] sm:$0xf]
        %v272 = vld [vmem:[%s238 + $0x34] sm:$0xf]
        %v273 = vld [vmem:[%s238 + $0x38] sm:$0xf]
        %v274 = vld [vmem:[%s238 + $0x3c] sm:$0xf]
        %v275 = vld [vmem:[%s238 + $0x40] sm:$0xf]
        %v276 = vld [vmem:[%s238 + $0x44] sm:$0xf]
        %v277 = vld [vmem:[%s238 + $0x48] sm:$0xf]
        %v278 = vld [vmem:[%s238 + $0x4c] sm:$0xf]
        %v279 = vld [vmem:[%s238 + $0x50] sm:$0xf]
        %v280 = vld [vmem:[%s238 + $0x54] sm:$0xf]
        %v281 = vld [vmem:[%s238 + $0x58] sm:$0xf]
        %v282 = vld [vmem:[%s238 + $0x5c] sm:$0xf]
        %v283 = vld [vmem:[%s238 + $0x60] sm:$0xf]
        %v284 = vld [vmem:[%s238 + $0x64] sm:$0xf]
        %v285 = vld [vmem:[%s238 + $0x68] sm:$0xf]
        %v286 = vld [vmem:[%s238 + $0x6c] sm:$0xf]
        %v287 = vld [vmem:[%s238 + $0x70] sm:$0xf]
        %v288 = vld [vmem:[%s238 + $0x74] sm:$0xf]
        %v289 = vld [vmem:[%s238 + $0x78] sm:$0xf]
        %v290 = vld [vmem:[%s238 + $0x7c] sm:$0xf]
        %v291 = vld [vmem:[%s238 + $0x80] sm:$0xf]
        %v292 = vld [vmem:[%s238 + $0x84] sm:$0xf]
        %v293 = vld [vmem:[%s238 + $0x88] sm:$0xf]
        %v294 = vld [vmem:[%s238 + $0x8c] sm:$0xf]
        %v295 = vld [vmem:[%s238 + $0x90] sm:$0xf]
        %v296 = vld [vmem:[%s238 + $0x94] sm:$0xf]
        %v297 = vld [vmem:[%s238 + $0x98] sm:$0xf]
        %v298 = vld [vmem:[%s238 + $0x9c] sm:$0xf]
        %v299 = vld [vmem:[%s238 + $0xa0] sm:$0xf]
        %v300 = vld [vmem:[%s238 + $0xa4] sm:$0xf]
        %v301 = vld [vmem:[%s238 + $0xa8] sm:$0xf]
        %v302 = vld [vmem:[%s238 + $0xac] sm:$0xf]
        %v303 = vld [vmem:[%s238 + $0xb0] sm:$0xf]
        %v304 = vld [vmem:[%s238 + $0xb4] sm:$0xf]
        %v305 = vld [vmem:[%s238 + $0xb8] sm:$0xf]
        %v306 = vld [vmem:[%s238 + $0xbc] sm:$0xf]
        %v307 = vld [vmem:[%s238 + $0xc0] sm:$0xf]
        %v308 = vld [vmem:[%s238 + $0xc4] sm:$0xf]
        %v309 = vld [vmem:[%s238 + $0xc8] sm:$0xf]
        %v310 = vld [vmem:[%s238 + $0xcc] sm:$0xf]
        %v311 = vld [vmem:[%s238 + $0xd0] sm:$0xf]
        %v312 = vld [vmem:[%s238 + $0xd4] sm:$0xf]
        %v313 = vld [vmem:[%s238 + $0xd8] sm:$0xf]
        %v314 = vld [vmem:[%s238 + $0xdc] sm:$0xf]
        %v315 = vld [vmem:[%s238 + $0xe0] sm:$0xf]
        %v316 = vld [vmem:[%s238 + $0xe4] sm:$0xf]
        %v317 = vld [vmem:[%s238 + $0xe8] sm:$0xf]
        %v318 = vld [vmem:[%s238 + $0xec] sm:$0xf]
        %v319 = vld [vmem:[%s238 + $0xf0] sm:$0xf]
        %v320 = vld [vmem:[%s238 + $0xf4] sm:$0xf]
        %v321 = vld [vmem:[%s238 + $0xf8] sm:$0xf]
        %v322 = vld [vmem:[%s238 + $0xfc] sm:$0xf]
        %v323 = vld [vmem:[%s238 + $0x100] sm:$0xf]
        %v324 = vld [vmem:[%s238 + $0x104] sm:$0xf]
        %v325 = vld [vmem:[%s238 + $0x108] sm:$0xf]
        %v326 = vld [vmem:[%s238 + $0x10c] sm:$0xf]
        %v327 = vld [vmem:[%s238 + $0x110] sm:$0xf]
        %v328 = vld [vmem:[%s238 + $0x114] sm:$0xf]
        %v329 = vld [vmem:[%s238 + $0x118] sm:$0xf]
        %v330 = vld [vmem:[%s238 + $0x11c] sm:$0xf]
        %v331 = vld [vmem:[%s238 + $0x120] sm:$0xf]
        %v332 = vld [vmem:[%s238 + $0x124] sm:$0xf]
        %v333 = vld [vmem:[%s238 + $0x128] sm:$0xf]
        %v334 = vld [vmem:[%s238 + $0x12c] sm:$0xf]
        %v335 = vld [vmem:[%s238 + $0x130] sm:$0xf]
        %v336 = vld [vmem:[%s238 + $0x134] sm:$0xf]
        %v337 = vld [vmem:[%s238 + $0x138] sm:$0xf]
        %v338 = vld [vmem:[%s238 + $0x13c] sm:$0xf]
        %v339 = vld [vmem:[%s238 + $0x140] sm:$0xf]
        %v340 = vld [vmem:[%s238 + $0x144] sm:$0xf]
        %v341 = vld [vmem:[%s238 + $0x148] sm:$0xf]
        %v342 = vld [vmem:[%s238 + $0x14c] sm:$0xf]
        %v343 = vld [vmem:[%s238 + $0x150] sm:$0xf]
        %v344 = vld [vmem:[%s238 + $0x154] sm:$0xf]
        %v345 = vld [vmem:[%s238 + $0x158] sm:$0xf]
        %v346 = vld [vmem:[%s238 + $0x15c] sm:$0xf]
        %v347 = vld [vmem:[%s238 + $0x160] sm:$0xf]
        %v348 = vld [vmem:[%s238 + $0x164] sm:$0xf]
        %v349 = vld [vmem:[%s238 + $0x168] sm:$0xf]
        %v350 = vld [vmem:[%s238 + $0x16c] sm:$0xf]
        %v351 = vld [vmem:[%s238 + $0x170] sm:$0xf]
        %v352 = vld [vmem:[%s238 + $0x174] sm:$0xf]
        %v353 = vld [vmem:[%s238 + $0x178] sm:$0xf]
        %v354 = vld [vmem:[%s238 + $0x17c] sm:$0xf]
        %v355 = vld [vmem:[%s238 + $0x180] sm:$0xf]
        %v356 = vld [vmem:[%s238 + $0x184] sm:$0xf]
        %v357 = vld [vmem:[%s238 + $0x188] sm:$0xf]
        %v358 = vld [vmem:[%s238 + $0x18c] sm:$0xf]
        %v359 = vld [vmem:[%s238 + $0x190] sm:$0xf]
        %v360 = vld [vmem:[%s238 + $0x194] sm:$0xf]
        %v361 = vld [vmem:[%s238 + $0x198] sm:$0xf]
        %v362 = vld [vmem:[%s238 + $0x19c] sm:$0xf]
        %v363 = vld [vmem:[%s238 + $0x1a0] sm:$0xf]
        %v364 = vld [vmem:[%s238 + $0x1a4] sm:$0xf]
        %v365 = vld [vmem:[%s238 + $0x1a8] sm:$0xf]
        %v366 = vld [vmem:[%s238 + $0x1ac] sm:$0xf]
        %v367 = vld [vmem:[%s238 + $0x1b0] sm:$0xf]
        %v368 = vld [vmem:[%s238 + $0x1b4] sm:$0xf]
        %v369 = vld [vmem:[%s238 + $0x1b8] sm:$0xf]
        %v370 = vld [vmem:[%s238 + $0x1bc] sm:$0xf]
        %v371 = vld [vmem:[%s238 + $0x1c0] sm:$0xf]
        %v372 = vld [vmem:[%s238 + $0x1c4] sm:$0xf]
        %v373 = vld [vmem:[%s238 + $0x1c8] sm:$0xf]
        %v374 = vld [vmem:[%s238 + $0x1cc] sm:$0xf]
        %v375 = vld [vmem:[%s238 + $0x1d0] sm:$0xf]
        %v376 = vld [vmem:[%s238 + $0x1d4] sm:$0xf]
        %v377 = vld [vmem:[%s238 + $0x1d8] sm:$0xf]
        %v378 = vld [vmem:[%s238 + $0x1dc] sm:$0xf]
        %v379 = vld [vmem:[%s238 + $0x1e0] sm:$0xf]
        %v380 = vld [vmem:[%s238 + $0x1e4] sm:$0xf]
        %v381 = vld [vmem:[%s238 + $0x1e8] sm:$0xf]
        %v382 = vld [vmem:[%s238 + $0x1ec] sm:$0xf]
        %v383 = vld [vmem:[%s238 + $0x1f0] sm:$0xf]
        %v384 = vld [vmem:[%s238 + $0x1f4] sm:$0xf]
        %v385 = vld [vmem:[%s238 + $0x1f8] sm:$0xf]
        %v386 = vld [vmem:[%s238 + $0x1fc] sm:$0xf]
        %v387 = vld [vmem:[%s238 + $0x200] sm:$0xf]
        %v388 = vld [vmem:[%s238 + $0x204] sm:$0xf]
        %v389 = vld [vmem:[%s238 + $0x208] sm:$0xf]
        %v390 = vld [vmem:[%s238 + $0x20c] sm:$0xf]
        %v391 = vld [vmem:[%s238 + $0x210] sm:$0xf]
        %v392 = vld [vmem:[%s238 + $0x214] sm:$0xf]
        %v393 = vld [vmem:[%s238 + $0x218] sm:$0xf]
        %v394 = vld [vmem:[%s238 + $0x21c] sm:$0xf]
        %v395 = vld [vmem:[%s238 + $0x220] sm:$0xf]
        %v396 = vld [vmem:[%s238 + $0x224] sm:$0xf]
        %v397 = vld [vmem:[%s238 + $0x228] sm:$0xf]
        %v398 = vld [vmem:[%s238 + $0x22c] sm:$0xf]
        %v399 = vld [vmem:[%s238 + $0x230] sm:$0xf]
        %v400 = vld [vmem:[%s238 + $0x234] sm:$0xf]
        %v401 = vld [vmem:[%s238 + $0x238] sm:$0xf]
        %v402 = vld [vmem:[%s238 + $0x23c] sm:$0xf]
        %v403 = vld [vmem:[%s238 + $0x240] sm:$0xf]
        %v404 = vld [vmem:[%s238 + $0x244] sm:$0xf]
        %v405 = vld [vmem:[%s238 + $0x248] sm:$0xf]
        %v406 = vld [vmem:[%s238 + $0x24c] sm:$0xf]
        %v407 = vld [vmem:[%s238 + $0x250] sm:$0xf]
        %v408 = vld [vmem:[%s238 + $0x254] sm:$0xf]
        %v409 = vld [vmem:[%s238 + $0x258] sm:$0xf]
        %v410 = vld [vmem:[%s238 + $0x25c] sm:$0xf]
        %v411 = vld [vmem:[%s238 + $0x260] sm:$0xf]
        %v412 = vld [vmem:[%s238 + $0x264] sm:$0xf]
        %v413 = vld [vmem:[%s238 + $0x268] sm:$0xf]
        %v414 = vld [vmem:[%s238 + $0x26c] sm:$0xf]
        %v415 = vld [vmem:[%s238 + $0x270] sm:$0xf]
        %v416 = vld [vmem:[%s238 + $0x274] sm:$0xf]
        %v417 = vld [vmem:[%s238 + $0x278] sm:$0xf]
        %v418 = vld [vmem:[%s238 + $0x27c] sm:$0xf]
        %v419 = vld [vmem:[%s238 + $0x280] sm:$0xf]
        %v420 = vld [vmem:[%s238 + $0x284] sm:$0xf]
        %v421 = vld [vmem:[%s238 + $0x288] sm:$0xf]
        %v422 = vld [vmem:[%s238 + $0x28c] sm:$0xf]
        %v423 = vld [vmem:[%s238 + $0x290] sm:$0xf]
        %v424 = vld [vmem:[%s238 + $0x294] sm:$0xf]
        %v425 = vld [vmem:[%s238 + $0x298] sm:$0xf]
        %v426 = vld [vmem:[%s238 + $0x29c] sm:$0xf]
        %v427 = vld [vmem:[%s238 + $0x2a0] sm:$0xf]
        %v428 = vld [vmem:[%s238 + $0x2a4] sm:$0xf]
        %v429 = vld [vmem:[%s238 + $0x2a8] sm:$0xf]
        %v430 = vld [vmem:[%s238 + $0x2ac] sm:$0xf]
        %v431 = vld [vmem:[%s238 + $0x2b0] sm:$0xf]
        %v432 = vld [vmem:[%s238 + $0x2b4] sm:$0xf]
        %v433 = vld [vmem:[%s238 + $0x2b8] sm:$0xf]
        %v434 = vld [vmem:[%s238 + $0x2bc] sm:$0xf]
        %v435 = vld [vmem:[%s238 + $0x2c0] sm:$0xf]
        %v436 = vld [vmem:[%s238 + $0x2c4] sm:$0xf]
        %v437 = vld [vmem:[%s238 + $0x2c8] sm:$0xf]
        %v438 = vld [vmem:[%s238 + $0x2cc] sm:$0xf]
        %v439 = vld [vmem:[%s238 + $0x2d0] sm:$0xf]
        %v440 = vld [vmem:[%s238 + $0x2d4] sm:$0xf]
        %v441 = vld [vmem:[%s238 + $0x2d8] sm:$0xf]
        %v442 = vld [vmem:[%s238 + $0x2dc] sm:$0xf]
        %v443 = vld [vmem:[%s238 + $0x2e0] sm:$0xf]
        %v444 = vld [vmem:[%s238 + $0x2e4] sm:$0xf]
        %v445 = vld [vmem:[%s238 + $0x2e8] sm:$0xf]
        %v446 = vld [vmem:[%s238 + $0x2ec] sm:$0xf]
        %v447 = vld [vmem:[%s238 + $0x2f0] sm:$0xf]
        %v448 = vld [vmem:[%s238 + $0x2f4] sm:$0xf]
        %v449 = vld [vmem:[%s238 + $0x2f8] sm:$0xf]
        %v450 = vld [vmem:[%s238 + $0x2fc] sm:$0xf]
        %v451 = vld [vmem:[%s238 + $0x300] sm:$0xf]
        %v452 = vld [vmem:[%s238 + $0x304] sm:$0xf]
        %v453 = vld [vmem:[%s238 + $0x308] sm:$0xf]
        %v454 = vld [vmem:[%s238 + $0x30c] sm:$0xf]
        %v455 = vld [vmem:[%s238 + $0x310] sm:$0xf]
        %v456 = vld [vmem:[%s238 + $0x314] sm:$0xf]
        %v457 = vld [vmem:[%s238 + $0x318] sm:$0xf]
        %v458 = vld [vmem:[%s238 + $0x31c] sm:$0xf]
        %v459 = vld [vmem:[%s238 + $0x320] sm:$0xf]
        %v460 = vld [vmem:[%s238 + $0x324] sm:$0xf]
        %v461 = vld [vmem:[%s238 + $0x328] sm:$0xf]
        %v462 = vld [vmem:[%s238 + $0x32c] sm:$0xf]
        %v463 = vld [vmem:[%s238 + $0x330] sm:$0xf]
        %v464 = vld [vmem:[%s238 + $0x334] sm:$0xf]
        %v465 = vld [vmem:[%s238 + $0x338] sm:$0xf]
        %v466 = vld [vmem:[%s238 + $0x33c] sm:$0xf]
        %v467 = vld [vmem:[%s238 + $0x340] sm:$0xf]
        %v468 = vld [vmem:[%s238 + $0x344] sm:$0xf]
        %v469 = vld [vmem:[%s238 + $0x348] sm:$0xf]
        %v470 = vld [vmem:[%s238 + $0x34c] sm:$0xf]
        %v471 = vld [vmem:[%s238 + $0x350] sm:$0xf]
        %v472 = vld [vmem:[%s238 + $0x354] sm:$0xf]
        %v473 = vld [vmem:[%s238 + $0x358] sm:$0xf]
        %v474 = vld [vmem:[%s238 + $0x35c] sm:$0xf]
        %v475 = vld [vmem:[%s238 + $0x360] sm:$0xf]
        %v476 = vld [vmem:[%s238 + $0x364] sm:$0xf]
        %v477 = vld [vmem:[%s238 + $0x368] sm:$0xf]
        %v478 = vld [vmem:[%s238 + $0x36c] sm:$0xf]
        %v479 = vld [vmem:[%s238 + $0x370] sm:$0xf]
        %v480 = vld [vmem:[%s238 + $0x374] sm:$0xf]
        %v481 = vld [vmem:[%s238 + $0x378] sm:$0xf]
        %v482 = vld [vmem:[%s238 + $0x37c] sm:$0xf]
        %v483 = vld [vmem:[%s238 + $0x380] sm:$0xf]
        %v484 = vld [vmem:[%s238 + $0x384] sm:$0xf]
        %v485 = vld [vmem:[%s238 + $0x388] sm:$0xf]
        %v486 = vld [vmem:[%s238 + $0x38c] sm:$0xf]
        %v487 = vld [vmem:[%s238 + $0x390] sm:$0xf]
        %v488 = vld [vmem:[%s238 + $0x394] sm:$0xf]
        %v489 = vld [vmem:[%s238 + $0x398] sm:$0xf]
        %v490 = vld [vmem:[%s238 + $0x39c] sm:$0xf]
        %v491 = vld [vmem:[%s238 + $0x3a0] sm:$0xf]
        %v492 = vld [vmem:[%s238 + $0x3a4] sm:$0xf]
        %v493 = vld [vmem:[%s238 + $0x3a8] sm:$0xf]
        %v494 = vld [vmem:[%s238 + $0x3ac] sm:$0xf]
        %v495 = vld [vmem:[%s238 + $0x3b0] sm:$0xf]
        %v496 = vld [vmem:[%s238 + $0x3b4] sm:$0xf]
        %v497 = vld [vmem:[%s238 + $0x3b8] sm:$0xf]
        %v498 = vld [vmem:[%s238 + $0x3bc] sm:$0xf]
        %v499 = vld [vmem:[%s238 + $0x3c0] sm:$0xf]
        %v500 = vld [vmem:[%s238 + $0x3c4] sm:$0xf]
        %v501 = vld [vmem:[%s238 + $0x3c8] sm:$0xf]
        %v502 = vld [vmem:[%s238 + $0x3cc] sm:$0xf]
        %v503 = vld [vmem:[%s238 + $0x3d0] sm:$0xf]
        %v504 = vld [vmem:[%s238 + $0x3d4] sm:$0xf]
        %v505 = vld [vmem:[%s238 + $0x3d8] sm:$0xf]
        %v506 = vld [vmem:[%s238 + $0x3dc] sm:$0xf]
        %v507 = vld [vmem:[%s238 + $0x3e0] sm:$0xf]
        %v508 = vld [vmem:[%s238 + $0x3e4] sm:$0xf]
        %v509 = vld [vmem:[%s238 + $0x3e8] sm:$0xf]
        %v510 = vld [vmem:[%s238 + $0x3ec] sm:$0xf]
        %v511 = vld [vmem:[%s238 + $0x3f0] sm:$0xf]
        %v512 = vld [vmem:[%s238 + $0x3f4] sm:$0xf]
        %v513 = vld [vmem:[%s238 + $0x3f8] sm:$0xf]
        %v514 = vld [vmem:[%s238 + $0x3fc] sm:$0xf]
        %v515 = vld [vmem:[%s238 + $0x400] sm:$0xf]
        %v516 = vld [vmem:[%s238 + $0x404] sm:$0xf]
        %v517 = vld [vmem:[%s238 + $0x408] sm:$0xf]
        %v518 = vld [vmem:[%s238 + $0x40c] sm:$0xf]
        %v519 = vld [vmem:[%s238 + $0x410] sm:$0xf]
        %v520 = vld [vmem:[%s238 + $0x414] sm:$0xf]
        %v521 = vld [vmem:[%s238 + $0x418] sm:$0xf]
        %v522 = vld [vmem:[%s238 + $0x41c] sm:$0xf]
        %v523 = vld [vmem:[%s238 + $0x420] sm:$0xf]
        %v524 = vld [vmem:[%s238 + $0x424] sm:$0xf]
        %v525 = vld [vmem:[%s238 + $0x428] sm:$0xf]
        %v526 = vld [vmem:[%s238 + $0x42c] sm:$0xf]
        %v527 = vld [vmem:[%s238 + $0x430] sm:$0xf]
        %v528 = vld [vmem:[%s238 + $0x434] sm:$0xf]
        %v529 = vld [vmem:[%s238 + $0x438] sm:$0xf]
        %v530 = vld [vmem:[%s238 + $0x43c] sm:$0xf]
        %v531 = vld [vmem:[%s238 + $0x440] sm:$0xf]
        %v532 = vld [vmem:[%s238 + $0x444] sm:$0xf]
        %v533 = vld [vmem:[%s238 + $0x448] sm:$0xf]
        %v534 = vld [vmem:[%s238 + $0x44c] sm:$0xf]
        %v535 = vld [vmem:[%s238 + $0x450] sm:$0xf]
        %v536 = vld [vmem:[%s238 + $0x454] sm:$0xf]
        %v537 = vld [vmem:[%s238 + $0x458] sm:$0xf]
        %v538 = vld [vmem:[%s238 + $0x45c] sm:$0xf]
        %v539 = vld [vmem:[%s238 + $0x460] sm:$0xf]
        %v540 = vld [vmem:[%s238 + $0x464] sm:$0xf]
        %v541 = vld [vmem:[%s238 + $0x468] sm:$0xf]
        %v542 = vld [vmem:[%s238 + $0x46c] sm:$0xf]
        %v543 = vld [vmem:[%s238 + $0x470] sm:$0xf]
        %v544 = vld [vmem:[%s238 + $0x474] sm:$0xf]
        %v545 = vld [vmem:[%s238 + $0x478] sm:$0xf]
        %v546 = vld [vmem:[%s238 + $0x47c] sm:$0xf]
        %v547 = vld [vmem:[%s238 + $0x480] sm:$0xf]
        %v548 = vld [vmem:[%s238 + $0x484] sm:$0xf]
        %v549 = vld [vmem:[%s238 + $0x488] sm:$0xf]
        %v550 = vld [vmem:[%s238 + $0x48c] sm:$0xf]
        %v551 = vld [vmem:[%s238 + $0x490] sm:$0xf]
        %v552 = vld [vmem:[%s238 + $0x494] sm:$0xf]
        %v553 = vld [vmem:[%s238 + $0x498] sm:$0xf]
        %v554 = vld [vmem:[%s238 + $0x49c] sm:$0xf]
        %v555 = vld [vmem:[%s238 + $0x4a0] sm:$0xf]
        %v556 = vld [vmem:[%s238 + $0x4a4] sm:$0xf]
        %v557 = vld [vmem:[%s238 + $0x4a8] sm:$0xf]
        %v558 = vld [vmem:[%s238 + $0x4ac] sm:$0xf]
        %v559 = vld [vmem:[%s238 + $0x4b0] sm:$0xf]
        %v560 = vld [vmem:[%s238 + $0x4b4] sm:$0xf]
        %v561 = vld [vmem:[%s238 + $0x4b8] sm:$0xf]
        %v562 = vld [vmem:[%s238 + $0x4bc] sm:$0xf]
        %v563 = vld [vmem:[%s238 + $0x4c0] sm:$0xf]
        %v564 = vld [vmem:[%s238 + $0x4c4] sm:$0xf]
        %v565 = vld [vmem:[%s238 + $0x4c8] sm:$0xf]
        %v566 = vld [vmem:[%s238 + $0x4cc] sm:$0xf]
        %v567 = vld [vmem:[%s238 + $0x4d0] sm:$0xf]
        %v568 = vld [vmem:[%s238 + $0x4d4] sm:$0xf]
        %v569 = vld [vmem:[%s238 + $0x4d8] sm:$0xf]
        %v570 = vld [vmem:[%s238 + $0x4dc] sm:$0xf]
        %v571 = vld [vmem:[%s238 + $0x4e0] sm:$0xf]
        %v572 = vld [vmem:[%s238 + $0x4e4] sm:$0xf]
        %v573 = vld [vmem:[%s238 + $0x4e8] sm:$0xf]
        %v574 = vld [vmem:[%s238 + $0x4ec] sm:$0xf]
        %v575 = vld [vmem:[%s238 + $0x4f0] sm:$0xf]
        %v576 = vld [vmem:[%s238 + $0x4f4] sm:$0xf]
        %v577 = vld [vmem:[%s238 + $0x4f8] sm:$0xf]
        %v578 = vld [vmem:[%s238 + $0x4fc] sm:$0xf]
        %v579 = vld [vmem:[%s238 + $0x500] sm:$0xf]
        %v580 = vld [vmem:[%s238 + $0x504] sm:$0xf]
        %v581 = vld [vmem:[%s238 + $0x508] sm:$0xf]
        %v582 = vld [vmem:[%s238 + $0x50c] sm:$0xf]
        %v583 = vld [vmem:[%s238 + $0x510] sm:$0xf]
        %v584 = vld [vmem:[%s238 + $0x514] sm:$0xf]
        %v585 = vld [vmem:[%s238 + $0x518] sm:$0xf]
        %v586 = vld [vmem:[%s238 + $0x51c] sm:$0xf]
        %v587 = vld [vmem:[%s238 + $0x520] sm:$0xf]
        %v588 = vld [vmem:[%s238 + $0x524] sm:$0xf]
        %v589 = vld [vmem:[%s238 + $0x528] sm:$0xf]
        %v590 = vld [vmem:[%s238 + $0x52c] sm:$0xf]
        %v591 = vld [vmem:[%s238 + $0x530] sm:$0xf]
        %v592 = vld [vmem:[%s238 + $0x534] sm:$0xf]
        %v593 = vld [vmem:[%s238 + $0x538] sm:$0xf]
        %v594 = vld [vmem:[%s238 + $0x53c] sm:$0xf]
        %v595 = vld [vmem:[%s238 + $0x540] sm:$0xf]
        %v596 = vld [vmem:[%s238 + $0x544] sm:$0xf]
        %v597 = vld [vmem:[%s238 + $0x548] sm:$0xf]
        %v598 = vld [vmem:[%s238 + $0x54c] sm:$0xf]
        %v599 = vld [vmem:[%s238 + $0x550] sm:$0xf]
        %v600 = vld [vmem:[%s238 + $0x554] sm:$0xf]
        %v601 = vld [vmem:[%s238 + $0x558] sm:$0xf]
        %v602 = vld [vmem:[%s238 + $0x55c] sm:$0xf]
        %v603 = vld [vmem:[%s238 + $0x560] sm:$0xf]
        %v604 = vld [vmem:[%s238 + $0x564] sm:$0xf]
        %v605 = vld [vmem:[%s238 + $0x568] sm:$0xf]
        %v606 = vld [vmem:[%s238 + $0x56c] sm:$0xf]
        %v607 = vld [vmem:[%s238 + $0x570] sm:$0xf]
        %v608 = vld [vmem:[%s238 + $0x574] sm:$0xf]
        %v609 = vld [vmem:[%s238 + $0x578] sm:$0xf]
        %v610 = vld [vmem:[%s238 + $0x57c] sm:$0xf]
        %v611 = vld [vmem:[%s238 + $0x580] sm:$0xf]
        %v612 = vld [vmem:[%s238 + $0x584] sm:$0xf]
        %v613 = vld [vmem:[%s238 + $0x588] sm:$0xf]
        %v614 = vld [vmem:[%s238 + $0x58c] sm:$0xf]
        %v615 = vld [vmem:[%s238 + $0x590] sm:$0xf]
        %v616 = vld [vmem:[%s238 + $0x594] sm:$0xf]
        %v617 = vld [vmem:[%s238 + $0x598] sm:$0xf]
        %v618 = vld [vmem:[%s238 + $0x59c] sm:$0xf]
        %v619 = vld [vmem:[%s238 + $0x5a0] sm:$0xf]
        %v620 = vld [vmem:[%s238 + $0x5a4] sm:$0xf]
        %v621 = vld [vmem:[%s238 + $0x5a8] sm:$0xf]
        %v622 = vld [vmem:[%s238 + $0x5ac] sm:$0xf]
        %v623 = vld [vmem:[%s238 + $0x5b0] sm:$0xf]
        %v624 = vld [vmem:[%s238 + $0x5b4] sm:$0xf]
        %v625 = vld [vmem:[%s238 + $0x5b8] sm:$0xf]
        %v626 = vld [vmem:[%s238 + $0x5bc] sm:$0xf]
        %v627 = vld [vmem:[%s238 + $0x5c0] sm:$0xf]
        %v628 = vld [vmem:[%s238 + $0x5c4] sm:$0xf]
        %v629 = vld [vmem:[%s238 + $0x5c8] sm:$0xf]
        %v630 = vld [vmem:[%s238 + $0x5cc] sm:$0xf]
        %v631 = vld [vmem:[%s238 + $0x5d0] sm:$0xf]
        %v632 = vld [vmem:[%s238 + $0x5d4] sm:$0xf]
        %v633 = vld [vmem:[%s238 + $0x5d8] sm:$0xf]
        %v634 = vld [vmem:[%s238 + $0x5dc] sm:$0xf]
        %v635 = vld [vmem:[%s238 + $0x5e0] sm:$0xf]
        %v636 = vld [vmem:[%s238 + $0x5e4] sm:$0xf]
        %v637 = vld [vmem:[%s238 + $0x5e8] sm:$0xf]
        %v638 = vld [vmem:[%s238 + $0x5ec] sm:$0xf]
        %v639 = vld [vmem:[%s238 + $0x5f0] sm:$0xf]
        %v640 = vld [vmem:[%s238 + $0x5f4] sm:$0xf]
        %v641 = vld [vmem:[%s238 + $0x5f8] sm:$0xf]
        %v642 = vld [vmem:[%s238 + $0x5fc] sm:$0xf]
        %v643 = vld [vmem:[%s238 + $0x600] sm:$0xf]
        %v644 = vld [vmem:[%s238 + $0x604] sm:$0xf]
        %v645 = vld [vmem:[%s238 + $0x608] sm:$0xf]
        %v646 = vld [vmem:[%s238 + $0x60c] sm:$0xf]
        %v647 = vld [vmem:[%s238 + $0x610] sm:$0xf]
        %v648 = vld [vmem:[%s238 + $0x614] sm:$0xf]
        %v649 = vld [vmem:[%s238 + $0x618] sm:$0xf]
        %v650 = vld [vmem:[%s238 + $0x61c] sm:$0xf]
        %v651 = vld [vmem:[%s238 + $0x620] sm:$0xf]
        %v652 = vld [vmem:[%s238 + $0x624] sm:$0xf]
        %v653 = vld [vmem:[%s238 + $0x628] sm:$0xf]
        %v654 = vld [vmem:[%s238 + $0x62c] sm:$0xf]
        %v655 = vld [vmem:[%s238 + $0x630] sm:$0xf]
        %v656 = vld [vmem:[%s238 + $0x634] sm:$0xf]
        %v657 = vld [vmem:[%s238 + $0x638] sm:$0xf]
        %v658 = vld [vmem:[%s238 + $0x63c] sm:$0xf]
        %v659 = vld [vmem:[%s238 + $0x640] sm:$0xf]
        %v660 = vld [vmem:[%s238 + $0x644] sm:$0xf]
        %v661 = vld [vmem:[%s238 + $0x648] sm:$0xf]
        %v662 = vld [vmem:[%s238 + $0x64c] sm:$0xf]
        %v663 = vld [vmem:[%s238 + $0x650] sm:$0xf]
        %v664 = vld [vmem:[%s238 + $0x654] sm:$0xf]
        %v665 = vld [vmem:[%s238 + $0x658] sm:$0xf]
        %v666 = vld [vmem:[%s238 + $0x65c] sm:$0xf]
        %v667 = vld [vmem:[%s238 + $0x660] sm:$0xf]
        %v668 = vld [vmem:[%s238 + $0x664] sm:$0xf]
        %v669 = vld [vmem:[%s238 + $0x668] sm:$0xf]
        %v670 = vld [vmem:[%s238 + $0x66c] sm:$0xf]
        %v671 = vld [vmem:[%s238 + $0x670] sm:$0xf]
        %v672 = vld [vmem:[%s238 + $0x674] sm:$0xf]
        %v673 = vld [vmem:[%s238 + $0x678] sm:$0xf]
        %v674 = vld [vmem:[%s238 + $0x67c] sm:$0xf]
        %v675 = vld [vmem:[%s238 + $0x680] sm:$0xf]
        %v676 = vld [vmem:[%s238 + $0x684] sm:$0xf]
        %v677 = vld [vmem:[%s238 + $0x688] sm:$0xf]
        %v678 = vld [vmem:[%s238 + $0x68c] sm:$0xf]
        %v679 = vld [vmem:[%s238 + $0x690] sm:$0xf]
        %v680 = vld [vmem:[%s238 + $0x694] sm:$0xf]
        %v681 = vld [vmem:[%s238 + $0x698] sm:$0xf]
        %v682 = vld [vmem:[%s238 + $0x69c] sm:$0xf]
        %v683 = vld [vmem:[%s238 + $0x6a0] sm:$0xf]
        %v684 = vld [vmem:[%s238 + $0x6a4] sm:$0xf]
        %v685 = vld [vmem:[%s238 + $0x6a8] sm:$0xf]
        %v686 = vld [vmem:[%s238 + $0x6ac] sm:$0xf]
        %v687 = vld [vmem:[%s238 + $0x6b0] sm:$0xf]
        %v688 = vld [vmem:[%s238 + $0x6b4] sm:$0xf]
        %v689 = vld [vmem:[%s238 + $0x6b8] sm:$0xf]
        %v690 = vld [vmem:[%s238 + $0x6bc] sm:$0xf]
        %v691 = vld [vmem:[%s238 + $0x6c0] sm:$0xf]
        %v692 = vld [vmem:[%s238 + $0x6c4] sm:$0xf]
        %v693 = vld [vmem:[%s238 + $0x6c8] sm:$0xf]
        %v694 = vld [vmem:[%s238 + $0x6cc] sm:$0xf]
        %v695 = vld [vmem:[%s238 + $0x6d0] sm:$0xf]
        %v696 = vld [vmem:[%s238 + $0x6d4] sm:$0xf]
        %v697 = vld [vmem:[%s238 + $0x6d8] sm:$0xf]
        %v698 = vld [vmem:[%s238 + $0x6dc] sm:$0xf]
        %v699 = vld [vmem:[%s238 + $0x6e0] sm:$0xf]
        %v700 = vld [vmem:[%s238 + $0x6e4] sm:$0xf]
        %v701 = vld [vmem:[%s238 + $0x6e8] sm:$0xf]
        %v702 = vld [vmem:[%s238 + $0x6ec] sm:$0xf]
        %v703 = vld [vmem:[%s238 + $0x6f0] sm:$0xf]
        %v704 = vld [vmem:[%s238 + $0x6f4] sm:$0xf]
        %v705 = vld [vmem:[%s238 + $0x6f8] sm:$0xf]
        %v706 = vld [vmem:[%s238 + $0x6fc] sm:$0xf]
        %v707 = vld [vmem:[%s238 + $0x700] sm:$0xf]
        %v708 = vld [vmem:[%s238 + $0x704] sm:$0xf]
        %v709 = vld [vmem:[%s238 + $0x708] sm:$0xf]
        %v710 = vld [vmem:[%s238 + $0x70c] sm:$0xf]
        %v711 = vld [vmem:[%s238 + $0x710] sm:$0xf]
        %v712 = vld [vmem:[%s238 + $0x714] sm:$0xf]
        %v713 = vld [vmem:[%s238 + $0x718] sm:$0xf]
        %v714 = vld [vmem:[%s238 + $0x71c] sm:$0xf]
        %v715 = vld [vmem:[%s238 + $0x720] sm:$0xf]
        %v716 = vld [vmem:[%s238 + $0x724] sm:$0xf]
        %v717 = vld [vmem:[%s238 + $0x728] sm:$0xf]
        %v718 = vld [vmem:[%s238 + $0x72c] sm:$0xf]
        %v719 = vld [vmem:[%s238 + $0x730] sm:$0xf]
        %v720 = vld [vmem:[%s238 + $0x734] sm:$0xf]
        %v721 = vld [vmem:[%s238 + $0x738] sm:$0xf]
        %v722 = vld [vmem:[%s238 + $0x73c] sm:$0xf]
        %v723 = vld [vmem:[%s238 + $0x740] sm:$0xf]
        %v724 = vld [vmem:[%s238 + $0x744] sm:$0xf]
        %v725 = vld [vmem:[%s238 + $0x748] sm:$0xf]
        %v726 = vld [vmem:[%s238 + $0x74c] sm:$0xf]
        %v727 = vld [vmem:[%s238 + $0x750] sm:$0xf]
        %v728 = vld [vmem:[%s238 + $0x754] sm:$0xf]
        %v729 = vld [vmem:[%s238 + $0x758] sm:$0xf]
        %v730 = vld [vmem:[%s238 + $0x75c] sm:$0xf]
        %v731 = vld [vmem:[%s238 + $0x760] sm:$0xf]
        %v732 = vld [vmem:[%s238 + $0x764] sm:$0xf]
        %v733 = vld [vmem:[%s238 + $0x768] sm:$0xf]
        %v734 = vld [vmem:[%s238 + $0x76c] sm:$0xf]
        %v735 = vld [vmem:[%s238 + $0x770] sm:$0xf]
        %v736 = vld [vmem:[%s238 + $0x774] sm:$0xf]
        %v737 = vld [vmem:[%s238 + $0x778] sm:$0xf]
        %v738 = vld [vmem:[%s238 + $0x77c] sm:$0xf]
        %v739 = vld [vmem:[%s238 + $0x780] sm:$0xf]
        %v740 = vld [vmem:[%s238 + $0x784] sm:$0xf]
        %v741 = vld [vmem:[%s238 + $0x788] sm:$0xf]
        %v742 = vld [vmem:[%s238 + $0x78c] sm:$0xf]
        %v743 = vld [vmem:[%s238 + $0x790] sm:$0xf]
        %v744 = vld [vmem:[%s238 + $0x794] sm:$0xf]
        %v745 = vld [vmem:[%s238 + $0x798] sm:$0xf]
        %v746 = vld [vmem:[%s238 + $0x79c] sm:$0xf]
        %v747 = vld [vmem:[%s238 + $0x7a0] sm:$0xf]
        %v748 = vld [vmem:[%s238 + $0x7a4] sm:$0xf]
        %v749 = vld [vmem:[%s238 + $0x7a8] sm:$0xf]
        %v750 = vld [vmem:[%s238 + $0x7ac] sm:$0xf]
        %v751 = vld [vmem:[%s238 + $0x7b0] sm:$0xf]
        %v752 = vld [vmem:[%s238 + $0x7b4] sm:$0xf]
        %v753 = vld [vmem:[%s238 + $0x7b8] sm:$0xf]
        %v754 = vld [vmem:[%s238 + $0x7bc] sm:$0xf]
        %v755 = vld [vmem:[%s238 + $0x7c0] sm:$0xf]
        %v756 = vld [vmem:[%s238 + $0x7c4] sm:$0xf]
        %v757 = vld [vmem:[%s238 + $0x7c8] sm:$0xf]
        %v758 = vld [vmem:[%s238 + $0x7cc] sm:$0xf]
        %v759 = vld [vmem:[%s238 + $0x7d0] sm:$0xf]
        %v760 = vld [vmem:[%s238 + $0x7d4] sm:$0xf]
        %v761 = vld [vmem:[%s238 + $0x7d8] sm:$0xf]
        %v762 = vld [vmem:[%s238 + $0x7dc] sm:$0xf]
        %v763 = vld [vmem:[%s238 + $0x7e0] sm:$0xf]
        %v764 = vld [vmem:[%s238 + $0x7e4] sm:$0xf]
        %v765 = vld [vmem:[%s238 + $0x7e8] sm:$0xf]
        %v766 = vld [vmem:[%s238 + $0x7ec] sm:$0xf]
        %v767 = vld [vmem:[%s238 + $0x7f0] sm:$0xf]
        %v768 = vld [vmem:[%s238 + $0x7f4] sm:$0xf]
        %v769 = vld [vmem:[%s238 + $0x7f8] sm:$0xf]
        %v770 = vld [vmem:[%s238 + $0x7fc] sm:$0xf]
        %v771 = vld [vmem:[%s238 + $0x800] sm:$0xf]
        %v772 = vld [vmem:[%s238 + $0x804] sm:$0xf]
        %v773 = vld [vmem:[%s238 + $0x808] sm:$0xf]
        %v774 = vld [vmem:[%s238 + $0x80c] sm:$0xf]
        %v775 = vld [vmem:[%s238 + $0x810] sm:$0xf]
        %v776 = vld [vmem:[%s238 + $0x814] sm:$0xf]
        %v777 = vld [vmem:[%s238 + $0x818] sm:$0xf]
        %v778 = vld [vmem:[%s238 + $0x81c] sm:$0xf]
        %v779 = vld [vmem:[%s238 + $0x820] sm:$0xf]
        %v780 = vld [vmem:[%s238 + $0x824] sm:$0xf]
        %v781 = vld [vmem:[%s238 + $0x828] sm:$0xf]
        %v782 = vld [vmem:[%s238 + $0x82c] sm:$0xf]
        %v783 = vld [vmem:[%s238 + $0x830] sm:$0xf]
        %v784 = vld [vmem:[%s238 + $0x834] sm:$0xf]
        %v785 = vld [vmem:[%s238 + $0x838] sm:$0xf]
        %v786 = vld [vmem:[%s238 + $0x83c] sm:$0xf]
        %v787 = vld [vmem:[%s238 + $0x840] sm:$0xf]
        %v788 = vld [vmem:[%s238 + $0x844] sm:$0xf]
        %v789 = vld [vmem:[%s238 + $0x848] sm:$0xf]
        %v790 = vld [vmem:[%s238 + $0x84c] sm:$0xf]
        %v791 = vld [vmem:[%s238 + $0x850] sm:$0xf]
        %v792 = vld [vmem:[%s238 + $0x854] sm:$0xf]
        %v793 = vld [vmem:[%s238 + $0x858] sm:$0xf]
        %v794 = vld [vmem:[%s238 + $0x85c] sm:$0xf]
        %v795 = vld [vmem:[%s238 + $0x860] sm:$0xf]
        %v796 = vld [vmem:[%s238 + $0x864] sm:$0xf]
        %v797 = vld [vmem:[%s238 + $0x868] sm:$0xf]
        %v798 = vld [vmem:[%s238 + $0x86c] sm:$0xf]
        %v799 = vld [vmem:[%s238 + $0x870] sm:$0xf]
        %v800 = vld [vmem:[%s238 + $0x874] sm:$0xf]
        %v801 = vld [vmem:[%s238 + $0x878] sm:$0xf]
        %v802 = vld [vmem:[%s238 + $0x87c] sm:$0xf]
        %v803 = vld [vmem:[%s238 + $0x880] sm:$0xf]
        %v804 = vld [vmem:[%s238 + $0x884] sm:$0xf]
        %v805 = vld [vmem:[%s238 + $0x888] sm:$0xf]
        %v806 = vld [vmem:[%s238 + $0x88c] sm:$0xf]
        %v807 = vld [vmem:[%s238 + $0x890] sm:$0xf]
        %v808 = vld [vmem:[%s238 + $0x894] sm:$0xf]
        %v809 = vld [vmem:[%s238 + $0x898] sm:$0xf]
        %v810 = vld [vmem:[%s238 + $0x89c] sm:$0xf]
        %v811 = vld [vmem:[%s238 + $0x8a0] sm:$0xf]
        %v812 = vld [vmem:[%s238 + $0x8a4] sm:$0xf]
        %v813 = vld [vmem:[%s238 + $0x8a8] sm:$0xf]
        %v814 = vld [vmem:[%s238 + $0x8ac] sm:$0xf]
        %v815 = vld [vmem:[%s238 + $0x8b0] sm:$0xf]
        %v816 = vld [vmem:[%s238 + $0x8b4] sm:$0xf]
        %v817 = vld [vmem:[%s238 + $0x8b8] sm:$0xf]
        %v818 = vld [vmem:[%s238 + $0x8bc] sm:$0xf]
        %v819 = vld [vmem:[%s238 + $0x8c0] sm:$0xf]
        %v820 = vld [vmem:[%s238 + $0x8c4] sm:$0xf]
        %v821 = vld [vmem:[%s238 + $0x8c8] sm:$0xf]
        %v822 = vld [vmem:[%s238 + $0x8cc] sm:$0xf]
        %v823 = vld [vmem:[%s238 + $0x8d0] sm:$0xf]
        %v824 = vld [vmem:[%s238 + $0x8d4] sm:$0xf]
        %v825 = vld [vmem:[%s238 + $0x8d8] sm:$0xf]
        %v826 = vld [vmem:[%s238 + $0x8dc] sm:$0xf]
        %v827 = vld [vmem:[%s238 + $0x8e0] sm:$0xf]
        %v828 = vld [vmem:[%s238 + $0x8e4] sm:$0xf]
        %v829 = vld [vmem:[%s238 + $0x8e8] sm:$0xf]
        %v830 = vld [vmem:[%s238 + $0x8ec] sm:$0xf]
        %v831 = vld [vmem:[%s238 + $0x8f0] sm:$0xf]
        %v832 = vld [vmem:[%s238 + $0x8f4] sm:$0xf]
        %v833 = vld [vmem:[%s238 + $0x8f8] sm:$0xf]
        %v834 = vld [vmem:[%s238 + $0x8fc] sm:$0xf]
        %v835 = vld [vmem:[%s238 + $0x900] sm:$0xf]
        %v836 = vld [vmem:[%s238 + $0x904] sm:$0xf]
        %v837 = vld [vmem:[%s238 + $0x908] sm:$0xf]
        %v838 = vld [vmem:[%s238 + $0x90c] sm:$0xf]
        %v839 = vld [vmem:[%s238 + $0x910] sm:$0xf]
        %v840 = vld [vmem:[%s238 + $0x914] sm:$0xf]
        %v841 = vld [vmem:[%s238 + $0x918] sm:$0xf]
        %v842 = vld [vmem:[%s238 + $0x91c] sm:$0xf]
        %v843 = vld [vmem:[%s238 + $0x920] sm:$0xf]
        %v844 = vld [vmem:[%s238 + $0x924] sm:$0xf]
        %v845 = vld [vmem:[%s238 + $0x928] sm:$0xf]
        %v846 = vld [vmem:[%s238 + $0x92c] sm:$0xf]
        %v847 = vld [vmem:[%s238 + $0x930] sm:$0xf]
        %v848 = vld [vmem:[%s238 + $0x934] sm:$0xf]
        %v849 = vld [vmem:[%s238 + $0x938] sm:$0xf]
        %v850 = vld [vmem:[%s238 + $0x93c] sm:$0xf]
        %v851 = vld [vmem:[%s238 + $0x940] sm:$0xf]
        %v852 = vld [vmem:[%s238 + $0x944] sm:$0xf]
        %v853 = vld [vmem:[%s238 + $0x948] sm:$0xf]
        %v854 = vld [vmem:[%s238 + $0x94c] sm:$0xf]
        %v855 = vld [vmem:[%s238 + $0x950] sm:$0xf]
        %v856 = vld [vmem:[%s238 + $0x954] sm:$0xf]
        %v857 = vld [vmem:[%s238 + $0x958] sm:$0xf]
        %v858 = vld [vmem:[%s238 + $0x95c] sm:$0xf]
        %v859 = vld [vmem:[%s238 + $0x960] sm:$0xf]
        %v860 = vld [vmem:[%s238 + $0x964] sm:$0xf]
        %v861 = vld [vmem:[%s238 + $0x968] sm:$0xf]
        %v862 = vld [vmem:[%s238 + $0x96c] sm:$0xf]
        %v863 = vld [vmem:[%s238 + $0x970] sm:$0xf]
        %v864 = vld [vmem:[%s238 + $0x974] sm:$0xf]
        %v865 = vld [vmem:[%s238 + $0x978] sm:$0xf]
        %v866 = vld [vmem:[%s238 + $0x97c] sm:$0xf]
        %v867 = vld [vmem:[%s238 + $0x980] sm:$0xf]
        %v868 = vld [vmem:[%s238 + $0x984] sm:$0xf]
        %v869 = vld [vmem:[%s238 + $0x988] sm:$0xf]
        %v870 = vld [vmem:[%s238 + $0x98c] sm:$0xf]
        %v871 = vld [vmem:[%s238 + $0x990] sm:$0xf]
        %v872 = vld [vmem:[%s238 + $0x994] sm:$0xf]
        %v873 = vld [vmem:[%s238 + $0x998] sm:$0xf]
        %v874 = vld [vmem:[%s238 + $0x99c] sm:$0xf]
        %v875 = vld [vmem:[%s238 + $0x9a0] sm:$0xf]
        %v876 = vld [vmem:[%s238 + $0x9a4] sm:$0xf]
        %v877 = vld [vmem:[%s238 + $0x9a8] sm:$0xf]
        %v878 = vld [vmem:[%s238 + $0x9ac] sm:$0xf]
        %v879 = vld [vmem:[%s238 + $0x9b0] sm:$0xf]
        %v880 = vld [vmem:[%s238 + $0x9b4] sm:$0xf]
        %v881 = vld [vmem:[%s238 + $0x9b8] sm:$0xf]
        %v882 = vld [vmem:[%s238 + $0x9bc] sm:$0xf]
        %v883 = vld [vmem:[%s238 + $0x9c0] sm:$0xf]
        %v884 = vld [vmem:[%s238 + $0x9c4] sm:$0xf]
        %v885 = vld [vmem:[%s238 + $0x9c8] sm:$0xf]
        %v886 = vld [vmem:[%s238 + $0x9cc] sm:$0xf]
        %v887 = vld [vmem:[%s238 + $0x9d0] sm:$0xf]
        %v888 = vld [vmem:[%s238 + $0x9d4] sm:$0xf]
        %v889 = vld [vmem:[%s238 + $0x9d8] sm:$0xf]
        %v890 = vld [vmem:[%s238 + $0x9dc] sm:$0xf]
        %v891 = vld [vmem:[%s238 + $0x9e0] sm:$0xf]
        %v892 = vld [vmem:[%s238 + $0x9e4] sm:$0xf]
        %v893 = vld [vmem:[%s238 + $0x9e8] sm:$0xf]
        %v894 = vld [vmem:[%s238 + $0x9ec] sm:$0xf]
        %v895 = vld [vmem:[%s238 + $0x9f0] sm:$0xf]
        %v896 = vld [vmem:[%s238 + $0x9f4] sm:$0xf]
        %v897 = vld [vmem:[%s238 + $0x9f8] sm:$0xf]
        %v898 = vld [vmem:[%s238 + $0x9fc] sm:$0xf]
        %v899 = vld [vmem:[%s238 + $0xa00] sm:$0xf]
        %v900 = vld [vmem:[%s238 + $0xa04] sm:$0xf]
        %v901 = vld [vmem:[%s238 + $0xa08] sm:$0xf]
        %v902 = vld [vmem:[%s238 + $0xa0c] sm:$0xf]
        %v903 = vld [vmem:[%s238 + $0xa10] sm:$0xf]
        %v904 = vld [vmem:[%s238 + $0xa14] sm:$0xf]
        %v905 = vld [vmem:[%s238 + $0xa18] sm:$0xf]
        %v906 = vld [vmem:[%s238 + $0xa1c] sm:$0xf]
        %v907 = vld [vmem:[%s238 + $0xa20] sm:$0xf]
        %v908 = vld [vmem:[%s238 + $0xa24] sm:$0xf]
        %v909 = vld [vmem:[%s238 + $0xa28] sm:$0xf]
        %v910 = vld [vmem:[%s238 + $0xa2c] sm:$0xf]
        %v911 = vld [vmem:[%s238 + $0xa30] sm:$0xf]
        %v912 = vld [vmem:[%s238 + $0xa34] sm:$0xf]
        %v913 = vld [vmem:[%s238 + $0xa38] sm:$0xf]
        %v914 = vld [vmem:[%s238 + $0xa3c] sm:$0xf]
        %v915 = vld [vmem:[%s238 + $0xa40] sm:$0xf]
        %v916 = vld [vmem:[%s238 + $0xa44] sm:$0xf]
        %v917 = vld [vmem:[%s238 + $0xa48] sm:$0xf]
        %v918 = vld [vmem:[%s238 + $0xa4c] sm:$0xf]
        %v919 = vld [vmem:[%s238 + $0xa50] sm:$0xf]
        %v920 = vld [vmem:[%s238 + $0xa54] sm:$0xf]
        %v921 = vld [vmem:[%s238 + $0xa58] sm:$0xf]
        %v922 = vld [vmem:[%s238 + $0xa5c] sm:$0xf]
        %v923 = vld [vmem:[%s238 + $0xa60] sm:$0xf]
        %v924 = vld [vmem:[%s238 + $0xa64] sm:$0xf]
        %v925 = vld [vmem:[%s238 + $0xa68] sm:$0xf]
        %v926 = vld [vmem:[%s238 + $0xa6c] sm:$0xf]
        %v927 = vld [vmem:[%s238 + $0xa70] sm:$0xf]
        %v928 = vld [vmem:[%s238 + $0xa74] sm:$0xf]
        %v929 = vld [vmem:[%s238 + $0xa78] sm:$0xf]
        %v930 = vld [vmem:[%s238 + $0xa7c] sm:$0xf]
        %v931 = vld [vmem:[%s238 + $0xa80] sm:$0xf]
        %v932 = vld [vmem:[%s238 + $0xa84] sm:$0xf]
        %v933 = vld [vmem:[%s238 + $0xa88] sm:$0xf]
        %v934 = vld [vmem:[%s238 + $0xa8c] sm:$0xf]
        %v935 = vld [vmem:[%s238 + $0xa90] sm:$0xf]
        %v936 = vld [vmem:[%s238 + $0xa94] sm:$0xf]
        %v937 = vld [vmem:[%s238 + $0xa98] sm:$0xf]
        %v938 = vld [vmem:[%s238 + $0xa9c] sm:$0xf]
        %v939 = vld [vmem:[%s238 + $0xaa0] sm:$0xf]
        %v940 = vld [vmem:[%s238 + $0xaa4] sm:$0xf]
        %v941 = vld [vmem:[%s238 + $0xaa8] sm:$0xf]
        %v942 = vld [vmem:[%s238 + $0xaac] sm:$0xf]
        %v943 = vld [vmem:[%s238 + $0xab0] sm:$0xf]
        %v944 = vld [vmem:[%s238 + $0xab4] sm:$0xf]
        %v945 = vld [vmem:[%s238 + $0xab8] sm:$0xf]
        %v946 = vld [vmem:[%s238 + $0xabc] sm:$0xf]
        %v947 = vld [vmem:[%s238 + $0xac0] sm:$0xf]
        %v948 = vld [vmem:[%s238 + $0xac4] sm:$0xf]
        %v949 = vld [vmem:[%s238 + $0xac8] sm:$0xf]
        %v950 = vld [vmem:[%s238 + $0xacc] sm:$0xf]
        %v951 = vld [vmem:[%s238 + $0xad0] sm:$0xf]
        %v952 = vld [vmem:[%s238 + $0xad4] sm:$0xf]
        %v953 = vld [vmem:[%s238 + $0xad8] sm:$0xf]
        %v954 = vld [vmem:[%s238 + $0xadc] sm:$0xf]
        %v955 = vld [vmem:[%s238 + $0xae0] sm:$0xf]
        %v956 = vld [vmem:[%s238 + $0xae4] sm:$0xf]
        %v957 = vld [vmem:[%s238 + $0xae8] sm:$0xf]
        %v958 = vld [vmem:[%s238 + $0xaec] sm:$0xf]
        %v959 = vld [vmem:[%s238 + $0xaf0] sm:$0xf]
        %v960 = vld [vmem:[%s238 + $0xaf4] sm:$0xf]
        %v961 = vld [vmem:[%s238 + $0xaf8] sm:$0xf]
        %v962 = vld [vmem:[%s238 + $0xafc] sm:$0xf]
        %v963 = vld [vmem:[%s238 + $0xb00] sm:$0xf]
        %v964 = vld [vmem:[%s238 + $0xb04] sm:$0xf]
        %v965 = vld [vmem:[%s238 + $0xb08] sm:$0xf]
        %v966 = vld [vmem:[%s238 + $0xb0c] sm:$0xf]
        %v967 = vld [vmem:[%s238 + $0xb10] sm:$0xf]
        %v968 = vld [vmem:[%s238 + $0xb14] sm:$0xf]
        %v969 = vld [vmem:[%s238 + $0xb18] sm:$0xf]
        %v970 = vld [vmem:[%s238 + $0xb1c] sm:$0xf]
        %v971 = vld [vmem:[%s238 + $0xb20] sm:$0xf]
        %v972 = vld [vmem:[%s238 + $0xb24] sm:$0xf]
        %v973 = vld [vmem:[%s238 + $0xb28] sm:$0xf]
        %v974 = vld [vmem:[%s238 + $0xb2c] sm:$0xf]
        %v975 = vld [vmem:[%s238 + $0xb30] sm:$0xf]
        %v976 = vld [vmem:[%s238 + $0xb34] sm:$0xf]
        %v977 = vld [vmem:[%s238 + $0xb38] sm:$0xf]
        %v978 = vld [vmem:[%s238 + $0xb3c] sm:$0xf]
        %v979 = vld [vmem:[%s238 + $0xb40] sm:$0xf]
        %v980 = vld [vmem:[%s238 + $0xb44] sm:$0xf]
        %v981 = vld [vmem:[%s238 + $0xb48] sm:$0xf]
        %v982 = vld [vmem:[%s238 + $0xb4c] sm:$0xf]
        %v983 = vld [vmem:[%s238 + $0xb50] sm:$0xf]
        %v984 = vld [vmem:[%s238 + $0xb54] sm:$0xf]
        %v985 = vld [vmem:[%s238 + $0xb58] sm:$0xf]
        %v986 = vld [vmem:[%s238 + $0xb5c] sm:$0xf]
        %v987 = vld [vmem:[%s238 + $0xb60] sm:$0xf]
        %v988 = vld [vmem:[%s238 + $0xb64] sm:$0xf]
        %v989 = vld [vmem:[%s238 + $0xb68] sm:$0xf]
        %v990 = vld [vmem:[%s238 + $0xb6c] sm:$0xf]
        %v991 = vld [vmem:[%s238 + $0xb70] sm:$0xf]
        %v992 = vld [vmem:[%s238 + $0xb74] sm:$0xf]
        %v993 = vld [vmem:[%s238 + $0xb78] sm:$0xf]
        %v994 = vld [vmem:[%s238 + $0xb7c] sm:$0xf]
        %v995 = vld [vmem:[%s238 + $0xb80] sm:$0xf]
        %v996 = vld [vmem:[%s238 + $0xb84] sm:$0xf]
        %v997 = vld [vmem:[%s238 + $0xb88] sm:$0xf]
        %v998 = vld [vmem:[%s238 + $0xb8c] sm:$0xf]
        %v999 = vld [vmem:[%s238 + $0xb90] sm:$0xf]
        %v1000 = vld [vmem:[%s238 + $0xb94] sm:$0xf]
        %v1001 = vld [vmem:[%s238 + $0xb98] sm:$0xf]
        %v1002 = vld [vmem:[%s238 + $0xb9c] sm:$0xf]
        %v1003 = vld [vmem:[%s238 + $0xba0] sm:$0xf]
        %v1004 = vld [vmem:[%s238 + $0xba4] sm:$0xf]
        %v1005 = vld [vmem:[%s238 + $0xba8] sm:$0xf]
        %v1006 = vld [vmem:[%s238 + $0xbac] sm:$0xf]
        %v1007 = vld [vmem:[%s238 + $0xbb0] sm:$0xf]
        %v1008 = vld [vmem:[%s238 + $0xbb4] sm:$0xf]
        %v1009 = vld [vmem:[%s238 + $0xbb8] sm:$0xf]
        %v1010 = vld [vmem:[%s238 + $0xbbc] sm:$0xf]
        %v1011 = vld [vmem:[%s238 + $0xbc0] sm:$0xf]
        %v1012 = vld [vmem:[%s238 + $0xbc4] sm:$0xf]
        %v1013 = vld [vmem:[%s238 + $0xbc8] sm:$0xf]
        %v1014 = vld [vmem:[%s238 + $0xbcc] sm:$0xf]
        %v1015 = vld [vmem:[%s238 + $0xbd0] sm:$0xf]
        %v1016 = vld [vmem:[%s238 + $0xbd4] sm:$0xf]
        %v1017 = vld [vmem:[%s238 + $0xbd8] sm:$0xf]
        %v1018 = vld [vmem:[%s238 + $0xbdc] sm:$0xf]
        %v1019 = vld [vmem:[%s238 + $0xbe0] sm:$0xf]
        %v1020 = vld [vmem:[%s238 + $0xbe4] sm:$0xf]
        %v1021 = vld [vmem:[%s238 + $0xbe8] sm:$0xf]
        %v1022 = vld [vmem:[%s238 + $0xbec] sm:$0xf]
        %v1023 = vld [vmem:[%s238 + $0xbf0] sm:$0xf]
        %v1024 = vld [vmem:[%s238 + $0xbf4] sm:$0xf]
        %v1025 = vld [vmem:[%s238 + $0xbf8] sm:$0xf]
        %v1026 = vld [vmem:[%s238 + $0xbfc] sm:$0xf]
        %v1027 = vld [vmem:[%s238 + $0xc00] sm:$0xf]
        %v1028 = vld [vmem:[%s238 + $0xc04] sm:$0xf]
        %v1029 = vld [vmem:[%s238 + $0xc08] sm:$0xf]
        %v1030 = vld [vmem:[%s238 + $0xc0c] sm:$0xf]
        %v1031 = vld [vmem:[%s238 + $0xc10] sm:$0xf]
        %v1032 = vld [vmem:[%s238 + $0xc14] sm:$0xf]
        %v1033 = vld [vmem:[%s238 + $0xc18] sm:$0xf]
        %v1034 = vld [vmem:[%s238 + $0xc1c] sm:$0xf]
        %v1035 = vld [vmem:[%s238 + $0xc20] sm:$0xf]
        %v1036 = vld [vmem:[%s238 + $0xc24] sm:$0xf]
        %v1037 = vld [vmem:[%s238 + $0xc28] sm:$0xf]
        %v1038 = vld [vmem:[%s238 + $0xc2c] sm:$0xf]
        %v1039 = vld [vmem:[%s238 + $0xc30] sm:$0xf]
        %v1040 = vld [vmem:[%s238 + $0xc34] sm:$0xf]
        %v1041 = vld [vmem:[%s238 + $0xc38] sm:$0xf]
        %v1042 = vld [vmem:[%s238 + $0xc3c] sm:$0xf]
        %v1043 = vld [vmem:[%s238 + $0xc40] sm:$0xf]
        %v1044 = vld [vmem:[%s238 + $0xc44] sm:$0xf]
        %v1045 = vld [vmem:[%s238 + $0xc48] sm:$0xf]
        %v1046 = vld [vmem:[%s238 + $0xc4c] sm:$0xf]
        %v1047 = vld [vmem:[%s238 + $0xc50] sm:$0xf]
        %v1048 = vld [vmem:[%s238 + $0xc54] sm:$0xf]
        %v1049 = vld [vmem:[%s238 + $0xc58] sm:$0xf]
        %v1050 = vld [vmem:[%s238 + $0xc5c] sm:$0xf]
        %v1051 = vld [vmem:[%s238 + $0xc60] sm:$0xf]
        %v1052 = vld [vmem:[%s238 + $0xc64] sm:$0xf]
        %v1053 = vld [vmem:[%s238 + $0xc68] sm:$0xf]
        %v1054 = vld [vmem:[%s238 + $0xc6c] sm:$0xf]
        %v1055 = vld [vmem:[%s238 + $0xc70] sm:$0xf]
        %v1056 = vld [vmem:[%s238 + $0xc74] sm:$0xf]
        %v1057 = vld [vmem:[%s238 + $0xc78] sm:$0xf]
        %v1058 = vld [vmem:[%s238 + $0xc7c] sm:$0xf]
        %v1059 = vld [vmem:[%s238 + $0xc80] sm:$0xf]
        %v1060 = vld [vmem:[%s238 + $0xc84] sm:$0xf]
        %v1061 = vld [vmem:[%s238 + $0xc88] sm:$0xf]
        %v1062 = vld [vmem:[%s238 + $0xc8c] sm:$0xf]
        %v1063 = vld [vmem:[%s238 + $0xc90] sm:$0xf]
        %v1064 = vld [vmem:[%s238 + $0xc94] sm:$0xf]
        %v1065 = vld [vmem:[%s238 + $0xc98] sm:$0xf]
        %v1066 = vld [vmem:[%s238 + $0xc9c] sm:$0xf]
        %v1067 = vld [vmem:[%s238 + $0xca0] sm:$0xf]
        %v1068 = vld [vmem:[%s238 + $0xca4] sm:$0xf]
        %v1069 = vld [vmem:[%s238 + $0xca8] sm:$0xf]
        %v1070 = vld [vmem:[%s238 + $0xcac] sm:$0xf]
        %v1071 = vld [vmem:[%s238 + $0xcb0] sm:$0xf]
        %v1072 = vld [vmem:[%s238 + $0xcb4] sm:$0xf]
        %v1073 = vld [vmem:[%s238 + $0xcb8] sm:$0xf]
        %v1074 = vld [vmem:[%s238 + $0xcbc] sm:$0xf]
        %v1075 = vld [vmem:[%s238 + $0xcc0] sm:$0xf]
        %v1076 = vld [vmem:[%s238 + $0xcc4] sm:$0xf]
        %v1077 = vld [vmem:[%s238 + $0xcc8] sm:$0xf]
        %v1078 = vld [vmem:[%s238 + $0xccc] sm:$0xf]
        %v1079 = vld [vmem:[%s238 + $0xcd0] sm:$0xf]
        %v1080 = vld [vmem:[%s238 + $0xcd4] sm:$0xf]
        %v1081 = vld [vmem:[%s238 + $0xcd8] sm:$0xf]
        %v1082 = vld [vmem:[%s238 + $0xcdc] sm:$0xf]
        %v1083 = vld [vmem:[%s238 + $0xce0] sm:$0xf]
        %v1084 = vld [vmem:[%s238 + $0xce4] sm:$0xf]
        %v1085 = vld [vmem:[%s238 + $0xce8] sm:$0xf]
        %v1086 = vld [vmem:[%s238 + $0xcec] sm:$0xf]
        %v1087 = vld [vmem:[%s238 + $0xcf0] sm:$0xf]
        %v1088 = vld [vmem:[%s238 + $0xcf4] sm:$0xf]
        %v1089 = vld [vmem:[%s238 + $0xcf8] sm:$0xf]
        %v1090 = vld [vmem:[%s238 + $0xcfc] sm:$0xf]
        %v1091 = vld [vmem:[%s238 + $0xd00] sm:$0xf]
        %v1092 = vld [vmem:[%s238 + $0xd04] sm:$0xf]
        %v1093 = vld [vmem:[%s238 + $0xd08] sm:$0xf]
        %v1094 = vld [vmem:[%s238 + $0xd0c] sm:$0xf]
        %v1095 = vld [vmem:[%s238 + $0xd10] sm:$0xf]
        %v1096 = vld [vmem:[%s238 + $0xd14] sm:$0xf]
        %v1097 = vld [vmem:[%s238 + $0xd18] sm:$0xf]
        %v1098 = vld [vmem:[%s238 + $0xd1c] sm:$0xf]
        %v1099 = vld [vmem:[%s238 + $0xd20] sm:$0xf]
        %v1100 = vld [vmem:[%s238 + $0xd24] sm:$0xf]
        %v1101 = vld [vmem:[%s238 + $0xd28] sm:$0xf]
        %v1102 = vld [vmem:[%s238 + $0xd2c] sm:$0xf]
        %v1103 = vld [vmem:[%s238 + $0xd30] sm:$0xf]
        %v1104 = vld [vmem:[%s238 + $0xd34] sm:$0xf]
        %v1105 = vld [vmem:[%s238 + $0xd38] sm:$0xf]
        %v1106 = vld [vmem:[%s238 + $0xd3c] sm:$0xf]
        %v1107 = vld [vmem:[%s238 + $0xd40] sm:$0xf]
        %v1108 = vld [vmem:[%s238 + $0xd44] sm:$0xf]
        %v1109 = vld [vmem:[%s238 + $0xd48] sm:$0xf]
        %v1110 = vld [vmem:[%s238 + $0xd4c] sm:$0xf]
        %v1111 = vld [vmem:[%s238 + $0xd50] sm:$0xf]
        %v1112 = vld [vmem:[%s238 + $0xd54] sm:$0xf]
        %v1113 = vld [vmem:[%s238 + $0xd58] sm:$0xf]
        %v1114 = vld [vmem:[%s238 + $0xd5c] sm:$0xf]
        %v1115 = vld [vmem:[%s238 + $0xd60] sm:$0xf]
        %v1116 = vld [vmem:[%s238 + $0xd64] sm:$0xf]
        %v1117 = vld [vmem:[%s238 + $0xd68] sm:$0xf]
        %v1118 = vld [vmem:[%s238 + $0xd6c] sm:$0xf]
        %v1119 = vld [vmem:[%s238 + $0xd70] sm:$0xf]
        %v1120 = vld [vmem:[%s238 + $0xd74] sm:$0xf]
        %v1121 = vld [vmem:[%s238 + $0xd78] sm:$0xf]
        %v1122 = vld [vmem:[%s238 + $0xd7c] sm:$0xf]
        %v1123 = vld [vmem:[%s238 + $0xd80] sm:$0xf]
        %v1124 = vld [vmem:[%s238 + $0xd84] sm:$0xf]
        %v1125 = vld [vmem:[%s238 + $0xd88] sm:$0xf]
        %v1126 = vld [vmem:[%s238 + $0xd8c] sm:$0xf]
        %v1127 = vld [vmem:[%s238 + $0xd90] sm:$0xf]
        %v1128 = vld [vmem:[%s238 + $0xd94] sm:$0xf]
        %v1129 = vld [vmem:[%s238 + $0xd98] sm:$0xf]
        %v1130 = vld [vmem:[%s238 + $0xd9c] sm:$0xf]
        %v1131 = vld [vmem:[%s238 + $0xda0] sm:$0xf]
        %v1132 = vld [vmem:[%s238 + $0xda4] sm:$0xf]
        %v1133 = vld [vmem:[%s238 + $0xda8] sm:$0xf]
        %v1134 = vld [vmem:[%s238 + $0xdac] sm:$0xf]
        %v1135 = vld [vmem:[%s238 + $0xdb0] sm:$0xf]
        %v1136 = vld [vmem:[%s238 + $0xdb4] sm:$0xf]
        %v1137 = vld [vmem:[%s238 + $0xdb8] sm:$0xf]
        %v1138 = vld [vmem:[%s238 + $0xdbc] sm:$0xf]
        %v1139 = vld [vmem:[%s238 + $0xdc0] sm:$0xf]
        %v1140 = vld [vmem:[%s238 + $0xdc4] sm:$0xf]
        %v1141 = vld [vmem:[%s238 + $0xdc8] sm:$0xf]
        %v1142 = vld [vmem:[%s238 + $0xdcc] sm:$0xf]
        %v1143 = vld [vmem:[%s238 + $0xdd0] sm:$0xf]
        %v1144 = vld [vmem:[%s238 + $0xdd4] sm:$0xf]
        %v1145 = vld [vmem:[%s238 + $0xdd8] sm:$0xf]
        %v1146 = vld [vmem:[%s238 + $0xddc] sm:$0xf]
        %v1147 = vld [vmem:[%s238 + $0xde0] sm:$0xf]
        %v1148 = vld [vmem:[%s238 + $0xde4] sm:$0xf]
        %v1149 = vld [vmem:[%s238 + $0xde8] sm:$0xf]
        %v1150 = vld [vmem:[%s238 + $0xdec] sm:$0xf]
        %v1151 = vld [vmem:[%s238 + $0xdf0] sm:$0xf]
        %v1152 = vld [vmem:[%s238 + $0xdf4] sm:$0xf]
        %v1153 = vld [vmem:[%s238 + $0xdf8] sm:$0xf]
        %v1154 = vld [vmem:[%s238 + $0xdfc] sm:$0xf]
        %v1155 = vld [vmem:[%s238 + $0xe00] sm:$0xf]
        %v1156 = vld [vmem:[%s238 + $0xe04] sm:$0xf]
        %v1157 = vld [vmem:[%s238 + $0xe08] sm:$0xf]
        %v1158 = vld [vmem:[%s238 + $0xe0c] sm:$0xf]
        %v1159 = vld [vmem:[%s238 + $0xe10] sm:$0xf]
        %v1160 = vld [vmem:[%s238 + $0xe14] sm:$0xf]
        %v1161 = vld [vmem:[%s238 + $0xe18] sm:$0xf]
        %v1162 = vld [vmem:[%s238 + $0xe1c] sm:$0xf]
        %v1163 = vld [vmem:[%s238 + $0xe20] sm:$0xf]
        %v1164 = vld [vmem:[%s238 + $0xe24] sm:$0xf]
        %v1165 = vld [vmem:[%s238 + $0xe28] sm:$0xf]
        %v1166 = vld [vmem:[%s238 + $0xe2c] sm:$0xf]
        %v1167 = vld [vmem:[%s238 + $0xe30] sm:$0xf]
        %v1168 = vld [vmem:[%s238 + $0xe34] sm:$0xf]
        %v1169 = vld [vmem:[%s238 + $0xe38] sm:$0xf]
        %v1170 = vld [vmem:[%s238 + $0xe3c] sm:$0xf]
        %v1171 = vld [vmem:[%s238 + $0xe40] sm:$0xf]
        %v1172 = vld [vmem:[%s238 + $0xe44] sm:$0xf]
        %v1173 = vld [vmem:[%s238 + $0xe48] sm:$0xf]
        %v1174 = vld [vmem:[%s238 + $0xe4c] sm:$0xf]
        %v1175 = vld [vmem:[%s238 + $0xe50] sm:$0xf]
        %v1176 = vld [vmem:[%s238 + $0xe54] sm:$0xf]
        %v1177 = vld [vmem:[%s238 + $0xe58] sm:$0xf]
        %v1178 = vld [vmem:[%s238 + $0xe5c] sm:$0xf]
        %v1179 = vld [vmem:[%s238 + $0xe60] sm:$0xf]
        %v1180 = vld [vmem:[%s238 + $0xe64] sm:$0xf]
        %v1181 = vld [vmem:[%s238 + $0xe68] sm:$0xf]
        %v1182 = vld [vmem:[%s238 + $0xe6c] sm:$0xf]
        %v1183 = vld [vmem:[%s238 + $0xe70] sm:$0xf]
        %v1184 = vld [vmem:[%s238 + $0xe74] sm:$0xf]
        %v1185 = vld [vmem:[%s238 + $0xe78] sm:$0xf]
        %v1186 = vld [vmem:[%s238 + $0xe7c] sm:$0xf]
        %v1187 = vld [vmem:[%s238 + $0xe80] sm:$0xf]
        %v1188 = vld [vmem:[%s238 + $0xe84] sm:$0xf]
        %v1189 = vld [vmem:[%s238 + $0xe88] sm:$0xf]
        %v1190 = vld [vmem:[%s238 + $0xe8c] sm:$0xf]
        %v1191 = vld [vmem:[%s238 + $0xe90] sm:$0xf]
        %v1192 = vld [vmem:[%s238 + $0xe94] sm:$0xf]
        %v1193 = vld [vmem:[%s238 + $0xe98] sm:$0xf]
        %v1194 = vld [vmem:[%s238 + $0xe9c] sm:$0xf]
        %v1195 = vld [vmem:[%s238 + $0xea0] sm:$0xf]
        %v1196 = vld [vmem:[%s238 + $0xea4] sm:$0xf]
        %v1197 = vld [vmem:[%s238 + $0xea8] sm:$0xf]
        %v1198 = vld [vmem:[%s238 + $0xeac] sm:$0xf]
        %v1199 = vld [vmem:[%s238 + $0xeb0] sm:$0xf]
        %v1200 = vld [vmem:[%s238 + $0xeb4] sm:$0xf]
        %v1201 = vld [vmem:[%s238 + $0xeb8] sm:$0xf]
        %v1202 = vld [vmem:[%s238 + $0xebc] sm:$0xf]
        %v1203 = vld [vmem:[%s238 + $0xec0] sm:$0xf]
        %v1204 = vld [vmem:[%s238 + $0xec4] sm:$0xf]
        %v1205 = vld [vmem:[%s238 + $0xec8] sm:$0xf]
        %v1206 = vld [vmem:[%s238 + $0xecc] sm:$0xf]
        %v1207 = vld [vmem:[%s238 + $0xed0] sm:$0xf]
        %v1208 = vld [vmem:[%s238 + $0xed4] sm:$0xf]
        %v1209 = vld [vmem:[%s238 + $0xed8] sm:$0xf]
        %v1210 = vld [vmem:[%s238 + $0xedc] sm:$0xf]
        %v1211 = vld [vmem:[%s238 + $0xee0] sm:$0xf]
        %v1212 = vld [vmem:[%s238 + $0xee4] sm:$0xf]
        %v1213 = vld [vmem:[%s238 + $0xee8] sm:$0xf]
        %v1214 = vld [vmem:[%s238 + $0xeec] sm:$0xf]
        %v1215 = vld [vmem:[%s238 + $0xef0] sm:$0xf]
        %v1216 = vld [vmem:[%s238 + $0xef4] sm:$0xf]
        %v1217 = vld [vmem:[%s238 + $0xef8] sm:$0xf]
        %v1218 = vld [vmem:[%s238 + $0xefc] sm:$0xf]
        %v1219 = vld [vmem:[%s238 + $0xf00] sm:$0xf]
        %v1220 = vld [vmem:[%s238 + $0xf04] sm:$0xf]
        %v1221 = vld [vmem:[%s238 + $0xf08] sm:$0xf]
        %v1222 = vld [vmem:[%s238 + $0xf0c] sm:$0xf]
        %v1223 = vld [vmem:[%s238 + $0xf10] sm:$0xf]
        %v1224 = vld [vmem:[%s238 + $0xf14] sm:$0xf]
        %v1225 = vld [vmem:[%s238 + $0xf18] sm:$0xf]
        %v1226 = vld [vmem:[%s238 + $0xf1c] sm:$0xf]
        %v1227 = vld [vmem:[%s238 + $0xf20] sm:$0xf]
        %v1228 = vld [vmem:[%s238 + $0xf24] sm:$0xf]
        %v1229 = vld [vmem:[%s238 + $0xf28] sm:$0xf]
        %v1230 = vld [vmem:[%s238 + $0xf2c] sm:$0xf]
        %v1231 = vld [vmem:[%s238 + $0xf30] sm:$0xf]
        %v1232 = vld [vmem:[%s238 + $0xf34] sm:$0xf]
        %v1233 = vld [vmem:[%s238 + $0xf38] sm:$0xf]
        %v1234 = vld [vmem:[%s238 + $0xf3c] sm:$0xf]
        %v1235 = vld [vmem:[%s238 + $0xf40] sm:$0xf]
        %v1236 = vld [vmem:[%s238 + $0xf44] sm:$0xf]
        %v1237 = vld [vmem:[%s238 + $0xf48] sm:$0xf]
        %v1238 = vld [vmem:[%s238 + $0xf4c] sm:$0xf]
        %v1239 = vld [vmem:[%s238 + $0xf50] sm:$0xf]
        %v1240 = vld [vmem:[%s238 + $0xf54] sm:$0xf]
        %v1241 = vld [vmem:[%s238 + $0xf58] sm:$0xf]
        %v1242 = vld [vmem:[%s238 + $0xf5c] sm:$0xf]
        %v1243 = vld [vmem:[%s238 + $0xf60] sm:$0xf]
        %v1244 = vld [vmem:[%s238 + $0xf64] sm:$0xf]
        %v1245 = vld [vmem:[%s238 + $0xf68] sm:$0xf]
        %v1246 = vld [vmem:[%s238 + $0xf6c] sm:$0xf]
        %v1247 = vld [vmem:[%s238 + $0xf70] sm:$0xf]
        %v1248 = vld [vmem:[%s238 + $0xf74] sm:$0xf]
        %v1249 = vld [vmem:[%s238 + $0xf78] sm:$0xf]
        %v1250 = vld [vmem:[%s238 + $0xf7c] sm:$0xf]
        %v1251 = vld [vmem:[%s238 + $0xf80] sm:$0xf]
        %v1252 = vld [vmem:[%s238 + $0xf84] sm:$0xf]
        %v1253 = vld [vmem:[%s238 + $0xf88] sm:$0xf]
        %v1254 = vld [vmem:[%s238 + $0xf8c] sm:$0xf]
        %v1255 = vld [vmem:[%s238 + $0xf90] sm:$0xf]
        %v1256 = vld [vmem:[%s238 + $0xf94] sm:$0xf]
        %v1257 = vld [vmem:[%s238 + $0xf98] sm:$0xf]
        %v1258 = vld [vmem:[%s238 + $0xf9c] sm:$0xf]
        %v1259 = vld [vmem:[%s238 + $0xfa0] sm:$0xf]
        %v1260 = vld [vmem:[%s238 + $0xfa4] sm:$0xf]
        %v1261 = vld [vmem:[%s238 + $0xfa8] sm:$0xf]
        %v1262 = vld [vmem:[%s238 + $0xfac] sm:$0xf]
        %v1263 = vld [vmem:[%s238 + $0xfb0] sm:$0xf]
        %v1264 = vld [vmem:[%s238 + $0xfb4] sm:$0xf]
        %v1265 = vld [vmem:[%s238 + $0xfb8] sm:$0xf]
        %v1266 = vld [vmem:[%s238 + $0xfbc] sm:$0xf]
        %v1267 = vld [vmem:[%s238 + $0xfc0] sm:$0xf]
        %v1268 = vld [vmem:[%s238 + $0xfc4] sm:$0xf]
        %v1269 = vld [vmem:[%s238 + $0xfc8] sm:$0xf]
        %v1270 = vld [vmem:[%s238 + $0xfcc] sm:$0xf]
        %v1271 = vld [vmem:[%s238 + $0xfd0] sm:$0xf]
        %v1272 = vld [vmem:[%s238 + $0xfd4] sm:$0xf]
        %v1273 = vld [vmem:[%s238 + $0xfd8] sm:$0xf]
        %v1274 = vld [vmem:[%s238 + $0xfdc] sm:$0xf]
        %v1275 = vld [vmem:[%s238 + $0xfe0] sm:$0xf]
        %v1276 = vld [vmem:[%s238 + $0xfe4] sm:$0xf]
        %v1277 = vld [vmem:[%s238 + $0xfe8] sm:$0xf]
        %v1278 = vld [vmem:[%s238 + $0xfec] sm:$0xf]
        %v1279 = vld [vmem:[%s238 + $0xff0] sm:$0xf]
        %v1280 = vld [vmem:[%s238 + $0xff4] sm:$0xf]
        %v1281 = vld [vmem:[%s238 + $0xff8] sm:$0xf]
        %v1282 = vld [vmem:[%s238 + $0xffc] sm:$0xf]
        %v1291 = vcombine.high %v251, %v251
        %v1293 = vunpack.c.l.s4 1966171168
        %v1294 = vunpack.c.0.s8 %v1293
        %v1295 = vlaneseq
        %v1296 = vshrl.u32 %v1295, 7
        %v1297 = vsub.s32 %v1294, %v1296
        %v1298 = vrot.slane %v251, %v1297
        %v1300 = vunpack.c.l.s4 1966171168
        %v1301 = vunpack.c.0.s8 %v1300
        %v1302 = vlaneseq
        %v1303 = vshrl.u32 %v1302, 7
        %v1304 = vsub.s32 %v1301, %v1303
        %v1305 = vrot.slane %v1291, %v1304
        %v1306 = vcombine.high %v1298, %v1298
        %v1307 = vcombine.high %v1305, %v1305
        %v1309 = vunpack.c.l.s4 1966171168
        %v1310 = vunpack.c.0.s8 %v1309
        %v1311 = vlaneseq
        %v1312 = vshrl.u32 %v1311, 7
        %v1313 = vsub.s32 %v1310, %v1312
        %v1314 = vrot.slane %v1298, %v1313
        %v1316 = vunpack.c.l.s4 1966171168
        %v1317 = vunpack.c.0.s8 %v1316
        %v1318 = vlaneseq
        %v1319 = vshrl.u32 %v1318, 7
        %v1320 = vsub.s32 %v1317, %v1319
        %v1321 = vrot.slane %v1305, %v1320
        %v1323 = vunpack.c.l.s4 1966171168
        %v1324 = vunpack.c.0.s8 %v1323
        %v1325 = vlaneseq
        %v1326 = vshrl.u32 %v1325, 7
        %v1327 = vsub.s32 %v1324, %v1326
        %v1328 = vrot.slane %v1306, %v1327
        %v1330 = vunpack.c.l.s4 1966171168
        %v1331 = vunpack.c.0.s8 %v1330
        %v1332 = vlaneseq
        %v1333 = vshrl.u32 %v1332, 7
        %v1334 = vsub.s32 %v1331, %v1333
        %v1335 = vrot.slane %v1307, %v1334
        %v1336 = vcombine.high %v1314, %v1314
        %v1337 = vcombine.high %v1321, %v1321
        %v1338 = vcombine.high %v1328, %v1328
        %v1339 = vcombine.high %v1335, %v1335
        %v1340 = vcombine.high %v252, %v252
        %v1342 = vunpack.c.l.s4 1966171168
        %v1343 = vunpack.c.0.s8 %v1342
        %v1344 = vlaneseq
        %v1345 = vshrl.u32 %v1344, 7
        %v1346 = vsub.s32 %v1343, %v1345
        %v1347 = vrot.slane %v252, %v1346
        %v1349 = vunpack.c.l.s4 1966171168
        %v1350 = vunpack.c.0.s8 %v1349
        %v1351 = vlaneseq
        %v1352 = vshrl.u32 %v1351, 7
        %v1353 = vsub.s32 %v1350, %v1352
        %v1354 = vrot.slane %v1340, %v1353
        %v1355 = vcombine.high %v1347, %v1347
        %v1356 = vcombine.high %v1354, %v1354
        %v1358 = vunpack.c.l.s4 1966171168
        %v1359 = vunpack.c.0.s8 %v1358
        %v1360 = vlaneseq
        %v1361 = vshrl.u32 %v1360, 7
        %v1362 = vsub.s32 %v1359, %v1361
        %v1363 = vrot.slane %v1347, %v1362
        %v1365 = vunpack.c.l.s4 1966171168
        %v1366 = vunpack.c.0.s8 %v1365
        %v1367 = vlaneseq
        %v1368 = vshrl.u32 %v1367, 7
        %v1369 = vsub.s32 %v1366, %v1368
        %v1370 = vrot.slane %v1354, %v1369
        %v1372 = vunpack.c.l.s4 1966171168
        %v1373 = vunpack.c.0.s8 %v1372
        %v1374 = vlaneseq
        %v1375 = vshrl.u32 %v1374, 7
        %v1376 = vsub.s32 %v1373, %v1375
        %v1377 = vrot.slane %v1355, %v1376
        %v1379 = vunpack.c.l.s4 1966171168
        %v1380 = vunpack.c.0.s8 %v1379
        %v1381 = vlaneseq
        %v1382 = vshrl.u32 %v1381, 7
        %v1383 = vsub.s32 %v1380, %v1382
        %v1384 = vrot.slane %v1356, %v1383
        %v1385 = vcombine.high %v1363, %v1363
        %v1386 = vcombine.high %v1370, %v1370
        %v1387 = vcombine.high %v1377, %v1377
        %v1388 = vcombine.high %v1384, %v1384
        %v1389 = vcombine.high %v253, %v253
        %v1391 = vunpack.c.l.s4 1966171168
        %v1392 = vunpack.c.0.s8 %v1391
        %v1393 = vlaneseq
        %v1394 = vshrl.u32 %v1393, 7
        %v1395 = vsub.s32 %v1392, %v1394
        %v1396 = vrot.slane %v253, %v1395
        %v1398 = vunpack.c.l.s4 1966171168
        %v1399 = vunpack.c.0.s8 %v1398
        %v1400 = vlaneseq
        %v1401 = vshrl.u32 %v1400, 7
        %v1402 = vsub.s32 %v1399, %v1401
        %v1403 = vrot.slane %v1389, %v1402
        %v1404 = vcombine.high %v1396, %v1396
        %v1405 = vcombine.high %v1403, %v1403
        %v1407 = vunpack.c.l.s4 1966171168
        %v1408 = vunpack.c.0.s8 %v1407
        %v1409 = vlaneseq
        %v1410 = vshrl.u32 %v1409, 7
        %v1411 = vsub.s32 %v1408, %v1410
        %v1412 = vrot.slane %v1396, %v1411
        %v1414 = vunpack.c.l.s4 1966171168
        %v1415 = vunpack.c.0.s8 %v1414
        %v1416 = vlaneseq
        %v1417 = vshrl.u32 %v1416, 7
        %v1418 = vsub.s32 %v1415, %v1417
        %v1419 = vrot.slane %v1403, %v1418
        %v1421 = vunpack.c.l.s4 1966171168
        %v1422 = vunpack.c.0.s8 %v1421
        %v1423 = vlaneseq
        %v1424 = vshrl.u32 %v1423, 7
        %v1425 = vsub.s32 %v1422, %v1424
        %v1426 = vrot.slane %v1404, %v1425
        %v1428 = vunpack.c.l.s4 1966171168
        %v1429 = vunpack.c.0.s8 %v1428
        %v1430 = vlaneseq
        %v1431 = vshrl.u32 %v1430, 7
        %v1432 = vsub.s32 %v1429, %v1431
        %v1433 = vrot.slane %v1405, %v1432
        %v1434 = vcombine.high %v1412, %v1412
        %v1435 = vcombine.high %v1419, %v1419
        %v1436 = vcombine.high %v1426, %v1426
        %v1437 = vcombine.high %v1433, %v1433
        %v1438 = vcombine.high %v254, %v254
        %v1440 = vunpack.c.l.s4 1966171168
        %v1441 = vunpack.c.0.s8 %v1440
        %v1442 = vlaneseq
        %v1443 = vshrl.u32 %v1442, 7
        %v1444 = vsub.s32 %v1441, %v1443
        %v1445 = vrot.slane %v254, %v1444
        %v1447 = vunpack.c.l.s4 1966171168
        %v1448 = vunpack.c.0.s8 %v1447
        %v1449 = vlaneseq
        %v1450 = vshrl.u32 %v1449, 7
        %v1451 = vsub.s32 %v1448, %v1450
        %v1452 = vrot.slane %v1438, %v1451
        %v1453 = vcombine.high %v1445, %v1445
        %v1454 = vcombine.high %v1452, %v1452
        %v1456 = vunpack.c.l.s4 1966171168
        %v1457 = vunpack.c.0.s8 %v1456
        %v1458 = vlaneseq
        %v1459 = vshrl.u32 %v1458, 7
        %v1460 = vsub.s32 %v1457, %v1459
        %v1461 = vrot.slane %v1445, %v1460
        %v1463 = vunpack.c.l.s4 1966171168
        %v1464 = vunpack.c.0.s8 %v1463
        %v1465 = vlaneseq
        %v1466 = vshrl.u32 %v1465, 7
        %v1467 = vsub.s32 %v1464, %v1466
        %v1468 = vrot.slane %v1452, %v1467
        %v1470 = vunpack.c.l.s4 1966171168
        %v1471 = vunpack.c.0.s8 %v1470
        %v1472 = vlaneseq
        %v1473 = vshrl.u32 %v1472, 7
        %v1474 = vsub.s32 %v1471, %v1473
        %v1475 = vrot.slane %v1453, %v1474
        %v1477 = vunpack.c.l.s4 1966171168
        %v1478 = vunpack.c.0.s8 %v1477
        %v1479 = vlaneseq
        %v1480 = vshrl.u32 %v1479, 7
        %v1481 = vsub.s32 %v1478, %v1480
        %v1482 = vrot.slane %v1454, %v1481
        %v1483 = vcombine.high %v1461, %v1461
        %v1484 = vcombine.high %v1468, %v1468
        %v1485 = vcombine.high %v1475, %v1475
        %v1486 = vcombine.high %v1482, %v1482
        %v1487 = vcombine.high %v255, %v255
        %v1489 = vunpack.c.l.s4 1966171168
        %v1490 = vunpack.c.0.s8 %v1489
        %v1491 = vlaneseq
        %v1492 = vshrl.u32 %v1491, 7
        %v1493 = vsub.s32 %v1490, %v1492
        %v1494 = vrot.slane %v255, %v1493
        %v1496 = vunpack.c.l.s4 1966171168
        %v1497 = vunpack.c.0.s8 %v1496
        %v1498 = vlaneseq
        %v1499 = vshrl.u32 %v1498, 7
        %v1500 = vsub.s32 %v1497, %v1499
        %v1501 = vrot.slane %v1487, %v1500
        %v1502 = vcombine.high %v1494, %v1494
        %v1503 = vcombine.high %v1501, %v1501
        %v1505 = vunpack.c.l.s4 1966171168
        %v1506 = vunpack.c.0.s8 %v1505
        %v1507 = vlaneseq
        %v1508 = vshrl.u32 %v1507, 7
        %v1509 = vsub.s32 %v1506, %v1508
        %v1510 = vrot.slane %v1494, %v1509
        %v1512 = vunpack.c.l.s4 1966171168
        %v1513 = vunpack.c.0.s8 %v1512
        %v1514 = vlaneseq
        %v1515 = vshrl.u32 %v1514, 7
        %v1516 = vsub.s32 %v1513, %v1515
        %v1517 = vrot.slane %v1501, %v1516
        %v1519 = vunpack.c.l.s4 1966171168
        %v1520 = vunpack.c.0.s8 %v1519
        %v1521 = vlaneseq
        %v1522 = vshrl.u32 %v1521, 7
        %v1523 = vsub.s32 %v1520, %v1522
        %v1524 = vrot.slane %v1502, %v1523
        %v1526 = vunpack.c.l.s4 1966171168
        %v1527 = vunpack.c.0.s8 %v1526
        %v1528 = vlaneseq
        %v1529 = vshrl.u32 %v1528, 7
        %v1530 = vsub.s32 %v1527, %v1529
        %v1531 = vrot.slane %v1503, %v1530
        %v1532 = vcombine.high %v1510, %v1510
        %v1533 = vcombine.high %v1517, %v1517
        %v1534 = vcombine.high %v1524, %v1524
        %v1535 = vcombine.high %v1531, %v1531
        %v1536 = vcombine.high %v256, %v256
        %v1538 = vunpack.c.l.s4 1966171168
        %v1539 = vunpack.c.0.s8 %v1538
        %v1540 = vlaneseq
        %v1541 = vshrl.u32 %v1540, 7
        %v1542 = vsub.s32 %v1539, %v1541
        %v1543 = vrot.slane %v256, %v1542
        %v1545 = vunpack.c.l.s4 1966171168
        %v1546 = vunpack.c.0.s8 %v1545
        %v1547 = vlaneseq
        %v1548 = vshrl.u32 %v1547, 7
        %v1549 = vsub.s32 %v1546, %v1548
        %v1550 = vrot.slane %v1536, %v1549
        %v1551 = vcombine.high %v1543, %v1543
        %v1552 = vcombine.high %v1550, %v1550
        %v1554 = vunpack.c.l.s4 1966171168
        %v1555 = vunpack.c.0.s8 %v1554
        %v1556 = vlaneseq
        %v1557 = vshrl.u32 %v1556, 7
        %v1558 = vsub.s32 %v1555, %v1557
        %v1559 = vrot.slane %v1543, %v1558
        %v1561 = vunpack.c.l.s4 1966171168
        %v1562 = vunpack.c.0.s8 %v1561
        %v1563 = vlaneseq
        %v1564 = vshrl.u32 %v1563, 7
        %v1565 = vsub.s32 %v1562, %v1564
        %v1566 = vrot.slane %v1550, %v1565
        %v1568 = vunpack.c.l.s4 1966171168
        %v1569 = vunpack.c.0.s8 %v1568
        %v1570 = vlaneseq
        %v1571 = vshrl.u32 %v1570, 7
        %v1572 = vsub.s32 %v1569, %v1571
        %v1573 = vrot.slane %v1551, %v1572
        %v1575 = vunpack.c.l.s4 1966171168
        %v1576 = vunpack.c.0.s8 %v1575
        %v1577 = vlaneseq
        %v1578 = vshrl.u32 %v1577, 7
        %v1579 = vsub.s32 %v1576, %v1578
        %v1580 = vrot.slane %v1552, %v1579
        %v1581 = vcombine.high %v1559, %v1559
        %v1582 = vcombine.high %v1566, %v1566
        %v1583 = vcombine.high %v1573, %v1573
        %v1584 = vcombine.high %v1580, %v1580
        %v1585 = vcombine.high %v257, %v257
        %v1587 = vunpack.c.l.s4 1966171168
        %v1588 = vunpack.c.0.s8 %v1587
        %v1589 = vlaneseq
        %v1590 = vshrl.u32 %v1589, 7
        %v1591 = vsub.s32 %v1588, %v1590
        %v1592 = vrot.slane %v257, %v1591
        %v1594 = vunpack.c.l.s4 1966171168
        %v1595 = vunpack.c.0.s8 %v1594
        %v1596 = vlaneseq
        %v1597 = vshrl.u32 %v1596, 7
        %v1598 = vsub.s32 %v1595, %v1597
        %v1599 = vrot.slane %v1585, %v1598
        %v1600 = vcombine.high %v1592, %v1592
        %v1601 = vcombine.high %v1599, %v1599
        %v1603 = vunpack.c.l.s4 1966171168
        %v1604 = vunpack.c.0.s8 %v1603
        %v1605 = vlaneseq
        %v1606 = vshrl.u32 %v1605, 7
        %v1607 = vsub.s32 %v1604, %v1606
        %v1608 = vrot.slane %v1592, %v1607
        %v1610 = vunpack.c.l.s4 1966171168
        %v1611 = vunpack.c.0.s8 %v1610
        %v1612 = vlaneseq
        %v1613 = vshrl.u32 %v1612, 7
        %v1614 = vsub.s32 %v1611, %v1613
        %v1615 = vrot.slane %v1599, %v1614
        %v1617 = vunpack.c.l.s4 1966171168
        %v1618 = vunpack.c.0.s8 %v1617
        %v1619 = vlaneseq
        %v1620 = vshrl.u32 %v1619, 7
        %v1621 = vsub.s32 %v1618, %v1620
        %v1622 = vrot.slane %v1600, %v1621
        %v1624 = vunpack.c.l.s4 1966171168
        %v1625 = vunpack.c.0.s8 %v1624
        %v1626 = vlaneseq
        %v1627 = vshrl.u32 %v1626, 7
        %v1628 = vsub.s32 %v1625, %v1627
        %v1629 = vrot.slane %v1601, %v1628
        %v1630 = vcombine.high %v1608, %v1608
        %v1631 = vcombine.high %v1615, %v1615
        %v1632 = vcombine.high %v1622, %v1622
        %v1633 = vcombine.high %v1629, %v1629
        %v1634 = vcombine.high %v258, %v258
        %v1636 = vunpack.c.l.s4 1966171168
        %v1637 = vunpack.c.0.s8 %v1636
        %v1638 = vlaneseq
        %v1639 = vshrl.u32 %v1638, 7
        %v1640 = vsub.s32 %v1637, %v1639
        %v1641 = vrot.slane %v258, %v1640
        %v1643 = vunpack.c.l.s4 1966171168
        %v1644 = vunpack.c.0.s8 %v1643
        %v1645 = vlaneseq
        %v1646 = vshrl.u32 %v1645, 7
        %v1647 = vsub.s32 %v1644, %v1646
        %v1648 = vrot.slane %v1634, %v1647
        %v1649 = vcombine.high %v1641, %v1641
        %v1650 = vcombine.high %v1648, %v1648
        %v1652 = vunpack.c.l.s4 1966171168
        %v1653 = vunpack.c.0.s8 %v1652
        %v1654 = vlaneseq
        %v1655 = vshrl.u32 %v1654, 7
        %v1656 = vsub.s32 %v1653, %v1655
        %v1657 = vrot.slane %v1641, %v1656
        %v1659 = vunpack.c.l.s4 1966171168
        %v1660 = vunpack.c.0.s8 %v1659
        %v1661 = vlaneseq
        %v1662 = vshrl.u32 %v1661, 7
        %v1663 = vsub.s32 %v1660, %v1662
        %v1664 = vrot.slane %v1648, %v1663
        %v1666 = vunpack.c.l.s4 1966171168
        %v1667 = vunpack.c.0.s8 %v1666
        %v1668 = vlaneseq
        %v1669 = vshrl.u32 %v1668, 7
        %v1670 = vsub.s32 %v1667, %v1669
        %v1671 = vrot.slane %v1649, %v1670
        %v1673 = vunpack.c.l.s4 1966171168
        %v1674 = vunpack.c.0.s8 %v1673
        %v1675 = vlaneseq
        %v1676 = vshrl.u32 %v1675, 7
        %v1677 = vsub.s32 %v1674, %v1676
        %v1678 = vrot.slane %v1650, %v1677
        %v1679 = vcombine.high %v1657, %v1657
        %v1680 = vcombine.high %v1664, %v1664
        %v1681 = vcombine.high %v1671, %v1671
        %v1682 = vcombine.high %v1678, %v1678
        %v2771 = vunpack.c.l.b16 %v259
        %v2772 = vunpack.c.l.b16 %v260
        %v2773 = vunpack.c.l.b16 %v261
        %v2774 = vunpack.c.l.b16 %v262
        %v2775 = vunpack.c.l.b16 %v263
        %v2776 = vunpack.c.l.b16 %v264
        %v2777 = vunpack.c.l.b16 %v265
        %v2778 = vunpack.c.l.b16 %v266
        %v2779 = vunpack.c.l.b16 %v267
        %v2780 = vunpack.c.l.b16 %v268
        %v2781 = vunpack.c.l.b16 %v269
        %v2782 = vunpack.c.l.b16 %v270
        %v2783 = vunpack.c.l.b16 %v271
        %v2784 = vunpack.c.l.b16 %v272
        %v2785 = vunpack.c.l.b16 %v273
        %v2786 = vunpack.c.l.b16 %v274
        %v2787 = vunpack.c.l.b16 %v275
        %v2788 = vunpack.c.l.b16 %v276
        %v2789 = vunpack.c.l.b16 %v277
        %v2790 = vunpack.c.l.b16 %v278
        %v2791 = vunpack.c.l.b16 %v279
        %v2792 = vunpack.c.l.b16 %v280
        %v2793 = vunpack.c.l.b16 %v281
        %v2794 = vunpack.c.l.b16 %v282
        %v2795 = vunpack.c.l.b16 %v283
        %v2796 = vunpack.c.l.b16 %v284
        %v2797 = vunpack.c.l.b16 %v285
        %v2798 = vunpack.c.l.b16 %v286
        %v2799 = vunpack.c.l.b16 %v287
        %v2800 = vunpack.c.l.b16 %v288
        %v2801 = vunpack.c.l.b16 %v289
        %v2802 = vunpack.c.l.b16 %v290
        %v2803 = vunpack.c.l.b16 %v291
        %v2804 = vunpack.c.l.b16 %v292
        %v2805 = vunpack.c.l.b16 %v293
        %v2806 = vunpack.c.l.b16 %v294
        %v2807 = vunpack.c.l.b16 %v295
        %v2808 = vunpack.c.l.b16 %v296
        %v2809 = vunpack.c.l.b16 %v297
        %v2810 = vunpack.c.l.b16 %v298
        %v2811 = vunpack.c.l.b16 %v299
        %v2812 = vunpack.c.l.b16 %v300
        %v2813 = vunpack.c.l.b16 %v301
        %v2814 = vunpack.c.l.b16 %v302
        %v2815 = vunpack.c.l.b16 %v303
        %v2816 = vunpack.c.l.b16 %v304
        %v2817 = vunpack.c.l.b16 %v305
        %v2818 = vunpack.c.l.b16 %v306
        %v2819 = vunpack.c.l.b16 %v307
        %v2820 = vunpack.c.l.b16 %v308
        %v2821 = vunpack.c.l.b16 %v309
        %v2822 = vunpack.c.l.b16 %v310
        %v2823 = vunpack.c.l.b16 %v311
        %v2824 = vunpack.c.l.b16 %v312
        %v2825 = vunpack.c.l.b16 %v313
        %v2826 = vunpack.c.l.b16 %v314
        %v2827 = vunpack.c.l.b16 %v315
        %v2828 = vunpack.c.l.b16 %v316
        %v2829 = vunpack.c.l.b16 %v317
        %v2830 = vunpack.c.l.b16 %v318
        %v2831 = vunpack.c.l.b16 %v319
        %v2832 = vunpack.c.l.b16 %v320
        %v2833 = vunpack.c.l.b16 %v321
        %v2834 = vunpack.c.l.b16 %v322
        %v2835 = vunpack.c.l.b16 %v323
        %v2836 = vunpack.c.l.b16 %v324
        %v2837 = vunpack.c.l.b16 %v325
        %v2838 = vunpack.c.l.b16 %v326
        %v2839 = vunpack.c.l.b16 %v327
        %v2840 = vunpack.c.l.b16 %v328
        %v2841 = vunpack.c.l.b16 %v329
        %v2842 = vunpack.c.l.b16 %v330
        %v2843 = vunpack.c.l.b16 %v331
        %v2844 = vunpack.c.l.b16 %v332
        %v2845 = vunpack.c.l.b16 %v333
        %v2846 = vunpack.c.l.b16 %v334
        %v2847 = vunpack.c.l.b16 %v335
        %v2848 = vunpack.c.l.b16 %v336
        %v2849 = vunpack.c.l.b16 %v337
        %v2850 = vunpack.c.l.b16 %v338
        %v2851 = vunpack.c.l.b16 %v339
        %v2852 = vunpack.c.l.b16 %v340
        %v2853 = vunpack.c.l.b16 %v341
        %v2854 = vunpack.c.l.b16 %v342
        %v2855 = vunpack.c.l.b16 %v343
        %v2856 = vunpack.c.l.b16 %v344
        %v2857 = vunpack.c.l.b16 %v345
        %v2858 = vunpack.c.l.b16 %v346
        %v2859 = vunpack.c.l.b16 %v347
        %v2860 = vunpack.c.l.b16 %v348
        %v2861 = vunpack.c.l.b16 %v349
        %v2862 = vunpack.c.l.b16 %v350
        %v2863 = vunpack.c.l.b16 %v351
        %v2864 = vunpack.c.l.b16 %v352
        %v2865 = vunpack.c.l.b16 %v353
        %v2866 = vunpack.c.l.b16 %v354
        %v2867 = vunpack.c.l.b16 %v355
        %v2868 = vunpack.c.l.b16 %v356
        %v2869 = vunpack.c.l.b16 %v357
        %v2870 = vunpack.c.l.b16 %v358
        %v2871 = vunpack.c.l.b16 %v359
        %v2872 = vunpack.c.l.b16 %v360
        %v2873 = vunpack.c.l.b16 %v361
        %v2874 = vunpack.c.l.b16 %v362
        %v2875 = vunpack.c.l.b16 %v363
        %v2876 = vunpack.c.l.b16 %v364
        %v2877 = vunpack.c.l.b16 %v365
        %v2878 = vunpack.c.l.b16 %v366
        %v2879 = vunpack.c.l.b16 %v367
        %v2880 = vunpack.c.l.b16 %v368
        %v2881 = vunpack.c.l.b16 %v369
        %v2882 = vunpack.c.l.b16 %v370
        %v2883 = vunpack.c.l.b16 %v371
        %v2884 = vunpack.c.l.b16 %v372
        %v2885 = vunpack.c.l.b16 %v373
        %v2886 = vunpack.c.l.b16 %v374
        %v2887 = vunpack.c.l.b16 %v375
        %v2888 = vunpack.c.l.b16 %v376
        %v2889 = vunpack.c.l.b16 %v377
        %v2890 = vunpack.c.l.b16 %v378
        %v2891 = vunpack.c.l.b16 %v379
        %v2892 = vunpack.c.l.b16 %v380
        %v2893 = vunpack.c.l.b16 %v381
        %v2894 = vunpack.c.l.b16 %v382
        %v2895 = vunpack.c.l.b16 %v383
        %v2896 = vunpack.c.l.b16 %v384
        %v2897 = vunpack.c.l.b16 %v385
        %v2898 = vunpack.c.l.b16 %v386
        %v2899 = vunpack.c.l.b16 %v387
        %v2900 = vunpack.c.l.b16 %v388
        %v2901 = vunpack.c.l.b16 %v389
        %v2902 = vunpack.c.l.b16 %v390
        %v2903 = vunpack.c.l.b16 %v391
        %v2904 = vunpack.c.l.b16 %v392
        %v2905 = vunpack.c.l.b16 %v393
        %v2906 = vunpack.c.l.b16 %v394
        %v2907 = vunpack.c.l.b16 %v395
        %v2908 = vunpack.c.l.b16 %v396
        %v2909 = vunpack.c.l.b16 %v397
        %v2910 = vunpack.c.l.b16 %v398
        %v2911 = vunpack.c.l.b16 %v399
        %v2912 = vunpack.c.l.b16 %v400
        %v2913 = vunpack.c.l.b16 %v401
        %v2914 = vunpack.c.l.b16 %v402
        %v2915 = vunpack.c.l.b16 %v403
        %v2916 = vunpack.c.l.b16 %v404
        %v2917 = vunpack.c.l.b16 %v405
        %v2918 = vunpack.c.l.b16 %v406
        %v2919 = vunpack.c.l.b16 %v407
        %v2920 = vunpack.c.l.b16 %v408
        %v2921 = vunpack.c.l.b16 %v409
        %v2922 = vunpack.c.l.b16 %v410
        %v2923 = vunpack.c.l.b16 %v411
        %v2924 = vunpack.c.l.b16 %v412
        %v2925 = vunpack.c.l.b16 %v413
        %v2926 = vunpack.c.l.b16 %v414
        %v2927 = vunpack.c.l.b16 %v415
        %v2928 = vunpack.c.l.b16 %v416
        %v2929 = vunpack.c.l.b16 %v417
        %v2930 = vunpack.c.l.b16 %v418
        %v2931 = vunpack.c.l.b16 %v419
        %v2932 = vunpack.c.l.b16 %v420
        %v2933 = vunpack.c.l.b16 %v421
        %v2934 = vunpack.c.l.b16 %v422
        %v2935 = vunpack.c.l.b16 %v423
        %v2936 = vunpack.c.l.b16 %v424
        %v2937 = vunpack.c.l.b16 %v425
        %v2938 = vunpack.c.l.b16 %v426
        %v2939 = vunpack.c.l.b16 %v427
        %v2940 = vunpack.c.l.b16 %v428
        %v2941 = vunpack.c.l.b16 %v429
        %v2942 = vunpack.c.l.b16 %v430
        %v2943 = vunpack.c.l.b16 %v431
        %v2944 = vunpack.c.l.b16 %v432
        %v2945 = vunpack.c.l.b16 %v433
        %v2946 = vunpack.c.l.b16 %v434
        %v2947 = vunpack.c.l.b16 %v435
        %v2948 = vunpack.c.l.b16 %v436
        %v2949 = vunpack.c.l.b16 %v437
        %v2950 = vunpack.c.l.b16 %v438
        %v2951 = vunpack.c.l.b16 %v439
        %v2952 = vunpack.c.l.b16 %v440
        %v2953 = vunpack.c.l.b16 %v441
        %v2954 = vunpack.c.l.b16 %v442
        %v2955 = vunpack.c.l.b16 %v443
        %v2956 = vunpack.c.l.b16 %v444
        %v2957 = vunpack.c.l.b16 %v445
        %v2958 = vunpack.c.l.b16 %v446
        %v2959 = vunpack.c.l.b16 %v447
        %v2960 = vunpack.c.l.b16 %v448
        %v2961 = vunpack.c.l.b16 %v449
        %v2962 = vunpack.c.l.b16 %v450
        %v2963 = vunpack.c.l.b16 %v451
        %v2964 = vunpack.c.l.b16 %v452
        %v2965 = vunpack.c.l.b16 %v453
        %v2966 = vunpack.c.l.b16 %v454
        %v2967 = vunpack.c.l.b16 %v455
        %v2968 = vunpack.c.l.b16 %v456
        %v2969 = vunpack.c.l.b16 %v457
        %v2970 = vunpack.c.l.b16 %v458
        %v2971 = vunpack.c.l.b16 %v459
        %v2972 = vunpack.c.l.b16 %v460
        %v2973 = vunpack.c.l.b16 %v461
        %v2974 = vunpack.c.l.b16 %v462
        %v2975 = vunpack.c.l.b16 %v463
        %v2976 = vunpack.c.l.b16 %v464
        %v2977 = vunpack.c.l.b16 %v465
        %v2978 = vunpack.c.l.b16 %v466
        %v2979 = vunpack.c.l.b16 %v467
        %v2980 = vunpack.c.l.b16 %v468
        %v2981 = vunpack.c.l.b16 %v469
        %v2982 = vunpack.c.l.b16 %v470
        %v2983 = vunpack.c.l.b16 %v471
        %v2984 = vunpack.c.l.b16 %v472
        %v2985 = vunpack.c.l.b16 %v473
        %v2986 = vunpack.c.l.b16 %v474
        %v2987 = vunpack.c.l.b16 %v475
        %v2988 = vunpack.c.l.b16 %v476
        %v2989 = vunpack.c.l.b16 %v477
        %v2990 = vunpack.c.l.b16 %v478
        %v2991 = vunpack.c.l.b16 %v479
        %v2992 = vunpack.c.l.b16 %v480
        %v2993 = vunpack.c.l.b16 %v481
        %v2994 = vunpack.c.l.b16 %v482
        %v2995 = vunpack.c.l.b16 %v483
        %v2996 = vunpack.c.l.b16 %v484
        %v2997 = vunpack.c.l.b16 %v485
        %v2998 = vunpack.c.l.b16 %v486
        %v2999 = vunpack.c.l.b16 %v487
        %v3000 = vunpack.c.l.b16 %v488
        %v3001 = vunpack.c.l.b16 %v489
        %v3002 = vunpack.c.l.b16 %v490
        %v3003 = vunpack.c.l.b16 %v491
        %v3004 = vunpack.c.l.b16 %v492
        %v3005 = vunpack.c.l.b16 %v493
        %v3006 = vunpack.c.l.b16 %v494
        %v3007 = vunpack.c.l.b16 %v495
        %v3008 = vunpack.c.l.b16 %v496
        %v3009 = vunpack.c.l.b16 %v497
        %v3010 = vunpack.c.l.b16 %v498
        %v3011 = vunpack.c.l.b16 %v499
        %v3012 = vunpack.c.l.b16 %v500
        %v3013 = vunpack.c.l.b16 %v501
        %v3014 = vunpack.c.l.b16 %v502
        %v3015 = vunpack.c.l.b16 %v503
        %v3016 = vunpack.c.l.b16 %v504
        %v3017 = vunpack.c.l.b16 %v505
        %v3018 = vunpack.c.l.b16 %v506
        %v3019 = vunpack.c.l.b16 %v507
        %v3020 = vunpack.c.l.b16 %v508
        %v3021 = vunpack.c.l.b16 %v509
        %v3022 = vunpack.c.l.b16 %v510
        %v3023 = vunpack.c.l.b16 %v511
        %v3024 = vunpack.c.l.b16 %v512
        %v3025 = vunpack.c.l.b16 %v513
        %v3026 = vunpack.c.l.b16 %v514
        %v3027 = vunpack.c.l.b16 %v515
        %v3028 = vunpack.c.l.b16 %v516
        %v3029 = vunpack.c.l.b16 %v517
        %v3030 = vunpack.c.l.b16 %v518
        %v3031 = vunpack.c.l.b16 %v519
        %v3032 = vunpack.c.l.b16 %v520
        %v3033 = vunpack.c.l.b16 %v521
        %v3034 = vunpack.c.l.b16 %v522
        %v3035 = vunpack.c.l.b16 %v523
        %v3036 = vunpack.c.l.b16 %v524
        %v3037 = vunpack.c.l.b16 %v525
        %v3038 = vunpack.c.l.b16 %v526
        %v3039 = vunpack.c.l.b16 %v527
        %v3040 = vunpack.c.l.b16 %v528
        %v3041 = vunpack.c.l.b16 %v529
        %v3042 = vunpack.c.l.b16 %v530
        %v3043 = vunpack.c.l.b16 %v531
        %v3044 = vunpack.c.l.b16 %v532
        %v3045 = vunpack.c.l.b16 %v533
        %v3046 = vunpack.c.l.b16 %v534
        %v3047 = vunpack.c.l.b16 %v535
        %v3048 = vunpack.c.l.b16 %v536
        %v3049 = vunpack.c.l.b16 %v537
        %v3050 = vunpack.c.l.b16 %v538
        %v3051 = vunpack.c.l.b16 %v539
        %v3052 = vunpack.c.l.b16 %v540
        %v3053 = vunpack.c.l.b16 %v541
        %v3054 = vunpack.c.l.b16 %v542
        %v3055 = vunpack.c.l.b16 %v543
        %v3056 = vunpack.c.l.b16 %v544
        %v3057 = vunpack.c.l.b16 %v545
        %v3058 = vunpack.c.l.b16 %v546
        %v3059 = vunpack.c.l.b16 %v547
        %v3060 = vunpack.c.l.b16 %v548
        %v3061 = vunpack.c.l.b16 %v549
        %v3062 = vunpack.c.l.b16 %v550
        %v3063 = vunpack.c.l.b16 %v551
        %v3064 = vunpack.c.l.b16 %v552
        %v3065 = vunpack.c.l.b16 %v553
        %v3066 = vunpack.c.l.b16 %v554
        %v3067 = vunpack.c.l.b16 %v555
        %v3068 = vunpack.c.l.b16 %v556
        %v3069 = vunpack.c.l.b16 %v557
        %v3070 = vunpack.c.l.b16 %v558
        %v3071 = vunpack.c.l.b16 %v559
        %v3072 = vunpack.c.l.b16 %v560
        %v3073 = vunpack.c.l.b16 %v561
        %v3074 = vunpack.c.l.b16 %v562
        %v3075 = vunpack.c.l.b16 %v563
        %v3076 = vunpack.c.l.b16 %v564
        %v3077 = vunpack.c.l.b16 %v565
        %v3078 = vunpack.c.l.b16 %v566
        %v3079 = vunpack.c.l.b16 %v567
        %v3080 = vunpack.c.l.b16 %v568
        %v3081 = vunpack.c.l.b16 %v569
        %v3082 = vunpack.c.l.b16 %v570
        %v3083 = vunpack.c.l.b16 %v571
        %v3084 = vunpack.c.l.b16 %v572
        %v3085 = vunpack.c.l.b16 %v573
        %v3086 = vunpack.c.l.b16 %v574
        %v3087 = vunpack.c.l.b16 %v575
        %v3088 = vunpack.c.l.b16 %v576
        %v3089 = vunpack.c.l.b16 %v577
        %v3090 = vunpack.c.l.b16 %v578
        %v3091 = vunpack.c.l.b16 %v579
        %v3092 = vunpack.c.l.b16 %v580
        %v3093 = vunpack.c.l.b16 %v581
        %v3094 = vunpack.c.l.b16 %v582
        %v3095 = vunpack.c.l.b16 %v583
        %v3096 = vunpack.c.l.b16 %v584
        %v3097 = vunpack.c.l.b16 %v585
        %v3098 = vunpack.c.l.b16 %v586
        %v3099 = vunpack.c.l.b16 %v587
        %v3100 = vunpack.c.l.b16 %v588
        %v3101 = vunpack.c.l.b16 %v589
        %v3102 = vunpack.c.l.b16 %v590
        %v3103 = vunpack.c.l.b16 %v591
        %v3104 = vunpack.c.l.b16 %v592
        %v3105 = vunpack.c.l.b16 %v593
        %v3106 = vunpack.c.l.b16 %v594
        %v3107 = vunpack.c.l.b16 %v595
        %v3108 = vunpack.c.l.b16 %v596
        %v3109 = vunpack.c.l.b16 %v597
        %v3110 = vunpack.c.l.b16 %v598
        %v3111 = vunpack.c.l.b16 %v599
        %v3112 = vunpack.c.l.b16 %v600
        %v3113 = vunpack.c.l.b16 %v601
        %v3114 = vunpack.c.l.b16 %v602
        %v3115 = vunpack.c.l.b16 %v603
        %v3116 = vunpack.c.l.b16 %v604
        %v3117 = vunpack.c.l.b16 %v605
        %v3118 = vunpack.c.l.b16 %v606
        %v3119 = vunpack.c.l.b16 %v607
        %v3120 = vunpack.c.l.b16 %v608
        %v3121 = vunpack.c.l.b16 %v609
        %v3122 = vunpack.c.l.b16 %v610
        %v3123 = vunpack.c.l.b16 %v611
        %v3124 = vunpack.c.l.b16 %v612
        %v3125 = vunpack.c.l.b16 %v613
        %v3126 = vunpack.c.l.b16 %v614
        %v3127 = vunpack.c.l.b16 %v615
        %v3128 = vunpack.c.l.b16 %v616
        %v3129 = vunpack.c.l.b16 %v617
        %v3130 = vunpack.c.l.b16 %v618
        %v3131 = vunpack.c.l.b16 %v619
        %v3132 = vunpack.c.l.b16 %v620
        %v3133 = vunpack.c.l.b16 %v621
        %v3134 = vunpack.c.l.b16 %v622
        %v3135 = vunpack.c.l.b16 %v623
        %v3136 = vunpack.c.l.b16 %v624
        %v3137 = vunpack.c.l.b16 %v625
        %v3138 = vunpack.c.l.b16 %v626
        %v3139 = vunpack.c.l.b16 %v627
        %v3140 = vunpack.c.l.b16 %v628
        %v3141 = vunpack.c.l.b16 %v629
        %v3142 = vunpack.c.l.b16 %v630
        %v3143 = vunpack.c.l.b16 %v631
        %v3144 = vunpack.c.l.b16 %v632
        %v3145 = vunpack.c.l.b16 %v633
        %v3146 = vunpack.c.l.b16 %v634
        %v3147 = vunpack.c.l.b16 %v635
        %v3148 = vunpack.c.l.b16 %v636
        %v3149 = vunpack.c.l.b16 %v637
        %v3150 = vunpack.c.l.b16 %v638
        %v3151 = vunpack.c.l.b16 %v639
        %v3152 = vunpack.c.l.b16 %v640
        %v3153 = vunpack.c.l.b16 %v641
        %v3154 = vunpack.c.l.b16 %v642
        %v3155 = vunpack.c.l.b16 %v643
        %v3156 = vunpack.c.l.b16 %v644
        %v3157 = vunpack.c.l.b16 %v645
        %v3158 = vunpack.c.l.b16 %v646
        %v3159 = vunpack.c.l.b16 %v647
        %v3160 = vunpack.c.l.b16 %v648
        %v3161 = vunpack.c.l.b16 %v649
        %v3162 = vunpack.c.l.b16 %v650
        %v3163 = vunpack.c.l.b16 %v651
        %v3164 = vunpack.c.l.b16 %v652
        %v3165 = vunpack.c.l.b16 %v653
        %v3166 = vunpack.c.l.b16 %v654
        %v3167 = vunpack.c.l.b16 %v655
        %v3168 = vunpack.c.l.b16 %v656
        %v3169 = vunpack.c.l.b16 %v657
        %v3170 = vunpack.c.l.b16 %v658
        %v3171 = vunpack.c.l.b16 %v659
        %v3172 = vunpack.c.l.b16 %v660
        %v3173 = vunpack.c.l.b16 %v661
        %v3174 = vunpack.c.l.b16 %v662
        %v3175 = vunpack.c.l.b16 %v663
        %v3176 = vunpack.c.l.b16 %v664
        %v3177 = vunpack.c.l.b16 %v665
        %v3178 = vunpack.c.l.b16 %v666
        %v3179 = vunpack.c.l.b16 %v667
        %v3180 = vunpack.c.l.b16 %v668
        %v3181 = vunpack.c.l.b16 %v669
        %v3182 = vunpack.c.l.b16 %v670
        %v3183 = vunpack.c.l.b16 %v671
        %v3184 = vunpack.c.l.b16 %v672
        %v3185 = vunpack.c.l.b16 %v673
        %v3186 = vunpack.c.l.b16 %v674
        %v3187 = vunpack.c.l.b16 %v675
        %v3188 = vunpack.c.l.b16 %v676
        %v3189 = vunpack.c.l.b16 %v677
        %v3190 = vunpack.c.l.b16 %v678
        %v3191 = vunpack.c.l.b16 %v679
        %v3192 = vunpack.c.l.b16 %v680
        %v3193 = vunpack.c.l.b16 %v681
        %v3194 = vunpack.c.l.b16 %v682
        %v3195 = vunpack.c.l.b16 %v683
        %v3196 = vunpack.c.l.b16 %v684
        %v3197 = vunpack.c.l.b16 %v685
        %v3198 = vunpack.c.l.b16 %v686
        %v3199 = vunpack.c.l.b16 %v687
        %v3200 = vunpack.c.l.b16 %v688
        %v3201 = vunpack.c.l.b16 %v689
        %v3202 = vunpack.c.l.b16 %v690
        %v3203 = vunpack.c.l.b16 %v691
        %v3204 = vunpack.c.l.b16 %v692
        %v3205 = vunpack.c.l.b16 %v693
        %v3206 = vunpack.c.l.b16 %v694
        %v3207 = vunpack.c.l.b16 %v695
        %v3208 = vunpack.c.l.b16 %v696
        %v3209 = vunpack.c.l.b16 %v697
        %v3210 = vunpack.c.l.b16 %v698
        %v3211 = vunpack.c.l.b16 %v699
        %v3212 = vunpack.c.l.b16 %v700
        %v3213 = vunpack.c.l.b16 %v701
        %v3214 = vunpack.c.l.b16 %v702
        %v3215 = vunpack.c.l.b16 %v703
        %v3216 = vunpack.c.l.b16 %v704
        %v3217 = vunpack.c.l.b16 %v705
        %v3218 = vunpack.c.l.b16 %v706
        %v3219 = vunpack.c.l.b16 %v707
        %v3220 = vunpack.c.l.b16 %v708
        %v3221 = vunpack.c.l.b16 %v709
        %v3222 = vunpack.c.l.b16 %v710
        %v3223 = vunpack.c.l.b16 %v711
        %v3224 = vunpack.c.l.b16 %v712
        %v3225 = vunpack.c.l.b16 %v713
        %v3226 = vunpack.c.l.b16 %v714
        %v3227 = vunpack.c.l.b16 %v715
        %v3228 = vunpack.c.l.b16 %v716
        %v3229 = vunpack.c.l.b16 %v717
        %v3230 = vunpack.c.l.b16 %v718
        %v3231 = vunpack.c.l.b16 %v719
        %v3232 = vunpack.c.l.b16 %v720
        %v3233 = vunpack.c.l.b16 %v721
        %v3234 = vunpack.c.l.b16 %v722
        %v3235 = vunpack.c.l.b16 %v723
        %v3236 = vunpack.c.l.b16 %v724
        %v3237 = vunpack.c.l.b16 %v725
        %v3238 = vunpack.c.l.b16 %v726
        %v3239 = vunpack.c.l.b16 %v727
        %v3240 = vunpack.c.l.b16 %v728
        %v3241 = vunpack.c.l.b16 %v729
        %v3242 = vunpack.c.l.b16 %v730
        %v3243 = vunpack.c.l.b16 %v731
        %v3244 = vunpack.c.l.b16 %v732
        %v3245 = vunpack.c.l.b16 %v733
        %v3246 = vunpack.c.l.b16 %v734
        %v3247 = vunpack.c.l.b16 %v735
        %v3248 = vunpack.c.l.b16 %v736
        %v3249 = vunpack.c.l.b16 %v737
        %v3250 = vunpack.c.l.b16 %v738
        %v3251 = vunpack.c.l.b16 %v739
        %v3252 = vunpack.c.l.b16 %v740
        %v3253 = vunpack.c.l.b16 %v741
        %v3254 = vunpack.c.l.b16 %v742
        %v3255 = vunpack.c.l.b16 %v743
        %v3256 = vunpack.c.l.b16 %v744
        %v3257 = vunpack.c.l.b16 %v745
        %v3258 = vunpack.c.l.b16 %v746
        %v3259 = vunpack.c.l.b16 %v747
        %v3260 = vunpack.c.l.b16 %v748
        %v3261 = vunpack.c.l.b16 %v749
        %v3262 = vunpack.c.l.b16 %v750
        %v3263 = vunpack.c.l.b16 %v751
        %v3264 = vunpack.c.l.b16 %v752
        %v3265 = vunpack.c.l.b16 %v753
        %v3266 = vunpack.c.l.b16 %v754
        %v3267 = vunpack.c.l.b16 %v755
        %v3268 = vunpack.c.l.b16 %v756
        %v3269 = vunpack.c.l.b16 %v757
        %v3270 = vunpack.c.l.b16 %v758
        %v3271 = vunpack.c.l.b16 %v759
        %v3272 = vunpack.c.l.b16 %v760
        %v3273 = vunpack.c.l.b16 %v761
        %v3274 = vunpack.c.l.b16 %v762
        %v3275 = vunpack.c.l.b16 %v763
        %v3276 = vunpack.c.l.b16 %v764
        %v3277 = vunpack.c.l.b16 %v765
        %v3278 = vunpack.c.l.b16 %v766
        %v3279 = vunpack.c.l.b16 %v767
        %v3280 = vunpack.c.l.b16 %v768
        %v3281 = vunpack.c.l.b16 %v769
        %v3282 = vunpack.c.l.b16 %v770
        %v3283 = vunpack.c.l.b16 %v771
        %v3284 = vunpack.c.l.b16 %v772
        %v3285 = vunpack.c.l.b16 %v773
        %v3286 = vunpack.c.l.b16 %v774
        %v3287 = vunpack.c.l.b16 %v775
        %v3288 = vunpack.c.l.b16 %v776
        %v3289 = vunpack.c.l.b16 %v777
        %v3290 = vunpack.c.l.b16 %v778
        %v3291 = vunpack.c.l.b16 %v779
        %v3292 = vunpack.c.l.b16 %v780
        %v3293 = vunpack.c.l.b16 %v781
        %v3294 = vunpack.c.l.b16 %v782
        %v3295 = vunpack.c.l.b16 %v783
        %v3296 = vunpack.c.l.b16 %v784
        %v3297 = vunpack.c.l.b16 %v785
        %v3298 = vunpack.c.l.b16 %v786
        %v3299 = vunpack.c.l.b16 %v787
        %v3300 = vunpack.c.l.b16 %v788
        %v3301 = vunpack.c.l.b16 %v789
        %v3302 = vunpack.c.l.b16 %v790
        %v3303 = vunpack.c.l.b16 %v791
        %v3304 = vunpack.c.l.b16 %v792
        %v3305 = vunpack.c.l.b16 %v793
        %v3306 = vunpack.c.l.b16 %v794
        %v3307 = vunpack.c.l.b16 %v795
        %v3308 = vunpack.c.l.b16 %v796
        %v3309 = vunpack.c.l.b16 %v797
        %v3310 = vunpack.c.l.b16 %v798
        %v3311 = vunpack.c.l.b16 %v799
        %v3312 = vunpack.c.l.b16 %v800
        %v3313 = vunpack.c.l.b16 %v801
        %v3314 = vunpack.c.l.b16 %v802
        %v3315 = vunpack.c.l.b16 %v803
        %v3316 = vunpack.c.l.b16 %v804
        %v3317 = vunpack.c.l.b16 %v805
        %v3318 = vunpack.c.l.b16 %v806
        %v3319 = vunpack.c.l.b16 %v807
        %v3320 = vunpack.c.l.b16 %v808
        %v3321 = vunpack.c.l.b16 %v809
        %v3322 = vunpack.c.l.b16 %v810
        %v3323 = vunpack.c.l.b16 %v811
        %v3324 = vunpack.c.l.b16 %v812
        %v3325 = vunpack.c.l.b16 %v813
        %v3326 = vunpack.c.l.b16 %v814
        %v3327 = vunpack.c.l.b16 %v815
        %v3328 = vunpack.c.l.b16 %v816
        %v3329 = vunpack.c.l.b16 %v817
        %v3330 = vunpack.c.l.b16 %v818
        %v3331 = vunpack.c.l.b16 %v819
        %v3332 = vunpack.c.l.b16 %v820
        %v3333 = vunpack.c.l.b16 %v821
        %v3334 = vunpack.c.l.b16 %v822
        %v3335 = vunpack.c.l.b16 %v823
        %v3336 = vunpack.c.l.b16 %v824
        %v3337 = vunpack.c.l.b16 %v825
        %v3338 = vunpack.c.l.b16 %v826
        %v3339 = vunpack.c.l.b16 %v827
        %v3340 = vunpack.c.l.b16 %v828
        %v3341 = vunpack.c.l.b16 %v829
        %v3342 = vunpack.c.l.b16 %v830
        %v3343 = vunpack.c.l.b16 %v831
        %v3344 = vunpack.c.l.b16 %v832
        %v3345 = vunpack.c.l.b16 %v833
        %v3346 = vunpack.c.l.b16 %v834
        %v3347 = vunpack.c.l.b16 %v835
        %v3348 = vunpack.c.l.b16 %v836
        %v3349 = vunpack.c.l.b16 %v837
        %v3350 = vunpack.c.l.b16 %v838
        %v3351 = vunpack.c.l.b16 %v839
        %v3352 = vunpack.c.l.b16 %v840
        %v3353 = vunpack.c.l.b16 %v841
        %v3354 = vunpack.c.l.b16 %v842
        %v3355 = vunpack.c.l.b16 %v843
        %v3356 = vunpack.c.l.b16 %v844
        %v3357 = vunpack.c.l.b16 %v845
        %v3358 = vunpack.c.l.b16 %v846
        %v3359 = vunpack.c.l.b16 %v847
        %v3360 = vunpack.c.l.b16 %v848
        %v3361 = vunpack.c.l.b16 %v849
        %v3362 = vunpack.c.l.b16 %v850
        %v3363 = vunpack.c.l.b16 %v851
        %v3364 = vunpack.c.l.b16 %v852
        %v3365 = vunpack.c.l.b16 %v853
        %v3366 = vunpack.c.l.b16 %v854
        %v3367 = vunpack.c.l.b16 %v855
        %v3368 = vunpack.c.l.b16 %v856
        %v3369 = vunpack.c.l.b16 %v857
        %v3370 = vunpack.c.l.b16 %v858
        %v3371 = vunpack.c.l.b16 %v859
        %v3372 = vunpack.c.l.b16 %v860
        %v3373 = vunpack.c.l.b16 %v861
        %v3374 = vunpack.c.l.b16 %v862
        %v3375 = vunpack.c.l.b16 %v863
        %v3376 = vunpack.c.l.b16 %v864
        %v3377 = vunpack.c.l.b16 %v865
        %v3378 = vunpack.c.l.b16 %v866
        %v3379 = vunpack.c.l.b16 %v867
        %v3380 = vunpack.c.l.b16 %v868
        %v3381 = vunpack.c.l.b16 %v869
        %v3382 = vunpack.c.l.b16 %v870
        %v3383 = vunpack.c.l.b16 %v871
        %v3384 = vunpack.c.l.b16 %v872
        %v3385 = vunpack.c.l.b16 %v873
        %v3386 = vunpack.c.l.b16 %v874
        %v3387 = vunpack.c.l.b16 %v875
        %v3388 = vunpack.c.l.b16 %v876
        %v3389 = vunpack.c.l.b16 %v877
        %v3390 = vunpack.c.l.b16 %v878
        %v3391 = vunpack.c.l.b16 %v879
        %v3392 = vunpack.c.l.b16 %v880
        %v3393 = vunpack.c.l.b16 %v881
        %v3394 = vunpack.c.l.b16 %v882
        %v3395 = vunpack.c.l.b16 %v883
        %v3396 = vunpack.c.l.b16 %v884
        %v3397 = vunpack.c.l.b16 %v885
        %v3398 = vunpack.c.l.b16 %v886
        %v3399 = vunpack.c.l.b16 %v887
        %v3400 = vunpack.c.l.b16 %v888
        %v3401 = vunpack.c.l.b16 %v889
        %v3402 = vunpack.c.l.b16 %v890
        %v3403 = vunpack.c.l.b16 %v891
        %v3404 = vunpack.c.l.b16 %v892
        %v3405 = vunpack.c.l.b16 %v893
        %v3406 = vunpack.c.l.b16 %v894
        %v3407 = vunpack.c.l.b16 %v895
        %v3408 = vunpack.c.l.b16 %v896
        %v3409 = vunpack.c.l.b16 %v897
        %v3410 = vunpack.c.l.b16 %v898
        %v3411 = vunpack.c.l.b16 %v899
        %v3412 = vunpack.c.l.b16 %v900
        %v3413 = vunpack.c.l.b16 %v901
        %v3414 = vunpack.c.l.b16 %v902
        %v3415 = vunpack.c.l.b16 %v903
        %v3416 = vunpack.c.l.b16 %v904
        %v3417 = vunpack.c.l.b16 %v905
        %v3418 = vunpack.c.l.b16 %v906
        %v3419 = vunpack.c.l.b16 %v907
        %v3420 = vunpack.c.l.b16 %v908
        %v3421 = vunpack.c.l.b16 %v909
        %v3422 = vunpack.c.l.b16 %v910
        %v3423 = vunpack.c.l.b16 %v911
        %v3424 = vunpack.c.l.b16 %v912
        %v3425 = vunpack.c.l.b16 %v913
        %v3426 = vunpack.c.l.b16 %v914
        %v3427 = vunpack.c.l.b16 %v915
        %v3428 = vunpack.c.l.b16 %v916
        %v3429 = vunpack.c.l.b16 %v917
        %v3430 = vunpack.c.l.b16 %v918
        %v3431 = vunpack.c.l.b16 %v919
        %v3432 = vunpack.c.l.b16 %v920
        %v3433 = vunpack.c.l.b16 %v921
        %v3434 = vunpack.c.l.b16 %v922
        %v3435 = vunpack.c.l.b16 %v923
        %v3436 = vunpack.c.l.b16 %v924
        %v3437 = vunpack.c.l.b16 %v925
        %v3438 = vunpack.c.l.b16 %v926
        %v3439 = vunpack.c.l.b16 %v927
        %v3440 = vunpack.c.l.b16 %v928
        %v3441 = vunpack.c.l.b16 %v929
        %v3442 = vunpack.c.l.b16 %v930
        %v3443 = vunpack.c.l.b16 %v931
        %v3444 = vunpack.c.l.b16 %v932
        %v3445 = vunpack.c.l.b16 %v933
        %v3446 = vunpack.c.l.b16 %v934
        %v3447 = vunpack.c.l.b16 %v935
        %v3448 = vunpack.c.l.b16 %v936
        %v3449 = vunpack.c.l.b16 %v937
        %v3450 = vunpack.c.l.b16 %v938
        %v3451 = vunpack.c.l.b16 %v939
        %v3452 = vunpack.c.l.b16 %v940
        %v3453 = vunpack.c.l.b16 %v941
        %v3454 = vunpack.c.l.b16 %v942
        %v3455 = vunpack.c.l.b16 %v943
        %v3456 = vunpack.c.l.b16 %v944
        %v3457 = vunpack.c.l.b16 %v945
        %v3458 = vunpack.c.l.b16 %v946
        %v3459 = vunpack.c.l.b16 %v947
        %v3460 = vunpack.c.l.b16 %v948
        %v3461 = vunpack.c.l.b16 %v949
        %v3462 = vunpack.c.l.b16 %v950
        %v3463 = vunpack.c.l.b16 %v951
        %v3464 = vunpack.c.l.b16 %v952
        %v3465 = vunpack.c.l.b16 %v953
        %v3466 = vunpack.c.l.b16 %v954
        %v3467 = vunpack.c.l.b16 %v955
        %v3468 = vunpack.c.l.b16 %v956
        %v3469 = vunpack.c.l.b16 %v957
        %v3470 = vunpack.c.l.b16 %v958
        %v3471 = vunpack.c.l.b16 %v959
        %v3472 = vunpack.c.l.b16 %v960
        %v3473 = vunpack.c.l.b16 %v961
        %v3474 = vunpack.c.l.b16 %v962
        %v3475 = vunpack.c.l.b16 %v963
        %v3476 = vunpack.c.l.b16 %v964
        %v3477 = vunpack.c.l.b16 %v965
        %v3478 = vunpack.c.l.b16 %v966
        %v3479 = vunpack.c.l.b16 %v967
        %v3480 = vunpack.c.l.b16 %v968
        %v3481 = vunpack.c.l.b16 %v969
        %v3482 = vunpack.c.l.b16 %v970
        %v3483 = vunpack.c.l.b16 %v971
        %v3484 = vunpack.c.l.b16 %v972
        %v3485 = vunpack.c.l.b16 %v973
        %v3486 = vunpack.c.l.b16 %v974
        %v3487 = vunpack.c.l.b16 %v975
        %v3488 = vunpack.c.l.b16 %v976
        %v3489 = vunpack.c.l.b16 %v977
        %v3490 = vunpack.c.l.b16 %v978
        %v3491 = vunpack.c.l.b16 %v979
        %v3492 = vunpack.c.l.b16 %v980
        %v3493 = vunpack.c.l.b16 %v981
        %v3494 = vunpack.c.l.b16 %v982
        %v3495 = vunpack.c.l.b16 %v983
        %v3496 = vunpack.c.l.b16 %v984
        %v3497 = vunpack.c.l.b16 %v985
        %v3498 = vunpack.c.l.b16 %v986
        %v3499 = vunpack.c.l.b16 %v987
        %v3500 = vunpack.c.l.b16 %v988
        %v3501 = vunpack.c.l.b16 %v989
        %v3502 = vunpack.c.l.b16 %v990
        %v3503 = vunpack.c.l.b16 %v991
        %v3504 = vunpack.c.l.b16 %v992
        %v3505 = vunpack.c.l.b16 %v993
        %v3506 = vunpack.c.l.b16 %v994
        %v3507 = vunpack.c.l.b16 %v995
        %v3508 = vunpack.c.l.b16 %v996
        %v3509 = vunpack.c.l.b16 %v997
        %v3510 = vunpack.c.l.b16 %v998
        %v3511 = vunpack.c.l.b16 %v999
        %v3512 = vunpack.c.l.b16 %v1000
        %v3513 = vunpack.c.l.b16 %v1001
        %v3514 = vunpack.c.l.b16 %v1002
        %v3515 = vunpack.c.l.b16 %v1003
        %v3516 = vunpack.c.l.b16 %v1004
        %v3517 = vunpack.c.l.b16 %v1005
        %v3518 = vunpack.c.l.b16 %v1006
        %v3519 = vunpack.c.l.b16 %v1007
        %v3520 = vunpack.c.l.b16 %v1008
        %v3521 = vunpack.c.l.b16 %v1009
        %v3522 = vunpack.c.l.b16 %v1010
        %v3523 = vunpack.c.l.b16 %v1011
        %v3524 = vunpack.c.l.b16 %v1012
        %v3525 = vunpack.c.l.b16 %v1013
        %v3526 = vunpack.c.l.b16 %v1014
        %v3527 = vunpack.c.l.b16 %v1015
        %v3528 = vunpack.c.l.b16 %v1016
        %v3529 = vunpack.c.l.b16 %v1017
        %v3530 = vunpack.c.l.b16 %v1018
        %v3531 = vunpack.c.l.b16 %v1019
        %v3532 = vunpack.c.l.b16 %v1020
        %v3533 = vunpack.c.l.b16 %v1021
        %v3534 = vunpack.c.l.b16 %v1022
        %v3535 = vunpack.c.l.b16 %v1023
        %v3536 = vunpack.c.l.b16 %v1024
        %v3537 = vunpack.c.l.b16 %v1025
        %v3538 = vunpack.c.l.b16 %v1026
        %v3539 = vunpack.c.l.b16 %v1027
        %v3540 = vunpack.c.l.b16 %v1028
        %v3541 = vunpack.c.l.b16 %v1029
        %v3542 = vunpack.c.l.b16 %v1030
        %v3543 = vunpack.c.l.b16 %v1031
        %v3544 = vunpack.c.l.b16 %v1032
        %v3545 = vunpack.c.l.b16 %v1033
        %v3546 = vunpack.c.l.b16 %v1034
        %v3547 = vunpack.c.l.b16 %v1035
        %v3548 = vunpack.c.l.b16 %v1036
        %v3549 = vunpack.c.l.b16 %v1037
        %v3550 = vunpack.c.l.b16 %v1038
        %v3551 = vunpack.c.l.b16 %v1039
        %v3552 = vunpack.c.l.b16 %v1040
        %v3553 = vunpack.c.l.b16 %v1041
        %v3554 = vunpack.c.l.b16 %v1042
        %v3555 = vunpack.c.l.b16 %v1043
        %v3556 = vunpack.c.l.b16 %v1044
        %v3557 = vunpack.c.l.b16 %v1045
        %v3558 = vunpack.c.l.b16 %v1046
        %v3559 = vunpack.c.l.b16 %v1047
        %v3560 = vunpack.c.l.b16 %v1048
        %v3561 = vunpack.c.l.b16 %v1049
        %v3562 = vunpack.c.l.b16 %v1050
        %v3563 = vunpack.c.l.b16 %v1051
        %v3564 = vunpack.c.l.b16 %v1052
        %v3565 = vunpack.c.l.b16 %v1053
        %v3566 = vunpack.c.l.b16 %v1054
        %v3567 = vunpack.c.l.b16 %v1055
        %v3568 = vunpack.c.l.b16 %v1056
        %v3569 = vunpack.c.l.b16 %v1057
        %v3570 = vunpack.c.l.b16 %v1058
        %v3571 = vunpack.c.l.b16 %v1059
        %v3572 = vunpack.c.l.b16 %v1060
        %v3573 = vunpack.c.l.b16 %v1061
        %v3574 = vunpack.c.l.b16 %v1062
        %v3575 = vunpack.c.l.b16 %v1063
        %v3576 = vunpack.c.l.b16 %v1064
        %v3577 = vunpack.c.l.b16 %v1065
        %v3578 = vunpack.c.l.b16 %v1066
        %v3579 = vunpack.c.l.b16 %v1067
        %v3580 = vunpack.c.l.b16 %v1068
        %v3581 = vunpack.c.l.b16 %v1069
        %v3582 = vunpack.c.l.b16 %v1070
        %v3583 = vunpack.c.l.b16 %v1071
        %v3584 = vunpack.c.l.b16 %v1072
        %v3585 = vunpack.c.l.b16 %v1073
        %v3586 = vunpack.c.l.b16 %v1074
        %v3587 = vunpack.c.l.b16 %v1075
        %v3588 = vunpack.c.l.b16 %v1076
        %v3589 = vunpack.c.l.b16 %v1077
        %v3590 = vunpack.c.l.b16 %v1078
        %v3591 = vunpack.c.l.b16 %v1079
        %v3592 = vunpack.c.l.b16 %v1080
        %v3593 = vunpack.c.l.b16 %v1081
        %v3594 = vunpack.c.l.b16 %v1082
        %v3595 = vunpack.c.l.b16 %v1083
        %v3596 = vunpack.c.l.b16 %v1084
        %v3597 = vunpack.c.l.b16 %v1085
        %v3598 = vunpack.c.l.b16 %v1086
        %v3599 = vunpack.c.l.b16 %v1087
        %v3600 = vunpack.c.l.b16 %v1088
        %v3601 = vunpack.c.l.b16 %v1089
        %v3602 = vunpack.c.l.b16 %v1090
        %v3603 = vunpack.c.l.b16 %v1091
        %v3604 = vunpack.c.l.b16 %v1092
        %v3605 = vunpack.c.l.b16 %v1093
        %v3606 = vunpack.c.l.b16 %v1094
        %v3607 = vunpack.c.l.b16 %v1095
        %v3608 = vunpack.c.l.b16 %v1096
        %v3609 = vunpack.c.l.b16 %v1097
        %v3610 = vunpack.c.l.b16 %v1098
        %v3611 = vunpack.c.l.b16 %v1099
        %v3612 = vunpack.c.l.b16 %v1100
        %v3613 = vunpack.c.l.b16 %v1101
        %v3614 = vunpack.c.l.b16 %v1102
        %v3615 = vunpack.c.l.b16 %v1103
        %v3616 = vunpack.c.l.b16 %v1104
        %v3617 = vunpack.c.l.b16 %v1105
        %v3618 = vunpack.c.l.b16 %v1106
        %v3619 = vunpack.c.l.b16 %v1107
        %v3620 = vunpack.c.l.b16 %v1108
        %v3621 = vunpack.c.l.b16 %v1109
        %v3622 = vunpack.c.l.b16 %v1110
        %v3623 = vunpack.c.l.b16 %v1111
        %v3624 = vunpack.c.l.b16 %v1112
        %v3625 = vunpack.c.l.b16 %v1113
        %v3626 = vunpack.c.l.b16 %v1114
        %v3627 = vunpack.c.l.b16 %v1115
        %v3628 = vunpack.c.l.b16 %v1116
        %v3629 = vunpack.c.l.b16 %v1117
        %v3630 = vunpack.c.l.b16 %v1118
        %v3631 = vunpack.c.l.b16 %v1119
        %v3632 = vunpack.c.l.b16 %v1120
        %v3633 = vunpack.c.l.b16 %v1121
        %v3634 = vunpack.c.l.b16 %v1122
        %v3635 = vunpack.c.l.b16 %v1123
        %v3636 = vunpack.c.l.b16 %v1124
        %v3637 = vunpack.c.l.b16 %v1125
        %v3638 = vunpack.c.l.b16 %v1126
        %v3639 = vunpack.c.l.b16 %v1127
        %v3640 = vunpack.c.l.b16 %v1128
        %v3641 = vunpack.c.l.b16 %v1129
        %v3642 = vunpack.c.l.b16 %v1130
        %v3643 = vunpack.c.l.b16 %v1131
        %v3644 = vunpack.c.l.b16 %v1132
        %v3645 = vunpack.c.l.b16 %v1133
        %v3646 = vunpack.c.l.b16 %v1134
        %v3647 = vunpack.c.l.b16 %v1135
        %v3648 = vunpack.c.l.b16 %v1136
        %v3649 = vunpack.c.l.b16 %v1137
        %v3650 = vunpack.c.l.b16 %v1138
        %v3651 = vunpack.c.l.b16 %v1139
        %v3652 = vunpack.c.l.b16 %v1140
        %v3653 = vunpack.c.l.b16 %v1141
        %v3654 = vunpack.c.l.b16 %v1142
        %v3655 = vunpack.c.l.b16 %v1143
        %v3656 = vunpack.c.l.b16 %v1144
        %v3657 = vunpack.c.l.b16 %v1145
        %v3658 = vunpack.c.l.b16 %v1146
        %v3659 = vunpack.c.l.b16 %v1147
        %v3660 = vunpack.c.l.b16 %v1148
        %v3661 = vunpack.c.l.b16 %v1149
        %v3662 = vunpack.c.l.b16 %v1150
        %v3663 = vunpack.c.l.b16 %v1151
        %v3664 = vunpack.c.l.b16 %v1152
        %v3665 = vunpack.c.l.b16 %v1153
        %v3666 = vunpack.c.l.b16 %v1154
        %v3667 = vunpack.c.l.b16 %v1155
        %v3668 = vunpack.c.l.b16 %v1156
        %v3669 = vunpack.c.l.b16 %v1157
        %v3670 = vunpack.c.l.b16 %v1158
        %v3671 = vunpack.c.l.b16 %v1159
        %v3672 = vunpack.c.l.b16 %v1160
        %v3673 = vunpack.c.l.b16 %v1161
        %v3674 = vunpack.c.l.b16 %v1162
        %v3675 = vunpack.c.l.b16 %v1163
        %v3676 = vunpack.c.l.b16 %v1164
        %v3677 = vunpack.c.l.b16 %v1165
        %v3678 = vunpack.c.l.b16 %v1166
        %v3679 = vunpack.c.l.b16 %v1167
        %v3680 = vunpack.c.l.b16 %v1168
        %v3681 = vunpack.c.l.b16 %v1169
        %v3682 = vunpack.c.l.b16 %v1170
        %v3683 = vunpack.c.l.b16 %v1171
        %v3684 = vunpack.c.l.b16 %v1172
        %v3685 = vunpack.c.l.b16 %v1173
        %v3686 = vunpack.c.l.b16 %v1174
        %v3687 = vunpack.c.l.b16 %v1175
        %v3688 = vunpack.c.l.b16 %v1176
        %v3689 = vunpack.c.l.b16 %v1177
        %v3690 = vunpack.c.l.b16 %v1178
        %v3691 = vunpack.c.l.b16 %v1179
        %v3692 = vunpack.c.l.b16 %v1180
        %v3693 = vunpack.c.l.b16 %v1181
        %v3694 = vunpack.c.l.b16 %v1182
        %v3695 = vunpack.c.l.b16 %v1183
        %v3696 = vunpack.c.l.b16 %v1184
        %v3697 = vunpack.c.l.b16 %v1185
        %v3698 = vunpack.c.l.b16 %v1186
        %v3699 = vunpack.c.l.b16 %v1187
        %v3700 = vunpack.c.l.b16 %v1188
        %v3701 = vunpack.c.l.b16 %v1189
        %v3702 = vunpack.c.l.b16 %v1190
        %v3703 = vunpack.c.l.b16 %v1191
        %v3704 = vunpack.c.l.b16 %v1192
        %v3705 = vunpack.c.l.b16 %v1193
        %v3706 = vunpack.c.l.b16 %v1194
        %v3707 = vunpack.c.l.b16 %v1195
        %v3708 = vunpack.c.l.b16 %v1196
        %v3709 = vunpack.c.l.b16 %v1197
        %v3710 = vunpack.c.l.b16 %v1198
        %v3711 = vunpack.c.l.b16 %v1199
        %v3712 = vunpack.c.l.b16 %v1200
        %v3713 = vunpack.c.l.b16 %v1201
        %v3714 = vunpack.c.l.b16 %v1202
        %v3715 = vunpack.c.l.b16 %v1203
        %v3716 = vunpack.c.l.b16 %v1204
        %v3717 = vunpack.c.l.b16 %v1205
        %v3718 = vunpack.c.l.b16 %v1206
        %v3719 = vunpack.c.l.b16 %v1207
        %v3720 = vunpack.c.l.b16 %v1208
        %v3721 = vunpack.c.l.b16 %v1209
        %v3722 = vunpack.c.l.b16 %v1210
        %v3723 = vunpack.c.l.b16 %v1211
        %v3724 = vunpack.c.l.b16 %v1212
        %v3725 = vunpack.c.l.b16 %v1213
        %v3726 = vunpack.c.l.b16 %v1214
        %v3727 = vunpack.c.l.b16 %v1215
        %v3728 = vunpack.c.l.b16 %v1216
        %v3729 = vunpack.c.l.b16 %v1217
        %v3730 = vunpack.c.l.b16 %v1218
        %v3731 = vunpack.c.l.b16 %v1219
        %v3732 = vunpack.c.l.b16 %v1220
        %v3733 = vunpack.c.l.b16 %v1221
        %v3734 = vunpack.c.l.b16 %v1222
        %v3735 = vunpack.c.l.b16 %v1223
        %v3736 = vunpack.c.l.b16 %v1224
        %v3737 = vunpack.c.l.b16 %v1225
        %v3738 = vunpack.c.l.b16 %v1226
        %v3739 = vunpack.c.l.b16 %v1227
        %v3740 = vunpack.c.l.b16 %v1228
        %v3741 = vunpack.c.l.b16 %v1229
        %v3742 = vunpack.c.l.b16 %v1230
        %v3743 = vunpack.c.l.b16 %v1231
        %v3744 = vunpack.c.l.b16 %v1232
        %v3745 = vunpack.c.l.b16 %v1233
        %v3746 = vunpack.c.l.b16 %v1234
        %v3747 = vunpack.c.l.b16 %v1235
        %v3748 = vunpack.c.l.b16 %v1236
        %v3749 = vunpack.c.l.b16 %v1237
        %v3750 = vunpack.c.l.b16 %v1238
        %v3751 = vunpack.c.l.b16 %v1239
        %v3752 = vunpack.c.l.b16 %v1240
        %v3753 = vunpack.c.l.b16 %v1241
        %v3754 = vunpack.c.l.b16 %v1242
        %v3755 = vunpack.c.l.b16 %v1243
        %v3756 = vunpack.c.l.b16 %v1244
        %v3757 = vunpack.c.l.b16 %v1245
        %v3758 = vunpack.c.l.b16 %v1246
        %v3759 = vunpack.c.l.b16 %v1247
        %v3760 = vunpack.c.l.b16 %v1248
        %v3761 = vunpack.c.l.b16 %v1249
        %v3762 = vunpack.c.l.b16 %v1250
        %v3763 = vunpack.c.l.b16 %v1251
        %v3764 = vunpack.c.l.b16 %v1252
        %v3765 = vunpack.c.l.b16 %v1253
        %v3766 = vunpack.c.l.b16 %v1254
        %v3767 = vunpack.c.l.b16 %v1255
        %v3768 = vunpack.c.l.b16 %v1256
        %v3769 = vunpack.c.l.b16 %v1257
        %v3770 = vunpack.c.l.b16 %v1258
        %v3771 = vunpack.c.l.b16 %v1259
        %v3772 = vunpack.c.l.b16 %v1260
        %v3773 = vunpack.c.l.b16 %v1261
        %v3774 = vunpack.c.l.b16 %v1262
        %v3775 = vunpack.c.l.b16 %v1263
        %v3776 = vunpack.c.l.b16 %v1264
        %v3777 = vunpack.c.l.b16 %v1265
        %v3778 = vunpack.c.l.b16 %v1266
        %v3779 = vunpack.c.l.b16 %v1267
        %v3780 = vunpack.c.l.b16 %v1268
        %v3781 = vunpack.c.l.b16 %v1269
        %v3782 = vunpack.c.l.b16 %v1270
        %v3783 = vunpack.c.l.b16 %v1271
        %v3784 = vunpack.c.l.b16 %v1272
        %v3785 = vunpack.c.l.b16 %v1273
        %v3786 = vunpack.c.l.b16 %v1274
        %v3787 = vunpack.c.l.b16 %v1275
        %v3788 = vunpack.c.l.b16 %v1276
        %v3789 = vunpack.c.l.b16 %v1277
        %v3790 = vunpack.c.l.b16 %v1278
        %v3791 = vunpack.c.l.b16 %v1279
        %v3792 = vunpack.c.l.b16 %v1280
        %v3793 = vunpack.c.l.b16 %v1281
        %v3794 = vunpack.c.l.b16 %v1282
        %v3795 = vpack.c.b16 %v2772, %v2771
        %v3796 = vpack.c.b16 %v2774, %v2773
        %v3797 = vpack.c.b16 %v2776, %v2775
        %v3798 = vpack.c.b16 %v2778, %v2777
        %v3799 = vpack.c.b16 %v2780, %v2779
        %v3800 = vpack.c.b16 %v2782, %v2781
        %v3801 = vpack.c.b16 %v2784, %v2783
        %v3802 = vpack.c.b16 %v2786, %v2785
        %v3803 = vpack.c.b16 %v2788, %v2787
        %v3804 = vpack.c.b16 %v2790, %v2789
        %v3805 = vpack.c.b16 %v2792, %v2791
        %v3806 = vpack.c.b16 %v2794, %v2793
        %v3807 = vpack.c.b16 %v2796, %v2795
        %v3808 = vpack.c.b16 %v2798, %v2797
        %v3809 = vpack.c.b16 %v2800, %v2799
        %v3810 = vpack.c.b16 %v2802, %v2801
        %v3811 = vpack.c.b16 %v2804, %v2803
        %v3812 = vpack.c.b16 %v2806, %v2805
        %v3813 = vpack.c.b16 %v2808, %v2807
        %v3814 = vpack.c.b16 %v2810, %v2809
        %v3815 = vpack.c.b16 %v2812, %v2811
        %v3816 = vpack.c.b16 %v2814, %v2813
        %v3817 = vpack.c.b16 %v2816, %v2815
        %v3818 = vpack.c.b16 %v2818, %v2817
        %v3819 = vpack.c.b16 %v2820, %v2819
        %v3820 = vpack.c.b16 %v2822, %v2821
        %v3821 = vpack.c.b16 %v2824, %v2823
        %v3822 = vpack.c.b16 %v2826, %v2825
        %v3823 = vpack.c.b16 %v2828, %v2827
        %v3824 = vpack.c.b16 %v2830, %v2829
        %v3825 = vpack.c.b16 %v2832, %v2831
        %v3826 = vpack.c.b16 %v2834, %v2833
        %v3827 = vpack.c.b16 %v2836, %v2835
        %v3828 = vpack.c.b16 %v2838, %v2837
        %v3829 = vpack.c.b16 %v2840, %v2839
        %v3830 = vpack.c.b16 %v2842, %v2841
        %v3831 = vpack.c.b16 %v2844, %v2843
        %v3832 = vpack.c.b16 %v2846, %v2845
        %v3833 = vpack.c.b16 %v2848, %v2847
        %v3834 = vpack.c.b16 %v2850, %v2849
        %v3835 = vpack.c.b16 %v2852, %v2851
        %v3836 = vpack.c.b16 %v2854, %v2853
        %v3837 = vpack.c.b16 %v2856, %v2855
        %v3838 = vpack.c.b16 %v2858, %v2857
        %v3839 = vpack.c.b16 %v2860, %v2859
        %v3840 = vpack.c.b16 %v2862, %v2861
        %v3841 = vpack.c.b16 %v2864, %v2863
        %v3842 = vpack.c.b16 %v2866, %v2865
        %v3843 = vpack.c.b16 %v2868, %v2867
        %v3844 = vpack.c.b16 %v2870, %v2869
        %v3845 = vpack.c.b16 %v2872, %v2871
        %v3846 = vpack.c.b16 %v2874, %v2873
        %v3847 = vpack.c.b16 %v2876, %v2875
        %v3848 = vpack.c.b16 %v2878, %v2877
        %v3849 = vpack.c.b16 %v2880, %v2879
        %v3850 = vpack.c.b16 %v2882, %v2881
        %v3851 = vpack.c.b16 %v2884, %v2883
        %v3852 = vpack.c.b16 %v2886, %v2885
        %v3853 = vpack.c.b16 %v2888, %v2887
        %v3854 = vpack.c.b16 %v2890, %v2889
        %v3855 = vpack.c.b16 %v2892, %v2891
        %v3856 = vpack.c.b16 %v2894, %v2893
        %v3857 = vpack.c.b16 %v2896, %v2895
        %v3858 = vpack.c.b16 %v2898, %v2897
        %v3859 = vpack.c.b16 %v2900, %v2899
        %v3860 = vpack.c.b16 %v2902, %v2901
        %v3861 = vpack.c.b16 %v2904, %v2903
        %v3862 = vpack.c.b16 %v2906, %v2905
        %v3863 = vpack.c.b16 %v2908, %v2907
        %v3864 = vpack.c.b16 %v2910, %v2909
        %v3865 = vpack.c.b16 %v2912, %v2911
        %v3866 = vpack.c.b16 %v2914, %v2913
        %v3867 = vpack.c.b16 %v2916, %v2915
        %v3868 = vpack.c.b16 %v2918, %v2917
        %v3869 = vpack.c.b16 %v2920, %v2919
        %v3870 = vpack.c.b16 %v2922, %v2921
        %v3871 = vpack.c.b16 %v2924, %v2923
        %v3872 = vpack.c.b16 %v2926, %v2925
        %v3873 = vpack.c.b16 %v2928, %v2927
        %v3874 = vpack.c.b16 %v2930, %v2929
        %v3875 = vpack.c.b16 %v2932, %v2931
        %v3876 = vpack.c.b16 %v2934, %v2933
        %v3877 = vpack.c.b16 %v2936, %v2935
        %v3878 = vpack.c.b16 %v2938, %v2937
        %v3879 = vpack.c.b16 %v2940, %v2939
        %v3880 = vpack.c.b16 %v2942, %v2941
        %v3881 = vpack.c.b16 %v2944, %v2943
        %v3882 = vpack.c.b16 %v2946, %v2945
        %v3883 = vpack.c.b16 %v2948, %v2947
        %v3884 = vpack.c.b16 %v2950, %v2949
        %v3885 = vpack.c.b16 %v2952, %v2951
        %v3886 = vpack.c.b16 %v2954, %v2953
        %v3887 = vpack.c.b16 %v2956, %v2955
        %v3888 = vpack.c.b16 %v2958, %v2957
        %v3889 = vpack.c.b16 %v2960, %v2959
        %v3890 = vpack.c.b16 %v2962, %v2961
        %v3891 = vpack.c.b16 %v2964, %v2963
        %v3892 = vpack.c.b16 %v2966, %v2965
        %v3893 = vpack.c.b16 %v2968, %v2967
        %v3894 = vpack.c.b16 %v2970, %v2969
        %v3895 = vpack.c.b16 %v2972, %v2971
        %v3896 = vpack.c.b16 %v2974, %v2973
        %v3897 = vpack.c.b16 %v2976, %v2975
        %v3898 = vpack.c.b16 %v2978, %v2977
        %v3899 = vpack.c.b16 %v2980, %v2979
        %v3900 = vpack.c.b16 %v2982, %v2981
        %v3901 = vpack.c.b16 %v2984, %v2983
        %v3902 = vpack.c.b16 %v2986, %v2985
        %v3903 = vpack.c.b16 %v2988, %v2987
        %v3904 = vpack.c.b16 %v2990, %v2989
        %v3905 = vpack.c.b16 %v2992, %v2991
        %v3906 = vpack.c.b16 %v2994, %v2993
        %v3907 = vpack.c.b16 %v2996, %v2995
        %v3908 = vpack.c.b16 %v2998, %v2997
        %v3909 = vpack.c.b16 %v3000, %v2999
        %v3910 = vpack.c.b16 %v3002, %v3001
        %v3911 = vpack.c.b16 %v3004, %v3003
        %v3912 = vpack.c.b16 %v3006, %v3005
        %v3913 = vpack.c.b16 %v3008, %v3007
        %v3914 = vpack.c.b16 %v3010, %v3009
        %v3915 = vpack.c.b16 %v3012, %v3011
        %v3916 = vpack.c.b16 %v3014, %v3013
        %v3917 = vpack.c.b16 %v3016, %v3015
        %v3918 = vpack.c.b16 %v3018, %v3017
        %v3919 = vpack.c.b16 %v3020, %v3019
        %v3920 = vpack.c.b16 %v3022, %v3021
        %v3921 = vpack.c.b16 %v3024, %v3023
        %v3922 = vpack.c.b16 %v3026, %v3025
        %v3923 = vpack.c.b16 %v3028, %v3027
        %v3924 = vpack.c.b16 %v3030, %v3029
        %v3925 = vpack.c.b16 %v3032, %v3031
        %v3926 = vpack.c.b16 %v3034, %v3033
        %v3927 = vpack.c.b16 %v3036, %v3035
        %v3928 = vpack.c.b16 %v3038, %v3037
        %v3929 = vpack.c.b16 %v3040, %v3039
        %v3930 = vpack.c.b16 %v3042, %v3041
        %v3931 = vpack.c.b16 %v3044, %v3043
        %v3932 = vpack.c.b16 %v3046, %v3045
        %v3933 = vpack.c.b16 %v3048, %v3047
        %v3934 = vpack.c.b16 %v3050, %v3049
        %v3935 = vpack.c.b16 %v3052, %v3051
        %v3936 = vpack.c.b16 %v3054, %v3053
        %v3937 = vpack.c.b16 %v3056, %v3055
        %v3938 = vpack.c.b16 %v3058, %v3057
        %v3939 = vpack.c.b16 %v3060, %v3059
        %v3940 = vpack.c.b16 %v3062, %v3061
        %v3941 = vpack.c.b16 %v3064, %v3063
        %v3942 = vpack.c.b16 %v3066, %v3065
        %v3943 = vpack.c.b16 %v3068, %v3067
        %v3944 = vpack.c.b16 %v3070, %v3069
        %v3945 = vpack.c.b16 %v3072, %v3071
        %v3946 = vpack.c.b16 %v3074, %v3073
        %v3947 = vpack.c.b16 %v3076, %v3075
        %v3948 = vpack.c.b16 %v3078, %v3077
        %v3949 = vpack.c.b16 %v3080, %v3079
        %v3950 = vpack.c.b16 %v3082, %v3081
        %v3951 = vpack.c.b16 %v3084, %v3083
        %v3952 = vpack.c.b16 %v3086, %v3085
        %v3953 = vpack.c.b16 %v3088, %v3087
        %v3954 = vpack.c.b16 %v3090, %v3089
        %v3955 = vpack.c.b16 %v3092, %v3091
        %v3956 = vpack.c.b16 %v3094, %v3093
        %v3957 = vpack.c.b16 %v3096, %v3095
        %v3958 = vpack.c.b16 %v3098, %v3097
        %v3959 = vpack.c.b16 %v3100, %v3099
        %v3960 = vpack.c.b16 %v3102, %v3101
        %v3961 = vpack.c.b16 %v3104, %v3103
        %v3962 = vpack.c.b16 %v3106, %v3105
        %v3963 = vpack.c.b16 %v3108, %v3107
        %v3964 = vpack.c.b16 %v3110, %v3109
        %v3965 = vpack.c.b16 %v3112, %v3111
        %v3966 = vpack.c.b16 %v3114, %v3113
        %v3967 = vpack.c.b16 %v3116, %v3115
        %v3968 = vpack.c.b16 %v3118, %v3117
        %v3969 = vpack.c.b16 %v3120, %v3119
        %v3970 = vpack.c.b16 %v3122, %v3121
        %v3971 = vpack.c.b16 %v3124, %v3123
        %v3972 = vpack.c.b16 %v3126, %v3125
        %v3973 = vpack.c.b16 %v3128, %v3127
        %v3974 = vpack.c.b16 %v3130, %v3129
        %v3975 = vpack.c.b16 %v3132, %v3131
        %v3976 = vpack.c.b16 %v3134, %v3133
        %v3977 = vpack.c.b16 %v3136, %v3135
        %v3978 = vpack.c.b16 %v3138, %v3137
        %v3979 = vpack.c.b16 %v3140, %v3139
        %v3980 = vpack.c.b16 %v3142, %v3141
        %v3981 = vpack.c.b16 %v3144, %v3143
        %v3982 = vpack.c.b16 %v3146, %v3145
        %v3983 = vpack.c.b16 %v3148, %v3147
        %v3984 = vpack.c.b16 %v3150, %v3149
        %v3985 = vpack.c.b16 %v3152, %v3151
        %v3986 = vpack.c.b16 %v3154, %v3153
        %v3987 = vpack.c.b16 %v3156, %v3155
        %v3988 = vpack.c.b16 %v3158, %v3157
        %v3989 = vpack.c.b16 %v3160, %v3159
        %v3990 = vpack.c.b16 %v3162, %v3161
        %v3991 = vpack.c.b16 %v3164, %v3163
        %v3992 = vpack.c.b16 %v3166, %v3165
        %v3993 = vpack.c.b16 %v3168, %v3167
        %v3994 = vpack.c.b16 %v3170, %v3169
        %v3995 = vpack.c.b16 %v3172, %v3171
        %v3996 = vpack.c.b16 %v3174, %v3173
        %v3997 = vpack.c.b16 %v3176, %v3175
        %v3998 = vpack.c.b16 %v3178, %v3177
        %v3999 = vpack.c.b16 %v3180, %v3179
        %v4000 = vpack.c.b16 %v3182, %v3181
        %v4001 = vpack.c.b16 %v3184, %v3183
        %v4002 = vpack.c.b16 %v3186, %v3185
        %v4003 = vpack.c.b16 %v3188, %v3187
        %v4004 = vpack.c.b16 %v3190, %v3189
        %v4005 = vpack.c.b16 %v3192, %v3191
        %v4006 = vpack.c.b16 %v3194, %v3193
        %v4007 = vpack.c.b16 %v3196, %v3195
        %v4008 = vpack.c.b16 %v3198, %v3197
        %v4009 = vpack.c.b16 %v3200, %v3199
        %v4010 = vpack.c.b16 %v3202, %v3201
        %v4011 = vpack.c.b16 %v3204, %v3203
        %v4012 = vpack.c.b16 %v3206, %v3205
        %v4013 = vpack.c.b16 %v3208, %v3207
        %v4014 = vpack.c.b16 %v3210, %v3209
        %v4015 = vpack.c.b16 %v3212, %v3211
        %v4016 = vpack.c.b16 %v3214, %v3213
        %v4017 = vpack.c.b16 %v3216, %v3215
        %v4018 = vpack.c.b16 %v3218, %v3217
        %v4019 = vpack.c.b16 %v3220, %v3219
        %v4020 = vpack.c.b16 %v3222, %v3221
        %v4021 = vpack.c.b16 %v3224, %v3223
        %v4022 = vpack.c.b16 %v3226, %v3225
        %v4023 = vpack.c.b16 %v3228, %v3227
        %v4024 = vpack.c.b16 %v3230, %v3229
        %v4025 = vpack.c.b16 %v3232, %v3231
        %v4026 = vpack.c.b16 %v3234, %v3233
        %v4027 = vpack.c.b16 %v3236, %v3235
        %v4028 = vpack.c.b16 %v3238, %v3237
        %v4029 = vpack.c.b16 %v3240, %v3239
        %v4030 = vpack.c.b16 %v3242, %v3241
        %v4031 = vpack.c.b16 %v3244, %v3243
        %v4032 = vpack.c.b16 %v3246, %v3245
        %v4033 = vpack.c.b16 %v3248, %v3247
        %v4034 = vpack.c.b16 %v3250, %v3249
        %v4035 = vpack.c.b16 %v3252, %v3251
        %v4036 = vpack.c.b16 %v3254, %v3253
        %v4037 = vpack.c.b16 %v3256, %v3255
        %v4038 = vpack.c.b16 %v3258, %v3257
        %v4039 = vpack.c.b16 %v3260, %v3259
        %v4040 = vpack.c.b16 %v3262, %v3261
        %v4041 = vpack.c.b16 %v3264, %v3263
        %v4042 = vpack.c.b16 %v3266, %v3265
        %v4043 = vpack.c.b16 %v3268, %v3267
        %v4044 = vpack.c.b16 %v3270, %v3269
        %v4045 = vpack.c.b16 %v3272, %v3271
        %v4046 = vpack.c.b16 %v3274, %v3273
        %v4047 = vpack.c.b16 %v3276, %v3275
        %v4048 = vpack.c.b16 %v3278, %v3277
        %v4049 = vpack.c.b16 %v3280, %v3279
        %v4050 = vpack.c.b16 %v3282, %v3281
        %v4051 = vpack.c.b16 %v3284, %v3283
        %v4052 = vpack.c.b16 %v3286, %v3285
        %v4053 = vpack.c.b16 %v3288, %v3287
        %v4054 = vpack.c.b16 %v3290, %v3289
        %v4055 = vpack.c.b16 %v3292, %v3291
        %v4056 = vpack.c.b16 %v3294, %v3293
        %v4057 = vpack.c.b16 %v3296, %v3295
        %v4058 = vpack.c.b16 %v3298, %v3297
        %v4059 = vpack.c.b16 %v3300, %v3299
        %v4060 = vpack.c.b16 %v3302, %v3301
        %v4061 = vpack.c.b16 %v3304, %v3303
        %v4062 = vpack.c.b16 %v3306, %v3305
        %v4063 = vpack.c.b16 %v3308, %v3307
        %v4064 = vpack.c.b16 %v3310, %v3309
        %v4065 = vpack.c.b16 %v3312, %v3311
        %v4066 = vpack.c.b16 %v3314, %v3313
        %v4067 = vpack.c.b16 %v3316, %v3315
        %v4068 = vpack.c.b16 %v3318, %v3317
        %v4069 = vpack.c.b16 %v3320, %v3319
        %v4070 = vpack.c.b16 %v3322, %v3321
        %v4071 = vpack.c.b16 %v3324, %v3323
        %v4072 = vpack.c.b16 %v3326, %v3325
        %v4073 = vpack.c.b16 %v3328, %v3327
        %v4074 = vpack.c.b16 %v3330, %v3329
        %v4075 = vpack.c.b16 %v3332, %v3331
        %v4076 = vpack.c.b16 %v3334, %v3333
        %v4077 = vpack.c.b16 %v3336, %v3335
        %v4078 = vpack.c.b16 %v3338, %v3337
        %v4079 = vpack.c.b16 %v3340, %v3339
        %v4080 = vpack.c.b16 %v3342, %v3341
        %v4081 = vpack.c.b16 %v3344, %v3343
        %v4082 = vpack.c.b16 %v3346, %v3345
        %v4083 = vpack.c.b16 %v3348, %v3347
        %v4084 = vpack.c.b16 %v3350, %v3349
        %v4085 = vpack.c.b16 %v3352, %v3351
        %v4086 = vpack.c.b16 %v3354, %v3353
        %v4087 = vpack.c.b16 %v3356, %v3355
        %v4088 = vpack.c.b16 %v3358, %v3357
        %v4089 = vpack.c.b16 %v3360, %v3359
        %v4090 = vpack.c.b16 %v3362, %v3361
        %v4091 = vpack.c.b16 %v3364, %v3363
        %v4092 = vpack.c.b16 %v3366, %v3365
        %v4093 = vpack.c.b16 %v3368, %v3367
        %v4094 = vpack.c.b16 %v3370, %v3369
        %v4095 = vpack.c.b16 %v3372, %v3371
        %v4096 = vpack.c.b16 %v3374, %v3373
        %v4097 = vpack.c.b16 %v3376, %v3375
        %v4098 = vpack.c.b16 %v3378, %v3377
        %v4099 = vpack.c.b16 %v3380, %v3379
        %v4100 = vpack.c.b16 %v3382, %v3381
        %v4101 = vpack.c.b16 %v3384, %v3383
        %v4102 = vpack.c.b16 %v3386, %v3385
        %v4103 = vpack.c.b16 %v3388, %v3387
        %v4104 = vpack.c.b16 %v3390, %v3389
        %v4105 = vpack.c.b16 %v3392, %v3391
        %v4106 = vpack.c.b16 %v3394, %v3393
        %v4107 = vpack.c.b16 %v3396, %v3395
        %v4108 = vpack.c.b16 %v3398, %v3397
        %v4109 = vpack.c.b16 %v3400, %v3399
        %v4110 = vpack.c.b16 %v3402, %v3401
        %v4111 = vpack.c.b16 %v3404, %v3403
        %v4112 = vpack.c.b16 %v3406, %v3405
        %v4113 = vpack.c.b16 %v3408, %v3407
        %v4114 = vpack.c.b16 %v3410, %v3409
        %v4115 = vpack.c.b16 %v3412, %v3411
        %v4116 = vpack.c.b16 %v3414, %v3413
        %v4117 = vpack.c.b16 %v3416, %v3415
        %v4118 = vpack.c.b16 %v3418, %v3417
        %v4119 = vpack.c.b16 %v3420, %v3419
        %v4120 = vpack.c.b16 %v3422, %v3421
        %v4121 = vpack.c.b16 %v3424, %v3423
        %v4122 = vpack.c.b16 %v3426, %v3425
        %v4123 = vpack.c.b16 %v3428, %v3427
        %v4124 = vpack.c.b16 %v3430, %v3429
        %v4125 = vpack.c.b16 %v3432, %v3431
        %v4126 = vpack.c.b16 %v3434, %v3433
        %v4127 = vpack.c.b16 %v3436, %v3435
        %v4128 = vpack.c.b16 %v3438, %v3437
        %v4129 = vpack.c.b16 %v3440, %v3439
        %v4130 = vpack.c.b16 %v3442, %v3441
        %v4131 = vpack.c.b16 %v3444, %v3443
        %v4132 = vpack.c.b16 %v3446, %v3445
        %v4133 = vpack.c.b16 %v3448, %v3447
        %v4134 = vpack.c.b16 %v3450, %v3449
        %v4135 = vpack.c.b16 %v3452, %v3451
        %v4136 = vpack.c.b16 %v3454, %v3453
        %v4137 = vpack.c.b16 %v3456, %v3455
        %v4138 = vpack.c.b16 %v3458, %v3457
        %v4139 = vpack.c.b16 %v3460, %v3459
        %v4140 = vpack.c.b16 %v3462, %v3461
        %v4141 = vpack.c.b16 %v3464, %v3463
        %v4142 = vpack.c.b16 %v3466, %v3465
        %v4143 = vpack.c.b16 %v3468, %v3467
        %v4144 = vpack.c.b16 %v3470, %v3469
        %v4145 = vpack.c.b16 %v3472, %v3471
        %v4146 = vpack.c.b16 %v3474, %v3473
        %v4147 = vpack.c.b16 %v3476, %v3475
        %v4148 = vpack.c.b16 %v3478, %v3477
        %v4149 = vpack.c.b16 %v3480, %v3479
        %v4150 = vpack.c.b16 %v3482, %v3481
        %v4151 = vpack.c.b16 %v3484, %v3483
        %v4152 = vpack.c.b16 %v3486, %v3485
        %v4153 = vpack.c.b16 %v3488, %v3487
        %v4154 = vpack.c.b16 %v3490, %v3489
        %v4155 = vpack.c.b16 %v3492, %v3491
        %v4156 = vpack.c.b16 %v3494, %v3493
        %v4157 = vpack.c.b16 %v3496, %v3495
        %v4158 = vpack.c.b16 %v3498, %v3497
        %v4159 = vpack.c.b16 %v3500, %v3499
        %v4160 = vpack.c.b16 %v3502, %v3501
        %v4161 = vpack.c.b16 %v3504, %v3503
        %v4162 = vpack.c.b16 %v3506, %v3505
        %v4163 = vpack.c.b16 %v3508, %v3507
        %v4164 = vpack.c.b16 %v3510, %v3509
        %v4165 = vpack.c.b16 %v3512, %v3511
        %v4166 = vpack.c.b16 %v3514, %v3513
        %v4167 = vpack.c.b16 %v3516, %v3515
        %v4168 = vpack.c.b16 %v3518, %v3517
        %v4169 = vpack.c.b16 %v3520, %v3519
        %v4170 = vpack.c.b16 %v3522, %v3521
        %v4171 = vpack.c.b16 %v3524, %v3523
        %v4172 = vpack.c.b16 %v3526, %v3525
        %v4173 = vpack.c.b16 %v3528, %v3527
        %v4174 = vpack.c.b16 %v3530, %v3529
        %v4175 = vpack.c.b16 %v3532, %v3531
        %v4176 = vpack.c.b16 %v3534, %v3533
        %v4177 = vpack.c.b16 %v3536, %v3535
        %v4178 = vpack.c.b16 %v3538, %v3537
        %v4179 = vpack.c.b16 %v3540, %v3539
        %v4180 = vpack.c.b16 %v3542, %v3541
        %v4181 = vpack.c.b16 %v3544, %v3543
        %v4182 = vpack.c.b16 %v3546, %v3545
        %v4183 = vpack.c.b16 %v3548, %v3547
        %v4184 = vpack.c.b16 %v3550, %v3549
        %v4185 = vpack.c.b16 %v3552, %v3551
        %v4186 = vpack.c.b16 %v3554, %v3553
        %v4187 = vpack.c.b16 %v3556, %v3555
        %v4188 = vpack.c.b16 %v3558, %v3557
        %v4189 = vpack.c.b16 %v3560, %v3559
        %v4190 = vpack.c.b16 %v3562, %v3561
        %v4191 = vpack.c.b16 %v3564, %v3563
        %v4192 = vpack.c.b16 %v3566, %v3565
        %v4193 = vpack.c.b16 %v3568, %v3567
        %v4194 = vpack.c.b16 %v3570, %v3569
        %v4195 = vpack.c.b16 %v3572, %v3571
        %v4196 = vpack.c.b16 %v3574, %v3573
        %v4197 = vpack.c.b16 %v3576, %v3575
        %v4198 = vpack.c.b16 %v3578, %v3577
        %v4199 = vpack.c.b16 %v3580, %v3579
        %v4200 = vpack.c.b16 %v3582, %v3581
        %v4201 = vpack.c.b16 %v3584, %v3583
        %v4202 = vpack.c.b16 %v3586, %v3585
        %v4203 = vpack.c.b16 %v3588, %v3587
        %v4204 = vpack.c.b16 %v3590, %v3589
        %v4205 = vpack.c.b16 %v3592, %v3591
        %v4206 = vpack.c.b16 %v3594, %v3593
        %v4207 = vpack.c.b16 %v3596, %v3595
        %v4208 = vpack.c.b16 %v3598, %v3597
        %v4209 = vpack.c.b16 %v3600, %v3599
        %v4210 = vpack.c.b16 %v3602, %v3601
        %v4211 = vpack.c.b16 %v3604, %v3603
        %v4212 = vpack.c.b16 %v3606, %v3605
        %v4213 = vpack.c.b16 %v3608, %v3607
        %v4214 = vpack.c.b16 %v3610, %v3609
        %v4215 = vpack.c.b16 %v3612, %v3611
        %v4216 = vpack.c.b16 %v3614, %v3613
        %v4217 = vpack.c.b16 %v3616, %v3615
        %v4218 = vpack.c.b16 %v3618, %v3617
        %v4219 = vpack.c.b16 %v3620, %v3619
        %v4220 = vpack.c.b16 %v3622, %v3621
        %v4221 = vpack.c.b16 %v3624, %v3623
        %v4222 = vpack.c.b16 %v3626, %v3625
        %v4223 = vpack.c.b16 %v3628, %v3627
        %v4224 = vpack.c.b16 %v3630, %v3629
        %v4225 = vpack.c.b16 %v3632, %v3631
        %v4226 = vpack.c.b16 %v3634, %v3633
        %v4227 = vpack.c.b16 %v3636, %v3635
        %v4228 = vpack.c.b16 %v3638, %v3637
        %v4229 = vpack.c.b16 %v3640, %v3639
        %v4230 = vpack.c.b16 %v3642, %v3641
        %v4231 = vpack.c.b16 %v3644, %v3643
        %v4232 = vpack.c.b16 %v3646, %v3645
        %v4233 = vpack.c.b16 %v3648, %v3647
        %v4234 = vpack.c.b16 %v3650, %v3649
        %v4235 = vpack.c.b16 %v3652, %v3651
        %v4236 = vpack.c.b16 %v3654, %v3653
        %v4237 = vpack.c.b16 %v3656, %v3655
        %v4238 = vpack.c.b16 %v3658, %v3657
        %v4239 = vpack.c.b16 %v3660, %v3659
        %v4240 = vpack.c.b16 %v3662, %v3661
        %v4241 = vpack.c.b16 %v3664, %v3663
        %v4242 = vpack.c.b16 %v3666, %v3665
        %v4243 = vpack.c.b16 %v3668, %v3667
        %v4244 = vpack.c.b16 %v3670, %v3669
        %v4245 = vpack.c.b16 %v3672, %v3671
        %v4246 = vpack.c.b16 %v3674, %v3673
        %v4247 = vpack.c.b16 %v3676, %v3675
        %v4248 = vpack.c.b16 %v3678, %v3677
        %v4249 = vpack.c.b16 %v3680, %v3679
        %v4250 = vpack.c.b16 %v3682, %v3681
        %v4251 = vpack.c.b16 %v3684, %v3683
        %v4252 = vpack.c.b16 %v3686, %v3685
        %v4253 = vpack.c.b16 %v3688, %v3687
        %v4254 = vpack.c.b16 %v3690, %v3689
        %v4255 = vpack.c.b16 %v3692, %v3691
        %v4256 = vpack.c.b16 %v3694, %v3693
        %v4257 = vpack.c.b16 %v3696, %v3695
        %v4258 = vpack.c.b16 %v3698, %v3697
        %v4259 = vpack.c.b16 %v3700, %v3699
        %v4260 = vpack.c.b16 %v3702, %v3701
        %v4261 = vpack.c.b16 %v3704, %v3703
        %v4262 = vpack.c.b16 %v3706, %v3705
        %v4263 = vpack.c.b16 %v3708, %v3707
        %v4264 = vpack.c.b16 %v3710, %v3709
        %v4265 = vpack.c.b16 %v3712, %v3711
        %v4266 = vpack.c.b16 %v3714, %v3713
        %v4267 = vpack.c.b16 %v3716, %v3715
        %v4268 = vpack.c.b16 %v3718, %v3717
        %v4269 = vpack.c.b16 %v3720, %v3719
        %v4270 = vpack.c.b16 %v3722, %v3721
        %v4271 = vpack.c.b16 %v3724, %v3723
        %v4272 = vpack.c.b16 %v3726, %v3725
        %v4273 = vpack.c.b16 %v3728, %v3727
        %v4274 = vpack.c.b16 %v3730, %v3729
        %v4275 = vpack.c.b16 %v3732, %v3731
        %v4276 = vpack.c.b16 %v3734, %v3733
        %v4277 = vpack.c.b16 %v3736, %v3735
        %v4278 = vpack.c.b16 %v3738, %v3737
        %v4279 = vpack.c.b16 %v3740, %v3739
        %v4280 = vpack.c.b16 %v3742, %v3741
        %v4281 = vpack.c.b16 %v3744, %v3743
        %v4282 = vpack.c.b16 %v3746, %v3745
        %v4283 = vpack.c.b16 %v3748, %v3747
        %v4284 = vpack.c.b16 %v3750, %v3749
        %v4285 = vpack.c.b16 %v3752, %v3751
        %v4286 = vpack.c.b16 %v3754, %v3753
        %v4287 = vpack.c.b16 %v3756, %v3755
        %v4288 = vpack.c.b16 %v3758, %v3757
        %v4289 = vpack.c.b16 %v3760, %v3759
        %v4290 = vpack.c.b16 %v3762, %v3761
        %v4291 = vpack.c.b16 %v3764, %v3763
        %v4292 = vpack.c.b16 %v3766, %v3765
        %v4293 = vpack.c.b16 %v3768, %v3767
        %v4294 = vpack.c.b16 %v3770, %v3769
        %v4295 = vpack.c.b16 %v3772, %v3771
        %v4296 = vpack.c.b16 %v3774, %v3773
        %v4297 = vpack.c.b16 %v3776, %v3775
        %v4298 = vpack.c.b16 %v3778, %v3777
        %v4299 = vpack.c.b16 %v3780, %v3779
        %v4300 = vpack.c.b16 %v3782, %v3781
        %v4301 = vpack.c.b16 %v3784, %v3783
        %v4302 = vpack.c.b16 %v3786, %v3785
        %v4303 = vpack.c.b16 %v3788, %v3787
        %v4304 = vpack.c.b16 %v3790, %v3789
        %v4305 = vpack.c.b16 %v3792, %v3791
        %v4306 = vpack.c.b16 %v3794, %v3793
        %4819 = vmatprep.subr.bf16.mxu0 0
        %4820 = vmatpush1.bf16.msra.mxu0 %v3802
        %4821 = vmatprep.subr.bf16.mxu0 0
        %4822 = vmatpush1.bf16.msra.mxu0 %v3801
        %4823 = vmatprep.subr.bf16.mxu0 0
        %4824 = vmatpush1.bf16.msra.mxu0 %v3800
        %4825 = vmatprep.subr.bf16.mxu0 0
        %4826 = vmatpush1.bf16.msra.mxu0 %v3799
        %4827 = vmatprep.subr.bf16.mxu0 0
        %4828 = vmatpush1.bf16.msra.mxu0 %v3798
        %4829 = vmatprep.subr.bf16.mxu0 0
        %4830 = vmatpush1.bf16.msra.mxu0 %v3797
        %4831 = vmatprep.subr.bf16.mxu0 0
        %4832 = vmatpush1.bf16.msra.mxu0 %v3796
        %4833 = vmatprep.subr.bf16.mxu0 0
        %4834 = vmatpush1.bf16.msra.mxu0 %v3795
        %4835 = vmatprep.subr.bf16.mxu0 0
        %4836 = vmatpush2.bf16.msra.mxu0 %v3810
        %4837 = vmatprep.subr.bf16.mxu0 0
        %4838 = vmatpush2.bf16.msra.mxu0 %v3809
        %4839 = vmatprep.subr.bf16.mxu0 0
        %4840 = vmatpush2.bf16.msra.mxu0 %v3808
        %4841 = vmatprep.subr.bf16.mxu0 0
        %4842 = vmatpush2.bf16.msra.mxu0 %v3807
        %4843 = vmatprep.subr.bf16.mxu0 0
        %4844 = vmatpush2.bf16.msra.mxu0 %v3806
        %4845 = vmatprep.subr.bf16.mxu0 0
        %4846 = vmatpush2.bf16.msra.mxu0 %v3805
        %4847 = vmatprep.subr.bf16.mxu0 0
        %4848 = vmatpush2.bf16.msra.mxu0 %v3804
        %4849 = vmatprep.subr.bf16.mxu0 0
        %4850 = vmatpush2.bf16.msra.mxu0 %v3803
        %4851 = vmatprep.mubr.bf16.mxu0 %v1328
        %4852 = vmatmul.mubr.bf16.gmra.mxu0 %v1314
        %v4853 = vpop.f32.mrf.mxu0
        %v4854 = vadd.f32 0.0, %v4853
        %v4855 = vpop.f32.mrf.mxu0
        %v4856 = vpop.f32.mrf.mxu0
        %v4857 = vpop.f32.mrf.mxu0
        %4858 = vdwg.mxu0
        %4859 = vmatprep.subr.bf16.mxu0 0
        %4860 = vmatpush1.bf16.msra.mxu0 %v3818
        %4861 = vmatprep.subr.bf16.mxu0 0
        %4862 = vmatpush1.bf16.msra.mxu0 %v3817
        %4863 = vmatprep.subr.bf16.mxu0 0
        %4864 = vmatpush1.bf16.msra.mxu0 %v3816
        %4865 = vmatprep.subr.bf16.mxu0 0
        %4866 = vmatpush1.bf16.msra.mxu0 %v3815
        %4867 = vmatprep.subr.bf16.mxu0 0
        %4868 = vmatpush1.bf16.msra.mxu0 %v3814
        %4869 = vmatprep.subr.bf16.mxu0 0
        %4870 = vmatpush1.bf16.msra.mxu0 %v3813
        %4871 = vmatprep.subr.bf16.mxu0 0
        %4872 = vmatpush1.bf16.msra.mxu0 %v3812
        %4873 = vmatprep.subr.bf16.mxu0 0
        %4874 = vmatpush1.bf16.msra.mxu0 %v3811
        %4875 = vmatprep.subr.bf16.mxu0 0
        %4876 = vmatpush2.bf16.msra.mxu0 %v3826
        %4877 = vmatprep.subr.bf16.mxu0 0
        %4878 = vmatpush2.bf16.msra.mxu0 %v3825
        %4879 = vmatprep.subr.bf16.mxu0 0
        %4880 = vmatpush2.bf16.msra.mxu0 %v3824
        %4881 = vmatprep.subr.bf16.mxu0 0
        %4882 = vmatpush2.bf16.msra.mxu0 %v3823
        %4883 = vmatprep.subr.bf16.mxu0 0
        %4884 = vmatpush2.bf16.msra.mxu0 %v3822
        %4885 = vmatprep.subr.bf16.mxu0 0
        %4886 = vmatpush2.bf16.msra.mxu0 %v3821
        %4887 = vmatprep.subr.bf16.mxu0 0
        %4888 = vmatpush2.bf16.msra.mxu0 %v3820
        %4889 = vmatprep.subr.bf16.mxu0 0
        %4890 = vmatpush2.bf16.msra.mxu0 %v3819
        %4891 = vmatprep.mubr.bf16.mxu0 %v1338
        %4892 = vmatmul.mubr.bf16.gmra.mxu0 %v1336
        %v4893 = vpop.f32.mrf.mxu0
        %v4894 = vadd.f32 %v4854, %v4893
        %v4895 = vpop.f32.mrf.mxu0
        %v4896 = vpop.f32.mrf.mxu0
        %v4897 = vpop.f32.mrf.mxu0
        %4898 = vdwg.mxu0
        %4899 = vmatprep.subr.bf16.mxu0 0
        %4900 = vmatpush1.bf16.msra.mxu0 %v3834
        %4901 = vmatprep.subr.bf16.mxu0 0
        %4902 = vmatpush1.bf16.msra.mxu0 %v3833
        %4903 = vmatprep.subr.bf16.mxu0 0
        %4904 = vmatpush1.bf16.msra.mxu0 %v3832
        %4905 = vmatprep.subr.bf16.mxu0 0
        %4906 = vmatpush1.bf16.msra.mxu0 %v3831
        %4907 = vmatprep.subr.bf16.mxu0 0
        %4908 = vmatpush1.bf16.msra.mxu0 %v3830
        %4909 = vmatprep.subr.bf16.mxu0 0
        %4910 = vmatpush1.bf16.msra.mxu0 %v3829
        %4911 = vmatprep.subr.bf16.mxu0 0
        %4912 = vmatpush1.bf16.msra.mxu0 %v3828
        %4913 = vmatprep.subr.bf16.mxu0 0
        %4914 = vmatpush1.bf16.msra.mxu0 %v3827
        %4915 = vmatprep.subr.bf16.mxu0 0
        %4916 = vmatpush2.bf16.msra.mxu0 %v3842
        %4917 = vmatprep.subr.bf16.mxu0 0
        %4918 = vmatpush2.bf16.msra.mxu0 %v3841
        %4919 = vmatprep.subr.bf16.mxu0 0
        %4920 = vmatpush2.bf16.msra.mxu0 %v3840
        %4921 = vmatprep.subr.bf16.mxu0 0
        %4922 = vmatpush2.bf16.msra.mxu0 %v3839
        %4923 = vmatprep.subr.bf16.mxu0 0
        %4924 = vmatpush2.bf16.msra.mxu0 %v3838
        %4925 = vmatprep.subr.bf16.mxu0 0
        %4926 = vmatpush2.bf16.msra.mxu0 %v3837
        %4927 = vmatprep.subr.bf16.mxu0 0
        %4928 = vmatpush2.bf16.msra.mxu0 %v3836
        %4929 = vmatprep.subr.bf16.mxu0 0
        %4930 = vmatpush2.bf16.msra.mxu0 %v3835
        %4931 = vmatprep.mubr.bf16.mxu0 %v1335
        %4932 = vmatmul.mubr.bf16.gmra.mxu0 %v1321
        %v4933 = vpop.f32.mrf.mxu0
        %v4934 = vadd.f32 %v4894, %v4933
        %v4935 = vpop.f32.mrf.mxu0
        %v4936 = vpop.f32.mrf.mxu0
        %v4937 = vpop.f32.mrf.mxu0
        %4938 = vdwg.mxu0
        %4939 = vmatprep.subr.bf16.mxu0 0
        %4940 = vmatpush1.bf16.msra.mxu0 %v3850
        %4941 = vmatprep.subr.bf16.mxu0 0
        %4942 = vmatpush1.bf16.msra.mxu0 %v3849
        %4943 = vmatprep.subr.bf16.mxu0 0
        %4944 = vmatpush1.bf16.msra.mxu0 %v3848
        %4945 = vmatprep.subr.bf16.mxu0 0
        %4946 = vmatpush1.bf16.msra.mxu0 %v3847
        %4947 = vmatprep.subr.bf16.mxu0 0
        %4948 = vmatpush1.bf16.msra.mxu0 %v3846
        %4949 = vmatprep.subr.bf16.mxu0 0
        %4950 = vmatpush1.bf16.msra.mxu0 %v3845
        %4951 = vmatprep.subr.bf16.mxu0 0
        %4952 = vmatpush1.bf16.msra.mxu0 %v3844
        %4953 = vmatprep.subr.bf16.mxu0 0
        %4954 = vmatpush1.bf16.msra.mxu0 %v3843
        %4955 = vmatprep.subr.bf16.mxu0 0
        %4956 = vmatpush2.bf16.msra.mxu0 %v3858
        %4957 = vmatprep.subr.bf16.mxu0 0
        %4958 = vmatpush2.bf16.msra.mxu0 %v3857
        %4959 = vmatprep.subr.bf16.mxu0 0
        %4960 = vmatpush2.bf16.msra.mxu0 %v3856
        %4961 = vmatprep.subr.bf16.mxu0 0
        %4962 = vmatpush2.bf16.msra.mxu0 %v3855
        %4963 = vmatprep.subr.bf16.mxu0 0
        %4964 = vmatpush2.bf16.msra.mxu0 %v3854
        %4965 = vmatprep.subr.bf16.mxu0 0
        %4966 = vmatpush2.bf16.msra.mxu0 %v3853
        %4967 = vmatprep.subr.bf16.mxu0 0
        %4968 = vmatpush2.bf16.msra.mxu0 %v3852
        %4969 = vmatprep.subr.bf16.mxu0 0
        %4970 = vmatpush2.bf16.msra.mxu0 %v3851
        %4971 = vmatprep.mubr.bf16.mxu0 %v1339
        %4972 = vmatmul.mubr.bf16.gmra.mxu0 %v1337
        %v4973 = vpop.f32.mrf.mxu0
        %v4974 = vadd.f32 %v4934, %v4973
        %v4975 = vpop.f32.mrf.mxu0
        %v4976 = vpop.f32.mrf.mxu0
        %v4977 = vpop.f32.mrf.mxu0
        %4978 = vdwg.mxu0
        %4979 = vmatprep.subr.bf16.mxu0 0
        %4980 = vmatpush1.bf16.msra.mxu0 %v3866
        %4981 = vmatprep.subr.bf16.mxu0 0
        %4982 = vmatpush1.bf16.msra.mxu0 %v3865
        %4983 = vmatprep.subr.bf16.mxu0 0
        %4984 = vmatpush1.bf16.msra.mxu0 %v3864
        %4985 = vmatprep.subr.bf16.mxu0 0
        %4986 = vmatpush1.bf16.msra.mxu0 %v3863
        %4987 = vmatprep.subr.bf16.mxu0 0
        %4988 = vmatpush1.bf16.msra.mxu0 %v3862
        %4989 = vmatprep.subr.bf16.mxu0 0
        %4990 = vmatpush1.bf16.msra.mxu0 %v3861
        %4991 = vmatprep.subr.bf16.mxu0 0
        %4992 = vmatpush1.bf16.msra.mxu0 %v3860
        %4993 = vmatprep.subr.bf16.mxu0 0
        %4994 = vmatpush1.bf16.msra.mxu0 %v3859
        %4995 = vmatprep.subr.bf16.mxu0 0
        %4996 = vmatpush2.bf16.msra.mxu0 %v3874
        %4997 = vmatprep.subr.bf16.mxu0 0
        %4998 = vmatpush2.bf16.msra.mxu0 %v3873
        %4999 = vmatprep.subr.bf16.mxu0 0
        %5000 = vmatpush2.bf16.msra.mxu0 %v3872
        %5001 = vmatprep.subr.bf16.mxu0 0
        %5002 = vmatpush2.bf16.msra.mxu0 %v3871
        %5003 = vmatprep.subr.bf16.mxu0 0
        %5004 = vmatpush2.bf16.msra.mxu0 %v3870
        %5005 = vmatprep.subr.bf16.mxu0 0
        %5006 = vmatpush2.bf16.msra.mxu0 %v3869
        %5007 = vmatprep.subr.bf16.mxu0 0
        %5008 = vmatpush2.bf16.msra.mxu0 %v3868
        %5009 = vmatprep.subr.bf16.mxu0 0
        %5010 = vmatpush2.bf16.msra.mxu0 %v3867
        %5011 = vmatprep.mubr.bf16.mxu0 %v1377
        %5012 = vmatmul.mubr.bf16.gmra.mxu0 %v1363
        %v5013 = vpop.f32.mrf.mxu0
        %v5014 = vadd.f32 %v4974, %v5013
        %v5015 = vpop.f32.mrf.mxu0
        %v5016 = vpop.f32.mrf.mxu0
        %v5017 = vpop.f32.mrf.mxu0
        %5018 = vdwg.mxu0
        %5019 = vmatprep.subr.bf16.mxu0 0
        %5020 = vmatpush1.bf16.msra.mxu0 %v3882
        %5021 = vmatprep.subr.bf16.mxu0 0
        %5022 = vmatpush1.bf16.msra.mxu0 %v3881
        %5023 = vmatprep.subr.bf16.mxu0 0
        %5024 = vmatpush1.bf16.msra.mxu0 %v3880
        %5025 = vmatprep.subr.bf16.mxu0 0
        %5026 = vmatpush1.bf16.msra.mxu0 %v3879
        %5027 = vmatprep.subr.bf16.mxu0 0
        %5028 = vmatpush1.bf16.msra.mxu0 %v3878
        %5029 = vmatprep.subr.bf16.mxu0 0
        %5030 = vmatpush1.bf16.msra.mxu0 %v3877
        %5031 = vmatprep.subr.bf16.mxu0 0
        %5032 = vmatpush1.bf16.msra.mxu0 %v3876
        %5033 = vmatprep.subr.bf16.mxu0 0
        %5034 = vmatpush1.bf16.msra.mxu0 %v3875
        %5035 = vmatprep.subr.bf16.mxu0 0
        %5036 = vmatpush2.bf16.msra.mxu0 %v3890
        %5037 = vmatprep.subr.bf16.mxu0 0
        %5038 = vmatpush2.bf16.msra.mxu0 %v3889
        %5039 = vmatprep.subr.bf16.mxu0 0
        %5040 = vmatpush2.bf16.msra.mxu0 %v3888
        %5041 = vmatprep.subr.bf16.mxu0 0
        %5042 = vmatpush2.bf16.msra.mxu0 %v3887
        %5043 = vmatprep.subr.bf16.mxu0 0
        %5044 = vmatpush2.bf16.msra.mxu0 %v3886
        %5045 = vmatprep.subr.bf16.mxu0 0
        %5046 = vmatpush2.bf16.msra.mxu0 %v3885
        %5047 = vmatprep.subr.bf16.mxu0 0
        %5048 = vmatpush2.bf16.msra.mxu0 %v3884
        %5049 = vmatprep.subr.bf16.mxu0 0
        %5050 = vmatpush2.bf16.msra.mxu0 %v3883
        %5051 = vmatprep.mubr.bf16.mxu0 %v1387
        %5052 = vmatmul.mubr.bf16.gmra.mxu0 %v1385
        %v5053 = vpop.f32.mrf.mxu0
        %v5054 = vadd.f32 %v5014, %v5053
        %v5055 = vpop.f32.mrf.mxu0
        %v5056 = vpop.f32.mrf.mxu0
        %v5057 = vpop.f32.mrf.mxu0
        %5058 = vdwg.mxu0
        %5059 = vmatprep.subr.bf16.mxu0 0
        %5060 = vmatpush1.bf16.msra.mxu0 %v3898
        %5061 = vmatprep.subr.bf16.mxu0 0
        %5062 = vmatpush1.bf16.msra.mxu0 %v3897
        %5063 = vmatprep.subr.bf16.mxu0 0
        %5064 = vmatpush1.bf16.msra.mxu0 %v3896
        %5065 = vmatprep.subr.bf16.mxu0 0
        %5066 = vmatpush1.bf16.msra.mxu0 %v3895
        %5067 = vmatprep.subr.bf16.mxu0 0
        %5068 = vmatpush1.bf16.msra.mxu0 %v3894
        %5069 = vmatprep.subr.bf16.mxu0 0
        %5070 = vmatpush1.bf16.msra.mxu0 %v3893
        %5071 = vmatprep.subr.bf16.mxu0 0
        %5072 = vmatpush1.bf16.msra.mxu0 %v3892
        %5073 = vmatprep.subr.bf16.mxu0 0
        %5074 = vmatpush1.bf16.msra.mxu0 %v3891
        %5075 = vmatprep.subr.bf16.mxu0 0
        %5076 = vmatpush2.bf16.msra.mxu0 %v3906
        %5077 = vmatprep.subr.bf16.mxu0 0
        %5078 = vmatpush2.bf16.msra.mxu0 %v3905
        %5079 = vmatprep.subr.bf16.mxu0 0
        %5080 = vmatpush2.bf16.msra.mxu0 %v3904
        %5081 = vmatprep.subr.bf16.mxu0 0
        %5082 = vmatpush2.bf16.msra.mxu0 %v3903
        %5083 = vmatprep.subr.bf16.mxu0 0
        %5084 = vmatpush2.bf16.msra.mxu0 %v3902
        %5085 = vmatprep.subr.bf16.mxu0 0
        %5086 = vmatpush2.bf16.msra.mxu0 %v3901
        %5087 = vmatprep.subr.bf16.mxu0 0
        %5088 = vmatpush2.bf16.msra.mxu0 %v3900
        %5089 = vmatprep.subr.bf16.mxu0 0
        %5090 = vmatpush2.bf16.msra.mxu0 %v3899
        %5091 = vmatprep.mubr.bf16.mxu0 %v1384
        %5092 = vmatmul.mubr.bf16.gmra.mxu0 %v1370
        %v5093 = vpop.f32.mrf.mxu0
        %v5094 = vadd.f32 %v5054, %v5093
        %v5095 = vpop.f32.mrf.mxu0
        %v5096 = vpop.f32.mrf.mxu0
        %v5097 = vpop.f32.mrf.mxu0
        %5098 = vdwg.mxu0
        %5099 = vmatprep.subr.bf16.mxu0 0
        %5100 = vmatpush1.bf16.msra.mxu0 %v3914
        %5101 = vmatprep.subr.bf16.mxu0 0
        %5102 = vmatpush1.bf16.msra.mxu0 %v3913
        %5103 = vmatprep.subr.bf16.mxu0 0
        %5104 = vmatpush1.bf16.msra.mxu0 %v3912
        %5105 = vmatprep.subr.bf16.mxu0 0
        %5106 = vmatpush1.bf16.msra.mxu0 %v3911
        %5107 = vmatprep.subr.bf16.mxu0 0
        %5108 = vmatpush1.bf16.msra.mxu0 %v3910
        %5109 = vmatprep.subr.bf16.mxu0 0
        %5110 = vmatpush1.bf16.msra.mxu0 %v3909
        %5111 = vmatprep.subr.bf16.mxu0 0
        %5112 = vmatpush1.bf16.msra.mxu0 %v3908
        %5113 = vmatprep.subr.bf16.mxu0 0
        %5114 = vmatpush1.bf16.msra.mxu0 %v3907
        %5115 = vmatprep.subr.bf16.mxu0 0
        %5116 = vmatpush2.bf16.msra.mxu0 %v3922
        %5117 = vmatprep.subr.bf16.mxu0 0
        %5118 = vmatpush2.bf16.msra.mxu0 %v3921
        %5119 = vmatprep.subr.bf16.mxu0 0
        %5120 = vmatpush2.bf16.msra.mxu0 %v3920
        %5121 = vmatprep.subr.bf16.mxu0 0
        %5122 = vmatpush2.bf16.msra.mxu0 %v3919
        %5123 = vmatprep.subr.bf16.mxu0 0
        %5124 = vmatpush2.bf16.msra.mxu0 %v3918
        %5125 = vmatprep.subr.bf16.mxu0 0
        %5126 = vmatpush2.bf16.msra.mxu0 %v3917
        %5127 = vmatprep.subr.bf16.mxu0 0
        %5128 = vmatpush2.bf16.msra.mxu0 %v3916
        %5129 = vmatprep.subr.bf16.mxu0 0
        %5130 = vmatpush2.bf16.msra.mxu0 %v3915
        %5131 = vmatprep.mubr.bf16.mxu0 %v1388
        %5132 = vmatmul.mubr.bf16.gmra.mxu0 %v1386
        %v5133 = vpop.f32.mrf.mxu0
        %v5134 = vadd.f32 %v5094, %v5133
        %v5135 = vpop.f32.mrf.mxu0
        %v5136 = vpop.f32.mrf.mxu0
        %v5137 = vpop.f32.mrf.mxu0
        %5138 = vdwg.mxu0
        %5139 = vmatprep.subr.bf16.mxu0 0
        %5140 = vmatpush1.bf16.msra.mxu0 %v3930
        %5141 = vmatprep.subr.bf16.mxu0 0
        %5142 = vmatpush1.bf16.msra.mxu0 %v3929
        %5143 = vmatprep.subr.bf16.mxu0 0
        %5144 = vmatpush1.bf16.msra.mxu0 %v3928
        %5145 = vmatprep.subr.bf16.mxu0 0
        %5146 = vmatpush1.bf16.msra.mxu0 %v3927
        %5147 = vmatprep.subr.bf16.mxu0 0
        %5148 = vmatpush1.bf16.msra.mxu0 %v3926
        %5149 = vmatprep.subr.bf16.mxu0 0
        %5150 = vmatpush1.bf16.msra.mxu0 %v3925
        %5151 = vmatprep.subr.bf16.mxu0 0
        %5152 = vmatpush1.bf16.msra.mxu0 %v3924
        %5153 = vmatprep.subr.bf16.mxu0 0
        %5154 = vmatpush1.bf16.msra.mxu0 %v3923
        %5155 = vmatprep.subr.bf16.mxu0 0
        %5156 = vmatpush2.bf16.msra.mxu0 %v3938
        %5157 = vmatprep.subr.bf16.mxu0 0
        %5158 = vmatpush2.bf16.msra.mxu0 %v3937
        %5159 = vmatprep.subr.bf16.mxu0 0
        %5160 = vmatpush2.bf16.msra.mxu0 %v3936
        %5161 = vmatprep.subr.bf16.mxu0 0
        %5162 = vmatpush2.bf16.msra.mxu0 %v3935
        %5163 = vmatprep.subr.bf16.mxu0 0
        %5164 = vmatpush2.bf16.msra.mxu0 %v3934
        %5165 = vmatprep.subr.bf16.mxu0 0
        %5166 = vmatpush2.bf16.msra.mxu0 %v3933
        %5167 = vmatprep.subr.bf16.mxu0 0
        %5168 = vmatpush2.bf16.msra.mxu0 %v3932
        %5169 = vmatprep.subr.bf16.mxu0 0
        %5170 = vmatpush2.bf16.msra.mxu0 %v3931
        %5171 = vmatprep.mubr.bf16.mxu0 %v1426
        %5172 = vmatmul.mubr.bf16.gmra.mxu0 %v1412
        %v5173 = vpop.f32.mrf.mxu0
        %v5174 = vadd.f32 %v5134, %v5173
        %v5175 = vpop.f32.mrf.mxu0
        %v5176 = vpop.f32.mrf.mxu0
        %v5177 = vpop.f32.mrf.mxu0
        %5178 = vdwg.mxu0
        %5179 = vmatprep.subr.bf16.mxu0 0
        %5180 = vmatpush1.bf16.msra.mxu0 %v3946
        %5181 = vmatprep.subr.bf16.mxu0 0
        %5182 = vmatpush1.bf16.msra.mxu0 %v3945
        %5183 = vmatprep.subr.bf16.mxu0 0
        %5184 = vmatpush1.bf16.msra.mxu0 %v3944
        %5185 = vmatprep.subr.bf16.mxu0 0
        %5186 = vmatpush1.bf16.msra.mxu0 %v3943
        %5187 = vmatprep.subr.bf16.mxu0 0
        %5188 = vmatpush1.bf16.msra.mxu0 %v3942
        %5189 = vmatprep.subr.bf16.mxu0 0
        %5190 = vmatpush1.bf16.msra.mxu0 %v3941
        %5191 = vmatprep.subr.bf16.mxu0 0
        %5192 = vmatpush1.bf16.msra.mxu0 %v3940
        %5193 = vmatprep.subr.bf16.mxu0 0
        %5194 = vmatpush1.bf16.msra.mxu0 %v3939
        %5195 = vmatprep.subr.bf16.mxu0 0
        %5196 = vmatpush2.bf16.msra.mxu0 %v3954
        %5197 = vmatprep.subr.bf16.mxu0 0
        %5198 = vmatpush2.bf16.msra.mxu0 %v3953
        %5199 = vmatprep.subr.bf16.mxu0 0
        %5200 = vmatpush2.bf16.msra.mxu0 %v3952
        %5201 = vmatprep.subr.bf16.mxu0 0
        %5202 = vmatpush2.bf16.msra.mxu0 %v3951
        %5203 = vmatprep.subr.bf16.mxu0 0
        %5204 = vmatpush2.bf16.msra.mxu0 %v3950
        %5205 = vmatprep.subr.bf16.mxu0 0
        %5206 = vmatpush2.bf16.msra.mxu0 %v3949
        %5207 = vmatprep.subr.bf16.mxu0 0
        %5208 = vmatpush2.bf16.msra.mxu0 %v3948
        %5209 = vmatprep.subr.bf16.mxu0 0
        %5210 = vmatpush2.bf16.msra.mxu0 %v3947
        %5211 = vmatprep.mubr.bf16.mxu0 %v1436
        %5212 = vmatmul.mubr.bf16.gmra.mxu0 %v1434
        %v5213 = vpop.f32.mrf.mxu0
        %v5214 = vadd.f32 %v5174, %v5213
        %v5215 = vpop.f32.mrf.mxu0
        %v5216 = vpop.f32.mrf.mxu0
        %v5217 = vpop.f32.mrf.mxu0
        %5218 = vdwg.mxu0
        %5219 = vmatprep.subr.bf16.mxu0 0
        %5220 = vmatpush1.bf16.msra.mxu0 %v3962
        %5221 = vmatprep.subr.bf16.mxu0 0
        %5222 = vmatpush1.bf16.msra.mxu0 %v3961
        %5223 = vmatprep.subr.bf16.mxu0 0
        %5224 = vmatpush1.bf16.msra.mxu0 %v3960
        %5225 = vmatprep.subr.bf16.mxu0 0
        %5226 = vmatpush1.bf16.msra.mxu0 %v3959
        %5227 = vmatprep.subr.bf16.mxu0 0
        %5228 = vmatpush1.bf16.msra.mxu0 %v3958
        %5229 = vmatprep.subr.bf16.mxu0 0
        %5230 = vmatpush1.bf16.msra.mxu0 %v3957
        %5231 = vmatprep.subr.bf16.mxu0 0
        %5232 = vmatpush1.bf16.msra.mxu0 %v3956
        %5233 = vmatprep.subr.bf16.mxu0 0
        %5234 = vmatpush1.bf16.msra.mxu0 %v3955
        %5235 = vmatprep.subr.bf16.mxu0 0
        %5236 = vmatpush2.bf16.msra.mxu0 %v3970
        %5237 = vmatprep.subr.bf16.mxu0 0
        %5238 = vmatpush2.bf16.msra.mxu0 %v3969
        %5239 = vmatprep.subr.bf16.mxu0 0
        %5240 = vmatpush2.bf16.msra.mxu0 %v3968
        %5241 = vmatprep.subr.bf16.mxu0 0
        %5242 = vmatpush2.bf16.msra.mxu0 %v3967
        %5243 = vmatprep.subr.bf16.mxu0 0
        %5244 = vmatpush2.bf16.msra.mxu0 %v3966
        %5245 = vmatprep.subr.bf16.mxu0 0
        %5246 = vmatpush2.bf16.msra.mxu0 %v3965
        %5247 = vmatprep.subr.bf16.mxu0 0
        %5248 = vmatpush2.bf16.msra.mxu0 %v3964
        %5249 = vmatprep.subr.bf16.mxu0 0
        %5250 = vmatpush2.bf16.msra.mxu0 %v3963
        %5251 = vmatprep.mubr.bf16.mxu0 %v1433
        %5252 = vmatmul.mubr.bf16.gmra.mxu0 %v1419
        %v5253 = vpop.f32.mrf.mxu0
        %v5254 = vadd.f32 %v5214, %v5253
        %v5255 = vpop.f32.mrf.mxu0
        %v5256 = vpop.f32.mrf.mxu0
        %v5257 = vpop.f32.mrf.mxu0
        %5258 = vdwg.mxu0
        %5259 = vmatprep.subr.bf16.mxu0 0
        %5260 = vmatpush1.bf16.msra.mxu0 %v3978
        %5261 = vmatprep.subr.bf16.mxu0 0
        %5262 = vmatpush1.bf16.msra.mxu0 %v3977
        %5263 = vmatprep.subr.bf16.mxu0 0
        %5264 = vmatpush1.bf16.msra.mxu0 %v3976
        %5265 = vmatprep.subr.bf16.mxu0 0
        %5266 = vmatpush1.bf16.msra.mxu0 %v3975
        %5267 = vmatprep.subr.bf16.mxu0 0
        %5268 = vmatpush1.bf16.msra.mxu0 %v3974
        %5269 = vmatprep.subr.bf16.mxu0 0
        %5270 = vmatpush1.bf16.msra.mxu0 %v3973
        %5271 = vmatprep.subr.bf16.mxu0 0
        %5272 = vmatpush1.bf16.msra.mxu0 %v3972
        %5273 = vmatprep.subr.bf16.mxu0 0
        %5274 = vmatpush1.bf16.msra.mxu0 %v3971
        %5275 = vmatprep.subr.bf16.mxu0 0
        %5276 = vmatpush2.bf16.msra.mxu0 %v3986
        %5277 = vmatprep.subr.bf16.mxu0 0
        %5278 = vmatpush2.bf16.msra.mxu0 %v3985
        %5279 = vmatprep.subr.bf16.mxu0 0
        %5280 = vmatpush2.bf16.msra.mxu0 %v3984
        %5281 = vmatprep.subr.bf16.mxu0 0
        %5282 = vmatpush2.bf16.msra.mxu0 %v3983
        %5283 = vmatprep.subr.bf16.mxu0 0
        %5284 = vmatpush2.bf16.msra.mxu0 %v3982
        %5285 = vmatprep.subr.bf16.mxu0 0
        %5286 = vmatpush2.bf16.msra.mxu0 %v3981
        %5287 = vmatprep.subr.bf16.mxu0 0
        %5288 = vmatpush2.bf16.msra.mxu0 %v3980
        %5289 = vmatprep.subr.bf16.mxu0 0
        %5290 = vmatpush2.bf16.msra.mxu0 %v3979
        %5291 = vmatprep.mubr.bf16.mxu0 %v1437
        %5292 = vmatmul.mubr.bf16.gmra.mxu0 %v1435
        %v5293 = vpop.f32.mrf.mxu0
        %v5294 = vadd.f32 %v5254, %v5293
        %v5295 = vpop.f32.mrf.mxu0
        %v5296 = vpop.f32.mrf.mxu0
        %v5297 = vpop.f32.mrf.mxu0
        %5298 = vdwg.mxu0
        %5299 = vmatprep.subr.bf16.mxu0 0
        %5300 = vmatpush1.bf16.msra.mxu0 %v3994
        %5301 = vmatprep.subr.bf16.mxu0 0
        %5302 = vmatpush1.bf16.msra.mxu0 %v3993
        %5303 = vmatprep.subr.bf16.mxu0 0
        %5304 = vmatpush1.bf16.msra.mxu0 %v3992
        %5305 = vmatprep.subr.bf16.mxu0 0
        %5306 = vmatpush1.bf16.msra.mxu0 %v3991
        %5307 = vmatprep.subr.bf16.mxu0 0
        %5308 = vmatpush1.bf16.msra.mxu0 %v3990
        %5309 = vmatprep.subr.bf16.mxu0 0
        %5310 = vmatpush1.bf16.msra.mxu0 %v3989
        %5311 = vmatprep.subr.bf16.mxu0 0
        %5312 = vmatpush1.bf16.msra.mxu0 %v3988
        %5313 = vmatprep.subr.bf16.mxu0 0
        %5314 = vmatpush1.bf16.msra.mxu0 %v3987
        %5315 = vmatprep.subr.bf16.mxu0 0
        %5316 = vmatpush2.bf16.msra.mxu0 %v4002
        %5317 = vmatprep.subr.bf16.mxu0 0
        %5318 = vmatpush2.bf16.msra.mxu0 %v4001
        %5319 = vmatprep.subr.bf16.mxu0 0
        %5320 = vmatpush2.bf16.msra.mxu0 %v4000
        %5321 = vmatprep.subr.bf16.mxu0 0
        %5322 = vmatpush2.bf16.msra.mxu0 %v3999
        %5323 = vmatprep.subr.bf16.mxu0 0
        %5324 = vmatpush2.bf16.msra.mxu0 %v3998
        %5325 = vmatprep.subr.bf16.mxu0 0
        %5326 = vmatpush2.bf16.msra.mxu0 %v3997
        %5327 = vmatprep.subr.bf16.mxu0 0
        %5328 = vmatpush2.bf16.msra.mxu0 %v3996
        %5329 = vmatprep.subr.bf16.mxu0 0
        %5330 = vmatpush2.bf16.msra.mxu0 %v3995
        %5331 = vmatprep.mubr.bf16.mxu0 %v1475
        %5332 = vmatmul.mubr.bf16.gmra.mxu0 %v1461
        %v5333 = vpop.f32.mrf.mxu0
        %v5334 = vadd.f32 %v5294, %v5333
        %v5335 = vpop.f32.mrf.mxu0
        %v5336 = vpop.f32.mrf.mxu0
        %v5337 = vpop.f32.mrf.mxu0
        %5338 = vdwg.mxu0
        %5339 = vmatprep.subr.bf16.mxu0 0
        %5340 = vmatpush1.bf16.msra.mxu0 %v4010
        %5341 = vmatprep.subr.bf16.mxu0 0
        %5342 = vmatpush1.bf16.msra.mxu0 %v4009
        %5343 = vmatprep.subr.bf16.mxu0 0
        %5344 = vmatpush1.bf16.msra.mxu0 %v4008
        %5345 = vmatprep.subr.bf16.mxu0 0
        %5346 = vmatpush1.bf16.msra.mxu0 %v4007
        %5347 = vmatprep.subr.bf16.mxu0 0
        %5348 = vmatpush1.bf16.msra.mxu0 %v4006
        %5349 = vmatprep.subr.bf16.mxu0 0
        %5350 = vmatpush1.bf16.msra.mxu0 %v4005
        %5351 = vmatprep.subr.bf16.mxu0 0
        %5352 = vmatpush1.bf16.msra.mxu0 %v4004
        %5353 = vmatprep.subr.bf16.mxu0 0
        %5354 = vmatpush1.bf16.msra.mxu0 %v4003
        %5355 = vmatprep.subr.bf16.mxu0 0
        %5356 = vmatpush2.bf16.msra.mxu0 %v4018
        %5357 = vmatprep.subr.bf16.mxu0 0
        %5358 = vmatpush2.bf16.msra.mxu0 %v4017
        %5359 = vmatprep.subr.bf16.mxu0 0
        %5360 = vmatpush2.bf16.msra.mxu0 %v4016
        %5361 = vmatprep.subr.bf16.mxu0 0
        %5362 = vmatpush2.bf16.msra.mxu0 %v4015
        %5363 = vmatprep.subr.bf16.mxu0 0
        %5364 = vmatpush2.bf16.msra.mxu0 %v4014
        %5365 = vmatprep.subr.bf16.mxu0 0
        %5366 = vmatpush2.bf16.msra.mxu0 %v4013
        %5367 = vmatprep.subr.bf16.mxu0 0
        %5368 = vmatpush2.bf16.msra.mxu0 %v4012
        %5369 = vmatprep.subr.bf16.mxu0 0
        %5370 = vmatpush2.bf16.msra.mxu0 %v4011
        %5371 = vmatprep.mubr.bf16.mxu0 %v1485
        %5372 = vmatmul.mubr.bf16.gmra.mxu0 %v1483
        %v5373 = vpop.f32.mrf.mxu0
        %v5374 = vadd.f32 %v5334, %v5373
        %v5375 = vpop.f32.mrf.mxu0
        %v5376 = vpop.f32.mrf.mxu0
        %v5377 = vpop.f32.mrf.mxu0
        %5378 = vdwg.mxu0
        %5379 = vmatprep.subr.bf16.mxu0 0
        %5380 = vmatpush1.bf16.msra.mxu0 %v4026
        %5381 = vmatprep.subr.bf16.mxu0 0
        %5382 = vmatpush1.bf16.msra.mxu0 %v4025
        %5383 = vmatprep.subr.bf16.mxu0 0
        %5384 = vmatpush1.bf16.msra.mxu0 %v4024
        %5385 = vmatprep.subr.bf16.mxu0 0
        %5386 = vmatpush1.bf16.msra.mxu0 %v4023
        %5387 = vmatprep.subr.bf16.mxu0 0
        %5388 = vmatpush1.bf16.msra.mxu0 %v4022
        %5389 = vmatprep.subr.bf16.mxu0 0
        %5390 = vmatpush1.bf16.msra.mxu0 %v4021
        %5391 = vmatprep.subr.bf16.mxu0 0
        %5392 = vmatpush1.bf16.msra.mxu0 %v4020
        %5393 = vmatprep.subr.bf16.mxu0 0
        %5394 = vmatpush1.bf16.msra.mxu0 %v4019
        %5395 = vmatprep.subr.bf16.mxu0 0
        %5396 = vmatpush2.bf16.msra.mxu0 %v4034
        %5397 = vmatprep.subr.bf16.mxu0 0
        %5398 = vmatpush2.bf16.msra.mxu0 %v4033
        %5399 = vmatprep.subr.bf16.mxu0 0
        %5400 = vmatpush2.bf16.msra.mxu0 %v4032
        %5401 = vmatprep.subr.bf16.mxu0 0
        %5402 = vmatpush2.bf16.msra.mxu0 %v4031
        %5403 = vmatprep.subr.bf16.mxu0 0
        %5404 = vmatpush2.bf16.msra.mxu0 %v4030
        %5405 = vmatprep.subr.bf16.mxu0 0
        %5406 = vmatpush2.bf16.msra.mxu0 %v4029
        %5407 = vmatprep.subr.bf16.mxu0 0
        %5408 = vmatpush2.bf16.msra.mxu0 %v4028
        %5409 = vmatprep.subr.bf16.mxu0 0
        %5410 = vmatpush2.bf16.msra.mxu0 %v4027
        %5411 = vmatprep.mubr.bf16.mxu0 %v1482
        %5412 = vmatmul.mubr.bf16.gmra.mxu0 %v1468
        %v5413 = vpop.f32.mrf.mxu0
        %v5414 = vadd.f32 %v5374, %v5413
        %v5415 = vpop.f32.mrf.mxu0
        %v5416 = vpop.f32.mrf.mxu0
        %v5417 = vpop.f32.mrf.mxu0
        %5418 = vdwg.mxu0
        %5419 = vmatprep.subr.bf16.mxu0 0
        %5420 = vmatpush1.bf16.msra.mxu0 %v4042
        %5421 = vmatprep.subr.bf16.mxu0 0
        %5422 = vmatpush1.bf16.msra.mxu0 %v4041
        %5423 = vmatprep.subr.bf16.mxu0 0
        %5424 = vmatpush1.bf16.msra.mxu0 %v4040
        %5425 = vmatprep.subr.bf16.mxu0 0
        %5426 = vmatpush1.bf16.msra.mxu0 %v4039
        %5427 = vmatprep.subr.bf16.mxu0 0
        %5428 = vmatpush1.bf16.msra.mxu0 %v4038
        %5429 = vmatprep.subr.bf16.mxu0 0
        %5430 = vmatpush1.bf16.msra.mxu0 %v4037
        %5431 = vmatprep.subr.bf16.mxu0 0
        %5432 = vmatpush1.bf16.msra.mxu0 %v4036
        %5433 = vmatprep.subr.bf16.mxu0 0
        %5434 = vmatpush1.bf16.msra.mxu0 %v4035
        %5435 = vmatprep.subr.bf16.mxu0 0
        %5436 = vmatpush2.bf16.msra.mxu0 %v4050
        %5437 = vmatprep.subr.bf16.mxu0 0
        %5438 = vmatpush2.bf16.msra.mxu0 %v4049
        %5439 = vmatprep.subr.bf16.mxu0 0
        %5440 = vmatpush2.bf16.msra.mxu0 %v4048
        %5441 = vmatprep.subr.bf16.mxu0 0
        %5442 = vmatpush2.bf16.msra.mxu0 %v4047
        %5443 = vmatprep.subr.bf16.mxu0 0
        %5444 = vmatpush2.bf16.msra.mxu0 %v4046
        %5445 = vmatprep.subr.bf16.mxu0 0
        %5446 = vmatpush2.bf16.msra.mxu0 %v4045
        %5447 = vmatprep.subr.bf16.mxu0 0
        %5448 = vmatpush2.bf16.msra.mxu0 %v4044
        %5449 = vmatprep.subr.bf16.mxu0 0
        %5450 = vmatpush2.bf16.msra.mxu0 %v4043
        %5451 = vmatprep.mubr.bf16.mxu0 %v1486
        %5452 = vmatmul.mubr.bf16.gmra.mxu0 %v1484
        %v5453 = vpop.f32.mrf.mxu0
        %v5454 = vadd.f32 %v5414, %v5453
        %v5455 = vpop.f32.mrf.mxu0
        %v5456 = vpop.f32.mrf.mxu0
        %v5457 = vpop.f32.mrf.mxu0
        %5458 = vdwg.mxu0
        %5459 = vmatprep.subr.bf16.mxu0 0
        %5460 = vmatpush1.bf16.msra.mxu0 %v4058
        %5461 = vmatprep.subr.bf16.mxu0 0
        %5462 = vmatpush1.bf16.msra.mxu0 %v4057
        %5463 = vmatprep.subr.bf16.mxu0 0
        %5464 = vmatpush1.bf16.msra.mxu0 %v4056
        %5465 = vmatprep.subr.bf16.mxu0 0
        %5466 = vmatpush1.bf16.msra.mxu0 %v4055
        %5467 = vmatprep.subr.bf16.mxu0 0
        %5468 = vmatpush1.bf16.msra.mxu0 %v4054
        %5469 = vmatprep.subr.bf16.mxu0 0
        %5470 = vmatpush1.bf16.msra.mxu0 %v4053
        %5471 = vmatprep.subr.bf16.mxu0 0
        %5472 = vmatpush1.bf16.msra.mxu0 %v4052
        %5473 = vmatprep.subr.bf16.mxu0 0
        %5474 = vmatpush1.bf16.msra.mxu0 %v4051
        %5475 = vmatprep.subr.bf16.mxu0 0
        %5476 = vmatpush2.bf16.msra.mxu0 %v4066
        %5477 = vmatprep.subr.bf16.mxu0 0
        %5478 = vmatpush2.bf16.msra.mxu0 %v4065
        %5479 = vmatprep.subr.bf16.mxu0 0
        %5480 = vmatpush2.bf16.msra.mxu0 %v4064
        %5481 = vmatprep.subr.bf16.mxu0 0
        %5482 = vmatpush2.bf16.msra.mxu0 %v4063
        %5483 = vmatprep.subr.bf16.mxu0 0
        %5484 = vmatpush2.bf16.msra.mxu0 %v4062
        %5485 = vmatprep.subr.bf16.mxu0 0
        %5486 = vmatpush2.bf16.msra.mxu0 %v4061
        %5487 = vmatprep.subr.bf16.mxu0 0
        %5488 = vmatpush2.bf16.msra.mxu0 %v4060
        %5489 = vmatprep.subr.bf16.mxu0 0
        %5490 = vmatpush2.bf16.msra.mxu0 %v4059
        %5491 = vmatprep.mubr.bf16.mxu0 %v1524
        %5492 = vmatmul.mubr.bf16.gmra.mxu0 %v1510
        %v5493 = vpop.f32.mrf.mxu0
        %v5494 = vadd.f32 %v5454, %v5493
        %v5495 = vpop.f32.mrf.mxu0
        %v5496 = vpop.f32.mrf.mxu0
        %v5497 = vpop.f32.mrf.mxu0
        %5498 = vdwg.mxu0
        %5499 = vmatprep.subr.bf16.mxu0 0
        %5500 = vmatpush1.bf16.msra.mxu0 %v4074
        %5501 = vmatprep.subr.bf16.mxu0 0
        %5502 = vmatpush1.bf16.msra.mxu0 %v4073
        %5503 = vmatprep.subr.bf16.mxu0 0
        %5504 = vmatpush1.bf16.msra.mxu0 %v4072
        %5505 = vmatprep.subr.bf16.mxu0 0
        %5506 = vmatpush1.bf16.msra.mxu0 %v4071
        %5507 = vmatprep.subr.bf16.mxu0 0
        %5508 = vmatpush1.bf16.msra.mxu0 %v4070
        %5509 = vmatprep.subr.bf16.mxu0 0
        %5510 = vmatpush1.bf16.msra.mxu0 %v4069
        %5511 = vmatprep.subr.bf16.mxu0 0
        %5512 = vmatpush1.bf16.msra.mxu0 %v4068
        %5513 = vmatprep.subr.bf16.mxu0 0
        %5514 = vmatpush1.bf16.msra.mxu0 %v4067
        %5515 = vmatprep.subr.bf16.mxu0 0
        %5516 = vmatpush2.bf16.msra.mxu0 %v4082
        %5517 = vmatprep.subr.bf16.mxu0 0
        %5518 = vmatpush2.bf16.msra.mxu0 %v4081
        %5519 = vmatprep.subr.bf16.mxu0 0
        %5520 = vmatpush2.bf16.msra.mxu0 %v4080
        %5521 = vmatprep.subr.bf16.mxu0 0
        %5522 = vmatpush2.bf16.msra.mxu0 %v4079
        %5523 = vmatprep.subr.bf16.mxu0 0
        %5524 = vmatpush2.bf16.msra.mxu0 %v4078
        %5525 = vmatprep.subr.bf16.mxu0 0
        %5526 = vmatpush2.bf16.msra.mxu0 %v4077
        %5527 = vmatprep.subr.bf16.mxu0 0
        %5528 = vmatpush2.bf16.msra.mxu0 %v4076
        %5529 = vmatprep.subr.bf16.mxu0 0
        %5530 = vmatpush2.bf16.msra.mxu0 %v4075
        %5531 = vmatprep.mubr.bf16.mxu0 %v1534
        %5532 = vmatmul.mubr.bf16.gmra.mxu0 %v1532
        %v5533 = vpop.f32.mrf.mxu0
        %v5534 = vadd.f32 %v5494, %v5533
        %v5535 = vpop.f32.mrf.mxu0
        %v5536 = vpop.f32.mrf.mxu0
        %v5537 = vpop.f32.mrf.mxu0
        %5538 = vdwg.mxu0
        %5539 = vmatprep.subr.bf16.mxu0 0
        %5540 = vmatpush1.bf16.msra.mxu0 %v4090
        %5541 = vmatprep.subr.bf16.mxu0 0
        %5542 = vmatpush1.bf16.msra.mxu0 %v4089
        %5543 = vmatprep.subr.bf16.mxu0 0
        %5544 = vmatpush1.bf16.msra.mxu0 %v4088
        %5545 = vmatprep.subr.bf16.mxu0 0
        %5546 = vmatpush1.bf16.msra.mxu0 %v4087
        %5547 = vmatprep.subr.bf16.mxu0 0
        %5548 = vmatpush1.bf16.msra.mxu0 %v4086
        %5549 = vmatprep.subr.bf16.mxu0 0
        %5550 = vmatpush1.bf16.msra.mxu0 %v4085
        %5551 = vmatprep.subr.bf16.mxu0 0
        %5552 = vmatpush1.bf16.msra.mxu0 %v4084
        %5553 = vmatprep.subr.bf16.mxu0 0
        %5554 = vmatpush1.bf16.msra.mxu0 %v4083
        %5555 = vmatprep.subr.bf16.mxu0 0
        %5556 = vmatpush2.bf16.msra.mxu0 %v4098
        %5557 = vmatprep.subr.bf16.mxu0 0
        %5558 = vmatpush2.bf16.msra.mxu0 %v4097
        %5559 = vmatprep.subr.bf16.mxu0 0
        %5560 = vmatpush2.bf16.msra.mxu0 %v4096
        %5561 = vmatprep.subr.bf16.mxu0 0
        %5562 = vmatpush2.bf16.msra.mxu0 %v4095
        %5563 = vmatprep.subr.bf16.mxu0 0
        %5564 = vmatpush2.bf16.msra.mxu0 %v4094
        %5565 = vmatprep.subr.bf16.mxu0 0
        %5566 = vmatpush2.bf16.msra.mxu0 %v4093
        %5567 = vmatprep.subr.bf16.mxu0 0
        %5568 = vmatpush2.bf16.msra.mxu0 %v4092
        %5569 = vmatprep.subr.bf16.mxu0 0
        %5570 = vmatpush2.bf16.msra.mxu0 %v4091
        %5571 = vmatprep.mubr.bf16.mxu0 %v1531
        %5572 = vmatmul.mubr.bf16.gmra.mxu0 %v1517
        %v5573 = vpop.f32.mrf.mxu0
        %v5574 = vadd.f32 %v5534, %v5573
        %v5575 = vpop.f32.mrf.mxu0
        %v5576 = vpop.f32.mrf.mxu0
        %v5577 = vpop.f32.mrf.mxu0
        %5578 = vdwg.mxu0
        %5579 = vmatprep.subr.bf16.mxu0 0
        %5580 = vmatpush1.bf16.msra.mxu0 %v4106
        %5581 = vmatprep.subr.bf16.mxu0 0
        %5582 = vmatpush1.bf16.msra.mxu0 %v4105
        %5583 = vmatprep.subr.bf16.mxu0 0
        %5584 = vmatpush1.bf16.msra.mxu0 %v4104
        %5585 = vmatprep.subr.bf16.mxu0 0
        %5586 = vmatpush1.bf16.msra.mxu0 %v4103
        %5587 = vmatprep.subr.bf16.mxu0 0
        %5588 = vmatpush1.bf16.msra.mxu0 %v4102
        %5589 = vmatprep.subr.bf16.mxu0 0
        %5590 = vmatpush1.bf16.msra.mxu0 %v4101
        %5591 = vmatprep.subr.bf16.mxu0 0
        %5592 = vmatpush1.bf16.msra.mxu0 %v4100
        %5593 = vmatprep.subr.bf16.mxu0 0
        %5594 = vmatpush1.bf16.msra.mxu0 %v4099
        %5595 = vmatprep.subr.bf16.mxu0 0
        %5596 = vmatpush2.bf16.msra.mxu0 %v4114
        %5597 = vmatprep.subr.bf16.mxu0 0
        %5598 = vmatpush2.bf16.msra.mxu0 %v4113
        %5599 = vmatprep.subr.bf16.mxu0 0
        %5600 = vmatpush2.bf16.msra.mxu0 %v4112
        %5601 = vmatprep.subr.bf16.mxu0 0
        %5602 = vmatpush2.bf16.msra.mxu0 %v4111
        %5603 = vmatprep.subr.bf16.mxu0 0
        %5604 = vmatpush2.bf16.msra.mxu0 %v4110
        %5605 = vmatprep.subr.bf16.mxu0 0
        %5606 = vmatpush2.bf16.msra.mxu0 %v4109
        %5607 = vmatprep.subr.bf16.mxu0 0
        %5608 = vmatpush2.bf16.msra.mxu0 %v4108
        %5609 = vmatprep.subr.bf16.mxu0 0
        %5610 = vmatpush2.bf16.msra.mxu0 %v4107
        %5611 = vmatprep.mubr.bf16.mxu0 %v1535
        %5612 = vmatmul.mubr.bf16.gmra.mxu0 %v1533
        %v5613 = vpop.f32.mrf.mxu0
        %v5614 = vadd.f32 %v5574, %v5613
        %v5615 = vpop.f32.mrf.mxu0
        %v5616 = vpop.f32.mrf.mxu0
        %v5617 = vpop.f32.mrf.mxu0
        %5618 = vdwg.mxu0
        %5619 = vmatprep.subr.bf16.mxu0 0
        %5620 = vmatpush1.bf16.msra.mxu0 %v4122
        %5621 = vmatprep.subr.bf16.mxu0 0
        %5622 = vmatpush1.bf16.msra.mxu0 %v4121
        %5623 = vmatprep.subr.bf16.mxu0 0
        %5624 = vmatpush1.bf16.msra.mxu0 %v4120
        %5625 = vmatprep.subr.bf16.mxu0 0
        %5626 = vmatpush1.bf16.msra.mxu0 %v4119
        %5627 = vmatprep.subr.bf16.mxu0 0
        %5628 = vmatpush1.bf16.msra.mxu0 %v4118
        %5629 = vmatprep.subr.bf16.mxu0 0
        %5630 = vmatpush1.bf16.msra.mxu0 %v4117
        %5631 = vmatprep.subr.bf16.mxu0 0
        %5632 = vmatpush1.bf16.msra.mxu0 %v4116
        %5633 = vmatprep.subr.bf16.mxu0 0
        %5634 = vmatpush1.bf16.msra.mxu0 %v4115
        %5635 = vmatprep.subr.bf16.mxu0 0
        %5636 = vmatpush2.bf16.msra.mxu0 %v4130
        %5637 = vmatprep.subr.bf16.mxu0 0
        %5638 = vmatpush2.bf16.msra.mxu0 %v4129
        %5639 = vmatprep.subr.bf16.mxu0 0
        %5640 = vmatpush2.bf16.msra.mxu0 %v4128
        %5641 = vmatprep.subr.bf16.mxu0 0
        %5642 = vmatpush2.bf16.msra.mxu0 %v4127
        %5643 = vmatprep.subr.bf16.mxu0 0
        %5644 = vmatpush2.bf16.msra.mxu0 %v4126
        %5645 = vmatprep.subr.bf16.mxu0 0
        %5646 = vmatpush2.bf16.msra.mxu0 %v4125
        %5647 = vmatprep.subr.bf16.mxu0 0
        %5648 = vmatpush2.bf16.msra.mxu0 %v4124
        %5649 = vmatprep.subr.bf16.mxu0 0
        %5650 = vmatpush2.bf16.msra.mxu0 %v4123
        %5651 = vmatprep.mubr.bf16.mxu0 %v1573
        %5652 = vmatmul.mubr.bf16.gmra.mxu0 %v1559
        %v5653 = vpop.f32.mrf.mxu0
        %v5654 = vadd.f32 %v5614, %v5653
        %v5655 = vpop.f32.mrf.mxu0
        %v5656 = vpop.f32.mrf.mxu0
        %v5657 = vpop.f32.mrf.mxu0
        %5658 = vdwg.mxu0
        %5659 = vmatprep.subr.bf16.mxu0 0
        %5660 = vmatpush1.bf16.msra.mxu0 %v4138
        %5661 = vmatprep.subr.bf16.mxu0 0
        %5662 = vmatpush1.bf16.msra.mxu0 %v4137
        %5663 = vmatprep.subr.bf16.mxu0 0
        %5664 = vmatpush1.bf16.msra.mxu0 %v4136
        %5665 = vmatprep.subr.bf16.mxu0 0
        %5666 = vmatpush1.bf16.msra.mxu0 %v4135
        %5667 = vmatprep.subr.bf16.mxu0 0
        %5668 = vmatpush1.bf16.msra.mxu0 %v4134
        %5669 = vmatprep.subr.bf16.mxu0 0
        %5670 = vmatpush1.bf16.msra.mxu0 %v4133
        %5671 = vmatprep.subr.bf16.mxu0 0
        %5672 = vmatpush1.bf16.msra.mxu0 %v4132
        %5673 = vmatprep.subr.bf16.mxu0 0
        %5674 = vmatpush1.bf16.msra.mxu0 %v4131
        %5675 = vmatprep.subr.bf16.mxu0 0
        %5676 = vmatpush2.bf16.msra.mxu0 %v4146
        %5677 = vmatprep.subr.bf16.mxu0 0
        %5678 = vmatpush2.bf16.msra.mxu0 %v4145
        %5679 = vmatprep.subr.bf16.mxu0 0
        %5680 = vmatpush2.bf16.msra.mxu0 %v4144
        %5681 = vmatprep.subr.bf16.mxu0 0
        %5682 = vmatpush2.bf16.msra.mxu0 %v4143
        %5683 = vmatprep.subr.bf16.mxu0 0
        %5684 = vmatpush2.bf16.msra.mxu0 %v4142
        %5685 = vmatprep.subr.bf16.mxu0 0
        %5686 = vmatpush2.bf16.msra.mxu0 %v4141
        %5687 = vmatprep.subr.bf16.mxu0 0
        %5688 = vmatpush2.bf16.msra.mxu0 %v4140
        %5689 = vmatprep.subr.bf16.mxu0 0
        %5690 = vmatpush2.bf16.msra.mxu0 %v4139
        %5691 = vmatprep.mubr.bf16.mxu0 %v1583
        %5692 = vmatmul.mubr.bf16.gmra.mxu0 %v1581
        %v5693 = vpop.f32.mrf.mxu0
        %v5694 = vadd.f32 %v5654, %v5693
        %v5695 = vpop.f32.mrf.mxu0
        %v5696 = vpop.f32.mrf.mxu0
        %v5697 = vpop.f32.mrf.mxu0
        %5698 = vdwg.mxu0
        %5699 = vmatprep.subr.bf16.mxu0 0
        %5700 = vmatpush1.bf16.msra.mxu0 %v4154
        %5701 = vmatprep.subr.bf16.mxu0 0
        %5702 = vmatpush1.bf16.msra.mxu0 %v4153
        %5703 = vmatprep.subr.bf16.mxu0 0
        %5704 = vmatpush1.bf16.msra.mxu0 %v4152
        %5705 = vmatprep.subr.bf16.mxu0 0
        %5706 = vmatpush1.bf16.msra.mxu0 %v4151
        %5707 = vmatprep.subr.bf16.mxu0 0
        %5708 = vmatpush1.bf16.msra.mxu0 %v4150
        %5709 = vmatprep.subr.bf16.mxu0 0
        %5710 = vmatpush1.bf16.msra.mxu0 %v4149
        %5711 = vmatprep.subr.bf16.mxu0 0
        %5712 = vmatpush1.bf16.msra.mxu0 %v4148
        %5713 = vmatprep.subr.bf16.mxu0 0
        %5714 = vmatpush1.bf16.msra.mxu0 %v4147
        %5715 = vmatprep.subr.bf16.mxu0 0
        %5716 = vmatpush2.bf16.msra.mxu0 %v4162
        %5717 = vmatprep.subr.bf16.mxu0 0
        %5718 = vmatpush2.bf16.msra.mxu0 %v4161
        %5719 = vmatprep.subr.bf16.mxu0 0
        %5720 = vmatpush2.bf16.msra.mxu0 %v4160
        %5721 = vmatprep.subr.bf16.mxu0 0
        %5722 = vmatpush2.bf16.msra.mxu0 %v4159
        %5723 = vmatprep.subr.bf16.mxu0 0
        %5724 = vmatpush2.bf16.msra.mxu0 %v4158
        %5725 = vmatprep.subr.bf16.mxu0 0
        %5726 = vmatpush2.bf16.msra.mxu0 %v4157
        %5727 = vmatprep.subr.bf16.mxu0 0
        %5728 = vmatpush2.bf16.msra.mxu0 %v4156
        %5729 = vmatprep.subr.bf16.mxu0 0
        %5730 = vmatpush2.bf16.msra.mxu0 %v4155
        %5731 = vmatprep.mubr.bf16.mxu0 %v1580
        %5732 = vmatmul.mubr.bf16.gmra.mxu0 %v1566
        %v5733 = vpop.f32.mrf.mxu0
        %v5734 = vadd.f32 %v5694, %v5733
        %v5735 = vpop.f32.mrf.mxu0
        %v5736 = vpop.f32.mrf.mxu0
        %v5737 = vpop.f32.mrf.mxu0
        %5738 = vdwg.mxu0
        %5739 = vmatprep.subr.bf16.mxu0 0
        %5740 = vmatpush1.bf16.msra.mxu0 %v4170
        %5741 = vmatprep.subr.bf16.mxu0 0
        %5742 = vmatpush1.bf16.msra.mxu0 %v4169
        %5743 = vmatprep.subr.bf16.mxu0 0
        %5744 = vmatpush1.bf16.msra.mxu0 %v4168
        %5745 = vmatprep.subr.bf16.mxu0 0
        %5746 = vmatpush1.bf16.msra.mxu0 %v4167
        %5747 = vmatprep.subr.bf16.mxu0 0
        %5748 = vmatpush1.bf16.msra.mxu0 %v4166
        %5749 = vmatprep.subr.bf16.mxu0 0
        %5750 = vmatpush1.bf16.msra.mxu0 %v4165
        %5751 = vmatprep.subr.bf16.mxu0 0
        %5752 = vmatpush1.bf16.msra.mxu0 %v4164
        %5753 = vmatprep.subr.bf16.mxu0 0
        %5754 = vmatpush1.bf16.msra.mxu0 %v4163
        %5755 = vmatprep.subr.bf16.mxu0 0
        %5756 = vmatpush2.bf16.msra.mxu0 %v4178
        %5757 = vmatprep.subr.bf16.mxu0 0
        %5758 = vmatpush2.bf16.msra.mxu0 %v4177
        %5759 = vmatprep.subr.bf16.mxu0 0
        %5760 = vmatpush2.bf16.msra.mxu0 %v4176
        %5761 = vmatprep.subr.bf16.mxu0 0
        %5762 = vmatpush2.bf16.msra.mxu0 %v4175
        %5763 = vmatprep.subr.bf16.mxu0 0
        %5764 = vmatpush2.bf16.msra.mxu0 %v4174
        %5765 = vmatprep.subr.bf16.mxu0 0
        %5766 = vmatpush2.bf16.msra.mxu0 %v4173
        %5767 = vmatprep.subr.bf16.mxu0 0
        %5768 = vmatpush2.bf16.msra.mxu0 %v4172
        %5769 = vmatprep.subr.bf16.mxu0 0
        %5770 = vmatpush2.bf16.msra.mxu0 %v4171
        %5771 = vmatprep.mubr.bf16.mxu0 %v1584
        %5772 = vmatmul.mubr.bf16.gmra.mxu0 %v1582
        %v5773 = vpop.f32.mrf.mxu0
        %v5774 = vadd.f32 %v5734, %v5773
        %v5775 = vpop.f32.mrf.mxu0
        %v5776 = vpop.f32.mrf.mxu0
        %v5777 = vpop.f32.mrf.mxu0
        %5778 = vdwg.mxu0
        %5779 = vmatprep.subr.bf16.mxu0 0
        %5780 = vmatpush1.bf16.msra.mxu0 %v4186
        %5781 = vmatprep.subr.bf16.mxu0 0
        %5782 = vmatpush1.bf16.msra.mxu0 %v4185
        %5783 = vmatprep.subr.bf16.mxu0 0
        %5784 = vmatpush1.bf16.msra.mxu0 %v4184
        %5785 = vmatprep.subr.bf16.mxu0 0
        %5786 = vmatpush1.bf16.msra.mxu0 %v4183
        %5787 = vmatprep.subr.bf16.mxu0 0
        %5788 = vmatpush1.bf16.msra.mxu0 %v4182
        %5789 = vmatprep.subr.bf16.mxu0 0
        %5790 = vmatpush1.bf16.msra.mxu0 %v4181
        %5791 = vmatprep.subr.bf16.mxu0 0
        %5792 = vmatpush1.bf16.msra.mxu0 %v4180
        %5793 = vmatprep.subr.bf16.mxu0 0
        %5794 = vmatpush1.bf16.msra.mxu0 %v4179
        %5795 = vmatprep.subr.bf16.mxu0 0
        %5796 = vmatpush2.bf16.msra.mxu0 %v4194
        %5797 = vmatprep.subr.bf16.mxu0 0
        %5798 = vmatpush2.bf16.msra.mxu0 %v4193
        %5799 = vmatprep.subr.bf16.mxu0 0
        %5800 = vmatpush2.bf16.msra.mxu0 %v4192
        %5801 = vmatprep.subr.bf16.mxu0 0
        %5802 = vmatpush2.bf16.msra.mxu0 %v4191
        %5803 = vmatprep.subr.bf16.mxu0 0
        %5804 = vmatpush2.bf16.msra.mxu0 %v4190
        %5805 = vmatprep.subr.bf16.mxu0 0
        %5806 = vmatpush2.bf16.msra.mxu0 %v4189
        %5807 = vmatprep.subr.bf16.mxu0 0
        %5808 = vmatpush2.bf16.msra.mxu0 %v4188
        %5809 = vmatprep.subr.bf16.mxu0 0
        %5810 = vmatpush2.bf16.msra.mxu0 %v4187
        %5811 = vmatprep.mubr.bf16.mxu0 %v1622
        %5812 = vmatmul.mubr.bf16.gmra.mxu0 %v1608
        %v5813 = vpop.f32.mrf.mxu0
        %v5814 = vadd.f32 %v5774, %v5813
        %v5815 = vpop.f32.mrf.mxu0
        %v5816 = vpop.f32.mrf.mxu0
        %v5817 = vpop.f32.mrf.mxu0
        %5818 = vdwg.mxu0
        %5819 = vmatprep.subr.bf16.mxu0 0
        %5820 = vmatpush1.bf16.msra.mxu0 %v4202
        %5821 = vmatprep.subr.bf16.mxu0 0
        %5822 = vmatpush1.bf16.msra.mxu0 %v4201
        %5823 = vmatprep.subr.bf16.mxu0 0
        %5824 = vmatpush1.bf16.msra.mxu0 %v4200
        %5825 = vmatprep.subr.bf16.mxu0 0
        %5826 = vmatpush1.bf16.msra.mxu0 %v4199
        %5827 = vmatprep.subr.bf16.mxu0 0
        %5828 = vmatpush1.bf16.msra.mxu0 %v4198
        %5829 = vmatprep.subr.bf16.mxu0 0
        %5830 = vmatpush1.bf16.msra.mxu0 %v4197
        %5831 = vmatprep.subr.bf16.mxu0 0
        %5832 = vmatpush1.bf16.msra.mxu0 %v4196
        %5833 = vmatprep.subr.bf16.mxu0 0
        %5834 = vmatpush1.bf16.msra.mxu0 %v4195
        %5835 = vmatprep.subr.bf16.mxu0 0
        %5836 = vmatpush2.bf16.msra.mxu0 %v4210
        %5837 = vmatprep.subr.bf16.mxu0 0
        %5838 = vmatpush2.bf16.msra.mxu0 %v4209
        %5839 = vmatprep.subr.bf16.mxu0 0
        %5840 = vmatpush2.bf16.msra.mxu0 %v4208
        %5841 = vmatprep.subr.bf16.mxu0 0
        %5842 = vmatpush2.bf16.msra.mxu0 %v4207
        %5843 = vmatprep.subr.bf16.mxu0 0
        %5844 = vmatpush2.bf16.msra.mxu0 %v4206
        %5845 = vmatprep.subr.bf16.mxu0 0
        %5846 = vmatpush2.bf16.msra.mxu0 %v4205
        %5847 = vmatprep.subr.bf16.mxu0 0
        %5848 = vmatpush2.bf16.msra.mxu0 %v4204
        %5849 = vmatprep.subr.bf16.mxu0 0
        %5850 = vmatpush2.bf16.msra.mxu0 %v4203
        %5851 = vmatprep.mubr.bf16.mxu0 %v1632
        %5852 = vmatmul.mubr.bf16.gmra.mxu0 %v1630
        %v5853 = vpop.f32.mrf.mxu0
        %v5854 = vadd.f32 %v5814, %v5853
        %v5855 = vpop.f32.mrf.mxu0
        %v5856 = vpop.f32.mrf.mxu0
        %v5857 = vpop.f32.mrf.mxu0
        %5858 = vdwg.mxu0
        %5859 = vmatprep.subr.bf16.mxu0 0
        %5860 = vmatpush1.bf16.msra.mxu0 %v4218
        %5861 = vmatprep.subr.bf16.mxu0 0
        %5862 = vmatpush1.bf16.msra.mxu0 %v4217
        %5863 = vmatprep.subr.bf16.mxu0 0
        %5864 = vmatpush1.bf16.msra.mxu0 %v4216
        %5865 = vmatprep.subr.bf16.mxu0 0
        %5866 = vmatpush1.bf16.msra.mxu0 %v4215
        %5867 = vmatprep.subr.bf16.mxu0 0
        %5868 = vmatpush1.bf16.msra.mxu0 %v4214
        %5869 = vmatprep.subr.bf16.mxu0 0
        %5870 = vmatpush1.bf16.msra.mxu0 %v4213
        %5871 = vmatprep.subr.bf16.mxu0 0
        %5872 = vmatpush1.bf16.msra.mxu0 %v4212
        %5873 = vmatprep.subr.bf16.mxu0 0
        %5874 = vmatpush1.bf16.msra.mxu0 %v4211
        %5875 = vmatprep.subr.bf16.mxu0 0
        %5876 = vmatpush2.bf16.msra.mxu0 %v4226
        %5877 = vmatprep.subr.bf16.mxu0 0
        %5878 = vmatpush2.bf16.msra.mxu0 %v4225
        %5879 = vmatprep.subr.bf16.mxu0 0
        %5880 = vmatpush2.bf16.msra.mxu0 %v4224
        %5881 = vmatprep.subr.bf16.mxu0 0
        %5882 = vmatpush2.bf16.msra.mxu0 %v4223
        %5883 = vmatprep.subr.bf16.mxu0 0
        %5884 = vmatpush2.bf16.msra.mxu0 %v4222
        %5885 = vmatprep.subr.bf16.mxu0 0
        %5886 = vmatpush2.bf16.msra.mxu0 %v4221
        %5887 = vmatprep.subr.bf16.mxu0 0
        %5888 = vmatpush2.bf16.msra.mxu0 %v4220
        %5889 = vmatprep.subr.bf16.mxu0 0
        %5890 = vmatpush2.bf16.msra.mxu0 %v4219
        %5891 = vmatprep.mubr.bf16.mxu0 %v1629
        %5892 = vmatmul.mubr.bf16.gmra.mxu0 %v1615
        %v5893 = vpop.f32.mrf.mxu0
        %v5894 = vadd.f32 %v5854, %v5893
        %v5895 = vpop.f32.mrf.mxu0
        %v5896 = vpop.f32.mrf.mxu0
        %v5897 = vpop.f32.mrf.mxu0
        %5898 = vdwg.mxu0
        %5899 = vmatprep.subr.bf16.mxu0 0
        %5900 = vmatpush1.bf16.msra.mxu0 %v4234
        %5901 = vmatprep.subr.bf16.mxu0 0
        %5902 = vmatpush1.bf16.msra.mxu0 %v4233
        %5903 = vmatprep.subr.bf16.mxu0 0
        %5904 = vmatpush1.bf16.msra.mxu0 %v4232
        %5905 = vmatprep.subr.bf16.mxu0 0
        %5906 = vmatpush1.bf16.msra.mxu0 %v4231
        %5907 = vmatprep.subr.bf16.mxu0 0
        %5908 = vmatpush1.bf16.msra.mxu0 %v4230
        %5909 = vmatprep.subr.bf16.mxu0 0
        %5910 = vmatpush1.bf16.msra.mxu0 %v4229
        %5911 = vmatprep.subr.bf16.mxu0 0
        %5912 = vmatpush1.bf16.msra.mxu0 %v4228
        %5913 = vmatprep.subr.bf16.mxu0 0
        %5914 = vmatpush1.bf16.msra.mxu0 %v4227
        %5915 = vmatprep.subr.bf16.mxu0 0
        %5916 = vmatpush2.bf16.msra.mxu0 %v4242
        %5917 = vmatprep.subr.bf16.mxu0 0
        %5918 = vmatpush2.bf16.msra.mxu0 %v4241
        %5919 = vmatprep.subr.bf16.mxu0 0
        %5920 = vmatpush2.bf16.msra.mxu0 %v4240
        %5921 = vmatprep.subr.bf16.mxu0 0
        %5922 = vmatpush2.bf16.msra.mxu0 %v4239
        %5923 = vmatprep.subr.bf16.mxu0 0
        %5924 = vmatpush2.bf16.msra.mxu0 %v4238
        %5925 = vmatprep.subr.bf16.mxu0 0
        %5926 = vmatpush2.bf16.msra.mxu0 %v4237
        %5927 = vmatprep.subr.bf16.mxu0 0
        %5928 = vmatpush2.bf16.msra.mxu0 %v4236
        %5929 = vmatprep.subr.bf16.mxu0 0
        %5930 = vmatpush2.bf16.msra.mxu0 %v4235
        %5931 = vmatprep.mubr.bf16.mxu0 %v1633
        %5932 = vmatmul.mubr.bf16.gmra.mxu0 %v1631
        %v5933 = vpop.f32.mrf.mxu0
        %v5934 = vadd.f32 %v5894, %v5933
        %v5935 = vpop.f32.mrf.mxu0
        %v5936 = vpop.f32.mrf.mxu0
        %v5937 = vpop.f32.mrf.mxu0
        %5938 = vdwg.mxu0
        %5939 = vmatprep.subr.bf16.mxu0 0
        %5940 = vmatpush1.bf16.msra.mxu0 %v4250
        %5941 = vmatprep.subr.bf16.mxu0 0
        %5942 = vmatpush1.bf16.msra.mxu0 %v4249
        %5943 = vmatprep.subr.bf16.mxu0 0
        %5944 = vmatpush1.bf16.msra.mxu0 %v4248
        %5945 = vmatprep.subr.bf16.mxu0 0
        %5946 = vmatpush1.bf16.msra.mxu0 %v4247
        %5947 = vmatprep.subr.bf16.mxu0 0
        %5948 = vmatpush1.bf16.msra.mxu0 %v4246
        %5949 = vmatprep.subr.bf16.mxu0 0
        %5950 = vmatpush1.bf16.msra.mxu0 %v4245
        %5951 = vmatprep.subr.bf16.mxu0 0
        %5952 = vmatpush1.bf16.msra.mxu0 %v4244
        %5953 = vmatprep.subr.bf16.mxu0 0
        %5954 = vmatpush1.bf16.msra.mxu0 %v4243
        %5955 = vmatprep.subr.bf16.mxu0 0
        %5956 = vmatpush2.bf16.msra.mxu0 %v4258
        %5957 = vmatprep.subr.bf16.mxu0 0
        %5958 = vmatpush2.bf16.msra.mxu0 %v4257
        %5959 = vmatprep.subr.bf16.mxu0 0
        %5960 = vmatpush2.bf16.msra.mxu0 %v4256
        %5961 = vmatprep.subr.bf16.mxu0 0
        %5962 = vmatpush2.bf16.msra.mxu0 %v4255
        %5963 = vmatprep.subr.bf16.mxu0 0
        %5964 = vmatpush2.bf16.msra.mxu0 %v4254
        %5965 = vmatprep.subr.bf16.mxu0 0
        %5966 = vmatpush2.bf16.msra.mxu0 %v4253
        %5967 = vmatprep.subr.bf16.mxu0 0
        %5968 = vmatpush2.bf16.msra.mxu0 %v4252
        %5969 = vmatprep.subr.bf16.mxu0 0
        %5970 = vmatpush2.bf16.msra.mxu0 %v4251
        %5971 = vmatprep.mubr.bf16.mxu0 %v1671
        %5972 = vmatmul.mubr.bf16.gmra.mxu0 %v1657
        %v5973 = vpop.f32.mrf.mxu0
        %v5974 = vadd.f32 %v5934, %v5973
        %v5975 = vpop.f32.mrf.mxu0
        %v5976 = vpop.f32.mrf.mxu0
        %v5977 = vpop.f32.mrf.mxu0
        %5978 = vdwg.mxu0
        %5979 = vmatprep.subr.bf16.mxu0 0
        %5980 = vmatpush1.bf16.msra.mxu0 %v4266
        %5981 = vmatprep.subr.bf16.mxu0 0
        %5982 = vmatpush1.bf16.msra.mxu0 %v4265
        %5983 = vmatprep.subr.bf16.mxu0 0
        %5984 = vmatpush1.bf16.msra.mxu0 %v4264
        %5985 = vmatprep.subr.bf16.mxu0 0
        %5986 = vmatpush1.bf16.msra.mxu0 %v4263
        %5987 = vmatprep.subr.bf16.mxu0 0
        %5988 = vmatpush1.bf16.msra.mxu0 %v4262
        %5989 = vmatprep.subr.bf16.mxu0 0
        %5990 = vmatpush1.bf16.msra.mxu0 %v4261
        %5991 = vmatprep.subr.bf16.mxu0 0
        %5992 = vmatpush1.bf16.msra.mxu0 %v4260
        %5993 = vmatprep.subr.bf16.mxu0 0
        %5994 = vmatpush1.bf16.msra.mxu0 %v4259
        %5995 = vmatprep.subr.bf16.mxu0 0
        %5996 = vmatpush2.bf16.msra.mxu0 %v4274
        %5997 = vmatprep.subr.bf16.mxu0 0
        %5998 = vmatpush2.bf16.msra.mxu0 %v4273
        %5999 = vmatprep.subr.bf16.mxu0 0
        %6000 = vmatpush2.bf16.msra.mxu0 %v4272
        %6001 = vmatprep.subr.bf16.mxu0 0
        %6002 = vmatpush2.bf16.msra.mxu0 %v4271
        %6003 = vmatprep.subr.bf16.mxu0 0
        %6004 = vmatpush2.bf16.msra.mxu0 %v4270
        %6005 = vmatprep.subr.bf16.mxu0 0
        %6006 = vmatpush2.bf16.msra.mxu0 %v4269
        %6007 = vmatprep.subr.bf16.mxu0 0
        %6008 = vmatpush2.bf16.msra.mxu0 %v4268
        %6009 = vmatprep.subr.bf16.mxu0 0
        %6010 = vmatpush2.bf16.msra.mxu0 %v4267
        %6011 = vmatprep.mubr.bf16.mxu0 %v1681
        %6012 = vmatmul.mubr.bf16.gmra.mxu0 %v1679
        %v6013 = vpop.f32.mrf.mxu0
        %v6014 = vadd.f32 %v5974, %v6013
        %v6015 = vpop.f32.mrf.mxu0
        %v6016 = vpop.f32.mrf.mxu0
        %v6017 = vpop.f32.mrf.mxu0
        %6018 = vdwg.mxu0
        %6019 = vmatprep.subr.bf16.mxu0 0
        %6020 = vmatpush1.bf16.msra.mxu0 %v4282
        %6021 = vmatprep.subr.bf16.mxu0 0
        %6022 = vmatpush1.bf16.msra.mxu0 %v4281
        %6023 = vmatprep.subr.bf16.mxu0 0
        %6024 = vmatpush1.bf16.msra.mxu0 %v4280
        %6025 = vmatprep.subr.bf16.mxu0 0
        %6026 = vmatpush1.bf16.msra.mxu0 %v4279
        %6027 = vmatprep.subr.bf16.mxu0 0
        %6028 = vmatpush1.bf16.msra.mxu0 %v4278
        %6029 = vmatprep.subr.bf16.mxu0 0
        %6030 = vmatpush1.bf16.msra.mxu0 %v4277
        %6031 = vmatprep.subr.bf16.mxu0 0
        %6032 = vmatpush1.bf16.msra.mxu0 %v4276
        %6033 = vmatprep.subr.bf16.mxu0 0
        %6034 = vmatpush1.bf16.msra.mxu0 %v4275
        %6035 = vmatprep.subr.bf16.mxu0 0
        %6036 = vmatpush2.bf16.msra.mxu0 %v4290
        %6037 = vmatprep.subr.bf16.mxu0 0
        %6038 = vmatpush2.bf16.msra.mxu0 %v4289
        %6039 = vmatprep.subr.bf16.mxu0 0
        %6040 = vmatpush2.bf16.msra.mxu0 %v4288
        %6041 = vmatprep.subr.bf16.mxu0 0
        %6042 = vmatpush2.bf16.msra.mxu0 %v4287
        %6043 = vmatprep.subr.bf16.mxu0 0
        %6044 = vmatpush2.bf16.msra.mxu0 %v4286
        %6045 = vmatprep.subr.bf16.mxu0 0
        %6046 = vmatpush2.bf16.msra.mxu0 %v4285
        %6047 = vmatprep.subr.bf16.mxu0 0
        %6048 = vmatpush2.bf16.msra.mxu0 %v4284
        %6049 = vmatprep.subr.bf16.mxu0 0
        %6050 = vmatpush2.bf16.msra.mxu0 %v4283
        %6051 = vmatprep.mubr.bf16.mxu0 %v1678
        %6052 = vmatmul.mubr.bf16.gmra.mxu0 %v1664
        %v6053 = vpop.f32.mrf.mxu0
        %v6054 = vadd.f32 %v6014, %v6053
        %v6055 = vpop.f32.mrf.mxu0
        %v6056 = vpop.f32.mrf.mxu0
        %v6057 = vpop.f32.mrf.mxu0
        %6058 = vdwg.mxu0
        %6059 = vmatprep.subr.bf16.mxu0 0
        %6060 = vmatpush1.bf16.msra.mxu0 %v4298
        %6061 = vmatprep.subr.bf16.mxu0 0
        %6062 = vmatpush1.bf16.msra.mxu0 %v4297
        %6063 = vmatprep.subr.bf16.mxu0 0
        %6064 = vmatpush1.bf16.msra.mxu0 %v4296
        %6065 = vmatprep.subr.bf16.mxu0 0
        %6066 = vmatpush1.bf16.msra.mxu0 %v4295
        %6067 = vmatprep.subr.bf16.mxu0 0
        %6068 = vmatpush1.bf16.msra.mxu0 %v4294
        %6069 = vmatprep.subr.bf16.mxu0 0
        %6070 = vmatpush1.bf16.msra.mxu0 %v4293
        %6071 = vmatprep.subr.bf16.mxu0 0
        %6072 = vmatpush1.bf16.msra.mxu0 %v4292
        %6073 = vmatprep.subr.bf16.mxu0 0
        %6074 = vmatpush1.bf16.msra.mxu0 %v4291
        %6075 = vmatprep.subr.bf16.mxu0 0
        %6076 = vmatpush2.bf16.msra.mxu0 %v4306
        %6077 = vmatprep.subr.bf16.mxu0 0
        %6078 = vmatpush2.bf16.msra.mxu0 %v4305
        %6079 = vmatprep.subr.bf16.mxu0 0
        %6080 = vmatpush2.bf16.msra.mxu0 %v4304
        %6081 = vmatprep.subr.bf16.mxu0 0
        %6082 = vmatpush2.bf16.msra.mxu0 %v4303
        %6083 = vmatprep.subr.bf16.mxu0 0
        %6084 = vmatpush2.bf16.msra.mxu0 %v4302
        %6085 = vmatprep.subr.bf16.mxu0 0
        %6086 = vmatpush2.bf16.msra.mxu0 %v4301
        %6087 = vmatprep.subr.bf16.mxu0 0
        %6088 = vmatpush2.bf16.msra.mxu0 %v4300
        %6089 = vmatprep.subr.bf16.mxu0 0
        %6090 = vmatpush2.bf16.msra.mxu0 %v4299
        %6091 = vmatprep.mubr.bf16.mxu0 %v1682
        %6092 = vmatmul.mubr.bf16.gmra.mxu0 %v1680
        %v6093 = vpop.f32.mrf.mxu0
        %v6094 = vadd.f32 %v6054, %v6093
        %v6095 = vpop.f32.mrf.mxu0
        %v6096 = vpop.f32.mrf.mxu0
        %v6097 = vpop.f32.mrf.mxu0
        %6098 = vdwg.mxu0
        %v6099 = vadd.f32 %v250, %v6094
        %vm6100 = vcmask 812032
        %6101 = vst.msk [vmem:[#allocation2] sm:$0x3] %vm6100, %v6099
        %p6102 = scmp.eq.s32.totalorder %s22, 3
        // Predicated region
        $region37: #{decoder_forward.5} parent=31 // pred_check
          %p6103 = pneg %p6102
        $region38: #{decoder_forward.5} parent=31 // pred_check_branch
          %6105 = sbr.rel (%p6103) target = $region40
        $region39: #{decoder_forward.5} parent=31 // pred_region
          %v6106 = vld [vmem:[#allocation2] sm:$0x3]
          %v6107 = vld [vmem:[%s242] sm:$0x1]
          %v6109 = vlaneseq
          %v6110 = vshrl.u32 %v6109, 7
          %v6111 = vsub.s32 0, %v6110
          %v6112 = vrot.slane %v6107, %v6111
          %v6114 = vadd.f32 %v6106, %v6112
          %v6115 = vtanh.pop %v6114
          %6116 = vst.msk [vmem:[#allocation3] sm:$0x3] %vm6100, %v6115
        $region40: #{decoder_forward.5} parent=31 // pred_fallthru
          _
        // Predicated region
        $region41: #{decoder_forward.5} parent=31 // pred_check
          %p6117 = pneg %p136
        $region42: #{decoder_forward.5} parent=31 // pred_check_branch
          %6119 = sbr.rel (%p6117) target = $region44
        $region43: #{decoder_forward.5} parent=31 // pred_region
          %s6121 = ssub.s32 32, 32
          %6122 = vsyncadd [#allocation4], %s6121
          %s6123 = sadd.s32 %s21, %s20
          %s6124 = smul.addr %s6123, 32
          %s6125 = scalar_lea.hbm %s3, %s6124
          %s6127 = sshll.u32 [#allocation3], 4
          %s6128 = int_to_ptr.vmem [resolvable:$true] %s6127
          %6130 = dma.vmem_to_hbm [thread:$0]  %s6128, 32, %s6125, [#allocation4]
        $region44: #{decoder_forward.5} parent=31 // pred_fallthru
          _
        // Predicated region
        $region45: #{decoder_forward.5} parent=31 // pred_check
          %p6131 = pneg %p136
        $region46: #{decoder_forward.5} parent=31 // pred_check_branch
          %6133 = sbr.rel (%p6131) target = $region48
        $region47: #{decoder_forward.5} parent=31 // pred_region
          %6134 = dma.done [#allocation4], 32
        $region48: #{decoder_forward.5} parent=31 // pred_fallthru
          _
      $region32: #{decoder_forward.5} parent=5 // pred_fallthru
        _
      %p6135 = scmp.le.s32.totalorder 2, %s10
      // Predicated region
      $region49: #{decoder_forward.5} parent=5 // pred_check
        %p6136 = pneg %p6135
      $region50: #{decoder_forward.5} parent=5 // pred_check_branch
        %6138 = sbr.rel (%p6136) target = $region52
      $region51: #{decoder_forward.5} parent=5 // pred_region
        %s6139 = ssub.s32 %s10, 2
      $region52: #{decoder_forward.5} parent=5 // pred_fallthru
        _
    $region6: #{decoder_forward.5} parent=1 // loop_footer
      %s14 = sadd.s32 1, %s10
    $region7: #{decoder_forward.5} parent=1 // loop_footer_branch
      %9 = sbr.rel target = $region3
    $region8: #{decoder_forward.5} parent=1 // loop_exit
      _
    %6140 = vsyncpa [#allocation4], 1
    %s6141 = scalar_lea.sflag [#allocation4], 1
    %6142 = vsyncpa %s6141, 1

</llo_original>
